<compile_context>
chip_gen: v6e
topology: v6e:2x2x1
jax: 0.10.0
libtpu: 0.0.40
codegen_flags: <defaults>
</compile_context>

<pallas_src>
import functools

import jax
import jax.numpy as jnp
from jax.experimental import pallas as pl
from jax.experimental.pallas import tpu as pltpu


def _round_up(x, m):
    return (x + m - 1) // m * m


# --------------------------------------------------------------------------------------
# Pallas kernel 1: single-pass (full-K) GEMM + bias (+ optional LeakyReLU)
#   patches[M, K] (bf16) @ weight[K, N] (bf16) -> f32 -> +bias -> LeakyReLU -> store
# --------------------------------------------------------------------------------------
def _gemm_bias_act_kernel(x_ref, w_ref, b_ref, o_ref, *, alpha):
    acc = jnp.dot(x_ref[...], w_ref[...], preferred_element_type=jnp.float32)
    acc = acc + b_ref[...]
    if alpha is not None:                                  # static (closure) branch
        acc = jnp.where(acc >= 0.0, acc, alpha * acc)      # LeakyReLU(alpha)
    o_ref[...] = acc.astype(o_ref.dtype)


def gemm_bias_act(x, w, b, *, alpha=None, out_dtype=jnp.bfloat16, tm_max=512):
    """act(x @ w + b).  K and N fit fully in VMEM for every layer of this model, so the
    whole contraction is one load->matmul->epilogue->store pass per (i, j) tile."""
    M, K = x.shape
    Kw, N = w.shape
    assert K == Kw

    # N tiling: model widths are 64/128/256 -> one lane-aligned (or full-dim) N block.
    if N % 128 == 0:
        tn = 256 if N % 256 == 0 else 128
    else:
        tn = N                                  # full-dim lane block (l1's 64 channels)

    # M tiling: >=2 blocks whenever possible so the v7x megacore has work on both TCs.
    tm = min(tm_max, max(16, _round_up(-(-M // 2), 16)))
    Mp = _round_up(M, tm)

    x = x.astype(jnp.bfloat16)
    w = w.astype(jnp.bfloat16)
    b = b.reshape(1, N).astype(jnp.float32)
    if Mp != M:
        x = jnp.pad(x, ((0, Mp - M), (0, 0)))

    kernel = functools.partial(_gemm_bias_act_kernel, alpha=alpha)
    out = pl.pallas_call(
        kernel,
        out_shape=jax.ShapeDtypeStruct((Mp, N), out_dtype),
        grid=(Mp // tm, N // tn),
        in_specs=[
            pl.BlockSpec((tm, K), lambda i, j: (i, 0)),
            pl.BlockSpec((K, tn), lambda i, j: (0, j)),
            pl.BlockSpec((1, tn), lambda i, j: (0, j)),
        ],
        out_specs=pl.BlockSpec((tm, tn), lambda i, j: (i, j)),
        compiler_params=pltpu.CompilerParams(
            dimension_semantics=("parallel", "parallel"),
            vmem_limit_bytes=32 * 1024 * 1024,
        ),
    )(x, w, b)

    if Mp != M:
        out = out[:M]
    return out


# --------------------------------------------------------------------------------------
# Pallas kernel 2: fused attn1 + attn2 + last-conv channel contraction.
#   - Q/K/V 1x1 projections with batch folded into M: (B*N, C) @ (C, .)
#   - softmax(QK^T), AV as batched einsums; y = relu(gamma*out + x)   (both blocks)
#   - epilogue: s = y @ w_taps  (w_taps = last conv's (C, 16) per-tap weights, padded
#     to 128 lanes), emitted as the only output.  The 25-value spatial tap-sum is done
#     in a tiny XLA epilogue outside the kernel.
# --------------------------------------------------------------------------------------
def _dual_attn_last_kernel(x_ref,
                           wq1_ref, bq1_ref, wk1_ref, bk1_ref, wv1_ref, bv1_ref, g1_ref,
                           wq2_ref, bq2_ref, wk2_ref, bk2_ref, wv2_ref, bv2_ref, g2_ref,
                           wtap_ref, s_ref, *, batch, seq):
    x2 = x_ref[...]                                        # (B*N, C) bf16

    def attn_block(xin_bf, xin_f32, wq_ref, bq_ref, wk_ref, bk_ref, wv_ref, bv_ref,
                   g_ref):
        # 1x1-conv projections, batch folded into the GEMM M dimension.
        q2 = jnp.dot(xin_bf, wq_ref[...], preferred_element_type=jnp.float32) + bq_ref[...]
        k2 = jnp.dot(xin_bf, wk_ref[...], preferred_element_type=jnp.float32) + bk_ref[...]
        v2 = jnp.dot(xin_bf, wv_ref[...], preferred_element_type=jnp.float32) + bv_ref[...]
        q = q2.astype(jnp.bfloat16).reshape(batch, seq, q2.shape[-1])
        k = k2.astype(jnp.bfloat16).reshape(batch, seq, k2.shape[-1])
        v = v2.astype(jnp.bfloat16).reshape(batch, seq, v2.shape[-1])
        # energy[b, i, j] = q_i . k_j ; softmax over j (exact f32 normalisation).
        energy = jnp.einsum('bik,bjk->bij', q, k, preferred_element_type=jnp.float32)
        energy = energy - jnp.max(energy, axis=-1, keepdims=True)
        p = jnp.exp(energy)
        att = p / jnp.sum(p, axis=-1, keepdims=True)
        out = jnp.einsum('bij,bjc->bic', att.astype(jnp.bfloat16), v,
                         preferred_element_type=jnp.float32)          # (B, N, C)
        out2 = out.reshape(batch * seq, out.shape[-1])
        return jnp.maximum(g_ref[0] * out2 + xin_f32, 0.0)            # F.relu(g*out + x)

    y1 = attn_block(x2, x2.astype(jnp.float32),
                    wq1_ref, bq1_ref, wk1_ref, bk1_ref, wv1_ref, bv1_ref, g1_ref)
    y2 = attn_block(y1.astype(jnp.bfloat16), y1,
                    wq2_ref, bq2_ref, wk2_ref, bk2_ref, wv2_ref, bv2_ref, g2_ref)
    # Fused last-conv channel contraction (4096-wide contraction done on the MXU here).
    s_ref[...] = jnp.dot(y2.astype(jnp.bfloat16), wtap_ref[...],
                         preferred_element_type=jnp.float32)


def dual_attn_plus_last(x_bnc, p):
    B, N, C = x_bnc.shape
    C8 = p["wq1"].shape[1]
    n_taps = p["w_last_taps"].shape[0]                     # 16
    x2 = x_bnc.reshape(B * N, C).astype(jnp.bfloat16)
    wtap = jnp.pad(p["w_last_taps"].T.astype(jnp.bfloat16),
                   ((0, 0), (0, 128 - n_taps)))            # (C, 128), lane-dense output

    vmem = pl.BlockSpec(memory_space=pltpu.MemorySpace.VMEM)
    smem = pl.BlockSpec(memory_space=pltpu.MemorySpace.SMEM)
    kernel = functools.partial(_dual_attn_last_kernel, batch=B, seq=N)
    return pl.pallas_call(
        kernel,
        grid=(1,),
        out_shape=jax.ShapeDtypeStruct((B * N, 128), jnp.float32),
        in_specs=([pl.BlockSpec((B * N, C), lambda i: (0, 0))]
                  + [vmem, vmem, vmem, vmem, vmem, vmem, smem] * 2
                  + [vmem]),
        out_specs=pl.BlockSpec((B * N, 128), lambda i: (0, 0)),
        compiler_params=pltpu.CompilerParams(
            dimension_semantics=("arbitrary",),
            vmem_limit_bytes=32 * 1024 * 1024,
        ),
    )(
        x2,
        p["wq1"].astype(jnp.bfloat16), p["bq1"].reshape(1, C8).astype(jnp.float32),
        p["wk1"].astype(jnp.bfloat16), p["bk1"].reshape(1, C8).astype(jnp.float32),
        p["wv1"].astype(jnp.bfloat16), p["bv1"].reshape(1, C).astype(jnp.float32),
        p["g1"].astype(jnp.float32),
        p["wq2"].astype(jnp.bfloat16), p["bq2"].reshape(1, C8).astype(jnp.float32),
        p["wk2"].astype(jnp.bfloat16), p["bk2"].reshape(1, C8).astype(jnp.float32),
        p["wv2"].astype(jnp.bfloat16), p["bv2"].reshape(1, C).astype(jnp.float32),
        p["g2"].astype(jnp.float32),
        wtap,
    )


# --------------------------------------------------------------------------------------
# JAX glue: im2col patch extraction (layout plumbing only; emits bf16 patches)
# --------------------------------------------------------------------------------------
def im2col(x_nhwc, kh, kw, stride, pad):
    x_nhwc = x_nhwc.astype(jnp.bfloat16)
    if pad:
        x_nhwc = jnp.pad(x_nhwc, ((0, 0), (pad, pad), (pad, pad), (0, 0)))
    B, H, W, C = x_nhwc.shape
    oh = (H - kh) // stride + 1
    ow = (W - kw) // stride + 1
    cols = []
    for i in range(kh):
        for j in range(kw):
            cols.append(x_nhwc[:, i:i + stride * oh:stride, j:j + stride * ow:stride, :])
    patches = jnp.concatenate(cols, axis=-1)            # (B, oh, ow, kh*kw*C)
    return patches.reshape(B * oh * ow, kh * kw * C), oh, ow


def conv2d(x_nhwc, w, b, *, kh, kw, stride, pad, alpha=None, out_dtype=jnp.bfloat16):
    B = x_nhwc.shape[0]
    patches, oh, ow = im2col(x_nhwc, kh, kw, stride, pad)
    y = gemm_bias_act(patches, w, b, alpha=alpha, out_dtype=out_dtype)
    return y.reshape(B, oh, ow, -1)


# --------------------------------------------------------------------------------------
# Deterministic parameter construction (synthetic init, no checkpoint)
# --------------------------------------------------------------------------------------
def _conv_init(key, fan_in, cout):
    kw_, kb_ = jax.random.split(key)
    w = jax.random.normal(kw_, (fan_in, cout), jnp.float32) / jnp.sqrt(float(fan_in))
    b = 0.01 * jax.random.normal(kb_, (cout,), jnp.float32)
    return w, b


def _spectral_normalize(w, key, n_iters=1, eps=1e-12):
    # Emulate SpectralNorm2d: flatten to (Cout, K), one power iteration, divide by sigma.
    w2d = w.T
    u = jax.random.normal(key, (w2d.shape[0],), jnp.float32)
    u = u / (jnp.linalg.norm(u) + eps)
    v = None
    for _ in range(n_iters):
        v = w2d.T @ u
        v = v / (jnp.linalg.norm(v) + eps)
        u = w2d @ v
        u = u / (jnp.linalg.norm(u) + eps)
    sigma = u @ (w2d @ v)
    return w / sigma


def init_params(key, in_channels=3, conv_dim=64, cin_pad=8):
    keys = jax.random.split(key, 16)
    p = {}
    # l1: Conv(3 -> 64, 4, 2, 1) + SpectralNorm.  Input channels padded 3 -> cin_pad so
    # the l1 contraction is K = 4*4*8 = 128 (one full lane-aligned contraction).
    w, b = _conv_init(keys[0], 4 * 4 * in_channels, conv_dim)
    w = _spectral_normalize(w, keys[1])
    w = w.reshape(4 * 4, in_channels, conv_dim)
    w = jnp.pad(w, ((0, 0), (0, cin_pad - in_channels), (0, 0)))
    p["w1"], p["b1"] = w.reshape(4 * 4 * cin_pad, conv_dim), b
    # l2: Conv(64 -> 128)
    w, b = _conv_init(keys[2], 4 * 4 * conv_dim, conv_dim * 2)
    p["w2"], p["b2"] = _spectral_normalize(w, keys[3]), b
    # l3: Conv(128 -> 256)  (imsize >= 64)
    w, b = _conv_init(keys[4], 4 * 4 * conv_dim * 2, conv_dim * 4)
    p["w3"], p["b3"] = _spectral_normalize(w, keys[5]), b
    C = conv_dim * 4                      # 256
    C8 = C // 8                           # 32
    # attn1 (plain 1x1 convs, gamma initialised to zero as in the module)
    p["wq1"], p["bq1"] = _conv_init(keys[6], C, C8)
    p["wk1"], p["bk1"] = _conv_init(keys[7], C, C8)
    p["wv1"], p["bv1"] = _conv_init(keys[8], C, C)
    p["g1"] = jnp.zeros((1,), jnp.float32)
    # attn2
    p["wq2"], p["bq2"] = _conv_init(keys[9], C, C8)
    p["wk2"], p["bk2"] = _conv_init(keys[10], C, C8)
    p["wv2"], p["bv2"] = _conv_init(keys[11], C, C)
    p["g2"] = jnp.zeros((1,), jnp.float32)
    # last: Conv2d(C, 1, 4) kept as per-tap weights (kh*kw, C) so its channel
    # contraction fuses into the attention kernel; no spectral norm, no activation.
    kw_, kb_ = jax.random.split(keys[12])
    p["w_last_taps"] = (jax.random.normal(kw_, (4 * 4, C), jnp.float32)
                        / jnp.sqrt(float(4 * 4 * C)))
    p["b_last"] = 0.01 * jax.random.normal(kb_, (1,), jnp.float32)
    return p


# --------------------------------------------------------------------------------------
# Discriminator forward (image_size=64 -> l4, l5 are empty Sequentials)
# --------------------------------------------------------------------------------------
def discriminator_forward(params, x_nchw, cin_pad=8):
    alpha = 0.1
    x = jnp.transpose(x_nchw, (0, 2, 3, 1)).astype(jnp.bfloat16)   # NCHW -> NHWC
    # pad Cin 3 -> 8 (matching the zero-padded w1 rows) so l1's K is a full 128 lanes
    x = jnp.pad(x, ((0, 0), (0, 0), (0, 0), (0, cin_pad - x.shape[-1])))
    out = conv2d(x, params["w1"], params["b1"], kh=4, kw=4, stride=2, pad=1, alpha=alpha)
    out = conv2d(out, params["w2"], params["b2"], kh=4, kw=4, stride=2, pad=1, alpha=alpha)
    out = conv2d(out, params["w3"], params["b3"], kh=4, kw=4, stride=2, pad=1, alpha=alpha)
    # l4, l5 are empty for image_size == 64
    B, H, W, C = out.shape
    s = dual_attn_plus_last(out.reshape(B, H * W, C), params)      # (B*H*W, 128) f32
    # Tiny XLA epilogue: 4x4 spatial tap-sum of the fused last conv (5x5 outputs/batch).
    n_taps = params["w_last_taps"].shape[0]                        # 16
    s = s[:, :n_taps].reshape(B, H, W, n_taps)
    oh, ow = H - 3, W - 3
    y = jnp.zeros((B, oh, ow), jnp.float32)
    t = 0
    for di in range(4):
        for dj in range(4):
            y = y + s[:, di:di + oh, dj:dj + ow, t]
            t += 1
    y = y + params["b_last"]
    return jnp.squeeze(y)                                          # matches out.squeeze()


if __name__ == "__main__":
    key = jax.random.PRNGKey(0)
    params = init_params(key)
    x = jax.random.normal(jax.random.fold_in(key, 999), (2, 3, 64, 64), jnp.float32)

    fwd = jax.jit(functools.partial(discriminator_forward, params))
    y = jax.block_until_ready(fwd(x))

    assert y.shape == (2, 5, 5), y.shape
    assert bool(jnp.all(jnp.isfinite(y)))
    print("KERNEL_OK")
</pallas_src>

<mosaic_0001>
module attributes {stable_mosaic.version = 11 : i64} {
  func.func @_gemm_bias_act_kernel(%arg0: i32, %arg1: i32, %arg2: memref<512x128xbf16, #tpu.memory_space<vmem>>, %arg3: memref<128x64xbf16, #tpu.memory_space<vmem>>, %arg4: memref<1x64xf32, #tpu.memory_space<vmem>>, %arg5: memref<512x64xbf16, #tpu.memory_space<vmem>>) attributes {dimension_semantics = [#tpu.dimension_semantics<parallel>, #tpu.dimension_semantics<parallel>], iteration_bounds = array<i64: 4, 1>, scalar_prefetch = 0 : i64, scratch_operands = 0 : i64, tpu.core_type = #tpu.core_type<tc>, window_params = [{transform_indices = @transform_0, window_bounds = array<i64: 512, 128>}, {transform_indices = @transform_1, window_bounds = array<i64: 128, 64>}, {transform_indices = @transform_2, window_bounds = array<i64: 1, 64>}, {transform_indices = @transform_3, window_bounds = array<i64: 512, 64>}]} {
    %c0 = arith.constant 0 : index
    %c0_0 = arith.constant 0 : index
    %0 = vector.load %arg2[%c0, %c0_0] : memref<512x128xbf16, #tpu.memory_space<vmem>>, vector<512x128xbf16>
    %c0_1 = arith.constant 0 : index
    %c0_2 = arith.constant 0 : index
    %1 = vector.load %arg3[%c0_1, %c0_2] : memref<128x64xbf16, #tpu.memory_space<vmem>>, vector<128x64xbf16>
    %cst = arith.constant dense<0.000000e+00> : vector<512x64xf32>
    %2 = tpu.matmul %0, %1, %cst {dimension_numbers = #tpu.dot_dimension_numbers<[1], [0], [0], [1], [0, 0, 1, 1], [], []>} : vector<512x128xbf16>, vector<128x64xbf16>, vector<512x64xf32> -> vector<512x64xf32>
    %c0_3 = arith.constant 0 : index
    %c0_4 = arith.constant 0 : index
    %3 = vector.load %arg4[%c0_3, %c0_4] : memref<1x64xf32, #tpu.memory_space<vmem>>, vector<1x64xf32>
    %4 = vector.broadcast %3 : vector<1x64xf32> to vector<512x64xf32>
    %5 = arith.addf %2, %4 : vector<512x64xf32>
    %cst_5 = arith.constant 0.000000e+00 : f32
    %6 = vector.broadcast %cst_5 : f32 to vector<512x64xf32>
    %7 = arith.cmpf oge, %5, %6 : vector<512x64xf32>
    %cst_6 = arith.constant 1.000000e-01 : f32
    %8 = vector.broadcast %cst_6 : f32 to vector<512x64xf32>
    %9 = arith.mulf %8, %5 : vector<512x64xf32>
    %10 = arith.select %7, %5, %9 : vector<512x64xi1>, vector<512x64xf32>
    %11 = arith.truncf %10 : vector<512x64xf32> to vector<512x64xbf16>
    %c0_7 = arith.constant 0 : index
    %c0_8 = arith.constant 0 : index
    %12 = vector.load %arg5[%c0_7, %c0_8] : memref<512x64xbf16, #tpu.memory_space<vmem>>, vector<512x64xbf16>
    tpu.vector_store %arg5[%c0_7, %c0_8], %11 {strides = array<i32>} : memref<512x64xbf16, #tpu.memory_space<vmem>>, vector<512x64xbf16>,
    return
  }
  func.func @transform_0(%arg0: i32, %arg1: i32) -> (i32, i32) {
    %c0_i32 = arith.constant 0 : i32
    %c0_i32_0 = arith.constant 0 : i32
    return %arg0, %c0_i32 : i32, i32
  }
  func.func @transform_1(%arg0: i32, %arg1: i32) -> (i32, i32) {
    %c0_i32 = arith.constant 0 : i32
    %c0_i32_0 = arith.constant 0 : i32
    return %c0_i32, %arg1 : i32, i32
  }
  func.func @transform_2(%arg0: i32, %arg1: i32) -> (i32, i32) {
    %c0_i32 = arith.constant 0 : i32
    %c0_i32_0 = arith.constant 0 : i32
    return %c0_i32, %arg1 : i32, i32
  }
  func.func @transform_3(%arg0: i32, %arg1: i32) -> (i32, i32) {
    %c0_i32 = arith.constant 0 : i32
    return %arg0, %arg1 : i32, i32
  }
}

module attributes {stable_mosaic.version = 11 : i64} {
  func.func @_gemm_bias_act_kernel(%arg0: i32, %arg1: i32, %arg2: memref<256x1024xbf16, #tpu.memory_space<vmem>>, %arg3: memref<1024x128xbf16, #tpu.memory_space<vmem>>, %arg4: memref<1x128xf32, #tpu.memory_space<vmem>>, %arg5: memref<256x128xbf16, #tpu.memory_space<vmem>>) attributes {dimension_semantics = [#tpu.dimension_semantics<parallel>, #tpu.dimension_semantics<parallel>], iteration_bounds = array<i64: 2, 1>, scalar_prefetch = 0 : i64, scratch_operands = 0 : i64, tpu.core_type = #tpu.core_type<tc>, window_params = [{transform_indices = @transform_0, window_bounds = array<i64: 256, 1024>}, {transform_indices = @transform_1, window_bounds = array<i64: 1024, 128>}, {transform_indices = @transform_2, window_bounds = array<i64: 1, 128>}, {transform_indices = @transform_3, window_bounds = array<i64: 256, 128>}]} {
    %c0 = arith.constant 0 : index
    %c0_0 = arith.constant 0 : index
    %0 = vector.load %arg2[%c0, %c0_0] : memref<256x1024xbf16, #tpu.memory_space<vmem>>, vector<256x1024xbf16>
    %c0_1 = arith.constant 0 : index
    %c0_2 = arith.constant 0 : index
    %1 = vector.load %arg3[%c0_1, %c0_2] : memref<1024x128xbf16, #tpu.memory_space<vmem>>, vector<1024x128xbf16>
    %cst = arith.constant dense<0.000000e+00> : vector<256x128xf32>
    %2 = tpu.matmul %0, %1, %cst {dimension_numbers = #tpu.dot_dimension_numbers<[1], [0], [0], [1], [0, 0, 1, 1], [], []>} : vector<256x1024xbf16>, vector<1024x128xbf16>, vector<256x128xf32> -> vector<256x128xf32>
    %c0_3 = arith.constant 0 : index
    %c0_4 = arith.constant 0 : index
    %3 = vector.load %arg4[%c0_3, %c0_4] : memref<1x128xf32, #tpu.memory_space<vmem>>, vector<1x128xf32>
    %4 = vector.broadcast %3 : vector<1x128xf32> to vector<256x128xf32>
    %5 = arith.addf %2, %4 : vector<256x128xf32>
    %cst_5 = arith.constant 0.000000e+00 : f32
    %6 = vector.broadcast %cst_5 : f32 to vector<256x128xf32>
    %7 = arith.cmpf oge, %5, %6 : vector<256x128xf32>
    %cst_6 = arith.constant 1.000000e-01 : f32
    %8 = vector.broadcast %cst_6 : f32 to vector<256x128xf32>
    %9 = arith.mulf %8, %5 : vector<256x128xf32>
    %10 = arith.select %7, %5, %9 : vector<256x128xi1>, vector<256x128xf32>
    %11 = arith.truncf %10 : vector<256x128xf32> to vector<256x128xbf16>
    %c0_7 = arith.constant 0 : index
    %c0_8 = arith.constant 0 : index
    %12 = vector.load %arg5[%c0_7, %c0_8] : memref<256x128xbf16, #tpu.memory_space<vmem>>, vector<256x128xbf16>
    tpu.vector_store %arg5[%c0_7, %c0_8], %11 {strides = array<i32>} : memref<256x128xbf16, #tpu.memory_space<vmem>>, vector<256x128xbf16>,
    return
  }
  func.func @transform_0(%arg0: i32, %arg1: i32) -> (i32, i32) {
    %c0_i32 = arith.constant 0 : i32
    %c0_i32_0 = arith.constant 0 : i32
    return %arg0, %c0_i32 : i32, i32
  }
  func.func @transform_1(%arg0: i32, %arg1: i32) -> (i32, i32) {
    %c0_i32 = arith.constant 0 : i32
    %c0_i32_0 = arith.constant 0 : i32
    return %c0_i32, %arg1 : i32, i32
  }
  func.func @transform_2(%arg0: i32, %arg1: i32) -> (i32, i32) {
    %c0_i32 = arith.constant 0 : i32
    %c0_i32_0 = arith.constant 0 : i32
    return %c0_i32, %arg1 : i32, i32
  }
  func.func @transform_3(%arg0: i32, %arg1: i32) -> (i32, i32) {
    %c0_i32 = arith.constant 0 : i32
    return %arg0, %arg1 : i32, i32
  }
}

module attributes {stable_mosaic.version = 11 : i64} {
  func.func @_dual_attn_last_kernel(%arg0: i32, %arg1: memref<128x256xbf16, #tpu.memory_space<vmem>>, %arg2: memref<256x32xbf16, #tpu.memory_space<vmem>>, %arg3: memref<1x32xf32, #tpu.memory_space<vmem>>, %arg4: memref<256x32xbf16, #tpu.memory_space<vmem>>, %arg5: memref<1x32xf32, #tpu.memory_space<vmem>>, %arg6: memref<256x256xbf16, #tpu.memory_space<vmem>>, %arg7: memref<1x256xf32, #tpu.memory_space<vmem>>, %arg8: memref<1xf32, #tpu.memory_space<smem>>, %arg9: memref<256x32xbf16, #tpu.memory_space<vmem>>, %arg10: memref<1x32xf32, #tpu.memory_space<vmem>>, %arg11: memref<256x32xbf16, #tpu.memory_space<vmem>>, %arg12: memref<1x32xf32, #tpu.memory_space<vmem>>, %arg13: memref<256x256xbf16, #tpu.memory_space<vmem>>, %arg14: memref<1x256xf32, #tpu.memory_space<vmem>>, %arg15: memref<1xf32, #tpu.memory_space<smem>>, %arg16: memref<256x128xbf16, #tpu.memory_space<vmem>>, %arg17: memref<128x128xf32, #tpu.memory_space<vmem>>) attributes {dimension_semantics = [#tpu.dimension_semantics<arbitrary>], iteration_bounds = array<i64: 1>, scalar_prefetch = 0 : i64, scratch_operands = 0 : i64, tpu.core_type = #tpu.core_type<tc>, window_params = [{pipeline_mode = #tpu.pipeline_mode<synchronous>, transform_indices = @transform_0, window_bounds = array<i64: 128, 256>}, {pipeline_mode = #tpu.pipeline_mode<synchronous>, transform_indices = @transform_1, window_bounds = array<i64: 256, 32>}, {pipeline_mode = #tpu.pipeline_mode<synchronous>, transform_indices = @transform_2, window_bounds = array<i64: 1, 32>}, {pipeline_mode = #tpu.pipeline_mode<synchronous>, transform_indices = @transform_3, window_bounds = array<i64: 256, 32>}, {pipeline_mode = #tpu.pipeline_mode<synchronous>, transform_indices = @transform_4, window_bounds = array<i64: 1, 32>}, {pipeline_mode = #tpu.pipeline_mode<synchronous>, transform_indices = @transform_5, window_bounds = array<i64: 256, 256>}, {pipeline_mode = #tpu.pipeline_mode<synchronous>, transform_indices = @transform_6, window_bounds = array<i64: 1, 256>}, {transform_indices = @transform_7, window_bounds = array<i64: 1>}, {pipeline_mode = #tpu.pipeline_mode<synchronous>, transform_indices = @transform_8, window_bounds = array<i64: 256, 32>}, {pipeline_mode = #tpu.pipeline_mode<synchronous>, transform_indices = @transform_9, window_bounds = array<i64: 1, 32>}, {pipeline_mode = #tpu.pipeline_mode<synchronous>, transform_indices = @transform_10, window_bounds = array<i64: 256, 32>}, {pipeline_mode = #tpu.pipeline_mode<synchronous>, transform_indices = @transform_11, window_bounds = array<i64: 1, 32>}, {pipeline_mode = #tpu.pipeline_mode<synchronous>, transform_indices = @transform_12, window_bounds = array<i64: 256, 256>}, {pipeline_mode = #tpu.pipeline_mode<synchronous>, transform_indices = @transform_13, window_bounds = array<i64: 1, 256>}, {transform_indices = @transform_14, window_bounds = array<i64: 1>}, {pipeline_mode = #tpu.pipeline_mode<synchronous>, transform_indices = @transform_15, window_bounds = array<i64: 256, 128>}, {pipeline_mode = #tpu.pipeline_mode<synchronous>, transform_indices = @transform_16, window_bounds = array<i64: 128, 128>}]} {
    %c0 = arith.constant 0 : index
    %c0_0 = arith.constant 0 : index
    %0 = vector.load %arg1[%c0, %c0_0] : memref<128x256xbf16, #tpu.memory_space<vmem>>, vector<128x256xbf16>
    %1 = arith.extf %0 : vector<128x256xbf16> to vector<128x256xf32>
    %c0_1 = arith.constant 0 : index
    %c0_2 = arith.constant 0 : index
    %2 = vector.load %arg2[%c0_1, %c0_2] : memref<256x32xbf16, #tpu.memory_space<vmem>>, vector<256x32xbf16>
    %cst = arith.constant dense<0.000000e+00> : vector<128x32xf32>
    %3 = tpu.matmul %0, %2, %cst {dimension_numbers = #tpu.dot_dimension_numbers<[1], [0], [0], [1], [0, 0, 1, 1], [], []>} : vector<128x256xbf16>, vector<256x32xbf16>, vector<128x32xf32> -> vector<128x32xf32>
    %c0_3 = arith.constant 0 : index
    %c0_4 = arith.constant 0 : index
    %4 = vector.load %arg3[%c0_3, %c0_4] : memref<1x32xf32, #tpu.memory_space<vmem>>, vector<1x32xf32>
    %5 = vector.broadcast %4 : vector<1x32xf32> to vector<128x32xf32>
    %6 = arith.addf %3, %5 : vector<128x32xf32>
    %c0_5 = arith.constant 0 : index
    %c0_6 = arith.constant 0 : index
    %7 = vector.load %arg4[%c0_5, %c0_6] : memref<256x32xbf16, #tpu.memory_space<vmem>>, vector<256x32xbf16>
    %cst_7 = arith.constant dense<0.000000e+00> : vector<128x32xf32>
    %8 = tpu.matmul %0, %7, %cst_7 {dimension_numbers = #tpu.dot_dimension_numbers<[1], [0], [0], [1], [0, 0, 1, 1], [], []>} : vector<128x256xbf16>, vector<256x32xbf16>, vector<128x32xf32> -> vector<128x32xf32>
    %c0_8 = arith.constant 0 : index
    %c0_9 = arith.constant 0 : index
    %9 = vector.load %arg5[%c0_8, %c0_9] : memref<1x32xf32, #tpu.memory_space<vmem>>, vector<1x32xf32>
    %10 = vector.broadcast %9 : vector<1x32xf32> to vector<128x32xf32>
    %11 = arith.addf %8, %10 : vector<128x32xf32>
    %c0_10 = arith.constant 0 : index
    %c0_11 = arith.constant 0 : index
    %12 = vector.load %arg6[%c0_10, %c0_11] : memref<256x256xbf16, #tpu.memory_space<vmem>>, vector<256x256xbf16>
    %cst_12 = arith.constant dense<0.000000e+00> : vector<128x256xf32>
    %13 = tpu.matmul %0, %12, %cst_12 {dimension_numbers = #tpu.dot_dimension_numbers<[1], [0], [0], [1], [0, 0, 1, 1], [], []>} : vector<128x256xbf16>, vector<256x256xbf16>, vector<128x256xf32> -> vector<128x256xf32>
    %c0_13 = arith.constant 0 : index
    %c0_14 = arith.constant 0 : index
    %14 = vector.load %arg7[%c0_13, %c0_14] : memref<1x256xf32, #tpu.memory_space<vmem>>, vector<1x256xf32>
    %15 = vector.broadcast %14 : vector<1x256xf32> to vector<128x256xf32>
    %16 = arith.addf %13, %15 : vector<128x256xf32>
    %17 = arith.truncf %6 : vector<128x32xf32> to vector<128x32xbf16>
    %18 = vector.shape_cast %17 : vector<128x32xbf16> to vector<2x64x32xbf16>
    %19 = arith.truncf %11 : vector<128x32xf32> to vector<128x32xbf16>
    %20 = vector.shape_cast %19 : vector<128x32xbf16> to vector<2x64x32xbf16>
    %21 = arith.truncf %16 : vector<128x256xf32> to vector<128x256xbf16>
    %22 = vector.shape_cast %21 : vector<128x256xbf16> to vector<2x64x256xbf16>
    "tpu.trace_start"() <{level = 10 : i32, message = "bik,bjk->bij"}> : () -> ()
    %cst_15 = arith.constant dense<0.000000e+00> : vector<2x64x64xf32>
    %23 = tpu.matmul %18, %20, %cst_15 {dimension_numbers = #tpu.dot_dimension_numbers<[2], [2], [1], [1], [0, 0, 0, 1, 1, 1], [0], [0]>} : vector<2x64x32xbf16>, vector<2x64x32xbf16>, vector<2x64x64xf32> -> vector<2x64x64xf32>
    "tpu.trace_stop"() : () -> ()
    %cst_16 = arith.constant dense<0xFF800000> : vector<2x64xf32>
    %24 = vector.multi_reduction <maximumf>, %23, %cst_16 [2] : vector<2x64x64xf32> to vector<2x64xf32>
    %25 = vector.shape_cast %24 : vector<2x64xf32> to vector<2x64x1xf32>
    %26 = vector.broadcast %25 : vector<2x64x1xf32> to vector<2x64x64xf32>
    %27 = arith.subf %23, %26 : vector<2x64x64xf32>
    %28 = math.exp %27 : vector<2x64x64xf32>
    %cst_17 = arith.constant dense<0.000000e+00> : vector<2x64xf32>
    %29 = vector.multi_reduction <add>, %28, %cst_17 [2] : vector<2x64x64xf32> to vector<2x64xf32>
    %30 = vector.shape_cast %29 : vector<2x64xf32> to vector<2x64x1xf32>
    %31 = vector.broadcast %30 : vector<2x64x1xf32> to vector<2x64x64xf32>
    %32 = arith.divf %28, %31 : vector<2x64x64xf32>
    %33 = arith.truncf %32 : vector<2x64x64xf32> to vector<2x64x64xbf16>
    "tpu.trace_start"() <{level = 10 : i32, message = "bij,bjc->bic"}> : () -> ()
    %cst_18 = arith.constant dense<0.000000e+00> : vector<2x64x256xf32>
    %34 = tpu.matmul %33, %22, %cst_18 {dimension_numbers = #tpu.dot_dimension_numbers<[2], [1], [1], [2], [0, 0, 0, 1, 1, 2], [0], [0]>} : vector<2x64x64xbf16>, vector<2x64x256xbf16>, vector<2x64x256xf32> -> vector<2x64x256xf32>
    "tpu.trace_stop"() : () -> ()
    %35 = vector.shape_cast %34 : vector<2x64x256xf32> to vector<128x256xf32>
    %c0_19 = arith.constant 0 : index
    %36 = memref.load %arg8[%c0_19] : memref<1xf32, #tpu.memory_space<smem>>
    %37 = vector.broadcast %36 : f32 to vector<128x256xf32>
    %38 = arith.mulf %37, %35 : vector<128x256xf32>
    %39 = arith.addf %38, %1 : vector<128x256xf32>
    %cst_20 = arith.constant 0.000000e+00 : f32
    %40 = vector.broadcast %cst_20 : f32 to vector<128x256xf32>
    %41 = arith.maximumf %39, %40 : vector<128x256xf32>
    %42 = arith.truncf %41 : vector<128x256xf32> to vector<128x256xbf16>
    %c0_21 = arith.constant 0 : index
    %c0_22 = arith.constant 0 : index
    %43 = vector.load %arg9[%c0_21, %c0_22] : memref<256x32xbf16, #tpu.memory_space<vmem>>, vector<256x32xbf16>
    %cst_23 = arith.constant dense<0.000000e+00> : vector<128x32xf32>
    %44 = tpu.matmul %42, %43, %cst_23 {dimension_numbers = #tpu.dot_dimension_numbers<[1], [0], [0], [1], [0, 0, 1, 1], [], []>} : vector<128x256xbf16>, vector<256x32xbf16>, vector<128x32xf32> -> vector<128x32xf32>
    %c0_24 = arith.constant 0 : index
    %c0_25 = arith.constant 0 : index
    %45 = vector.load %arg10[%c0_24, %c0_25] : memref<1x32xf32, #tpu.memory_space<vmem>>, vector<1x32xf32>
    %46 = vector.broadcast %45 : vector<1x32xf32> to vector<128x32xf32>
    %47 = arith.addf %44, %46 : vector<128x32xf32>
    %c0_26 = arith.constant 0 : index
    %c0_27 = arith.constant 0 : index
    %48 = vector.load %arg11[%c0_26, %c0_27] : memref<256x32xbf16, #tpu.memory_space<vmem>>, vector<256x32xbf16>
    %cst_28 = arith.constant dense<0.000000e+00> : vector<128x32xf32>
    %49 = tpu.matmul %42, %48, %cst_28 {dimension_numbers = #tpu.dot_dimension_numbers<[1], [0], [0], [1], [0, 0, 1, 1], [], []>} : vector<128x256xbf16>, vector<256x32xbf16>, vector<128x32xf32> -> vector<128x32xf32>
    %c0_29 = arith.constant 0 : index
    %c0_30 = arith.constant 0 : index
    %50 = vector.load %arg12[%c0_29, %c0_30] : memref<1x32xf32, #tpu.memory_space<vmem>>, vector<1x32xf32>
    %51 = vector.broadcast %50 : vector<1x32xf32> to vector<128x32xf32>
    %52 = arith.addf %49, %51 : vector<128x32xf32>
    %c0_31 = arith.constant 0 : index
    %c0_32 = arith.constant 0 : index
    %53 = vector.load %arg13[%c0_31, %c0_32] : memref<256x256xbf16, #tpu.memory_space<vmem>>, vector<256x256xbf16>
    %cst_33 = arith.constant dense<0.000000e+00> : vector<128x256xf32>
    %54 = tpu.matmul %42, %53, %cst_33 {dimension_numbers = #tpu.dot_dimension_numbers<[1], [0], [0], [1], [0, 0, 1, 1], [], []>} : vector<128x256xbf16>, vector<256x256xbf16>, vector<128x256xf32> -> vector<128x256xf32>
    %c0_34 = arith.constant 0 : index
    %c0_35 = arith.constant 0 : index
    %55 = vector.load %arg14[%c0_34, %c0_35] : memref<1x256xf32, #tpu.memory_space<vmem>>, vector<1x256xf32>
    %56 = vector.broadcast %55 : vector<1x256xf32> to vector<128x256xf32>
    %57 = arith.addf %54, %56 : vector<128x256xf32>
    %58 = arith.truncf %47 : vector<128x32xf32> to vector<128x32xbf16>
    %59 = vector.shape_cast %58 : vector<128x32xbf16> to vector<2x64x32xbf16>
    %60 = arith.truncf %52 : vector<128x32xf32> to vector<128x32xbf16>
    %61 = vector.shape_cast %60 : vector<128x32xbf16> to vector<2x64x32xbf16>
    %62 = arith.truncf %57 : vector<128x256xf32> to vector<128x256xbf16>
    %63 = vector.shape_cast %62 : vector<128x256xbf16> to vector<2x64x256xbf16>
    "tpu.trace_start"() <{level = 10 : i32, message = "bik,bjk->bij"}> : () -> ()
    %cst_36 = arith.constant dense<0.000000e+00> : vector<2x64x64xf32>
    %64 = tpu.matmul %59, %61, %cst_36 {dimension_numbers = #tpu.dot_dimension_numbers<[2], [2], [1], [1], [0, 0, 0, 1, 1, 1], [0], [0]>} : vector<2x64x32xbf16>, vector<2x64x32xbf16>, vector<2x64x64xf32> -> vector<2x64x64xf32>
    "tpu.trace_stop"() : () -> ()
    %cst_37 = arith.constant dense<0xFF800000> : vector<2x64xf32>
    %65 = vector.multi_reduction <maximumf>, %64, %cst_37 [2] : vector<2x64x64xf32> to vector<2x64xf32>
    %66 = vector.shape_cast %65 : vector<2x64xf32> to vector<2x64x1xf32>
    %67 = vector.broadcast %66 : vector<2x64x1xf32> to vector<2x64x64xf32>
    %68 = arith.subf %64, %67 : vector<2x64x64xf32>
    %69 = math.exp %68 : vector<2x64x64xf32>
    %cst_38 = arith.constant dense<0.000000e+00> : vector<2x64xf32>
    %70 = vector.multi_reduction <add>, %69, %cst_38 [2] : vector<2x64x64xf32> to vector<2x64xf32>
    %71 = vector.shape_cast %70 : vector<2x64xf32> to vector<2x64x1xf32>
    %72 = vector.broadcast %71 : vector<2x64x1xf32> to vector<2x64x64xf32>
    %73 = arith.divf %69, %72 : vector<2x64x64xf32>
    %74 = arith.truncf %73 : vector<2x64x64xf32> to vector<2x64x64xbf16>
    "tpu.trace_start"() <{level = 10 : i32, message = "bij,bjc->bic"}> : () -> ()
    %cst_39 = arith.constant dense<0.000000e+00> : vector<2x64x256xf32>
    %75 = tpu.matmul %74, %63, %cst_39 {dimension_numbers = #tpu.dot_dimension_numbers<[2], [1], [1], [2], [0, 0, 0, 1, 1, 2], [0], [0]>} : vector<2x64x64xbf16>, vector<2x64x256xbf16>, vector<2x64x256xf32> -> vector<2x64x256xf32>
    "tpu.trace_stop"() : () -> ()
    %76 = vector.shape_cast %75 : vector<2x64x256xf32> to vector<128x256xf32>
    %c0_40 = arith.constant 0 : index
    %77 = memref.load %arg15[%c0_40] : memref<1xf32, #tpu.memory_space<smem>>
    %78 = vector.broadcast %77 : f32 to vector<128x256xf32>
    %79 = arith.mulf %78, %76 : vector<128x256xf32>
    %80 = arith.addf %79, %41 : vector<128x256xf32>
    %cst_41 = arith.constant 0.000000e+00 : f32
    %81 = vector.broadcast %cst_41 : f32 to vector<128x256xf32>
    %82 = arith.maximumf %80, %81 : vector<128x256xf32>
    %83 = arith.truncf %82 : vector<128x256xf32> to vector<128x256xbf16>
    %c0_42 = arith.constant 0 : index
    %c0_43 = arith.constant 0 : index
    %84 = vector.load %arg16[%c0_42, %c0_43] : memref<256x128xbf16, #tpu.memory_space<vmem>>, vector<256x128xbf16>
    %cst_44 = arith.constant dense<0.000000e+00> : vector<128x128xf32>
    %85 = tpu.matmul %83, %84, %cst_44 {dimension_numbers = #tpu.dot_dimension_numbers<[1], [0], [0], [1], [0, 0, 1, 1], [], []>} : vector<128x256xbf16>, vector<256x128xbf16>, vector<128x128xf32> -> vector<128x128xf32>
    %c0_45 = arith.constant 0 : index
    %c0_46 = arith.constant 0 : index
    %86 = vector.load %arg17[%c0_45, %c0_46] : memref<128x128xf32, #tpu.memory_space<vmem>>, vector<128x128xf32>
    tpu.vector_store %arg17[%c0_45, %c0_46], %85 {strides = array<i32>} : memref<128x128xf32, #tpu.memory_space<vmem>>, vector<128x128xf32>,
    return
  }
  func.func @transform_0(%arg0: i32) -> (i32, i32) {
    %c0_i32 = arith.constant 0 : i32
    %c0_i32_0 = arith.constant 0 : i32
    %c0_i32_1 = arith.constant 0 : i32
    return %c0_i32, %c0_i32_0 : i32, i32
  }
  func.func @transform_1(%arg0: i32) -> (i32, i32) {
    %c0_i32 = arith.constant 0 : i32
    %c0_i32_0 = arith.constant 0 : i32
    %c0_i32_1 = arith.constant 0 : i32
    return %c0_i32, %c0_i32_0 : i32, i32
  }
  func.func @transform_2(%arg0: i32) -> (i32, i32) {
    %c0_i32 = arith.constant 0 : i32
    %c0_i32_0 = arith.constant 0 : i32
    %c0_i32_1 = arith.constant 0 : i32
    return %c0_i32, %c0_i32_0 : i32, i32
  }
  func.func @transform_3(%arg0: i32) -> (i32, i32) {
    %c0_i32 = arith.constant 0 : i32
    %c0_i32_0 = arith.constant 0 : i32
    %c0_i32_1 = arith.constant 0 : i32
    return %c0_i32, %c0_i32_0 : i32, i32
  }
  func.func @transform_4(%arg0: i32) -> (i32, i32) {
    %c0_i32 = arith.constant 0 : i32
    %c0_i32_0 = arith.constant 0 : i32
    %c0_i32_1 = arith.constant 0 : i32
    return %c0_i32, %c0_i32_0 : i32, i32
  }
  func.func @transform_5(%arg0: i32) -> (i32, i32) {
    %c0_i32 = arith.constant 0 : i32
    %c0_i32_0 = arith.constant 0 : i32
    %c0_i32_1 = arith.constant 0 : i32
    return %c0_i32, %c0_i32_0 : i32, i32
  }
  func.func @transform_6(%arg0: i32) -> (i32, i32) {
    %c0_i32 = arith.constant 0 : i32
    %c0_i32_0 = arith.constant 0 : i32
    %c0_i32_1 = arith.constant 0 : i32
    return %c0_i32, %c0_i32_0 : i32, i32
  }
  func.func @transform_7(%arg0: i32) -> i32 {
    %c0_i32 = arith.constant 0 : i32
    %c0_i32_0 = arith.constant 0 : i32
    return %c0_i32 : i32
  }
  func.func @transform_8(%arg0: i32) -> (i32, i32) {
    %c0_i32 = arith.constant 0 : i32
    %c0_i32_0 = arith.constant 0 : i32
    %c0_i32_1 = arith.constant 0 : i32
    return %c0_i32, %c0_i32_0 : i32, i32
  }
  func.func @transform_9(%arg0: i32) -> (i32, i32) {
    %c0_i32 = arith.constant 0 : i32
    %c0_i32_0 = arith.constant 0 : i32
    %c0_i32_1 = arith.constant 0 : i32
    return %c0_i32, %c0_i32_0 : i32, i32
  }
  func.func @transform_10(%arg0: i32) -> (i32, i32) {
    %c0_i32 = arith.constant 0 : i32
    %c0_i32_0 = arith.constant 0 : i32
    %c0_i32_1 = arith.constant 0 : i32
    return %c0_i32, %c0_i32_0 : i32, i32
  }
  func.func @transform_11(%arg0: i32) -> (i32, i32) {
    %c0_i32 = arith.constant 0 : i32
    %c0_i32_0 = arith.constant 0 : i32
    %c0_i32_1 = arith.constant 0 : i32
    return %c0_i32, %c0_i32_0 : i32, i32
  }
  func.func @transform_12(%arg0: i32) -> (i32, i32) {
    %c0_i32 = arith.constant 0 : i32
    %c0_i32_0 = arith.constant 0 : i32
    %c0_i32_1 = arith.constant 0 : i32
    return %c0_i32, %c0_i32_0 : i32, i32
  }
  func.func @transform_13(%arg0: i32) -> (i32, i32) {
    %c0_i32 = arith.constant 0 : i32
    %c0_i32_0 = arith.constant 0 : i32
    %c0_i32_1 = arith.constant 0 : i32
    return %c0_i32, %c0_i32_0 : i32, i32
  }
  func.func @transform_14(%arg0: i32) -> i32 {
    %c0_i32 = arith.constant 0 : i32
    %c0_i32_0 = arith.constant 0 : i32
    return %c0_i32 : i32
  }
  func.func @transform_15(%arg0: i32) -> (i32, i32) {
    %c0_i32 = arith.constant 0 : i32
    %c0_i32_0 = arith.constant 0 : i32
    %c0_i32_1 = arith.constant 0 : i32
    return %c0_i32, %c0_i32_0 : i32, i32
  }
  func.func @transform_16(%arg0: i32) -> (i32, i32) {
    %c0_i32 = arith.constant 0 : i32
    %c0_i32_0 = arith.constant 0 : i32
    %c0_i32_1 = arith.constant 0 : i32
    return %c0_i32, %c0_i32_0 : i32, i32
  }
}

module attributes {stable_mosaic.version = 11 : i64} {
  func.func @_gemm_bias_act_kernel(%arg0: i32, %arg1: i32, %arg2: memref<64x2048xbf16, #tpu.memory_space<vmem>>, %arg3: memref<2048x256xbf16, #tpu.memory_space<vmem>>, %arg4: memref<1x256xf32, #tpu.memory_space<vmem>>, %arg5: memref<64x256xbf16, #tpu.memory_space<vmem>>) attributes {dimension_semantics = [#tpu.dimension_semantics<parallel>, #tpu.dimension_semantics<parallel>], iteration_bounds = array<i64: 2, 1>, scalar_prefetch = 0 : i64, scratch_operands = 0 : i64, tpu.core_type = #tpu.core_type<tc>, window_params = [{transform_indices = @transform_0, window_bounds = array<i64: 64, 2048>}, {transform_indices = @transform_1, window_bounds = array<i64: 2048, 256>}, {transform_indices = @transform_2, window_bounds = array<i64: 1, 256>}, {transform_indices = @transform_3, window_bounds = array<i64: 64, 256>}]} {
    %c0 = arith.constant 0 : index
    %c0_0 = arith.constant 0 : index
    %0 = vector.load %arg2[%c0, %c0_0] : memref<64x2048xbf16, #tpu.memory_space<vmem>>, vector<64x2048xbf16>
    %c0_1 = arith.constant 0 : index
    %c0_2 = arith.constant 0 : index
    %1 = vector.load %arg3[%c0_1, %c0_2] : memref<2048x256xbf16, #tpu.memory_space<vmem>>, vector<2048x256xbf16>
    %cst = arith.constant dense<0.000000e+00> : vector<64x256xf32>
    %2 = tpu.matmul %0, %1, %cst {dimension_numbers = #tpu.dot_dimension_numbers<[1], [0], [0], [1], [0, 0, 1, 1], [], []>} : vector<64x2048xbf16>, vector<2048x256xbf16>, vector<64x256xf32> -> vector<64x256xf32>
    %c0_3 = arith.constant 0 : index
    %c0_4 = arith.constant 0 : index
    %3 = vector.load %arg4[%c0_3, %c0_4] : memref<1x256xf32, #tpu.memory_space<vmem>>, vector<1x256xf32>
    %4 = vector.broadcast %3 : vector<1x256xf32> to vector<64x256xf32>
    %5 = arith.addf %2, %4 : vector<64x256xf32>
    %cst_5 = arith.constant 0.000000e+00 : f32
    %6 = vector.broadcast %cst_5 : f32 to vector<64x256xf32>
    %7 = arith.cmpf oge, %5, %6 : vector<64x256xf32>
    %cst_6 = arith.constant 1.000000e-01 : f32
    %8 = vector.broadcast %cst_6 : f32 to vector<64x256xf32>
    %9 = arith.mulf %8, %5 : vector<64x256xf32>
    %10 = arith.select %7, %5, %9 : vector<64x256xi1>, vector<64x256xf32>
    %11 = arith.truncf %10 : vector<64x256xf32> to vector<64x256xbf16>
    %c0_7 = arith.constant 0 : index
    %c0_8 = arith.constant 0 : index
    %12 = vector.load %arg5[%c0_7, %c0_8] : memref<64x256xbf16, #tpu.memory_space<vmem>>, vector<64x256xbf16>
    tpu.vector_store %arg5[%c0_7, %c0_8], %11 {strides = array<i32>} : memref<64x256xbf16, #tpu.memory_space<vmem>>, vector<64x256xbf16>,
    return
  }
  func.func @transform_0(%arg0: i32, %arg1: i32) -> (i32, i32) {
    %c0_i32 = arith.constant 0 : i32
    %c0_i32_0 = arith.constant 0 : i32
    return %arg0, %c0_i32 : i32, i32
  }
  func.func @transform_1(%arg0: i32, %arg1: i32) -> (i32, i32) {
    %c0_i32 = arith.constant 0 : i32
    %c0_i32_0 = arith.constant 0 : i32
    return %c0_i32, %arg1 : i32, i32
  }
  func.func @transform_2(%arg0: i32, %arg1: i32) -> (i32, i32) {
    %c0_i32 = arith.constant 0 : i32
    %c0_i32_0 = arith.constant 0 : i32
    return %c0_i32, %arg1 : i32, i32
  }
  func.func @transform_3(%arg0: i32, %arg1: i32) -> (i32, i32) {
    %c0_i32 = arith.constant 0 : i32
    return %arg0, %arg1 : i32, i32
  }
}

</mosaic_0001>

<llo_original>
// kernel: discriminator_forward.4
$region0: #{discriminator_forward.4}
  #allocation0 [shape = 'u32[]', space=smem, size = 0x4, offset = 0x4, fixed_abs, tag = 'smem constant byte address 0x4 - core index']
  #allocation1 [shape = 'u32[144,128]{1,0:T(1,128)}', space=vmem, size = 0x12000, scoped, tag = 'internal scratch']
  %s0 = inlined_call_operand.vmem [shape: bf16[2048,128], index: 0, kind: input, shape index: {}]
  %s1 = inlined_call_operand.vmem [shape: bf16[128,64], index: 1, kind: input, shape index: {}]
  %s2 = inlined_call_operand.vmem [shape: f32[1,64], index: 2, kind: input, shape index: {}]
  %s3 = inlined_call_operand.vmem [shape: bf16[2048,64], index: 3, kind: output, shape index: {}]
  %s4 = sld [smem:[#allocation0]]
  $region45: #{discriminator_forward.4} parent=0
    _
  %s6 = ssub.s32 1, %s4
  %s7 = scalar_select 0, %s6, %s4
  loop: start=0, step=1, limit=6
  $region2: #{discriminator_forward.4} parent=0 // loop_pre_header
    _
  $region3: #{discriminator_forward.4} parent=0 // loop_header
    %s9 = sphi 0, %s13
    %p10 = scmp.ge.s32.totalorder %s9, 6
    %s16 = sphi 0, %s28
    %s17 = sphi 0, %s24
    %s18 = sphi 0, %s16
    %s19 = sphi 0, %s17
    %s20 = sphi 0, %s18
    %s21 = sphi 0, %s19
    %s31 = sphi 0, %s33
    %s34 = sphi 0, %s31
    %s35 = sphi 0, %s34
    %s51 = sphi 0, %s35
    %s57 = sphi 0, %s59
    %s60 = sphi 0, %s57
    %s61 = sphi 0, %s60
    %s77 = sphi 0, %s61
    %s83 = sphi 0, %s85
    %s86 = sphi 0, %s83
    %s87 = sphi 0, %s86
    %s103 = sphi 0, %s87
    %s111 = sphi 0, %s113
    %s114 = sphi 0, %s111
    %s115 = sphi 0, %s114
    %s131 = sphi 0, %s115
  $region4: #{discriminator_forward.4} parent=0 // loop_header_branch
    %12 = sbr.rel (%p10) target = $region8
  $region5: #{discriminator_forward.4} parent=0 // loop_body
    %s14 = ssub.s32 %s9, 1
    %s15 = ssub.s32 %s9, 2
    %s22 = sadd.s32 1, %s17
    %p23 = scmp.ge.s32.totalorder %s22, 1
    %s24 = scalar_select %p23, 0, %s22
    %s25 = sadd.s32 1, %s16
    %s26 = scalar_select %p23, %s25, %s16
    %p27 = scmp.ge.s32.totalorder %s26, 4
    %s28 = scalar_select %p27, 0, %s26
    %s29 = ssub.s32 %s16, %s28
    %p30 = scmp.eq.s32.totalorder %s29, 0
    %s32 = sadd.s32 %s31, 1
    %s33 = scalar_select %p30, %s31, %s32
    %p36 = pneg %p30
    %p37 = scmp.eq.s32.totalorder %s9, 3
    %p38 = por %p36, %p37
    %p39 = scmp.ne.s32.totalorder %s31, %s34
    %p40 = scmp.eq.s32.totalorder %s9, 0
    %p41 = por %p39, %p40
    %p42 = scmp.ne.s32.totalorder %s31, %s34
    %p43 = scmp.eq.s32.totalorder %s14, 3
    %p44 = por %p42, %p43
    %p45 = scmp.ne.s32.totalorder %s34, %s35
    %p46 = scmp.eq.s32.totalorder %s14, 0
    %p47 = por %p45, %p46
    %p48 = scmp.ne.s32.totalorder %s34, %s35
    %p49 = scmp.eq.s32.totalorder %s15, 3
    %p50 = por %p48, %p49
    %p52 = scmp.ne.s32.totalorder %s35, %s51
    %p53 = scmp.eq.s32.totalorder %s15, 0
    %p54 = por %p52, %p53
    %s55 = ssub.s32 %s17, %s24
    %p56 = scmp.eq.s32.totalorder %s55, 0
    %s58 = sadd.s32 %s57, 1
    %s59 = scalar_select %p56, %s57, %s58
    %p62 = pneg %p56
    %p63 = scmp.eq.s32.totalorder %s9, 3
    %p64 = por %p62, %p63
    %p65 = scmp.ne.s32.totalorder %s57, %s60
    %p66 = scmp.eq.s32.totalorder %s9, 0
    %p67 = por %p65, %p66
    %p68 = scmp.ne.s32.totalorder %s57, %s60
    %p69 = scmp.eq.s32.totalorder %s14, 3
    %p70 = por %p68, %p69
    %p71 = scmp.ne.s32.totalorder %s60, %s61
    %p72 = scmp.eq.s32.totalorder %s14, 0
    %p73 = por %p71, %p72
    %p74 = scmp.ne.s32.totalorder %s60, %s61
    %p75 = scmp.eq.s32.totalorder %s15, 3
    %p76 = por %p74, %p75
    %p78 = scmp.ne.s32.totalorder %s61, %s77
    %p79 = scmp.eq.s32.totalorder %s15, 0
    %p80 = por %p78, %p79
    %s81 = ssub.s32 %s17, %s24
    %p82 = scmp.eq.s32.totalorder %s81, 0
    %s84 = sadd.s32 %s83, 1
    %s85 = scalar_select %p82, %s83, %s84
    %p88 = pneg %p82
    %p89 = scmp.eq.s32.totalorder %s9, 3
    %p90 = por %p88, %p89
    %p91 = scmp.ne.s32.totalorder %s83, %s86
    %p92 = scmp.eq.s32.totalorder %s9, 0
    %p93 = por %p91, %p92
    %p94 = scmp.ne.s32.totalorder %s83, %s86
    %p95 = scmp.eq.s32.totalorder %s14, 3
    %p96 = por %p94, %p95
    %p97 = scmp.ne.s32.totalorder %s86, %s87
    %p98 = scmp.eq.s32.totalorder %s14, 0
    %p99 = por %p97, %p98
    %p100 = scmp.ne.s32.totalorder %s86, %s87
    %p101 = scmp.eq.s32.totalorder %s15, 3
    %p102 = por %p100, %p101
    %p104 = scmp.ne.s32.totalorder %s87, %s103
    %p105 = scmp.eq.s32.totalorder %s15, 0
    %p106 = por %p104, %p105
    %s107 = ssub.s32 %s16, %s28
    %s108 = ssub.s32 %s17, %s24
    %s109 = sor.u32 %s107, %s108
    %p110 = scmp.eq.s32.totalorder %s109, 0
    %s112 = sadd.s32 %s111, 1
    %s113 = scalar_select %p110, %s111, %s112
    %p116 = pneg %p110
    %p117 = scmp.eq.s32.totalorder %s9, 3
    %p118 = por %p116, %p117
    %p119 = scmp.ne.s32.totalorder %s111, %s114
    %p120 = scmp.eq.s32.totalorder %s9, 0
    %p121 = por %p119, %p120
    %p122 = scmp.ne.s32.totalorder %s111, %s114
    %p123 = scmp.eq.s32.totalorder %s14, 3
    %p124 = por %p122, %p123
    %p125 = scmp.ne.s32.totalorder %s114, %s115
    %p126 = scmp.eq.s32.totalorder %s14, 0
    %p127 = por %p125, %p126
    %p128 = scmp.ne.s32.totalorder %s114, %s115
    %p129 = scmp.eq.s32.totalorder %s15, 3
    %p130 = por %p128, %p129
    %p132 = scmp.ne.s32.totalorder %s115, %s131
    %p133 = scmp.eq.s32.totalorder %s15, 0
    %p134 = por %p132, %p133
    %p135 = scmp.le.s32.totalorder 1, %s9
    %p136 = scmp.lt.s32.totalorder %s9, 5
    %p137 = pnand %p135, %p136
    %p138 = pneg %p137
    // Predicated region
    $region9: #{discriminator_forward.4} parent=5 // pred_check
      _
    $region10: #{discriminator_forward.4} parent=5 // pred_check_branch
      %140 = sbr.rel (%p137) target = $region12
    $region11: #{discriminator_forward.4} parent=5 // pred_region
      %s141 = ssub.s32 %s9, 1
      // Predicated region
      $region13: #{discriminator_forward.4} parent=11 // pred_check
        %p142 = pneg %p73
      $region14: #{discriminator_forward.4} parent=11 // pred_check_branch
        %144 = sbr.rel (%p142) target = $region16
      $region15: #{discriminator_forward.4} parent=11 // pred_region
        %p145 = scmp.lt.s32.totalorder %s19, 0
        %s146 = scalar_select %p145, %s19, 0
        %s147 = smul.addr %s146, 4
        %s148 = scalar_lea.vmem %s1, %s147
      $region16: #{discriminator_forward.4} parent=11 // pred_fallthru
        _
      // Predicated region
      $region17: #{discriminator_forward.4} parent=11 // pred_check
        %p149 = pneg %p99
      $region18: #{discriminator_forward.4} parent=11 // pred_check_branch
        %151 = sbr.rel (%p149) target = $region20
      $region19: #{discriminator_forward.4} parent=11 // pred_region
        %p152 = scmp.lt.s32.totalorder %s19, 0
        %s153 = scalar_select %p152, %s19, 0
        %s154 = scalar_lea.vmem %s2, %s153
      $region20: #{discriminator_forward.4} parent=11 // pred_fallthru
        _
    $region12: #{discriminator_forward.4} parent=5 // pred_fallthru
      _
    %p155 = scmp.lt.s32.totalorder %s9, 4
    // Predicated region
    $region21: #{discriminator_forward.4} parent=5 // pred_check
      %p156 = pneg %p155
    $region22: #{discriminator_forward.4} parent=5 // pred_check_branch
      %158 = sbr.rel (%p156) target = $region24
    $region23: #{discriminator_forward.4} parent=5 // pred_region
      // Predicated region
      $region25: #{discriminator_forward.4} parent=23 // pred_check
        %p159 = pneg %p41
      $region26: #{discriminator_forward.4} parent=23 // pred_check_branch
        %161 = sbr.rel (%p159) target = $region28
      $region27: #{discriminator_forward.4} parent=23 // pred_region
        %s162 = smul.u32 64, %s16
        %p163 = scmp.lt.s32.totalorder %s162, 255
        %s164 = scalar_select %p163, %s162, 255
        %s165 = smul.addr %s164, 4
        %s166 = scalar_lea.vmem %s0, %s165
        %s167 = smul.u32 64, %s16
      $region28: #{discriminator_forward.4} parent=23 // pred_fallthru
        _
    $region24: #{discriminator_forward.4} parent=5 // pred_fallthru
      _
    %p168 = scmp.le.s32.totalorder 1, %s9
    %p169 = scmp.lt.s32.totalorder %s9, 5
    %p170 = pnand %p168, %p169
    %p171 = pneg %p170
    // Predicated region
    $region29: #{discriminator_forward.4} parent=5 // pred_check
      _
    $region30: #{discriminator_forward.4} parent=5 // pred_check_branch
      %173 = sbr.rel (%p170) target = $region32
    $region31: #{discriminator_forward.4} parent=5 // pred_region
      %s174 = ssub.s32 %s9, 1
      %s175 = smul.u32 64, %s18
      %p176 = scmp.lt.s32.totalorder %s175, 255
      %s177 = scalar_select %p176, %s175, 255
      %s178 = smul.addr %s177, 4
      %s179 = scalar_lea.vmem %s0, %s178
      %p180 = pneg %p47
      %p181 = pneg %p44
      %p182 = scmp.lt.s32.totalorder %s19, 0
      %s183 = scalar_select %p182, %s19, 0
      %s184 = smul.addr %s183, 4
      %s185 = scalar_lea.vmem %s1, %s184
      %p186 = pneg %p73
      %p187 = pneg %p70
      %p188 = scmp.lt.s32.totalorder %s19, 0
      %s189 = scalar_select %p188, %s19, 0
      %s190 = scalar_lea.vmem %s2, %s189
      %p191 = pneg %p99
      %p192 = pneg %p96
      %p193 = pneg %p127
      %p194 = pneg %p124
      %s195 = smul.u32 64, %s18
      %p196 = scmp.lt.s32.totalorder %s195, 255
      %s197 = scalar_select %p196, %s195, 255
      %p198 = scmp.lt.s32.totalorder %s19, 0
      %s199 = scalar_select %p198, %s19, 0
      %s200 = sadd.s32 %s199, %s197
      %s201 = smul.addr %s200, 4
      %s202 = scalar_lea.vmem %s3, %s201
      %s203 = smul.u32 64, %s18
      %p204 = scmp.lt.s32.totalorder %s203, 255
      %s205 = scalar_select %p204, %s203, 255
      %s206 = smul.addr %s205, 4
      %s207 = scalar_lea.vmem %s0, %s206
      %s208 = smul.u32 64, %s18
      %p209 = scmp.lt.s32.totalorder %s19, 0
      %s210 = scalar_select %p209, %s19, 0
      %s211 = smul.addr %s210, 4
      %s212 = scalar_lea.vmem %s1, %s211
      %p213 = scmp.lt.s32.totalorder %s19, 0
      %s214 = scalar_select %p213, %s19, 0
      %s215 = scalar_lea.vmem %s2, %s214
      %s216 = smul.u32 64, %s18
      %p217 = scmp.lt.s32.totalorder %s216, 255
      %s218 = scalar_select %p217, %s216, 255
      %p219 = scmp.lt.s32.totalorder %s19, 0
      %s220 = scalar_select %p219, %s19, 0
      %s221 = sadd.s32 %s220, %s218
      %s222 = smul.addr %s221, 4
      %s223 = scalar_lea.vmem %s3, %s222
      %s224 = smul.u32 64, %s18
      %v226 = vld [vmem:[%s207] sm:$0xf]
      %v227 = vld [vmem:[%s207 + $0x4] sm:$0xf]
      %v228 = vld [vmem:[%s207 + $0x8] sm:$0xf]
      %v229 = vld [vmem:[%s207 + $0xc] sm:$0xf]
      %v230 = vld [vmem:[%s207 + $0x10] sm:$0xf]
      %v231 = vld [vmem:[%s207 + $0x14] sm:$0xf]
      %v232 = vld [vmem:[%s207 + $0x18] sm:$0xf]
      %v233 = vld [vmem:[%s207 + $0x1c] sm:$0xf]
      %v234 = vld [vmem:[%s207 + $0x20] sm:$0xf]
      %v235 = vld [vmem:[%s207 + $0x24] sm:$0xf]
      %v236 = vld [vmem:[%s207 + $0x28] sm:$0xf]
      %v237 = vld [vmem:[%s207 + $0x2c] sm:$0xf]
      %v238 = vld [vmem:[%s207 + $0x30] sm:$0xf]
      %v239 = vld [vmem:[%s207 + $0x34] sm:$0xf]
      %v240 = vld [vmem:[%s207 + $0x38] sm:$0xf]
      %v241 = vld [vmem:[%s207 + $0x3c] sm:$0xf]
      %v242 = vld [vmem:[%s207 + $0x40] sm:$0xf]
      %v243 = vld [vmem:[%s207 + $0x44] sm:$0xf]
      %v244 = vld [vmem:[%s207 + $0x48] sm:$0xf]
      %v245 = vld [vmem:[%s207 + $0x4c] sm:$0xf]
      %v246 = vld [vmem:[%s207 + $0x50] sm:$0xf]
      %v247 = vld [vmem:[%s207 + $0x54] sm:$0xf]
      %v248 = vld [vmem:[%s207 + $0x58] sm:$0xf]
      %v249 = vld [vmem:[%s207 + $0x5c] sm:$0xf]
      %v250 = vld [vmem:[%s207 + $0x60] sm:$0xf]
      %v251 = vld [vmem:[%s207 + $0x64] sm:$0xf]
      %v252 = vld [vmem:[%s207 + $0x68] sm:$0xf]
      %v253 = vld [vmem:[%s207 + $0x6c] sm:$0xf]
      %v254 = vld [vmem:[%s207 + $0x70] sm:$0xf]
      %v255 = vld [vmem:[%s207 + $0x74] sm:$0xf]
      %v256 = vld [vmem:[%s207 + $0x78] sm:$0xf]
      %v257 = vld [vmem:[%s207 + $0x7c] sm:$0xf]
      %v258 = vld [vmem:[%s207 + $0x80] sm:$0xf]
      %v259 = vld [vmem:[%s207 + $0x84] sm:$0xf]
      %v260 = vld [vmem:[%s207 + $0x88] sm:$0xf]
      %v261 = vld [vmem:[%s207 + $0x8c] sm:$0xf]
      %v262 = vld [vmem:[%s207 + $0x90] sm:$0xf]
      %v263 = vld [vmem:[%s207 + $0x94] sm:$0xf]
      %v264 = vld [vmem:[%s207 + $0x98] sm:$0xf]
      %v265 = vld [vmem:[%s207 + $0x9c] sm:$0xf]
      %v266 = vld [vmem:[%s207 + $0xa0] sm:$0xf]
      %v267 = vld [vmem:[%s207 + $0xa4] sm:$0xf]
      %v268 = vld [vmem:[%s207 + $0xa8] sm:$0xf]
      %v269 = vld [vmem:[%s207 + $0xac] sm:$0xf]
      %v270 = vld [vmem:[%s207 + $0xb0] sm:$0xf]
      %v271 = vld [vmem:[%s207 + $0xb4] sm:$0xf]
      %v272 = vld [vmem:[%s207 + $0xb8] sm:$0xf]
      %v273 = vld [vmem:[%s207 + $0xbc] sm:$0xf]
      %v274 = vld [vmem:[%s207 + $0xc0] sm:$0xf]
      %v275 = vld [vmem:[%s207 + $0xc4] sm:$0xf]
      %v276 = vld [vmem:[%s207 + $0xc8] sm:$0xf]
      %v277 = vld [vmem:[%s207 + $0xcc] sm:$0xf]
      %v278 = vld [vmem:[%s207 + $0xd0] sm:$0xf]
      %v279 = vld [vmem:[%s207 + $0xd4] sm:$0xf]
      %v280 = vld [vmem:[%s207 + $0xd8] sm:$0xf]
      %v281 = vld [vmem:[%s207 + $0xdc] sm:$0xf]
      %v282 = vld [vmem:[%s207 + $0xe0] sm:$0xf]
      %v283 = vld [vmem:[%s207 + $0xe4] sm:$0xf]
      %v284 = vld [vmem:[%s207 + $0xe8] sm:$0xf]
      %v285 = vld [vmem:[%s207 + $0xec] sm:$0xf]
      %v286 = vld [vmem:[%s207 + $0xf0] sm:$0xf]
      %v287 = vld [vmem:[%s207 + $0xf4] sm:$0xf]
      %v288 = vld [vmem:[%s207 + $0xf8] sm:$0xf]
      %v289 = vld [vmem:[%s207 + $0xfc] sm:$0xf]
      %v290 = vld [vmem:[%s212] sm:$0xf]
      %v291 = vld [vmem:[%s212 + $0x4] sm:$0xf]
      %v292 = vld [vmem:[%s212 + $0x8] sm:$0xf]
      %v293 = vld [vmem:[%s212 + $0xc] sm:$0xf]
      %v294 = vld [vmem:[%s212 + $0x10] sm:$0xf]
      %v295 = vld [vmem:[%s212 + $0x14] sm:$0xf]
      %v296 = vld [vmem:[%s212 + $0x18] sm:$0xf]
      %v297 = vld [vmem:[%s212 + $0x1c] sm:$0xf]
      %v298 = vld [vmem:[%s212 + $0x20] sm:$0xf]
      %v299 = vld [vmem:[%s212 + $0x24] sm:$0xf]
      %v300 = vld [vmem:[%s212 + $0x28] sm:$0xf]
      %v301 = vld [vmem:[%s212 + $0x2c] sm:$0xf]
      %v302 = vld [vmem:[%s212 + $0x30] sm:$0xf]
      %v303 = vld [vmem:[%s212 + $0x34] sm:$0xf]
      %v304 = vld [vmem:[%s212 + $0x38] sm:$0xf]
      %v305 = vld [vmem:[%s212 + $0x3c] sm:$0xf]
      %v306 = vld [vmem:[%s215] sm:$0x1]
      %v308 = vlaneseq
      %v309 = vshrl.u32 %v308, 7
      %v310 = vsub.s32 0, %v309
      %v311 = vrot.slane %v306, %v310
      %v377 = vunpack.c.l.b16 %v226
      %v378 = vunpack.c.l.b16 %v227
      %v379 = vunpack.c.l.b16 %v228
      %v380 = vunpack.c.l.b16 %v229
      %v381 = vunpack.c.l.b16 %v230
      %v382 = vunpack.c.l.b16 %v231
      %v383 = vunpack.c.l.b16 %v232
      %v384 = vunpack.c.l.b16 %v233
      %v385 = vunpack.c.l.b16 %v234
      %v386 = vunpack.c.l.b16 %v235
      %v387 = vunpack.c.l.b16 %v236
      %v388 = vunpack.c.l.b16 %v237
      %v389 = vunpack.c.l.b16 %v238
      %v390 = vunpack.c.l.b16 %v239
      %v391 = vunpack.c.l.b16 %v240
      %v392 = vunpack.c.l.b16 %v241
      %v393 = vunpack.c.l.b16 %v242
      %v394 = vunpack.c.l.b16 %v243
      %v395 = vunpack.c.l.b16 %v244
      %v396 = vunpack.c.l.b16 %v245
      %v397 = vunpack.c.l.b16 %v246
      %v398 = vunpack.c.l.b16 %v247
      %v399 = vunpack.c.l.b16 %v248
      %v400 = vunpack.c.l.b16 %v249
      %v401 = vunpack.c.l.b16 %v250
      %v402 = vunpack.c.l.b16 %v251
      %v403 = vunpack.c.l.b16 %v252
      %v404 = vunpack.c.l.b16 %v253
      %v405 = vunpack.c.l.b16 %v254
      %v406 = vunpack.c.l.b16 %v255
      %v407 = vunpack.c.l.b16 %v256
      %v408 = vunpack.c.l.b16 %v257
      %v409 = vunpack.c.l.b16 %v258
      %v410 = vunpack.c.l.b16 %v259
      %v411 = vunpack.c.l.b16 %v260
      %v412 = vunpack.c.l.b16 %v261
      %v413 = vunpack.c.l.b16 %v262
      %v414 = vunpack.c.l.b16 %v263
      %v415 = vunpack.c.l.b16 %v264
      %v416 = vunpack.c.l.b16 %v265
      %v417 = vunpack.c.l.b16 %v266
      %v418 = vunpack.c.l.b16 %v267
      %v419 = vunpack.c.l.b16 %v268
      %v420 = vunpack.c.l.b16 %v269
      %v421 = vunpack.c.l.b16 %v270
      %v422 = vunpack.c.l.b16 %v271
      %v423 = vunpack.c.l.b16 %v272
      %v424 = vunpack.c.l.b16 %v273
      %v425 = vunpack.c.l.b16 %v274
      %v426 = vunpack.c.l.b16 %v275
      %v427 = vunpack.c.l.b16 %v276
      %v428 = vunpack.c.l.b16 %v277
      %v429 = vunpack.c.l.b16 %v278
      %v430 = vunpack.c.l.b16 %v279
      %v431 = vunpack.c.l.b16 %v280
      %v432 = vunpack.c.l.b16 %v281
      %v433 = vunpack.c.l.b16 %v282
      %v434 = vunpack.c.l.b16 %v283
      %v435 = vunpack.c.l.b16 %v284
      %v436 = vunpack.c.l.b16 %v285
      %v437 = vunpack.c.l.b16 %v286
      %v438 = vunpack.c.l.b16 %v287
      %v439 = vunpack.c.l.b16 %v288
      %v440 = vunpack.c.l.b16 %v289
      %v441 = vpack.c.b16 %v378, %v377
      %v442 = vpack.c.b16 %v380, %v379
      %v443 = vpack.c.b16 %v382, %v381
      %v444 = vpack.c.b16 %v384, %v383
      %v445 = vpack.c.b16 %v386, %v385
      %v446 = vpack.c.b16 %v388, %v387
      %v447 = vpack.c.b16 %v390, %v389
      %v448 = vpack.c.b16 %v392, %v391
      %v449 = vpack.c.b16 %v394, %v393
      %v450 = vpack.c.b16 %v396, %v395
      %v451 = vpack.c.b16 %v398, %v397
      %v452 = vpack.c.b16 %v400, %v399
      %v453 = vpack.c.b16 %v402, %v401
      %v454 = vpack.c.b16 %v404, %v403
      %v455 = vpack.c.b16 %v406, %v405
      %v456 = vpack.c.b16 %v408, %v407
      %v457 = vpack.c.b16 %v410, %v409
      %v458 = vpack.c.b16 %v412, %v411
      %v459 = vpack.c.b16 %v414, %v413
      %v460 = vpack.c.b16 %v416, %v415
      %v461 = vpack.c.b16 %v418, %v417
      %v462 = vpack.c.b16 %v420, %v419
      %v463 = vpack.c.b16 %v422, %v421
      %v464 = vpack.c.b16 %v424, %v423
      %v465 = vpack.c.b16 %v426, %v425
      %v466 = vpack.c.b16 %v428, %v427
      %v467 = vpack.c.b16 %v430, %v429
      %v468 = vpack.c.b16 %v432, %v431
      %v469 = vpack.c.b16 %v434, %v433
      %v470 = vpack.c.b16 %v436, %v435
      %v471 = vpack.c.b16 %v438, %v437
      %v472 = vpack.c.b16 %v440, %v439
      %v521 = vunpack.c.l.b16 %v290
      %v522 = vunpack.c.l.b16 %v291
      %v523 = vunpack.c.l.b16 %v292
      %v524 = vunpack.c.l.b16 %v293
      %v525 = vunpack.c.l.b16 %v294
      %v526 = vunpack.c.l.b16 %v295
      %v527 = vunpack.c.l.b16 %v296
      %v528 = vunpack.c.l.b16 %v297
      %v529 = vunpack.c.l.b16 %v298
      %v530 = vunpack.c.l.b16 %v299
      %v531 = vunpack.c.l.b16 %v300
      %v532 = vunpack.c.l.b16 %v301
      %v533 = vunpack.c.l.b16 %v302
      %v534 = vunpack.c.l.b16 %v303
      %v535 = vunpack.c.l.b16 %v304
      %v536 = vunpack.c.l.b16 %v305
      %v537 = vpack.c.b16 %v522, %v521
      %v538 = vpack.c.b16 %v524, %v523
      %v539 = vpack.c.b16 %v526, %v525
      %v540 = vpack.c.b16 %v528, %v527
      %v541 = vpack.c.b16 %v530, %v529
      %v542 = vpack.c.b16 %v532, %v531
      %v543 = vpack.c.b16 %v534, %v533
      %v544 = vpack.c.b16 %v536, %v535
      %553 = vmatprep.subr.bf16.mxu0 0
      %554 = vmatpush1.bf16.msra.mxu0 %v544
      %555 = vmatprep.subr.bf16.mxu0 0
      %556 = vmatpush1.bf16.msra.mxu0 %v543
      %557 = vmatprep.subr.bf16.mxu0 0
      %558 = vmatpush1.bf16.msra.mxu0 %v542
      %559 = vmatprep.subr.bf16.mxu0 0
      %560 = vmatpush1.bf16.msra.mxu0 %v541
      %561 = vmatprep.subr.bf16.mxu0 0
      %562 = vmatpush1.bf16.msra.mxu0 %v540
      %563 = vmatprep.subr.bf16.mxu0 0
      %564 = vmatpush1.bf16.msra.mxu0 %v539
      %565 = vmatprep.subr.bf16.mxu0 0
      %566 = vmatpush1.bf16.msra.mxu0 %v538
      %567 = vmatprep.subr.bf16.mxu0 0
      %568 = vmatpush1.bf16.msra.mxu0 %v537
      %569 = vmatprep.subr.bf16.mxu0 0
      %570 = vmatpush2.bf16.msra.mxu0 0
      %571 = vmatprep.subr.bf16.mxu0 0
      %572 = vmatpush2.bf16.msra.mxu0 0
      %573 = vmatprep.subr.bf16.mxu0 0
      %574 = vmatpush2.bf16.msra.mxu0 0
      %575 = vmatprep.subr.bf16.mxu0 0
      %576 = vmatpush2.bf16.msra.mxu0 0
      %577 = vmatprep.subr.bf16.mxu0 0
      %578 = vmatpush2.bf16.msra.mxu0 0
      %579 = vmatprep.subr.bf16.mxu0 0
      %580 = vmatpush2.bf16.msra.mxu0 0
      %581 = vmatprep.subr.bf16.mxu0 0
      %582 = vmatpush2.bf16.msra.mxu0 0
      %583 = vmatprep.subr.bf16.mxu0 0
      %584 = vmatpush2.bf16.msra.mxu0 0
      %585 = vmatprep.mubr.bf16.mxu0 0
      %586 = vmatmul.mubr.bf16.gmra.mxu0 %v441
      %v587 = vpop.f32.mrf.mxu0
      %v588 = vadd.f32 %v311, %v587
      %v589 = vpop.f32.mrf.mxu0
      %v590 = vpop.f32.mrf.mxu0
      %v591 = vadd.f32 %v311, %v590
      %v592 = vpop.f32.mrf.mxu0
      %593 = vmatprep.mubr.bf16.mxu0 0
      %594 = vmatmul.mubr.bf16.gmra.mxu0 %v442
      %v595 = vpop.f32.mrf.mxu0
      %v596 = vadd.f32 %v311, %v595
      %v597 = vpop.f32.mrf.mxu0
      %v598 = vpop.f32.mrf.mxu0
      %v599 = vadd.f32 %v311, %v598
      %v600 = vpop.f32.mrf.mxu0
      %601 = vmatprep.mubr.bf16.mxu0 0
      %602 = vmatmul.mubr.bf16.gmra.mxu0 %v443
      %v603 = vpop.f32.mrf.mxu0
      %v604 = vadd.f32 %v311, %v603
      %v605 = vpop.f32.mrf.mxu0
      %v606 = vpop.f32.mrf.mxu0
      %v607 = vadd.f32 %v311, %v606
      %v608 = vpop.f32.mrf.mxu0
      %609 = vmatprep.mubr.bf16.mxu0 0
      %610 = vmatmul.mubr.bf16.gmra.mxu0 %v444
      %v611 = vpop.f32.mrf.mxu0
      %v612 = vadd.f32 %v311, %v611
      %v613 = vpop.f32.mrf.mxu0
      %v614 = vpop.f32.mrf.mxu0
      %v615 = vadd.f32 %v311, %v614
      %v616 = vpop.f32.mrf.mxu0
      %617 = vmatprep.mubr.bf16.mxu0 0
      %618 = vmatmul.mubr.bf16.gmra.mxu0 %v445
      %v619 = vpop.f32.mrf.mxu0
      %v620 = vadd.f32 %v311, %v619
      %v621 = vpop.f32.mrf.mxu0
      %v622 = vpop.f32.mrf.mxu0
      %v623 = vadd.f32 %v311, %v622
      %v624 = vpop.f32.mrf.mxu0
      %625 = vmatprep.mubr.bf16.mxu0 0
      %626 = vmatmul.mubr.bf16.gmra.mxu0 %v446
      %v627 = vpop.f32.mrf.mxu0
      %v628 = vadd.f32 %v311, %v627
      %v629 = vpop.f32.mrf.mxu0
      %v630 = vpop.f32.mrf.mxu0
      %v631 = vadd.f32 %v311, %v630
      %v632 = vpop.f32.mrf.mxu0
      %633 = vmatprep.mubr.bf16.mxu0 0
      %634 = vmatmul.mubr.bf16.gmra.mxu0 %v447
      %v635 = vpop.f32.mrf.mxu0
      %v636 = vadd.f32 %v311, %v635
      %v637 = vpop.f32.mrf.mxu0
      %v638 = vpop.f32.mrf.mxu0
      %v639 = vadd.f32 %v311, %v638
      %v640 = vpop.f32.mrf.mxu0
      %641 = vmatprep.mubr.bf16.mxu0 0
      %642 = vmatmul.mubr.bf16.gmra.mxu0 %v448
      %v643 = vpop.f32.mrf.mxu0
      %v644 = vadd.f32 %v311, %v643
      %v645 = vpop.f32.mrf.mxu0
      %v646 = vpop.f32.mrf.mxu0
      %v647 = vadd.f32 %v311, %v646
      %v648 = vpop.f32.mrf.mxu0
      %649 = vmatprep.mubr.bf16.mxu0 0
      %650 = vmatmul.mubr.bf16.gmra.mxu0 %v449
      %v651 = vpop.f32.mrf.mxu0
      %v652 = vadd.f32 %v311, %v651
      %v653 = vpop.f32.mrf.mxu0
      %v654 = vpop.f32.mrf.mxu0
      %v655 = vadd.f32 %v311, %v654
      %v656 = vpop.f32.mrf.mxu0
      %657 = vmatprep.mubr.bf16.mxu0 0
      %658 = vmatmul.mubr.bf16.gmra.mxu0 %v450
      %v659 = vpop.f32.mrf.mxu0
      %v660 = vadd.f32 %v311, %v659
      %v661 = vpop.f32.mrf.mxu0
      %v662 = vpop.f32.mrf.mxu0
      %v663 = vadd.f32 %v311, %v662
      %v664 = vpop.f32.mrf.mxu0
      %665 = vmatprep.mubr.bf16.mxu0 0
      %666 = vmatmul.mubr.bf16.gmra.mxu0 %v451
      %v667 = vpop.f32.mrf.mxu0
      %v668 = vadd.f32 %v311, %v667
      %v669 = vpop.f32.mrf.mxu0
      %v670 = vpop.f32.mrf.mxu0
      %v671 = vadd.f32 %v311, %v670
      %v672 = vpop.f32.mrf.mxu0
      %673 = vmatprep.mubr.bf16.mxu0 0
      %674 = vmatmul.mubr.bf16.gmra.mxu0 %v452
      %v675 = vpop.f32.mrf.mxu0
      %v676 = vadd.f32 %v311, %v675
      %v677 = vpop.f32.mrf.mxu0
      %v678 = vpop.f32.mrf.mxu0
      %v679 = vadd.f32 %v311, %v678
      %v680 = vpop.f32.mrf.mxu0
      %681 = vmatprep.mubr.bf16.mxu0 0
      %682 = vmatmul.mubr.bf16.gmra.mxu0 %v453
      %v683 = vpop.f32.mrf.mxu0
      %v684 = vadd.f32 %v311, %v683
      %v685 = vpop.f32.mrf.mxu0
      %v686 = vpop.f32.mrf.mxu0
      %v687 = vadd.f32 %v311, %v686
      %v688 = vpop.f32.mrf.mxu0
      %689 = vmatprep.mubr.bf16.mxu0 0
      %690 = vmatmul.mubr.bf16.gmra.mxu0 %v454
      %v691 = vpop.f32.mrf.mxu0
      %v692 = vadd.f32 %v311, %v691
      %v693 = vpop.f32.mrf.mxu0
      %v694 = vpop.f32.mrf.mxu0
      %v695 = vadd.f32 %v311, %v694
      %v696 = vpop.f32.mrf.mxu0
      %697 = vmatprep.mubr.bf16.mxu0 0
      %698 = vmatmul.mubr.bf16.gmra.mxu0 %v455
      %v699 = vpop.f32.mrf.mxu0
      %v700 = vadd.f32 %v311, %v699
      %v701 = vpop.f32.mrf.mxu0
      %v702 = vpop.f32.mrf.mxu0
      %v703 = vadd.f32 %v311, %v702
      %v704 = vpop.f32.mrf.mxu0
      %705 = vmatprep.mubr.bf16.mxu0 0
      %706 = vmatmul.mubr.bf16.gmra.mxu0 %v456
      %v707 = vpop.f32.mrf.mxu0
      %v708 = vadd.f32 %v311, %v707
      %v709 = vpop.f32.mrf.mxu0
      %v710 = vpop.f32.mrf.mxu0
      %v711 = vadd.f32 %v311, %v710
      %v712 = vpop.f32.mrf.mxu0
      %713 = vmatprep.mubr.bf16.mxu0 0
      %714 = vmatmul.mubr.bf16.gmra.mxu0 %v457
      %v715 = vpop.f32.mrf.mxu0
      %v716 = vadd.f32 %v311, %v715
      %v717 = vpop.f32.mrf.mxu0
      %v718 = vpop.f32.mrf.mxu0
      %v719 = vadd.f32 %v311, %v718
      %v720 = vpop.f32.mrf.mxu0
      %721 = vmatprep.mubr.bf16.mxu0 0
      %722 = vmatmul.mubr.bf16.gmra.mxu0 %v458
      %v723 = vpop.f32.mrf.mxu0
      %v724 = vadd.f32 %v311, %v723
      %v725 = vpop.f32.mrf.mxu0
      %v726 = vpop.f32.mrf.mxu0
      %v727 = vadd.f32 %v311, %v726
      %v728 = vpop.f32.mrf.mxu0
      %729 = vmatprep.mubr.bf16.mxu0 0
      %730 = vmatmul.mubr.bf16.gmra.mxu0 %v459
      %v731 = vpop.f32.mrf.mxu0
      %v732 = vadd.f32 %v311, %v731
      %v733 = vpop.f32.mrf.mxu0
      %v734 = vpop.f32.mrf.mxu0
      %v735 = vadd.f32 %v311, %v734
      %v736 = vpop.f32.mrf.mxu0
      %737 = vmatprep.mubr.bf16.mxu0 0
      %738 = vmatmul.mubr.bf16.gmra.mxu0 %v460
      %v739 = vpop.f32.mrf.mxu0
      %v740 = vadd.f32 %v311, %v739
      %v741 = vpop.f32.mrf.mxu0
      %v742 = vpop.f32.mrf.mxu0
      %v743 = vadd.f32 %v311, %v742
      %v744 = vpop.f32.mrf.mxu0
      %745 = vmatprep.mubr.bf16.mxu0 0
      %746 = vmatmul.mubr.bf16.gmra.mxu0 %v461
      %v747 = vpop.f32.mrf.mxu0
      %v748 = vadd.f32 %v311, %v747
      %v749 = vpop.f32.mrf.mxu0
      %v750 = vpop.f32.mrf.mxu0
      %v751 = vadd.f32 %v311, %v750
      %v752 = vpop.f32.mrf.mxu0
      %753 = vmatprep.mubr.bf16.mxu0 0
      %754 = vmatmul.mubr.bf16.gmra.mxu0 %v462
      %v755 = vpop.f32.mrf.mxu0
      %v756 = vadd.f32 %v311, %v755
      %v757 = vpop.f32.mrf.mxu0
      %v758 = vpop.f32.mrf.mxu0
      %v759 = vadd.f32 %v311, %v758
      %v760 = vpop.f32.mrf.mxu0
      %761 = vmatprep.mubr.bf16.mxu0 0
      %762 = vmatmul.mubr.bf16.gmra.mxu0 %v463
      %v763 = vpop.f32.mrf.mxu0
      %v764 = vadd.f32 %v311, %v763
      %v765 = vpop.f32.mrf.mxu0
      %v766 = vpop.f32.mrf.mxu0
      %v767 = vadd.f32 %v311, %v766
      %v768 = vpop.f32.mrf.mxu0
      %769 = vmatprep.mubr.bf16.mxu0 0
      %770 = vmatmul.mubr.bf16.gmra.mxu0 %v464
      %v771 = vpop.f32.mrf.mxu0
      %v772 = vadd.f32 %v311, %v771
      %v773 = vpop.f32.mrf.mxu0
      %v774 = vpop.f32.mrf.mxu0
      %v775 = vadd.f32 %v311, %v774
      %v776 = vpop.f32.mrf.mxu0
      %777 = vmatprep.mubr.bf16.mxu0 0
      %778 = vmatmul.mubr.bf16.gmra.mxu0 %v465
      %v779 = vpop.f32.mrf.mxu0
      %v780 = vadd.f32 %v311, %v779
      %v781 = vpop.f32.mrf.mxu0
      %v782 = vpop.f32.mrf.mxu0
      %v783 = vadd.f32 %v311, %v782
      %v784 = vpop.f32.mrf.mxu0
      %785 = vmatprep.mubr.bf16.mxu0 0
      %786 = vmatmul.mubr.bf16.gmra.mxu0 %v466
      %v787 = vpop.f32.mrf.mxu0
      %v788 = vadd.f32 %v311, %v787
      %v789 = vpop.f32.mrf.mxu0
      %v790 = vpop.f32.mrf.mxu0
      %v791 = vadd.f32 %v311, %v790
      %v792 = vpop.f32.mrf.mxu0
      %793 = vmatprep.mubr.bf16.mxu0 0
      %794 = vmatmul.mubr.bf16.gmra.mxu0 %v467
      %v795 = vpop.f32.mrf.mxu0
      %v796 = vadd.f32 %v311, %v795
      %v797 = vpop.f32.mrf.mxu0
      %v798 = vpop.f32.mrf.mxu0
      %v799 = vadd.f32 %v311, %v798
      %v800 = vpop.f32.mrf.mxu0
      %801 = vmatprep.mubr.bf16.mxu0 0
      %802 = vmatmul.mubr.bf16.gmra.mxu0 %v468
      %v803 = vpop.f32.mrf.mxu0
      %v804 = vadd.f32 %v311, %v803
      %v805 = vpop.f32.mrf.mxu0
      %v806 = vpop.f32.mrf.mxu0
      %v807 = vadd.f32 %v311, %v806
      %v808 = vpop.f32.mrf.mxu0
      %809 = vmatprep.mubr.bf16.mxu0 0
      %810 = vmatmul.mubr.bf16.gmra.mxu0 %v469
      %v811 = vpop.f32.mrf.mxu0
      %v812 = vadd.f32 %v311, %v811
      %v813 = vpop.f32.mrf.mxu0
      %v814 = vpop.f32.mrf.mxu0
      %v815 = vadd.f32 %v311, %v814
      %v816 = vpop.f32.mrf.mxu0
      %817 = vmatprep.mubr.bf16.mxu0 0
      %818 = vmatmul.mubr.bf16.gmra.mxu0 %v470
      %v819 = vpop.f32.mrf.mxu0
      %v820 = vadd.f32 %v311, %v819
      %v821 = vpop.f32.mrf.mxu0
      %v822 = vpop.f32.mrf.mxu0
      %v823 = vadd.f32 %v311, %v822
      %v824 = vpop.f32.mrf.mxu0
      %825 = vmatprep.mubr.bf16.mxu0 0
      %826 = vmatmul.mubr.bf16.gmra.mxu0 %v471
      %v827 = vpop.f32.mrf.mxu0
      %v828 = vadd.f32 %v311, %v827
      %v829 = vpop.f32.mrf.mxu0
      %v830 = vpop.f32.mrf.mxu0
      %v831 = vadd.f32 %v311, %v830
      %v832 = vpop.f32.mrf.mxu0
      %833 = vmatprep.mubr.bf16.mxu0 0
      %834 = vmatmul.mubr.bf16.gmra.mxu0 %v472
      %v835 = vpop.f32.mrf.mxu0
      %v836 = vadd.f32 %v311, %v835
      %v837 = vpop.f32.mrf.mxu0
      %v838 = vpop.f32.mrf.mxu0
      %v839 = vadd.f32 %v311, %v838
      %v840 = vpop.f32.mrf.mxu0
      %841 = vdwg.mxu0
      %vm842 = vcmp.ge.f32.partialorder %v588, 0.0
      %vm843 = vcmp.ge.f32.partialorder %v591, 0.0
      %vm844 = vcmp.ge.f32.partialorder %v596, 0.0
      %vm845 = vcmp.ge.f32.partialorder %v599, 0.0
      %vm846 = vcmp.ge.f32.partialorder %v604, 0.0
      %vm847 = vcmp.ge.f32.partialorder %v607, 0.0
      %vm848 = vcmp.ge.f32.partialorder %v612, 0.0
      %vm849 = vcmp.ge.f32.partialorder %v615, 0.0
      %vm850 = vcmp.ge.f32.partialorder %v620, 0.0
      %vm851 = vcmp.ge.f32.partialorder %v623, 0.0
      %vm852 = vcmp.ge.f32.partialorder %v628, 0.0
      %vm853 = vcmp.ge.f32.partialorder %v631, 0.0
      %vm854 = vcmp.ge.f32.partialorder %v636, 0.0
      %vm855 = vcmp.ge.f32.partialorder %v639, 0.0
      %vm856 = vcmp.ge.f32.partialorder %v644, 0.0
      %vm857 = vcmp.ge.f32.partialorder %v647, 0.0
      %vm858 = vcmp.ge.f32.partialorder %v652, 0.0
      %vm859 = vcmp.ge.f32.partialorder %v655, 0.0
      %vm860 = vcmp.ge.f32.partialorder %v660, 0.0
      %vm861 = vcmp.ge.f32.partialorder %v663, 0.0
      %vm862 = vcmp.ge.f32.partialorder %v668, 0.0
      %vm863 = vcmp.ge.f32.partialorder %v671, 0.0
      %vm864 = vcmp.ge.f32.partialorder %v676, 0.0
      %vm865 = vcmp.ge.f32.partialorder %v679, 0.0
      %vm866 = vcmp.ge.f32.partialorder %v684, 0.0
      %vm867 = vcmp.ge.f32.partialorder %v687, 0.0
      %vm868 = vcmp.ge.f32.partialorder %v692, 0.0
      %vm869 = vcmp.ge.f32.partialorder %v695, 0.0
      %vm870 = vcmp.ge.f32.partialorder %v700, 0.0
      %vm871 = vcmp.ge.f32.partialorder %v703, 0.0
      %vm872 = vcmp.ge.f32.partialorder %v708, 0.0
      %vm873 = vcmp.ge.f32.partialorder %v711, 0.0
      %vm874 = vcmp.ge.f32.partialorder %v716, 0.0
      %vm875 = vcmp.ge.f32.partialorder %v719, 0.0
      %vm876 = vcmp.ge.f32.partialorder %v724, 0.0
      %vm877 = vcmp.ge.f32.partialorder %v727, 0.0
      %vm878 = vcmp.ge.f32.partialorder %v732, 0.0
      %vm879 = vcmp.ge.f32.partialorder %v735, 0.0
      %vm880 = vcmp.ge.f32.partialorder %v740, 0.0
      %vm881 = vcmp.ge.f32.partialorder %v743, 0.0
      %vm882 = vcmp.ge.f32.partialorder %v748, 0.0
      %vm883 = vcmp.ge.f32.partialorder %v751, 0.0
      %vm884 = vcmp.ge.f32.partialorder %v756, 0.0
      %vm885 = vcmp.ge.f32.partialorder %v759, 0.0
      %vm886 = vcmp.ge.f32.partialorder %v764, 0.0
      %vm887 = vcmp.ge.f32.partialorder %v767, 0.0
      %vm888 = vcmp.ge.f32.partialorder %v772, 0.0
      %vm889 = vcmp.ge.f32.partialorder %v775, 0.0
      %vm890 = vcmp.ge.f32.partialorder %v780, 0.0
      %vm891 = vcmp.ge.f32.partialorder %v783, 0.0
      %vm892 = vcmp.ge.f32.partialorder %v788, 0.0
      %vm893 = vcmp.ge.f32.partialorder %v791, 0.0
      %vm894 = vcmp.ge.f32.partialorder %v796, 0.0
      %vm895 = vcmp.ge.f32.partialorder %v799, 0.0
      %vm896 = vcmp.ge.f32.partialorder %v804, 0.0
      %vm897 = vcmp.ge.f32.partialorder %v807, 0.0
      %vm898 = vcmp.ge.f32.partialorder %v812, 0.0
      %vm899 = vcmp.ge.f32.partialorder %v815, 0.0
      %vm900 = vcmp.ge.f32.partialorder %v820, 0.0
      %vm901 = vcmp.ge.f32.partialorder %v823, 0.0
      %vm902 = vcmp.ge.f32.partialorder %v828, 0.0
      %vm903 = vcmp.ge.f32.partialorder %v831, 0.0
      %vm904 = vcmp.ge.f32.partialorder %v836, 0.0
      %vm905 = vcmp.ge.f32.partialorder %v839, 0.0
      %v906 = vmul.f32 %v588, 0.1
      %v907 = vmul.f32 %v591, 0.1
      %v908 = vmul.f32 %v596, 0.1
      %v909 = vmul.f32 %v599, 0.1
      %v910 = vmul.f32 %v604, 0.1
      %v911 = vmul.f32 %v607, 0.1
      %v912 = vmul.f32 %v612, 0.1
      %v913 = vmul.f32 %v615, 0.1
      %v914 = vmul.f32 %v620, 0.1
      %v915 = vmul.f32 %v623, 0.1
      %v916 = vmul.f32 %v628, 0.1
      %v917 = vmul.f32 %v631, 0.1
      %v918 = vmul.f32 %v636, 0.1
      %v919 = vmul.f32 %v639, 0.1
      %v920 = vmul.f32 %v644, 0.1
      %v921 = vmul.f32 %v647, 0.1
      %v922 = vmul.f32 %v652, 0.1
      %v923 = vmul.f32 %v655, 0.1
      %v924 = vmul.f32 %v660, 0.1
      %v925 = vmul.f32 %v663, 0.1
      %v926 = vmul.f32 %v668, 0.1
      %v927 = vmul.f32 %v671, 0.1
      %v928 = vmul.f32 %v676, 0.1
      %v929 = vmul.f32 %v679, 0.1
      %v930 = vmul.f32 %v684, 0.1
      %v931 = vmul.f32 %v687, 0.1
      %v932 = vmul.f32 %v692, 0.1
      %v933 = vmul.f32 %v695, 0.1
      %v934 = vmul.f32 %v700, 0.1
      %v935 = vmul.f32 %v703, 0.1
      %v936 = vmul.f32 %v708, 0.1
      %v937 = vmul.f32 %v711, 0.1
      %v938 = vmul.f32 %v716, 0.1
      %v939 = vmul.f32 %v719, 0.1
      %v940 = vmul.f32 %v724, 0.1
      %v941 = vmul.f32 %v727, 0.1
      %v942 = vmul.f32 %v732, 0.1
      %v943 = vmul.f32 %v735, 0.1
      %v944 = vmul.f32 %v740, 0.1
      %v945 = vmul.f32 %v743, 0.1
      %v946 = vmul.f32 %v748, 0.1
      %v947 = vmul.f32 %v751, 0.1
      %v948 = vmul.f32 %v756, 0.1
      %v949 = vmul.f32 %v759, 0.1
      %v950 = vmul.f32 %v764, 0.1
      %v951 = vmul.f32 %v767, 0.1
      %v952 = vmul.f32 %v772, 0.1
      %v953 = vmul.f32 %v775, 0.1
      %v954 = vmul.f32 %v780, 0.1
      %v955 = vmul.f32 %v783, 0.1
      %v956 = vmul.f32 %v788, 0.1
      %v957 = vmul.f32 %v791, 0.1
      %v958 = vmul.f32 %v796, 0.1
      %v959 = vmul.f32 %v799, 0.1
      %v960 = vmul.f32 %v804, 0.1
      %v961 = vmul.f32 %v807, 0.1
      %v962 = vmul.f32 %v812, 0.1
      %v963 = vmul.f32 %v815, 0.1
      %v964 = vmul.f32 %v820, 0.1
      %v965 = vmul.f32 %v823, 0.1
      %v966 = vmul.f32 %v828, 0.1
      %v967 = vmul.f32 %v831, 0.1
      %v968 = vmul.f32 %v836, 0.1
      %v969 = vmul.f32 %v839, 0.1
      %v970 = vsel %vm842, %v588, %v906
      %v971 = vsel %vm843, %v591, %v907
      %v972 = vsel %vm844, %v596, %v908
      %v973 = vsel %vm845, %v599, %v909
      %v974 = vsel %vm846, %v604, %v910
      %v975 = vsel %vm847, %v607, %v911
      %v976 = vsel %vm848, %v612, %v912
      %v977 = vsel %vm849, %v615, %v913
      %v978 = vsel %vm850, %v620, %v914
      %v979 = vsel %vm851, %v623, %v915
      %v980 = vsel %vm852, %v628, %v916
      %v981 = vsel %vm853, %v631, %v917
      %v982 = vsel %vm854, %v636, %v918
      %v983 = vsel %vm855, %v639, %v919
      %v984 = vsel %vm856, %v644, %v920
      %v985 = vsel %vm857, %v647, %v921
      %v986 = vsel %vm858, %v652, %v922
      %v987 = vsel %vm859, %v655, %v923
      %v988 = vsel %vm860, %v660, %v924
      %v989 = vsel %vm861, %v663, %v925
      %v990 = vsel %vm862, %v668, %v926
      %v991 = vsel %vm863, %v671, %v927
      %v992 = vsel %vm864, %v676, %v928
      %v993 = vsel %vm865, %v679, %v929
      %v994 = vsel %vm866, %v684, %v930
      %v995 = vsel %vm867, %v687, %v931
      %v996 = vsel %vm868, %v692, %v932
      %v997 = vsel %vm869, %v695, %v933
      %v998 = vsel %vm870, %v700, %v934
      %v999 = vsel %vm871, %v703, %v935
      %v1000 = vsel %vm872, %v708, %v936
      %v1001 = vsel %vm873, %v711, %v937
      %v1002 = vsel %vm874, %v716, %v938
      %v1003 = vsel %vm875, %v719, %v939
      %v1004 = vsel %vm876, %v724, %v940
      %v1005 = vsel %vm877, %v727, %v941
      %v1006 = vsel %vm878, %v732, %v942
      %v1007 = vsel %vm879, %v735, %v943
      %v1008 = vsel %vm880, %v740, %v944
      %v1009 = vsel %vm881, %v743, %v945
      %v1010 = vsel %vm882, %v748, %v946
      %v1011 = vsel %vm883, %v751, %v947
      %v1012 = vsel %vm884, %v756, %v948
      %v1013 = vsel %vm885, %v759, %v949
      %v1014 = vsel %vm886, %v764, %v950
      %v1015 = vsel %vm887, %v767, %v951
      %v1016 = vsel %vm888, %v772, %v952
      %v1017 = vsel %vm889, %v775, %v953
      %v1018 = vsel %vm890, %v780, %v954
      %v1019 = vsel %vm891, %v783, %v955
      %v1020 = vsel %vm892, %v788, %v956
      %v1021 = vsel %vm893, %v791, %v957
      %v1022 = vsel %vm894, %v796, %v958
      %v1023 = vsel %vm895, %v799, %v959
      %v1024 = vsel %vm896, %v804, %v960
      %v1025 = vsel %vm897, %v807, %v961
      %v1026 = vsel %vm898, %v812, %v962
      %v1027 = vsel %vm899, %v815, %v963
      %v1028 = vsel %vm900, %v820, %v964
      %v1029 = vsel %vm901, %v823, %v965
      %v1030 = vsel %vm902, %v828, %v966
      %v1031 = vsel %vm903, %v831, %v967
      %v1032 = vsel %vm904, %v836, %v968
      %v1033 = vsel %vm905, %v839, %v969
      %v1034 = vpack.c.bf16 %v971, %v970
      %v1035 = vpack.c.bf16 %v973, %v972
      %v1036 = vpack.c.bf16 %v975, %v974
      %v1037 = vpack.c.bf16 %v977, %v976
      %v1038 = vpack.c.bf16 %v979, %v978
      %v1039 = vpack.c.bf16 %v981, %v980
      %v1040 = vpack.c.bf16 %v983, %v982
      %v1041 = vpack.c.bf16 %v985, %v984
      %v1042 = vpack.c.bf16 %v987, %v986
      %v1043 = vpack.c.bf16 %v989, %v988
      %v1044 = vpack.c.bf16 %v991, %v990
      %v1045 = vpack.c.bf16 %v993, %v992
      %v1046 = vpack.c.bf16 %v995, %v994
      %v1047 = vpack.c.bf16 %v997, %v996
      %v1048 = vpack.c.bf16 %v999, %v998
      %v1049 = vpack.c.bf16 %v1001, %v1000
      %v1050 = vpack.c.bf16 %v1003, %v1002
      %v1051 = vpack.c.bf16 %v1005, %v1004
      %v1052 = vpack.c.bf16 %v1007, %v1006
      %v1053 = vpack.c.bf16 %v1009, %v1008
      %v1054 = vpack.c.bf16 %v1011, %v1010
      %v1055 = vpack.c.bf16 %v1013, %v1012
      %v1056 = vpack.c.bf16 %v1015, %v1014
      %v1057 = vpack.c.bf16 %v1017, %v1016
      %v1058 = vpack.c.bf16 %v1019, %v1018
      %v1059 = vpack.c.bf16 %v1021, %v1020
      %v1060 = vpack.c.bf16 %v1023, %v1022
      %v1061 = vpack.c.bf16 %v1025, %v1024
      %v1062 = vpack.c.bf16 %v1027, %v1026
      %v1063 = vpack.c.bf16 %v1029, %v1028
      %v1064 = vpack.c.bf16 %v1031, %v1030
      %v1065 = vpack.c.bf16 %v1033, %v1032
      %v1098 = vunpack.c.l.b16 %v1034
      %v1099 = vunpack.c.h.b16 %v1034
      %v1100 = vunpack.c.l.b16 %v1035
      %v1101 = vunpack.c.h.b16 %v1035
      %v1102 = vunpack.c.l.b16 %v1036
      %v1103 = vunpack.c.h.b16 %v1036
      %v1104 = vunpack.c.l.b16 %v1037
      %v1105 = vunpack.c.h.b16 %v1037
      %v1106 = vunpack.c.l.b16 %v1038
      %v1107 = vunpack.c.h.b16 %v1038
      %v1108 = vunpack.c.l.b16 %v1039
      %v1109 = vunpack.c.h.b16 %v1039
      %v1110 = vunpack.c.l.b16 %v1040
      %v1111 = vunpack.c.h.b16 %v1040
      %v1112 = vunpack.c.l.b16 %v1041
      %v1113 = vunpack.c.h.b16 %v1041
      %v1114 = vunpack.c.l.b16 %v1042
      %v1115 = vunpack.c.h.b16 %v1042
      %v1116 = vunpack.c.l.b16 %v1043
      %v1117 = vunpack.c.h.b16 %v1043
      %v1118 = vunpack.c.l.b16 %v1044
      %v1119 = vunpack.c.h.b16 %v1044
      %v1120 = vunpack.c.l.b16 %v1045
      %v1121 = vunpack.c.h.b16 %v1045
      %v1122 = vunpack.c.l.b16 %v1046
      %v1123 = vunpack.c.h.b16 %v1046
      %v1124 = vunpack.c.l.b16 %v1047
      %v1125 = vunpack.c.h.b16 %v1047
      %v1126 = vunpack.c.l.b16 %v1048
      %v1127 = vunpack.c.h.b16 %v1048
      %v1128 = vunpack.c.l.b16 %v1049
      %v1129 = vunpack.c.h.b16 %v1049
      %v1130 = vunpack.c.l.b16 %v1050
      %v1131 = vunpack.c.h.b16 %v1050
      %v1132 = vunpack.c.l.b16 %v1051
      %v1133 = vunpack.c.h.b16 %v1051
      %v1134 = vunpack.c.l.b16 %v1052
      %v1135 = vunpack.c.h.b16 %v1052
      %v1136 = vunpack.c.l.b16 %v1053
      %v1137 = vunpack.c.h.b16 %v1053
      %v1138 = vunpack.c.l.b16 %v1054
      %v1139 = vunpack.c.h.b16 %v1054
      %v1140 = vunpack.c.l.b16 %v1055
      %v1141 = vunpack.c.h.b16 %v1055
      %v1142 = vunpack.c.l.b16 %v1056
      %v1143 = vunpack.c.h.b16 %v1056
      %v1144 = vunpack.c.l.b16 %v1057
      %v1145 = vunpack.c.h.b16 %v1057
      %v1146 = vunpack.c.l.b16 %v1058
      %v1147 = vunpack.c.h.b16 %v1058
      %v1148 = vunpack.c.l.b16 %v1059
      %v1149 = vunpack.c.h.b16 %v1059
      %v1150 = vunpack.c.l.b16 %v1060
      %v1151 = vunpack.c.h.b16 %v1060
      %v1152 = vunpack.c.l.b16 %v1061
      %v1153 = vunpack.c.h.b16 %v1061
      %v1154 = vunpack.c.l.b16 %v1062
      %v1155 = vunpack.c.h.b16 %v1062
      %v1156 = vunpack.c.l.b16 %v1063
      %v1157 = vunpack.c.h.b16 %v1063
      %v1158 = vunpack.c.l.b16 %v1064
      %v1159 = vunpack.c.h.b16 %v1064
      %v1160 = vunpack.c.l.b16 %v1065
      %v1161 = vunpack.c.h.b16 %v1065
      %v1162 = vpack.c.b16 %v1098, %v1098
      %v1163 = vpack.c.b16 %v1099, %v1099
      %v1164 = vpack.c.b16 %v1100, %v1100
      %v1165 = vpack.c.b16 %v1101, %v1101
      %v1166 = vpack.c.b16 %v1102, %v1102
      %v1167 = vpack.c.b16 %v1103, %v1103
      %v1168 = vpack.c.b16 %v1104, %v1104
      %v1169 = vpack.c.b16 %v1105, %v1105
      %v1170 = vpack.c.b16 %v1106, %v1106
      %v1171 = vpack.c.b16 %v1107, %v1107
      %v1172 = vpack.c.b16 %v1108, %v1108
      %v1173 = vpack.c.b16 %v1109, %v1109
      %v1174 = vpack.c.b16 %v1110, %v1110
      %v1175 = vpack.c.b16 %v1111, %v1111
      %v1176 = vpack.c.b16 %v1112, %v1112
      %v1177 = vpack.c.b16 %v1113, %v1113
      %v1178 = vpack.c.b16 %v1114, %v1114
      %v1179 = vpack.c.b16 %v1115, %v1115
      %v1180 = vpack.c.b16 %v1116, %v1116
      %v1181 = vpack.c.b16 %v1117, %v1117
      %v1182 = vpack.c.b16 %v1118, %v1118
      %v1183 = vpack.c.b16 %v1119, %v1119
      %v1184 = vpack.c.b16 %v1120, %v1120
      %v1185 = vpack.c.b16 %v1121, %v1121
      %v1186 = vpack.c.b16 %v1122, %v1122
      %v1187 = vpack.c.b16 %v1123, %v1123
      %v1188 = vpack.c.b16 %v1124, %v1124
      %v1189 = vpack.c.b16 %v1125, %v1125
      %v1190 = vpack.c.b16 %v1126, %v1126
      %v1191 = vpack.c.b16 %v1127, %v1127
      %v1192 = vpack.c.b16 %v1128, %v1128
      %v1193 = vpack.c.b16 %v1129, %v1129
      %v1194 = vpack.c.b16 %v1130, %v1130
      %v1195 = vpack.c.b16 %v1131, %v1131
      %v1196 = vpack.c.b16 %v1132, %v1132
      %v1197 = vpack.c.b16 %v1133, %v1133
      %v1198 = vpack.c.b16 %v1134, %v1134
      %v1199 = vpack.c.b16 %v1135, %v1135
      %v1200 = vpack.c.b16 %v1136, %v1136
      %v1201 = vpack.c.b16 %v1137, %v1137
      %v1202 = vpack.c.b16 %v1138, %v1138
      %v1203 = vpack.c.b16 %v1139, %v1139
      %v1204 = vpack.c.b16 %v1140, %v1140
      %v1205 = vpack.c.b16 %v1141, %v1141
      %v1206 = vpack.c.b16 %v1142, %v1142
      %v1207 = vpack.c.b16 %v1143, %v1143
      %v1208 = vpack.c.b16 %v1144, %v1144
      %v1209 = vpack.c.b16 %v1145, %v1145
      %v1210 = vpack.c.b16 %v1146, %v1146
      %v1211 = vpack.c.b16 %v1147, %v1147
      %v1212 = vpack.c.b16 %v1148, %v1148
      %v1213 = vpack.c.b16 %v1149, %v1149
      %v1214 = vpack.c.b16 %v1150, %v1150
      %v1215 = vpack.c.b16 %v1151, %v1151
      %v1216 = vpack.c.b16 %v1152, %v1152
      %v1217 = vpack.c.b16 %v1153, %v1153
      %v1218 = vpack.c.b16 %v1154, %v1154
      %v1219 = vpack.c.b16 %v1155, %v1155
      %v1220 = vpack.c.b16 %v1156, %v1156
      %v1221 = vpack.c.b16 %v1157, %v1157
      %v1222 = vpack.c.b16 %v1158, %v1158
      %v1223 = vpack.c.b16 %v1159, %v1159
      %v1224 = vpack.c.b16 %v1160, %v1160
      %v1225 = vpack.c.b16 %v1161, %v1161
      %vm1290 = vcmask 519168
      %1291 = vst.msk [vmem:[%s223] sm:$0xf] %vm1290, %v1162
      %1292 = vst.msk [vmem:[%s223 + $0x4] sm:$0xf] %vm1290, %v1163
      %1293 = vst.msk [vmem:[%s223 + $0x8] sm:$0xf] %vm1290, %v1164
      %1294 = vst.msk [vmem:[%s223 + $0xc] sm:$0xf] %vm1290, %v1165
      %1295 = vst.msk [vmem:[%s223 + $0x10] sm:$0xf] %vm1290, %v1166
      %1296 = vst.msk [vmem:[%s223 + $0x14] sm:$0xf] %vm1290, %v1167
      %1297 = vst.msk [vmem:[%s223 + $0x18] sm:$0xf] %vm1290, %v1168
      %1298 = vst.msk [vmem:[%s223 + $0x1c] sm:$0xf] %vm1290, %v1169
      %1299 = vst.msk [vmem:[%s223 + $0x20] sm:$0xf] %vm1290, %v1170
      %1300 = vst.msk [vmem:[%s223 + $0x24] sm:$0xf] %vm1290, %v1171
      %1301 = vst.msk [vmem:[%s223 + $0x28] sm:$0xf] %vm1290, %v1172
      %1302 = vst.msk [vmem:[%s223 + $0x2c] sm:$0xf] %vm1290, %v1173
      %1303 = vst.msk [vmem:[%s223 + $0x30] sm:$0xf] %vm1290, %v1174
      %1304 = vst.msk [vmem:[%s223 + $0x34] sm:$0xf] %vm1290, %v1175
      %1305 = vst.msk [vmem:[%s223 + $0x38] sm:$0xf] %vm1290, %v1176
      %1306 = vst.msk [vmem:[%s223 + $0x3c] sm:$0xf] %vm1290, %v1177
      %1307 = vst.msk [vmem:[%s223 + $0x40] sm:$0xf] %vm1290, %v1178
      %1308 = vst.msk [vmem:[%s223 + $0x44] sm:$0xf] %vm1290, %v1179
      %1309 = vst.msk [vmem:[%s223 + $0x48] sm:$0xf] %vm1290, %v1180
      %1310 = vst.msk [vmem:[%s223 + $0x4c] sm:$0xf] %vm1290, %v1181
      %1311 = vst.msk [vmem:[%s223 + $0x50] sm:$0xf] %vm1290, %v1182
      %1312 = vst.msk [vmem:[%s223 + $0x54] sm:$0xf] %vm1290, %v1183
      %1313 = vst.msk [vmem:[%s223 + $0x58] sm:$0xf] %vm1290, %v1184
      %1314 = vst.msk [vmem:[%s223 + $0x5c] sm:$0xf] %vm1290, %v1185
      %1315 = vst.msk [vmem:[%s223 + $0x60] sm:$0xf] %vm1290, %v1186
      %1316 = vst.msk [vmem:[%s223 + $0x64] sm:$0xf] %vm1290, %v1187
      %1317 = vst.msk [vmem:[%s223 + $0x68] sm:$0xf] %vm1290, %v1188
      %1318 = vst.msk [vmem:[%s223 + $0x6c] sm:$0xf] %vm1290, %v1189
      %1319 = vst.msk [vmem:[%s223 + $0x70] sm:$0xf] %vm1290, %v1190
      %1320 = vst.msk [vmem:[%s223 + $0x74] sm:$0xf] %vm1290, %v1191
      %1321 = vst.msk [vmem:[%s223 + $0x78] sm:$0xf] %vm1290, %v1192
      %1322 = vst.msk [vmem:[%s223 + $0x7c] sm:$0xf] %vm1290, %v1193
      %1323 = vst.msk [vmem:[%s223 + $0x80] sm:$0xf] %vm1290, %v1194
      %1324 = vst.msk [vmem:[%s223 + $0x84] sm:$0xf] %vm1290, %v1195
      %1325 = vst.msk [vmem:[%s223 + $0x88] sm:$0xf] %vm1290, %v1196
      %1326 = vst.msk [vmem:[%s223 + $0x8c] sm:$0xf] %vm1290, %v1197
      %1327 = vst.msk [vmem:[%s223 + $0x90] sm:$0xf] %vm1290, %v1198
      %1328 = vst.msk [vmem:[%s223 + $0x94] sm:$0xf] %vm1290, %v1199
      %1329 = vst.msk [vmem:[%s223 + $0x98] sm:$0xf] %vm1290, %v1200
      %1330 = vst.msk [vmem:[%s223 + $0x9c] sm:$0xf] %vm1290, %v1201
      %1331 = vst.msk [vmem:[%s223 + $0xa0] sm:$0xf] %vm1290, %v1202
      %1332 = vst.msk [vmem:[%s223 + $0xa4] sm:$0xf] %vm1290, %v1203
      %1333 = vst.msk [vmem:[%s223 + $0xa8] sm:$0xf] %vm1290, %v1204
      %1334 = vst.msk [vmem:[%s223 + $0xac] sm:$0xf] %vm1290, %v1205
      %1335 = vst.msk [vmem:[%s223 + $0xb0] sm:$0xf] %vm1290, %v1206
      %1336 = vst.msk [vmem:[%s223 + $0xb4] sm:$0xf] %vm1290, %v1207
      %1337 = vst.msk [vmem:[%s223 + $0xb8] sm:$0xf] %vm1290, %v1208
      %1338 = vst.msk [vmem:[%s223 + $0xbc] sm:$0xf] %vm1290, %v1209
      %1339 = vst.msk [vmem:[%s223 + $0xc0] sm:$0xf] %vm1290, %v1210
      %1340 = vst.msk [vmem:[%s223 + $0xc4] sm:$0xf] %vm1290, %v1211
      %1341 = vst.msk [vmem:[%s223 + $0xc8] sm:$0xf] %vm1290, %v1212
      %1342 = vst.msk [vmem:[%s223 + $0xcc] sm:$0xf] %vm1290, %v1213
      %1343 = vst.msk [vmem:[%s223 + $0xd0] sm:$0xf] %vm1290, %v1214
      %1344 = vst.msk [vmem:[%s223 + $0xd4] sm:$0xf] %vm1290, %v1215
      %1345 = vst.msk [vmem:[%s223 + $0xd8] sm:$0xf] %vm1290, %v1216
      %1346 = vst.msk [vmem:[%s223 + $0xdc] sm:$0xf] %vm1290, %v1217
      %1347 = vst.msk [vmem:[%s223 + $0xe0] sm:$0xf] %vm1290, %v1218
      %1348 = vst.msk [vmem:[%s223 + $0xe4] sm:$0xf] %vm1290, %v1219
      %1349 = vst.msk [vmem:[%s223 + $0xe8] sm:$0xf] %vm1290, %v1220
      %1350 = vst.msk [vmem:[%s223 + $0xec] sm:$0xf] %vm1290, %v1221
      %1351 = vst.msk [vmem:[%s223 + $0xf0] sm:$0xf] %vm1290, %v1222
      %1352 = vst.msk [vmem:[%s223 + $0xf4] sm:$0xf] %vm1290, %v1223
      %1353 = vst.msk [vmem:[%s223 + $0xf8] sm:$0xf] %vm1290, %v1224
      %1354 = vst.msk [vmem:[%s223 + $0xfc] sm:$0xf] %vm1290, %v1225
      %s1355 = smul.u32 64, %s18
      %p1356 = scmp.lt.s32.totalorder %s1355, 255
      %s1357 = scalar_select %p1356, %s1355, 255
      %p1358 = scmp.lt.s32.totalorder %s19, 0
      %s1359 = scalar_select %p1358, %s19, 0
      %s1360 = sadd.s32 %s1359, %s1357
      %s1361 = smul.addr %s1360, 4
      %s1362 = scalar_lea.vmem %s3, %s1361
      // Predicated region
      $region33: #{discriminator_forward.4} parent=31 // pred_check
        %p1363 = pneg %p124
      $region34: #{discriminator_forward.4} parent=31 // pred_check_branch
        %1365 = sbr.rel (%p1363) target = $region36
      $region35: #{discriminator_forward.4} parent=31 // pred_region
        %s1366 = smul.u32 64, %s18
      $region36: #{discriminator_forward.4} parent=31 // pred_fallthru
        _
    $region32: #{discriminator_forward.4} parent=5 // pred_fallthru
      _
    %p1367 = scmp.le.s32.totalorder 2, %s9
    // Predicated region
    $region37: #{discriminator_forward.4} parent=5 // pred_check
      %p1368 = pneg %p1367
    $region38: #{discriminator_forward.4} parent=5 // pred_check_branch
      %1370 = sbr.rel (%p1368) target = $region40
    $region39: #{discriminator_forward.4} parent=5 // pred_region
      %s1371 = ssub.s32 %s9, 2
      // Predicated region
      $region41: #{discriminator_forward.4} parent=39 // pred_check
        %p1372 = pneg %p130
      $region42: #{discriminator_forward.4} parent=39 // pred_check_branch
        %1374 = sbr.rel (%p1372) target = $region44
      $region43: #{discriminator_forward.4} parent=39 // pred_region
        %s1375 = smul.u32 64, %s20
        %p1376 = scmp.lt.s32.totalorder %s1375, 255
        %s1377 = scalar_select %p1376, %s1375, 255
        %p1378 = scmp.lt.s32.totalorder %s21, 0
        %s1379 = scalar_select %p1378, %s21, 0
        %s1380 = sadd.s32 %s1379, %s1377
        %s1381 = smul.addr %s1380, 4
        %s1382 = scalar_lea.vmem %s3, %s1381
      $region44: #{discriminator_forward.4} parent=39 // pred_fallthru
        _
    $region40: #{discriminator_forward.4} parent=5 // pred_fallthru
      _
  $region6: #{discriminator_forward.4} parent=0 // loop_footer
    %s13 = sadd.s32 1, %s9
  $region7: #{discriminator_forward.4} parent=0 // loop_footer_branch
    %8 = sbr.rel target = $region3
  $region8: #{discriminator_forward.4} parent=0 // loop_exit
    _

// kernel: discriminator_forward.5
$region0: #{discriminator_forward.5}
  #allocation0 [shape = 'u32[]', space=smem, size = 0x4, offset = 0x4, fixed_abs, tag = 'smem constant byte address 0x4 - core index']
  #allocation1 [shape = 'u32[144,128]{1,0:T(1,128)}', space=vmem, size = 0x12000, scoped, tag = 'internal scratch']
  %s0 = inlined_call_operand.vmem [shape: bf16[512,1024], index: 0, kind: input, shape index: {}]
  %s1 = inlined_call_operand.vmem [shape: bf16[1024,128], index: 1, kind: input, shape index: {}]
  %s2 = inlined_call_operand.vmem [shape: f32[1,128], index: 2, kind: input, shape index: {}]
  %s3 = inlined_call_operand.vmem [shape: bf16[512,128], index: 3, kind: output, shape index: {}]
  %s4 = sld [smem:[#allocation0]]
  $region45: #{discriminator_forward.5} parent=0
    _
  %s6 = ssub.s32 1, %s4
  %s7 = scalar_select 0, %s6, %s4
  loop: start=0, step=1, limit=4
  $region2: #{discriminator_forward.5} parent=0 // loop_pre_header
    _
  $region3: #{discriminator_forward.5} parent=0 // loop_header
    %s9 = sphi 0, %s13
    %p10 = scmp.ge.s32.totalorder %s9, 4
    %s16 = sphi 0, %s28
    %s17 = sphi 0, %s24
    %s18 = sphi 0, %s16
    %s19 = sphi 0, %s17
    %s20 = sphi 0, %s18
    %s21 = sphi 0, %s19
    %s31 = sphi 0, %s33
    %s34 = sphi 0, %s31
    %s35 = sphi 0, %s34
    %s51 = sphi 0, %s35
    %s57 = sphi 0, %s59
    %s60 = sphi 0, %s57
    %s61 = sphi 0, %s60
    %s77 = sphi 0, %s61
    %s83 = sphi 0, %s85
    %s86 = sphi 0, %s83
    %s87 = sphi 0, %s86
    %s103 = sphi 0, %s87
    %s111 = sphi 0, %s113
    %s114 = sphi 0, %s111
    %s115 = sphi 0, %s114
    %s131 = sphi 0, %s115
  $region4: #{discriminator_forward.5} parent=0 // loop_header_branch
    %12 = sbr.rel (%p10) target = $region8
  $region5: #{discriminator_forward.5} parent=0 // loop_body
    %s14 = ssub.s32 %s9, 1
    %s15 = ssub.s32 %s9, 2
    %s22 = sadd.s32 1, %s17
    %p23 = scmp.ge.s32.totalorder %s22, 1
    %s24 = scalar_select %p23, 0, %s22
    %s25 = sadd.s32 1, %s16
    %s26 = scalar_select %p23, %s25, %s16
    %p27 = scmp.ge.s32.totalorder %s26, 2
    %s28 = scalar_select %p27, 0, %s26
    %s29 = ssub.s32 %s16, %s28
    %p30 = scmp.eq.s32.totalorder %s29, 0
    %s32 = sadd.s32 %s31, 1
    %s33 = scalar_select %p30, %s31, %s32
    %p36 = pneg %p30
    %p37 = scmp.eq.s32.totalorder %s9, 1
    %p38 = por %p36, %p37
    %p39 = scmp.ne.s32.totalorder %s31, %s34
    %p40 = scmp.eq.s32.totalorder %s9, 0
    %p41 = por %p39, %p40
    %p42 = scmp.ne.s32.totalorder %s31, %s34
    %p43 = scmp.eq.s32.totalorder %s14, 1
    %p44 = por %p42, %p43
    %p45 = scmp.ne.s32.totalorder %s34, %s35
    %p46 = scmp.eq.s32.totalorder %s14, 0
    %p47 = por %p45, %p46
    %p48 = scmp.ne.s32.totalorder %s34, %s35
    %p49 = scmp.eq.s32.totalorder %s15, 1
    %p50 = por %p48, %p49
    %p52 = scmp.ne.s32.totalorder %s35, %s51
    %p53 = scmp.eq.s32.totalorder %s15, 0
    %p54 = por %p52, %p53
    %s55 = ssub.s32 %s17, %s24
    %p56 = scmp.eq.s32.totalorder %s55, 0
    %s58 = sadd.s32 %s57, 1
    %s59 = scalar_select %p56, %s57, %s58
    %p62 = pneg %p56
    %p63 = scmp.eq.s32.totalorder %s9, 1
    %p64 = por %p62, %p63
    %p65 = scmp.ne.s32.totalorder %s57, %s60
    %p66 = scmp.eq.s32.totalorder %s9, 0
    %p67 = por %p65, %p66
    %p68 = scmp.ne.s32.totalorder %s57, %s60
    %p69 = scmp.eq.s32.totalorder %s14, 1
    %p70 = por %p68, %p69
    %p71 = scmp.ne.s32.totalorder %s60, %s61
    %p72 = scmp.eq.s32.totalorder %s14, 0
    %p73 = por %p71, %p72
    %p74 = scmp.ne.s32.totalorder %s60, %s61
    %p75 = scmp.eq.s32.totalorder %s15, 1
    %p76 = por %p74, %p75
    %p78 = scmp.ne.s32.totalorder %s61, %s77
    %p79 = scmp.eq.s32.totalorder %s15, 0
    %p80 = por %p78, %p79
    %s81 = ssub.s32 %s17, %s24
    %p82 = scmp.eq.s32.totalorder %s81, 0
    %s84 = sadd.s32 %s83, 1
    %s85 = scalar_select %p82, %s83, %s84
    %p88 = pneg %p82
    %p89 = scmp.eq.s32.totalorder %s9, 1
    %p90 = por %p88, %p89
    %p91 = scmp.ne.s32.totalorder %s83, %s86
    %p92 = scmp.eq.s32.totalorder %s9, 0
    %p93 = por %p91, %p92
    %p94 = scmp.ne.s32.totalorder %s83, %s86
    %p95 = scmp.eq.s32.totalorder %s14, 1
    %p96 = por %p94, %p95
    %p97 = scmp.ne.s32.totalorder %s86, %s87
    %p98 = scmp.eq.s32.totalorder %s14, 0
    %p99 = por %p97, %p98
    %p100 = scmp.ne.s32.totalorder %s86, %s87
    %p101 = scmp.eq.s32.totalorder %s15, 1
    %p102 = por %p100, %p101
    %p104 = scmp.ne.s32.totalorder %s87, %s103
    %p105 = scmp.eq.s32.totalorder %s15, 0
    %p106 = por %p104, %p105
    %s107 = ssub.s32 %s16, %s28
    %s108 = ssub.s32 %s17, %s24
    %s109 = sor.u32 %s107, %s108
    %p110 = scmp.eq.s32.totalorder %s109, 0
    %s112 = sadd.s32 %s111, 1
    %s113 = scalar_select %p110, %s111, %s112
    %p116 = pneg %p110
    %p117 = scmp.eq.s32.totalorder %s9, 1
    %p118 = por %p116, %p117
    %p119 = scmp.ne.s32.totalorder %s111, %s114
    %p120 = scmp.eq.s32.totalorder %s9, 0
    %p121 = por %p119, %p120
    %p122 = scmp.ne.s32.totalorder %s111, %s114
    %p123 = scmp.eq.s32.totalorder %s14, 1
    %p124 = por %p122, %p123
    %p125 = scmp.ne.s32.totalorder %s114, %s115
    %p126 = scmp.eq.s32.totalorder %s14, 0
    %p127 = por %p125, %p126
    %p128 = scmp.ne.s32.totalorder %s114, %s115
    %p129 = scmp.eq.s32.totalorder %s15, 1
    %p130 = por %p128, %p129
    %p132 = scmp.ne.s32.totalorder %s115, %s131
    %p133 = scmp.eq.s32.totalorder %s15, 0
    %p134 = por %p132, %p133
    %p135 = scmp.le.s32.totalorder 1, %s9
    %p136 = scmp.lt.s32.totalorder %s9, 3
    %p137 = pnand %p135, %p136
    %p138 = pneg %p137
    // Predicated region
    $region9: #{discriminator_forward.5} parent=5 // pred_check
      _
    $region10: #{discriminator_forward.5} parent=5 // pred_check_branch
      %140 = sbr.rel (%p137) target = $region12
    $region11: #{discriminator_forward.5} parent=5 // pred_region
      %s141 = ssub.s32 %s9, 1
      // Predicated region
      $region13: #{discriminator_forward.5} parent=11 // pred_check
        %p142 = pneg %p73
      $region14: #{discriminator_forward.5} parent=11 // pred_check_branch
        %144 = sbr.rel (%p142) target = $region16
      $region15: #{discriminator_forward.5} parent=11 // pred_region
        %p145 = scmp.lt.s32.totalorder %s19, 0
        %s146 = scalar_select %p145, %s19, 0
        %s147 = smul.addr %s146, 4
        %s148 = scalar_lea.vmem %s1, %s147
      $region16: #{discriminator_forward.5} parent=11 // pred_fallthru
        _
      // Predicated region
      $region17: #{discriminator_forward.5} parent=11 // pred_check
        %p149 = pneg %p99
      $region18: #{discriminator_forward.5} parent=11 // pred_check_branch
        %151 = sbr.rel (%p149) target = $region20
      $region19: #{discriminator_forward.5} parent=11 // pred_region
        %p152 = scmp.lt.s32.totalorder %s19, 0
        %s153 = scalar_select %p152, %s19, 0
        %s154 = scalar_lea.vmem %s2, %s153
      $region20: #{discriminator_forward.5} parent=11 // pred_fallthru
        _
    $region12: #{discriminator_forward.5} parent=5 // pred_fallthru
      _
    %p155 = scmp.lt.s32.totalorder %s9, 2
    // Predicated region
    $region21: #{discriminator_forward.5} parent=5 // pred_check
      %p156 = pneg %p155
    $region22: #{discriminator_forward.5} parent=5 // pred_check_branch
      %158 = sbr.rel (%p156) target = $region24
    $region23: #{discriminator_forward.5} parent=5 // pred_region
      // Predicated region
      $region25: #{discriminator_forward.5} parent=23 // pred_check
        %p159 = pneg %p41
      $region26: #{discriminator_forward.5} parent=23 // pred_check_branch
        %161 = sbr.rel (%p159) target = $region28
      $region27: #{discriminator_forward.5} parent=23 // pred_region
        %s162 = smul.u32 32, %s16
        %p163 = scmp.lt.s32.totalorder %s162, 63
        %s164 = scalar_select %p163, %s162, 63
        %s165 = smul.addr %s164, 8
        %s166 = smul.addr %s165, 4
        %s167 = scalar_lea.vmem %s0, %s166
        %s168 = smul.u32 32, %s16
      $region28: #{discriminator_forward.5} parent=23 // pred_fallthru
        _
    $region24: #{discriminator_forward.5} parent=5 // pred_fallthru
      _
    %p169 = scmp.le.s32.totalorder 1, %s9
    %p170 = scmp.lt.s32.totalorder %s9, 3
    %p171 = pnand %p169, %p170
    %p172 = pneg %p171
    // Predicated region
    $region29: #{discriminator_forward.5} parent=5 // pred_check
      _
    $region30: #{discriminator_forward.5} parent=5 // pred_check_branch
      %174 = sbr.rel (%p171) target = $region32
    $region31: #{discriminator_forward.5} parent=5 // pred_region
      %s175 = ssub.s32 %s9, 1
      %s176 = smul.u32 32, %s18
      %p177 = scmp.lt.s32.totalorder %s176, 63
      %s178 = scalar_select %p177, %s176, 63
      %s179 = smul.addr %s178, 8
      %s180 = smul.addr %s179, 4
      %s181 = scalar_lea.vmem %s0, %s180
      %p182 = pneg %p47
      %p183 = pneg %p44
      %p184 = scmp.lt.s32.totalorder %s19, 0
      %s185 = scalar_select %p184, %s19, 0
      %s186 = smul.addr %s185, 4
      %s187 = scalar_lea.vmem %s1, %s186
      %p188 = pneg %p73
      %p189 = pneg %p70
      %p190 = scmp.lt.s32.totalorder %s19, 0
      %s191 = scalar_select %p190, %s19, 0
      %s192 = scalar_lea.vmem %s2, %s191
      %p193 = pneg %p99
      %p194 = pneg %p96
      %p195 = pneg %p127
      %p196 = pneg %p124
      %s197 = smul.u32 32, %s18
      %p198 = scmp.lt.s32.totalorder %s197, 63
      %s199 = scalar_select %p198, %s197, 63
      %p200 = scmp.lt.s32.totalorder %s19, 0
      %s201 = scalar_select %p200, %s19, 0
      %s202 = sadd.s32 %s201, %s199
      %s203 = smul.addr %s202, 4
      %s204 = scalar_lea.vmem %s3, %s203
      %s205 = smul.u32 32, %s18
      %p206 = scmp.lt.s32.totalorder %s205, 63
      %s207 = scalar_select %p206, %s205, 63
      %s208 = smul.addr %s207, 8
      %s209 = smul.addr %s208, 4
      %s210 = scalar_lea.vmem %s0, %s209
      %s211 = smul.u32 32, %s18
      %p212 = scmp.lt.s32.totalorder %s19, 0
      %s213 = scalar_select %p212, %s19, 0
      %s214 = smul.addr %s213, 4
      %s215 = scalar_lea.vmem %s1, %s214
      %p216 = scmp.lt.s32.totalorder %s19, 0
      %s217 = scalar_select %p216, %s19, 0
      %s218 = scalar_lea.vmem %s2, %s217
      %s219 = smul.u32 32, %s18
      %p220 = scmp.lt.s32.totalorder %s219, 63
      %s221 = scalar_select %p220, %s219, 63
      %p222 = scmp.lt.s32.totalorder %s19, 0
      %s223 = scalar_select %p222, %s19, 0
      %s224 = sadd.s32 %s223, %s221
      %s225 = smul.addr %s224, 4
      %s226 = scalar_lea.vmem %s3, %s225
      %s227 = smul.u32 32, %s18
      %v229 = vld [vmem:[%s210] sm:$0xff]
      %v230 = vld [vmem:[%s210 + $0x8] sm:$0xff]
      %v231 = vld [vmem:[%s210 + $0x10] sm:$0xff]
      %v232 = vld [vmem:[%s210 + $0x18] sm:$0xff]
      %v233 = vld [vmem:[%s210 + $0x20] sm:$0xff]
      %v234 = vld [vmem:[%s210 + $0x28] sm:$0xff]
      %v235 = vld [vmem:[%s210 + $0x30] sm:$0xff]
      %v236 = vld [vmem:[%s210 + $0x38] sm:$0xff]
      %v237 = vld [vmem:[%s210 + $0x40] sm:$0xff]
      %v238 = vld [vmem:[%s210 + $0x48] sm:$0xff]
      %v239 = vld [vmem:[%s210 + $0x50] sm:$0xff]
      %v240 = vld [vmem:[%s210 + $0x58] sm:$0xff]
      %v241 = vld [vmem:[%s210 + $0x60] sm:$0xff]
      %v242 = vld [vmem:[%s210 + $0x68] sm:$0xff]
      %v243 = vld [vmem:[%s210 + $0x70] sm:$0xff]
      %v244 = vld [vmem:[%s210 + $0x78] sm:$0xff]
      %v245 = vld [vmem:[%s210 + $0x80] sm:$0xff]
      %v246 = vld [vmem:[%s210 + $0x88] sm:$0xff]
      %v247 = vld [vmem:[%s210 + $0x90] sm:$0xff]
      %v248 = vld [vmem:[%s210 + $0x98] sm:$0xff]
      %v249 = vld [vmem:[%s210 + $0xa0] sm:$0xff]
      %v250 = vld [vmem:[%s210 + $0xa8] sm:$0xff]
      %v251 = vld [vmem:[%s210 + $0xb0] sm:$0xff]
      %v252 = vld [vmem:[%s210 + $0xb8] sm:$0xff]
      %v253 = vld [vmem:[%s210 + $0xc0] sm:$0xff]
      %v254 = vld [vmem:[%s210 + $0xc8] sm:$0xff]
      %v255 = vld [vmem:[%s210 + $0xd0] sm:$0xff]
      %v256 = vld [vmem:[%s210 + $0xd8] sm:$0xff]
      %v257 = vld [vmem:[%s210 + $0xe0] sm:$0xff]
      %v258 = vld [vmem:[%s210 + $0xe8] sm:$0xff]
      %v259 = vld [vmem:[%s210 + $0xf0] sm:$0xff]
      %v260 = vld [vmem:[%s210 + $0xf8] sm:$0xff]
      %v261 = vld [vmem:[%s210 + $0x100] sm:$0xff]
      %v262 = vld [vmem:[%s210 + $0x108] sm:$0xff]
      %v263 = vld [vmem:[%s210 + $0x110] sm:$0xff]
      %v264 = vld [vmem:[%s210 + $0x118] sm:$0xff]
      %v265 = vld [vmem:[%s210 + $0x120] sm:$0xff]
      %v266 = vld [vmem:[%s210 + $0x128] sm:$0xff]
      %v267 = vld [vmem:[%s210 + $0x130] sm:$0xff]
      %v268 = vld [vmem:[%s210 + $0x138] sm:$0xff]
      %v269 = vld [vmem:[%s210 + $0x140] sm:$0xff]
      %v270 = vld [vmem:[%s210 + $0x148] sm:$0xff]
      %v271 = vld [vmem:[%s210 + $0x150] sm:$0xff]
      %v272 = vld [vmem:[%s210 + $0x158] sm:$0xff]
      %v273 = vld [vmem:[%s210 + $0x160] sm:$0xff]
      %v274 = vld [vmem:[%s210 + $0x168] sm:$0xff]
      %v275 = vld [vmem:[%s210 + $0x170] sm:$0xff]
      %v276 = vld [vmem:[%s210 + $0x178] sm:$0xff]
      %v277 = vld [vmem:[%s210 + $0x180] sm:$0xff]
      %v278 = vld [vmem:[%s210 + $0x188] sm:$0xff]
      %v279 = vld [vmem:[%s210 + $0x190] sm:$0xff]
      %v280 = vld [vmem:[%s210 + $0x198] sm:$0xff]
      %v281 = vld [vmem:[%s210 + $0x1a0] sm:$0xff]
      %v282 = vld [vmem:[%s210 + $0x1a8] sm:$0xff]
      %v283 = vld [vmem:[%s210 + $0x1b0] sm:$0xff]
      %v284 = vld [vmem:[%s210 + $0x1b8] sm:$0xff]
      %v285 = vld [vmem:[%s210 + $0x1c0] sm:$0xff]
      %v286 = vld [vmem:[%s210 + $0x1c8] sm:$0xff]
      %v287 = vld [vmem:[%s210 + $0x1d0] sm:$0xff]
      %v288 = vld [vmem:[%s210 + $0x1d8] sm:$0xff]
      %v289 = vld [vmem:[%s210 + $0x1e0] sm:$0xff]
      %v290 = vld [vmem:[%s210 + $0x1e8] sm:$0xff]
      %v291 = vld [vmem:[%s210 + $0x1f0] sm:$0xff]
      %v292 = vld [vmem:[%s210 + $0x1f8] sm:$0xff]
      %v293 = vld [vmem:[%s210 + $0x200] sm:$0xff]
      %v294 = vld [vmem:[%s210 + $0x208] sm:$0xff]
      %v295 = vld [vmem:[%s210 + $0x210] sm:$0xff]
      %v296 = vld [vmem:[%s210 + $0x218] sm:$0xff]
      %v297 = vld [vmem:[%s210 + $0x220] sm:$0xff]
      %v298 = vld [vmem:[%s210 + $0x228] sm:$0xff]
      %v299 = vld [vmem:[%s210 + $0x230] sm:$0xff]
      %v300 = vld [vmem:[%s210 + $0x238] sm:$0xff]
      %v301 = vld [vmem:[%s210 + $0x240] sm:$0xff]
      %v302 = vld [vmem:[%s210 + $0x248] sm:$0xff]
      %v303 = vld [vmem:[%s210 + $0x250] sm:$0xff]
      %v304 = vld [vmem:[%s210 + $0x258] sm:$0xff]
      %v305 = vld [vmem:[%s210 + $0x260] sm:$0xff]
      %v306 = vld [vmem:[%s210 + $0x268] sm:$0xff]
      %v307 = vld [vmem:[%s210 + $0x270] sm:$0xff]
      %v308 = vld [vmem:[%s210 + $0x278] sm:$0xff]
      %v309 = vld [vmem:[%s210 + $0x280] sm:$0xff]
      %v310 = vld [vmem:[%s210 + $0x288] sm:$0xff]
      %v311 = vld [vmem:[%s210 + $0x290] sm:$0xff]
      %v312 = vld [vmem:[%s210 + $0x298] sm:$0xff]
      %v313 = vld [vmem:[%s210 + $0x2a0] sm:$0xff]
      %v314 = vld [vmem:[%s210 + $0x2a8] sm:$0xff]
      %v315 = vld [vmem:[%s210 + $0x2b0] sm:$0xff]
      %v316 = vld [vmem:[%s210 + $0x2b8] sm:$0xff]
      %v317 = vld [vmem:[%s210 + $0x2c0] sm:$0xff]
      %v318 = vld [vmem:[%s210 + $0x2c8] sm:$0xff]
      %v319 = vld [vmem:[%s210 + $0x2d0] sm:$0xff]
      %v320 = vld [vmem:[%s210 + $0x2d8] sm:$0xff]
      %v321 = vld [vmem:[%s210 + $0x2e0] sm:$0xff]
      %v322 = vld [vmem:[%s210 + $0x2e8] sm:$0xff]
      %v323 = vld [vmem:[%s210 + $0x2f0] sm:$0xff]
      %v324 = vld [vmem:[%s210 + $0x2f8] sm:$0xff]
      %v325 = vld [vmem:[%s210 + $0x300] sm:$0xff]
      %v326 = vld [vmem:[%s210 + $0x308] sm:$0xff]
      %v327 = vld [vmem:[%s210 + $0x310] sm:$0xff]
      %v328 = vld [vmem:[%s210 + $0x318] sm:$0xff]
      %v329 = vld [vmem:[%s210 + $0x320] sm:$0xff]
      %v330 = vld [vmem:[%s210 + $0x328] sm:$0xff]
      %v331 = vld [vmem:[%s210 + $0x330] sm:$0xff]
      %v332 = vld [vmem:[%s210 + $0x338] sm:$0xff]
      %v333 = vld [vmem:[%s210 + $0x340] sm:$0xff]
      %v334 = vld [vmem:[%s210 + $0x348] sm:$0xff]
      %v335 = vld [vmem:[%s210 + $0x350] sm:$0xff]
      %v336 = vld [vmem:[%s210 + $0x358] sm:$0xff]
      %v337 = vld [vmem:[%s210 + $0x360] sm:$0xff]
      %v338 = vld [vmem:[%s210 + $0x368] sm:$0xff]
      %v339 = vld [vmem:[%s210 + $0x370] sm:$0xff]
      %v340 = vld [vmem:[%s210 + $0x378] sm:$0xff]
      %v341 = vld [vmem:[%s210 + $0x380] sm:$0xff]
      %v342 = vld [vmem:[%s210 + $0x388] sm:$0xff]
      %v343 = vld [vmem:[%s210 + $0x390] sm:$0xff]
      %v344 = vld [vmem:[%s210 + $0x398] sm:$0xff]
      %v345 = vld [vmem:[%s210 + $0x3a0] sm:$0xff]
      %v346 = vld [vmem:[%s210 + $0x3a8] sm:$0xff]
      %v347 = vld [vmem:[%s210 + $0x3b0] sm:$0xff]
      %v348 = vld [vmem:[%s210 + $0x3b8] sm:$0xff]
      %v349 = vld [vmem:[%s210 + $0x3c0] sm:$0xff]
      %v350 = vld [vmem:[%s210 + $0x3c8] sm:$0xff]
      %v351 = vld [vmem:[%s210 + $0x3d0] sm:$0xff]
      %v352 = vld [vmem:[%s210 + $0x3d8] sm:$0xff]
      %v353 = vld [vmem:[%s210 + $0x3e0] sm:$0xff]
      %v354 = vld [vmem:[%s210 + $0x3e8] sm:$0xff]
      %v355 = vld [vmem:[%s210 + $0x3f0] sm:$0xff]
      %v356 = vld [vmem:[%s210 + $0x3f8] sm:$0xff]
      %v357 = vld [vmem:[%s215] sm:$0xf]
      %v358 = vld [vmem:[%s215 + $0x4] sm:$0xf]
      %v359 = vld [vmem:[%s215 + $0x8] sm:$0xf]
      %v360 = vld [vmem:[%s215 + $0xc] sm:$0xf]
      %v361 = vld [vmem:[%s215 + $0x10] sm:$0xf]
      %v362 = vld [vmem:[%s215 + $0x14] sm:$0xf]
      %v363 = vld [vmem:[%s215 + $0x18] sm:$0xf]
      %v364 = vld [vmem:[%s215 + $0x1c] sm:$0xf]
      %v365 = vld [vmem:[%s215 + $0x20] sm:$0xf]
      %v366 = vld [vmem:[%s215 + $0x24] sm:$0xf]
      %v367 = vld [vmem:[%s215 + $0x28] sm:$0xf]
      %v368 = vld [vmem:[%s215 + $0x2c] sm:$0xf]
      %v369 = vld [vmem:[%s215 + $0x30] sm:$0xf]
      %v370 = vld [vmem:[%s215 + $0x34] sm:$0xf]
      %v371 = vld [vmem:[%s215 + $0x38] sm:$0xf]
      %v372 = vld [vmem:[%s215 + $0x3c] sm:$0xf]
      %v373 = vld [vmem:[%s215 + $0x40] sm:$0xf]
      %v374 = vld [vmem:[%s215 + $0x44] sm:$0xf]
      %v375 = vld [vmem:[%s215 + $0x48] sm:$0xf]
      %v376 = vld [vmem:[%s215 + $0x4c] sm:$0xf]
      %v377 = vld [vmem:[%s215 + $0x50] sm:$0xf]
      %v378 = vld [vmem:[%s215 + $0x54] sm:$0xf]
      %v379 = vld [vmem:[%s215 + $0x58] sm:$0xf]
      %v380 = vld [vmem:[%s215 + $0x5c] sm:$0xf]
      %v381 = vld [vmem:[%s215 + $0x60] sm:$0xf]
      %v382 = vld [vmem:[%s215 + $0x64] sm:$0xf]
      %v383 = vld [vmem:[%s215 + $0x68] sm:$0xf]
      %v384 = vld [vmem:[%s215 + $0x6c] sm:$0xf]
      %v385 = vld [vmem:[%s215 + $0x70] sm:$0xf]
      %v386 = vld [vmem:[%s215 + $0x74] sm:$0xf]
      %v387 = vld [vmem:[%s215 + $0x78] sm:$0xf]
      %v388 = vld [vmem:[%s215 + $0x7c] sm:$0xf]
      %v389 = vld [vmem:[%s215 + $0x80] sm:$0xf]
      %v390 = vld [vmem:[%s215 + $0x84] sm:$0xf]
      %v391 = vld [vmem:[%s215 + $0x88] sm:$0xf]
      %v392 = vld [vmem:[%s215 + $0x8c] sm:$0xf]
      %v393 = vld [vmem:[%s215 + $0x90] sm:$0xf]
      %v394 = vld [vmem:[%s215 + $0x94] sm:$0xf]
      %v395 = vld [vmem:[%s215 + $0x98] sm:$0xf]
      %v396 = vld [vmem:[%s215 + $0x9c] sm:$0xf]
      %v397 = vld [vmem:[%s215 + $0xa0] sm:$0xf]
      %v398 = vld [vmem:[%s215 + $0xa4] sm:$0xf]
      %v399 = vld [vmem:[%s215 + $0xa8] sm:$0xf]
      %v400 = vld [vmem:[%s215 + $0xac] sm:$0xf]
      %v401 = vld [vmem:[%s215 + $0xb0] sm:$0xf]
      %v402 = vld [vmem:[%s215 + $0xb4] sm:$0xf]
      %v403 = vld [vmem:[%s215 + $0xb8] sm:$0xf]
      %v404 = vld [vmem:[%s215 + $0xbc] sm:$0xf]
      %v405 = vld [vmem:[%s215 + $0xc0] sm:$0xf]
      %v406 = vld [vmem:[%s215 + $0xc4] sm:$0xf]
      %v407 = vld [vmem:[%s215 + $0xc8] sm:$0xf]
      %v408 = vld [vmem:[%s215 + $0xcc] sm:$0xf]
      %v409 = vld [vmem:[%s215 + $0xd0] sm:$0xf]
      %v410 = vld [vmem:[%s215 + $0xd4] sm:$0xf]
      %v411 = vld [vmem:[%s215 + $0xd8] sm:$0xf]
      %v412 = vld [vmem:[%s215 + $0xdc] sm:$0xf]
      %v413 = vld [vmem:[%s215 + $0xe0] sm:$0xf]
      %v414 = vld [vmem:[%s215 + $0xe4] sm:$0xf]
      %v415 = vld [vmem:[%s215 + $0xe8] sm:$0xf]
      %v416 = vld [vmem:[%s215 + $0xec] sm:$0xf]
      %v417 = vld [vmem:[%s215 + $0xf0] sm:$0xf]
      %v418 = vld [vmem:[%s215 + $0xf4] sm:$0xf]
      %v419 = vld [vmem:[%s215 + $0xf8] sm:$0xf]
      %v420 = vld [vmem:[%s215 + $0xfc] sm:$0xf]
      %v421 = vld [vmem:[%s215 + $0x100] sm:$0xf]
      %v422 = vld [vmem:[%s215 + $0x104] sm:$0xf]
      %v423 = vld [vmem:[%s215 + $0x108] sm:$0xf]
      %v424 = vld [vmem:[%s215 + $0x10c] sm:$0xf]
      %v425 = vld [vmem:[%s215 + $0x110] sm:$0xf]
      %v426 = vld [vmem:[%s215 + $0x114] sm:$0xf]
      %v427 = vld [vmem:[%s215 + $0x118] sm:$0xf]
      %v428 = vld [vmem:[%s215 + $0x11c] sm:$0xf]
      %v429 = vld [vmem:[%s215 + $0x120] sm:$0xf]
      %v430 = vld [vmem:[%s215 + $0x124] sm:$0xf]
      %v431 = vld [vmem:[%s215 + $0x128] sm:$0xf]
      %v432 = vld [vmem:[%s215 + $0x12c] sm:$0xf]
      %v433 = vld [vmem:[%s215 + $0x130] sm:$0xf]
      %v434 = vld [vmem:[%s215 + $0x134] sm:$0xf]
      %v435 = vld [vmem:[%s215 + $0x138] sm:$0xf]
      %v436 = vld [vmem:[%s215 + $0x13c] sm:$0xf]
      %v437 = vld [vmem:[%s215 + $0x140] sm:$0xf]
      %v438 = vld [vmem:[%s215 + $0x144] sm:$0xf]
      %v439 = vld [vmem:[%s215 + $0x148] sm:$0xf]
      %v440 = vld [vmem:[%s215 + $0x14c] sm:$0xf]
      %v441 = vld [vmem:[%s215 + $0x150] sm:$0xf]
      %v442 = vld [vmem:[%s215 + $0x154] sm:$0xf]
      %v443 = vld [vmem:[%s215 + $0x158] sm:$0xf]
      %v444 = vld [vmem:[%s215 + $0x15c] sm:$0xf]
      %v445 = vld [vmem:[%s215 + $0x160] sm:$0xf]
      %v446 = vld [vmem:[%s215 + $0x164] sm:$0xf]
      %v447 = vld [vmem:[%s215 + $0x168] sm:$0xf]
      %v448 = vld [vmem:[%s215 + $0x16c] sm:$0xf]
      %v449 = vld [vmem:[%s215 + $0x170] sm:$0xf]
      %v450 = vld [vmem:[%s215 + $0x174] sm:$0xf]
      %v451 = vld [vmem:[%s215 + $0x178] sm:$0xf]
      %v452 = vld [vmem:[%s215 + $0x17c] sm:$0xf]
      %v453 = vld [vmem:[%s215 + $0x180] sm:$0xf]
      %v454 = vld [vmem:[%s215 + $0x184] sm:$0xf]
      %v455 = vld [vmem:[%s215 + $0x188] sm:$0xf]
      %v456 = vld [vmem:[%s215 + $0x18c] sm:$0xf]
      %v457 = vld [vmem:[%s215 + $0x190] sm:$0xf]
      %v458 = vld [vmem:[%s215 + $0x194] sm:$0xf]
      %v459 = vld [vmem:[%s215 + $0x198] sm:$0xf]
      %v460 = vld [vmem:[%s215 + $0x19c] sm:$0xf]
      %v461 = vld [vmem:[%s215 + $0x1a0] sm:$0xf]
      %v462 = vld [vmem:[%s215 + $0x1a4] sm:$0xf]
      %v463 = vld [vmem:[%s215 + $0x1a8] sm:$0xf]
      %v464 = vld [vmem:[%s215 + $0x1ac] sm:$0xf]
      %v465 = vld [vmem:[%s215 + $0x1b0] sm:$0xf]
      %v466 = vld [vmem:[%s215 + $0x1b4] sm:$0xf]
      %v467 = vld [vmem:[%s215 + $0x1b8] sm:$0xf]
      %v468 = vld [vmem:[%s215 + $0x1bc] sm:$0xf]
      %v469 = vld [vmem:[%s215 + $0x1c0] sm:$0xf]
      %v470 = vld [vmem:[%s215 + $0x1c4] sm:$0xf]
      %v471 = vld [vmem:[%s215 + $0x1c8] sm:$0xf]
      %v472 = vld [vmem:[%s215 + $0x1cc] sm:$0xf]
      %v473 = vld [vmem:[%s215 + $0x1d0] sm:$0xf]
      %v474 = vld [vmem:[%s215 + $0x1d4] sm:$0xf]
      %v475 = vld [vmem:[%s215 + $0x1d8] sm:$0xf]
      %v476 = vld [vmem:[%s215 + $0x1dc] sm:$0xf]
      %v477 = vld [vmem:[%s215 + $0x1e0] sm:$0xf]
      %v478 = vld [vmem:[%s215 + $0x1e4] sm:$0xf]
      %v479 = vld [vmem:[%s215 + $0x1e8] sm:$0xf]
      %v480 = vld [vmem:[%s215 + $0x1ec] sm:$0xf]
      %v481 = vld [vmem:[%s215 + $0x1f0] sm:$0xf]
      %v482 = vld [vmem:[%s215 + $0x1f4] sm:$0xf]
      %v483 = vld [vmem:[%s215 + $0x1f8] sm:$0xf]
      %v484 = vld [vmem:[%s215 + $0x1fc] sm:$0xf]
      %v485 = vld [vmem:[%s218] sm:$0x1]
      %v487 = vlaneseq
      %v488 = vshrl.u32 %v487, 7
      %v489 = vsub.s32 0, %v488
      %v490 = vrot.slane %v485, %v489
      %v620 = vunpack.c.l.b16 %v229
      %v621 = vunpack.c.h.b16 %v229
      %v622 = vunpack.c.l.b16 %v230
      %v623 = vunpack.c.h.b16 %v230
      %v624 = vunpack.c.l.b16 %v231
      %v625 = vunpack.c.h.b16 %v231
      %v626 = vunpack.c.l.b16 %v232
      %v627 = vunpack.c.h.b16 %v232
      %v628 = vunpack.c.l.b16 %v233
      %v629 = vunpack.c.h.b16 %v233
      %v630 = vunpack.c.l.b16 %v234
      %v631 = vunpack.c.h.b16 %v234
      %v632 = vunpack.c.l.b16 %v235
      %v633 = vunpack.c.h.b16 %v235
      %v634 = vunpack.c.l.b16 %v236
      %v635 = vunpack.c.h.b16 %v236
      %v636 = vunpack.c.l.b16 %v237
      %v637 = vunpack.c.h.b16 %v237
      %v638 = vunpack.c.l.b16 %v238
      %v639 = vunpack.c.h.b16 %v238
      %v640 = vunpack.c.l.b16 %v239
      %v641 = vunpack.c.h.b16 %v239
      %v642 = vunpack.c.l.b16 %v240
      %v643 = vunpack.c.h.b16 %v240
      %v644 = vunpack.c.l.b16 %v241
      %v645 = vunpack.c.h.b16 %v241
      %v646 = vunpack.c.l.b16 %v242
      %v647 = vunpack.c.h.b16 %v242
      %v648 = vunpack.c.l.b16 %v243
      %v649 = vunpack.c.h.b16 %v243
      %v650 = vunpack.c.l.b16 %v244
      %v651 = vunpack.c.h.b16 %v244
      %v652 = vunpack.c.l.b16 %v245
      %v653 = vunpack.c.h.b16 %v245
      %v654 = vunpack.c.l.b16 %v246
      %v655 = vunpack.c.h.b16 %v246
      %v656 = vunpack.c.l.b16 %v247
      %v657 = vunpack.c.h.b16 %v247
      %v658 = vunpack.c.l.b16 %v248
      %v659 = vunpack.c.h.b16 %v248
      %v660 = vunpack.c.l.b16 %v249
      %v661 = vunpack.c.h.b16 %v249
      %v662 = vunpack.c.l.b16 %v250
      %v663 = vunpack.c.h.b16 %v250
      %v664 = vunpack.c.l.b16 %v251
      %v665 = vunpack.c.h.b16 %v251
      %v666 = vunpack.c.l.b16 %v252
      %v667 = vunpack.c.h.b16 %v252
      %v668 = vunpack.c.l.b16 %v253
      %v669 = vunpack.c.h.b16 %v253
      %v670 = vunpack.c.l.b16 %v254
      %v671 = vunpack.c.h.b16 %v254
      %v672 = vunpack.c.l.b16 %v255
      %v673 = vunpack.c.h.b16 %v255
      %v674 = vunpack.c.l.b16 %v256
      %v675 = vunpack.c.h.b16 %v256
      %v676 = vunpack.c.l.b16 %v257
      %v677 = vunpack.c.h.b16 %v257
      %v678 = vunpack.c.l.b16 %v258
      %v679 = vunpack.c.h.b16 %v258
      %v680 = vunpack.c.l.b16 %v259
      %v681 = vunpack.c.h.b16 %v259
      %v682 = vunpack.c.l.b16 %v260
      %v683 = vunpack.c.h.b16 %v260
      %v684 = vunpack.c.l.b16 %v261
      %v685 = vunpack.c.h.b16 %v261
      %v686 = vunpack.c.l.b16 %v262
      %v687 = vunpack.c.h.b16 %v262
      %v688 = vunpack.c.l.b16 %v263
      %v689 = vunpack.c.h.b16 %v263
      %v690 = vunpack.c.l.b16 %v264
      %v691 = vunpack.c.h.b16 %v264
      %v692 = vunpack.c.l.b16 %v265
      %v693 = vunpack.c.h.b16 %v265
      %v694 = vunpack.c.l.b16 %v266
      %v695 = vunpack.c.h.b16 %v266
      %v696 = vunpack.c.l.b16 %v267
      %v697 = vunpack.c.h.b16 %v267
      %v698 = vunpack.c.l.b16 %v268
      %v699 = vunpack.c.h.b16 %v268
      %v700 = vunpack.c.l.b16 %v269
      %v701 = vunpack.c.h.b16 %v269
      %v702 = vunpack.c.l.b16 %v270
      %v703 = vunpack.c.h.b16 %v270
      %v704 = vunpack.c.l.b16 %v271
      %v705 = vunpack.c.h.b16 %v271
      %v706 = vunpack.c.l.b16 %v272
      %v707 = vunpack.c.h.b16 %v272
      %v708 = vunpack.c.l.b16 %v273
      %v709 = vunpack.c.h.b16 %v273
      %v710 = vunpack.c.l.b16 %v274
      %v711 = vunpack.c.h.b16 %v274
      %v712 = vunpack.c.l.b16 %v275
      %v713 = vunpack.c.h.b16 %v275
      %v714 = vunpack.c.l.b16 %v276
      %v715 = vunpack.c.h.b16 %v276
      %v716 = vunpack.c.l.b16 %v277
      %v717 = vunpack.c.h.b16 %v277
      %v718 = vunpack.c.l.b16 %v278
      %v719 = vunpack.c.h.b16 %v278
      %v720 = vunpack.c.l.b16 %v279
      %v721 = vunpack.c.h.b16 %v279
      %v722 = vunpack.c.l.b16 %v280
      %v723 = vunpack.c.h.b16 %v280
      %v724 = vunpack.c.l.b16 %v281
      %v725 = vunpack.c.h.b16 %v281
      %v726 = vunpack.c.l.b16 %v282
      %v727 = vunpack.c.h.b16 %v282
      %v728 = vunpack.c.l.b16 %v283
      %v729 = vunpack.c.h.b16 %v283
      %v730 = vunpack.c.l.b16 %v284
      %v731 = vunpack.c.h.b16 %v284
      %v732 = vunpack.c.l.b16 %v285
      %v733 = vunpack.c.h.b16 %v285
      %v734 = vunpack.c.l.b16 %v286
      %v735 = vunpack.c.h.b16 %v286
      %v736 = vunpack.c.l.b16 %v287
      %v737 = vunpack.c.h.b16 %v287
      %v738 = vunpack.c.l.b16 %v288
      %v739 = vunpack.c.h.b16 %v288
      %v740 = vunpack.c.l.b16 %v289
      %v741 = vunpack.c.h.b16 %v289
      %v742 = vunpack.c.l.b16 %v290
      %v743 = vunpack.c.h.b16 %v290
      %v744 = vunpack.c.l.b16 %v291
      %v745 = vunpack.c.h.b16 %v291
      %v746 = vunpack.c.l.b16 %v292
      %v747 = vunpack.c.h.b16 %v292
      %v748 = vunpack.c.l.b16 %v293
      %v749 = vunpack.c.h.b16 %v293
      %v750 = vunpack.c.l.b16 %v294
      %v751 = vunpack.c.h.b16 %v294
      %v752 = vunpack.c.l.b16 %v295
      %v753 = vunpack.c.h.b16 %v295
      %v754 = vunpack.c.l.b16 %v296
      %v755 = vunpack.c.h.b16 %v296
      %v756 = vunpack.c.l.b16 %v297
      %v757 = vunpack.c.h.b16 %v297
      %v758 = vunpack.c.l.b16 %v298
      %v759 = vunpack.c.h.b16 %v298
      %v760 = vunpack.c.l.b16 %v299
      %v761 = vunpack.c.h.b16 %v299
      %v762 = vunpack.c.l.b16 %v300
      %v763 = vunpack.c.h.b16 %v300
      %v764 = vunpack.c.l.b16 %v301
      %v765 = vunpack.c.h.b16 %v301
      %v766 = vunpack.c.l.b16 %v302
      %v767 = vunpack.c.h.b16 %v302
      %v768 = vunpack.c.l.b16 %v303
      %v769 = vunpack.c.h.b16 %v303
      %v770 = vunpack.c.l.b16 %v304
      %v771 = vunpack.c.h.b16 %v304
      %v772 = vunpack.c.l.b16 %v305
      %v773 = vunpack.c.h.b16 %v305
      %v774 = vunpack.c.l.b16 %v306
      %v775 = vunpack.c.h.b16 %v306
      %v776 = vunpack.c.l.b16 %v307
      %v777 = vunpack.c.h.b16 %v307
      %v778 = vunpack.c.l.b16 %v308
      %v779 = vunpack.c.h.b16 %v308
      %v780 = vunpack.c.l.b16 %v309
      %v781 = vunpack.c.h.b16 %v309
      %v782 = vunpack.c.l.b16 %v310
      %v783 = vunpack.c.h.b16 %v310
      %v784 = vunpack.c.l.b16 %v311
      %v785 = vunpack.c.h.b16 %v311
      %v786 = vunpack.c.l.b16 %v312
      %v787 = vunpack.c.h.b16 %v312
      %v788 = vunpack.c.l.b16 %v313
      %v789 = vunpack.c.h.b16 %v313
      %v790 = vunpack.c.l.b16 %v314
      %v791 = vunpack.c.h.b16 %v314
      %v792 = vunpack.c.l.b16 %v315
      %v793 = vunpack.c.h.b16 %v315
      %v794 = vunpack.c.l.b16 %v316
      %v795 = vunpack.c.h.b16 %v316
      %v796 = vunpack.c.l.b16 %v317
      %v797 = vunpack.c.h.b16 %v317
      %v798 = vunpack.c.l.b16 %v318
      %v799 = vunpack.c.h.b16 %v318
      %v800 = vunpack.c.l.b16 %v319
      %v801 = vunpack.c.h.b16 %v319
      %v802 = vunpack.c.l.b16 %v320
      %v803 = vunpack.c.h.b16 %v320
      %v804 = vunpack.c.l.b16 %v321
      %v805 = vunpack.c.h.b16 %v321
      %v806 = vunpack.c.l.b16 %v322
      %v807 = vunpack.c.h.b16 %v322
      %v808 = vunpack.c.l.b16 %v323
      %v809 = vunpack.c.h.b16 %v323
      %v810 = vunpack.c.l.b16 %v324
      %v811 = vunpack.c.h.b16 %v324
      %v812 = vunpack.c.l.b16 %v325
      %v813 = vunpack.c.h.b16 %v325
      %v814 = vunpack.c.l.b16 %v326
      %v815 = vunpack.c.h.b16 %v326
      %v816 = vunpack.c.l.b16 %v327
      %v817 = vunpack.c.h.b16 %v327
      %v818 = vunpack.c.l.b16 %v328
      %v819 = vunpack.c.h.b16 %v328
      %v820 = vunpack.c.l.b16 %v329
      %v821 = vunpack.c.h.b16 %v329
      %v822 = vunpack.c.l.b16 %v330
      %v823 = vunpack.c.h.b16 %v330
      %v824 = vunpack.c.l.b16 %v331
      %v825 = vunpack.c.h.b16 %v331
      %v826 = vunpack.c.l.b16 %v332
      %v827 = vunpack.c.h.b16 %v332
      %v828 = vunpack.c.l.b16 %v333
      %v829 = vunpack.c.h.b16 %v333
      %v830 = vunpack.c.l.b16 %v334
      %v831 = vunpack.c.h.b16 %v334
      %v832 = vunpack.c.l.b16 %v335
      %v833 = vunpack.c.h.b16 %v335
      %v834 = vunpack.c.l.b16 %v336
      %v835 = vunpack.c.h.b16 %v336
      %v836 = vunpack.c.l.b16 %v337
      %v837 = vunpack.c.h.b16 %v337
      %v838 = vunpack.c.l.b16 %v338
      %v839 = vunpack.c.h.b16 %v338
      %v840 = vunpack.c.l.b16 %v339
      %v841 = vunpack.c.h.b16 %v339
      %v842 = vunpack.c.l.b16 %v340
      %v843 = vunpack.c.h.b16 %v340
      %v844 = vunpack.c.l.b16 %v341
      %v845 = vunpack.c.h.b16 %v341
      %v846 = vunpack.c.l.b16 %v342
      %v847 = vunpack.c.h.b16 %v342
      %v848 = vunpack.c.l.b16 %v343
      %v849 = vunpack.c.h.b16 %v343
      %v850 = vunpack.c.l.b16 %v344
      %v851 = vunpack.c.h.b16 %v344
      %v852 = vunpack.c.l.b16 %v345
      %v853 = vunpack.c.h.b16 %v345
      %v854 = vunpack.c.l.b16 %v346
      %v855 = vunpack.c.h.b16 %v346
      %v856 = vunpack.c.l.b16 %v347
      %v857 = vunpack.c.h.b16 %v347
      %v858 = vunpack.c.l.b16 %v348
      %v859 = vunpack.c.h.b16 %v348
      %v860 = vunpack.c.l.b16 %v349
      %v861 = vunpack.c.h.b16 %v349
      %v862 = vunpack.c.l.b16 %v350
      %v863 = vunpack.c.h.b16 %v350
      %v864 = vunpack.c.l.b16 %v351
      %v865 = vunpack.c.h.b16 %v351
      %v866 = vunpack.c.l.b16 %v352
      %v867 = vunpack.c.h.b16 %v352
      %v868 = vunpack.c.l.b16 %v353
      %v869 = vunpack.c.h.b16 %v353
      %v870 = vunpack.c.l.b16 %v354
      %v871 = vunpack.c.h.b16 %v354
      %v872 = vunpack.c.l.b16 %v355
      %v873 = vunpack.c.h.b16 %v355
      %v874 = vunpack.c.l.b16 %v356
      %v875 = vunpack.c.h.b16 %v356
      %v876 = vpack.c.b16 %v628, %v620
      %v877 = vpack.c.b16 %v629, %v621
      %v878 = vpack.c.b16 %v630, %v622
      %v879 = vpack.c.b16 %v631, %v623
      %v880 = vpack.c.b16 %v632, %v624
      %v881 = vpack.c.b16 %v633, %v625
      %v882 = vpack.c.b16 %v634, %v626
      %v883 = vpack.c.b16 %v635, %v627
      %v884 = vpack.c.b16 %v644, %v636
      %v885 = vpack.c.b16 %v645, %v637
      %v886 = vpack.c.b16 %v646, %v638
      %v887 = vpack.c.b16 %v647, %v639
      %v888 = vpack.c.b16 %v648, %v640
      %v889 = vpack.c.b16 %v649, %v641
      %v890 = vpack.c.b16 %v650, %v642
      %v891 = vpack.c.b16 %v651, %v643
      %v892 = vpack.c.b16 %v660, %v652
      %v893 = vpack.c.b16 %v661, %v653
      %v894 = vpack.c.b16 %v662, %v654
      %v895 = vpack.c.b16 %v663, %v655
      %v896 = vpack.c.b16 %v664, %v656
      %v897 = vpack.c.b16 %v665, %v657
      %v898 = vpack.c.b16 %v666, %v658
      %v899 = vpack.c.b16 %v667, %v659
      %v900 = vpack.c.b16 %v676, %v668
      %v901 = vpack.c.b16 %v677, %v669
      %v902 = vpack.c.b16 %v678, %v670
      %v903 = vpack.c.b16 %v679, %v671
      %v904 = vpack.c.b16 %v680, %v672
      %v905 = vpack.c.b16 %v681, %v673
      %v906 = vpack.c.b16 %v682, %v674
      %v907 = vpack.c.b16 %v683, %v675
      %v908 = vpack.c.b16 %v692, %v684
      %v909 = vpack.c.b16 %v693, %v685
      %v910 = vpack.c.b16 %v694, %v686
      %v911 = vpack.c.b16 %v695, %v687
      %v912 = vpack.c.b16 %v696, %v688
      %v913 = vpack.c.b16 %v697, %v689
      %v914 = vpack.c.b16 %v698, %v690
      %v915 = vpack.c.b16 %v699, %v691
      %v916 = vpack.c.b16 %v708, %v700
      %v917 = vpack.c.b16 %v709, %v701
      %v918 = vpack.c.b16 %v710, %v702
      %v919 = vpack.c.b16 %v711, %v703
      %v920 = vpack.c.b16 %v712, %v704
      %v921 = vpack.c.b16 %v713, %v705
      %v922 = vpack.c.b16 %v714, %v706
      %v923 = vpack.c.b16 %v715, %v707
      %v924 = vpack.c.b16 %v724, %v716
      %v925 = vpack.c.b16 %v725, %v717
      %v926 = vpack.c.b16 %v726, %v718
      %v927 = vpack.c.b16 %v727, %v719
      %v928 = vpack.c.b16 %v728, %v720
      %v929 = vpack.c.b16 %v729, %v721
      %v930 = vpack.c.b16 %v730, %v722
      %v931 = vpack.c.b16 %v731, %v723
      %v932 = vpack.c.b16 %v740, %v732
      %v933 = vpack.c.b16 %v741, %v733
      %v934 = vpack.c.b16 %v742, %v734
      %v935 = vpack.c.b16 %v743, %v735
      %v936 = vpack.c.b16 %v744, %v736
      %v937 = vpack.c.b16 %v745, %v737
      %v938 = vpack.c.b16 %v746, %v738
      %v939 = vpack.c.b16 %v747, %v739
      %v940 = vpack.c.b16 %v756, %v748
      %v941 = vpack.c.b16 %v757, %v749
      %v942 = vpack.c.b16 %v758, %v750
      %v943 = vpack.c.b16 %v759, %v751
      %v944 = vpack.c.b16 %v760, %v752
      %v945 = vpack.c.b16 %v761, %v753
      %v946 = vpack.c.b16 %v762, %v754
      %v947 = vpack.c.b16 %v763, %v755
      %v948 = vpack.c.b16 %v772, %v764
      %v949 = vpack.c.b16 %v773, %v765
      %v950 = vpack.c.b16 %v774, %v766
      %v951 = vpack.c.b16 %v775, %v767
      %v952 = vpack.c.b16 %v776, %v768
      %v953 = vpack.c.b16 %v777, %v769
      %v954 = vpack.c.b16 %v778, %v770
      %v955 = vpack.c.b16 %v779, %v771
      %v956 = vpack.c.b16 %v788, %v780
      %v957 = vpack.c.b16 %v789, %v781
      %v958 = vpack.c.b16 %v790, %v782
      %v959 = vpack.c.b16 %v791, %v783
      %v960 = vpack.c.b16 %v792, %v784
      %v961 = vpack.c.b16 %v793, %v785
      %v962 = vpack.c.b16 %v794, %v786
      %v963 = vpack.c.b16 %v795, %v787
      %v964 = vpack.c.b16 %v804, %v796
      %v965 = vpack.c.b16 %v805, %v797
      %v966 = vpack.c.b16 %v806, %v798
      %v967 = vpack.c.b16 %v807, %v799
      %v968 = vpack.c.b16 %v808, %v800
      %v969 = vpack.c.b16 %v809, %v801
      %v970 = vpack.c.b16 %v810, %v802
      %v971 = vpack.c.b16 %v811, %v803
      %v972 = vpack.c.b16 %v820, %v812
      %v973 = vpack.c.b16 %v821, %v813
      %v974 = vpack.c.b16 %v822, %v814
      %v975 = vpack.c.b16 %v823, %v815
      %v976 = vpack.c.b16 %v824, %v816
      %v977 = vpack.c.b16 %v825, %v817
      %v978 = vpack.c.b16 %v826, %v818
      %v979 = vpack.c.b16 %v827, %v819
      %v980 = vpack.c.b16 %v836, %v828
      %v981 = vpack.c.b16 %v837, %v829
      %v982 = vpack.c.b16 %v838, %v830
      %v983 = vpack.c.b16 %v839, %v831
      %v984 = vpack.c.b16 %v840, %v832
      %v985 = vpack.c.b16 %v841, %v833
      %v986 = vpack.c.b16 %v842, %v834
      %v987 = vpack.c.b16 %v843, %v835
      %v988 = vpack.c.b16 %v852, %v844
      %v989 = vpack.c.b16 %v853, %v845
      %v990 = vpack.c.b16 %v854, %v846
      %v991 = vpack.c.b16 %v855, %v847
      %v992 = vpack.c.b16 %v856, %v848
      %v993 = vpack.c.b16 %v857, %v849
      %v994 = vpack.c.b16 %v858, %v850
      %v995 = vpack.c.b16 %v859, %v851
      %v996 = vpack.c.b16 %v868, %v860
      %v997 = vpack.c.b16 %v869, %v861
      %v998 = vpack.c.b16 %v870, %v862
      %v999 = vpack.c.b16 %v871, %v863
      %v1000 = vpack.c.b16 %v872, %v864
      %v1001 = vpack.c.b16 %v873, %v865
      %v1002 = vpack.c.b16 %v874, %v866
      %v1003 = vpack.c.b16 %v875, %v867
      %v1260 = vunpack.c.l.b16 %v357
      %v1261 = vunpack.c.l.b16 %v358
      %v1262 = vunpack.c.l.b16 %v359
      %v1263 = vunpack.c.l.b16 %v360
      %v1264 = vunpack.c.l.b16 %v361
      %v1265 = vunpack.c.l.b16 %v362
      %v1266 = vunpack.c.l.b16 %v363
      %v1267 = vunpack.c.l.b16 %v364
      %v1268 = vunpack.c.l.b16 %v365
      %v1269 = vunpack.c.l.b16 %v366
      %v1270 = vunpack.c.l.b16 %v367
      %v1271 = vunpack.c.l.b16 %v368
      %v1272 = vunpack.c.l.b16 %v369
      %v1273 = vunpack.c.l.b16 %v370
      %v1274 = vunpack.c.l.b16 %v371
      %v1275 = vunpack.c.l.b16 %v372
      %v1276 = vunpack.c.l.b16 %v373
      %v1277 = vunpack.c.l.b16 %v374
      %v1278 = vunpack.c.l.b16 %v375
      %v1279 = vunpack.c.l.b16 %v376
      %v1280 = vunpack.c.l.b16 %v377
      %v1281 = vunpack.c.l.b16 %v378
      %v1282 = vunpack.c.l.b16 %v379
      %v1283 = vunpack.c.l.b16 %v380
      %v1284 = vunpack.c.l.b16 %v381
      %v1285 = vunpack.c.l.b16 %v382
      %v1286 = vunpack.c.l.b16 %v383
      %v1287 = vunpack.c.l.b16 %v384
      %v1288 = vunpack.c.l.b16 %v385
      %v1289 = vunpack.c.l.b16 %v386
      %v1290 = vunpack.c.l.b16 %v387
      %v1291 = vunpack.c.l.b16 %v388
      %v1292 = vunpack.c.l.b16 %v389
      %v1293 = vunpack.c.l.b16 %v390
      %v1294 = vunpack.c.l.b16 %v391
      %v1295 = vunpack.c.l.b16 %v392
      %v1296 = vunpack.c.l.b16 %v393
      %v1297 = vunpack.c.l.b16 %v394
      %v1298 = vunpack.c.l.b16 %v395
      %v1299 = vunpack.c.l.b16 %v396
      %v1300 = vunpack.c.l.b16 %v397
      %v1301 = vunpack.c.l.b16 %v398
      %v1302 = vunpack.c.l.b16 %v399
      %v1303 = vunpack.c.l.b16 %v400
      %v1304 = vunpack.c.l.b16 %v401
      %v1305 = vunpack.c.l.b16 %v402
      %v1306 = vunpack.c.l.b16 %v403
      %v1307 = vunpack.c.l.b16 %v404
      %v1308 = vunpack.c.l.b16 %v405
      %v1309 = vunpack.c.l.b16 %v406
      %v1310 = vunpack.c.l.b16 %v407
      %v1311 = vunpack.c.l.b16 %v408
      %v1312 = vunpack.c.l.b16 %v409
      %v1313 = vunpack.c.l.b16 %v410
      %v1314 = vunpack.c.l.b16 %v411
      %v1315 = vunpack.c.l.b16 %v412
      %v1316 = vunpack.c.l.b16 %v413
      %v1317 = vunpack.c.l.b16 %v414
      %v1318 = vunpack.c.l.b16 %v415
      %v1319 = vunpack.c.l.b16 %v416
      %v1320 = vunpack.c.l.b16 %v417
      %v1321 = vunpack.c.l.b16 %v418
      %v1322 = vunpack.c.l.b16 %v419
      %v1323 = vunpack.c.l.b16 %v420
      %v1324 = vunpack.c.l.b16 %v421
      %v1325 = vunpack.c.l.b16 %v422
      %v1326 = vunpack.c.l.b16 %v423
      %v1327 = vunpack.c.l.b16 %v424
      %v1328 = vunpack.c.l.b16 %v425
      %v1329 = vunpack.c.l.b16 %v426
      %v1330 = vunpack.c.l.b16 %v427
      %v1331 = vunpack.c.l.b16 %v428
      %v1332 = vunpack.c.l.b16 %v429
      %v1333 = vunpack.c.l.b16 %v430
      %v1334 = vunpack.c.l.b16 %v431
      %v1335 = vunpack.c.l.b16 %v432
      %v1336 = vunpack.c.l.b16 %v433
      %v1337 = vunpack.c.l.b16 %v434
      %v1338 = vunpack.c.l.b16 %v435
      %v1339 = vunpack.c.l.b16 %v436
      %v1340 = vunpack.c.l.b16 %v437
      %v1341 = vunpack.c.l.b16 %v438
      %v1342 = vunpack.c.l.b16 %v439
      %v1343 = vunpack.c.l.b16 %v440
      %v1344 = vunpack.c.l.b16 %v441
      %v1345 = vunpack.c.l.b16 %v442
      %v1346 = vunpack.c.l.b16 %v443
      %v1347 = vunpack.c.l.b16 %v444
      %v1348 = vunpack.c.l.b16 %v445
      %v1349 = vunpack.c.l.b16 %v446
      %v1350 = vunpack.c.l.b16 %v447
      %v1351 = vunpack.c.l.b16 %v448
      %v1352 = vunpack.c.l.b16 %v449
      %v1353 = vunpack.c.l.b16 %v450
      %v1354 = vunpack.c.l.b16 %v451
      %v1355 = vunpack.c.l.b16 %v452
      %v1356 = vunpack.c.l.b16 %v453
      %v1357 = vunpack.c.l.b16 %v454
      %v1358 = vunpack.c.l.b16 %v455
      %v1359 = vunpack.c.l.b16 %v456
      %v1360 = vunpack.c.l.b16 %v457
      %v1361 = vunpack.c.l.b16 %v458
      %v1362 = vunpack.c.l.b16 %v459
      %v1363 = vunpack.c.l.b16 %v460
      %v1364 = vunpack.c.l.b16 %v461
      %v1365 = vunpack.c.l.b16 %v462
      %v1366 = vunpack.c.l.b16 %v463
      %v1367 = vunpack.c.l.b16 %v464
      %v1368 = vunpack.c.l.b16 %v465
      %v1369 = vunpack.c.l.b16 %v466
      %v1370 = vunpack.c.l.b16 %v467
      %v1371 = vunpack.c.l.b16 %v468
      %v1372 = vunpack.c.l.b16 %v469
      %v1373 = vunpack.c.l.b16 %v470
      %v1374 = vunpack.c.l.b16 %v471
      %v1375 = vunpack.c.l.b16 %v472
      %v1376 = vunpack.c.l.b16 %v473
      %v1377 = vunpack.c.l.b16 %v474
      %v1378 = vunpack.c.l.b16 %v475
      %v1379 = vunpack.c.l.b16 %v476
      %v1380 = vunpack.c.l.b16 %v477
      %v1381 = vunpack.c.l.b16 %v478
      %v1382 = vunpack.c.l.b16 %v479
      %v1383 = vunpack.c.l.b16 %v480
      %v1384 = vunpack.c.l.b16 %v481
      %v1385 = vunpack.c.l.b16 %v482
      %v1386 = vunpack.c.l.b16 %v483
      %v1387 = vunpack.c.l.b16 %v484
      %v1388 = vpack.c.b16 %v1261, %v1260
      %v1389 = vpack.c.b16 %v1263, %v1262
      %v1390 = vpack.c.b16 %v1265, %v1264
      %v1391 = vpack.c.b16 %v1267, %v1266
      %v1392 = vpack.c.b16 %v1269, %v1268
      %v1393 = vpack.c.b16 %v1271, %v1270
      %v1394 = vpack.c.b16 %v1273, %v1272
      %v1395 = vpack.c.b16 %v1275, %v1274
      %v1396 = vpack.c.b16 %v1277, %v1276
      %v1397 = vpack.c.b16 %v1279, %v1278
      %v1398 = vpack.c.b16 %v1281, %v1280
      %v1399 = vpack.c.b16 %v1283, %v1282
      %v1400 = vpack.c.b16 %v1285, %v1284
      %v1401 = vpack.c.b16 %v1287, %v1286
      %v1402 = vpack.c.b16 %v1289, %v1288
      %v1403 = vpack.c.b16 %v1291, %v1290
      %v1404 = vpack.c.b16 %v1293, %v1292
      %v1405 = vpack.c.b16 %v1295, %v1294
      %v1406 = vpack.c.b16 %v1297, %v1296
      %v1407 = vpack.c.b16 %v1299, %v1298
      %v1408 = vpack.c.b16 %v1301, %v1300
      %v1409 = vpack.c.b16 %v1303, %v1302
      %v1410 = vpack.c.b16 %v1305, %v1304
      %v1411 = vpack.c.b16 %v1307, %v1306
      %v1412 = vpack.c.b16 %v1309, %v1308
      %v1413 = vpack.c.b16 %v1311, %v1310
      %v1414 = vpack.c.b16 %v1313, %v1312
      %v1415 = vpack.c.b16 %v1315, %v1314
      %v1416 = vpack.c.b16 %v1317, %v1316
      %v1417 = vpack.c.b16 %v1319, %v1318
      %v1418 = vpack.c.b16 %v1321, %v1320
      %v1419 = vpack.c.b16 %v1323, %v1322
      %v1420 = vpack.c.b16 %v1325, %v1324
      %v1421 = vpack.c.b16 %v1327, %v1326
      %v1422 = vpack.c.b16 %v1329, %v1328
      %v1423 = vpack.c.b16 %v1331, %v1330
      %v1424 = vpack.c.b16 %v1333, %v1332
      %v1425 = vpack.c.b16 %v1335, %v1334
      %v1426 = vpack.c.b16 %v1337, %v1336
      %v1427 = vpack.c.b16 %v1339, %v1338
      %v1428 = vpack.c.b16 %v1341, %v1340
      %v1429 = vpack.c.b16 %v1343, %v1342
      %v1430 = vpack.c.b16 %v1345, %v1344
      %v1431 = vpack.c.b16 %v1347, %v1346
      %v1432 = vpack.c.b16 %v1349, %v1348
      %v1433 = vpack.c.b16 %v1351, %v1350
      %v1434 = vpack.c.b16 %v1353, %v1352
      %v1435 = vpack.c.b16 %v1355, %v1354
      %v1436 = vpack.c.b16 %v1357, %v1356
      %v1437 = vpack.c.b16 %v1359, %v1358
      %v1438 = vpack.c.b16 %v1361, %v1360
      %v1439 = vpack.c.b16 %v1363, %v1362
      %v1440 = vpack.c.b16 %v1365, %v1364
      %v1441 = vpack.c.b16 %v1367, %v1366
      %v1442 = vpack.c.b16 %v1369, %v1368
      %v1443 = vpack.c.b16 %v1371, %v1370
      %v1444 = vpack.c.b16 %v1373, %v1372
      %v1445 = vpack.c.b16 %v1375, %v1374
      %v1446 = vpack.c.b16 %v1377, %v1376
      %v1447 = vpack.c.b16 %v1379, %v1378
      %v1448 = vpack.c.b16 %v1381, %v1380
      %v1449 = vpack.c.b16 %v1383, %v1382
      %v1450 = vpack.c.b16 %v1385, %v1384
      %v1451 = vpack.c.b16 %v1387, %v1386
      %1516 = vmatprep.subr.bf16.mxu0 0
      %1517 = vmatpush1.bf16.msra.mxu0 %v1395
      %1518 = vmatprep.subr.bf16.mxu0 0
      %1519 = vmatpush1.bf16.msra.mxu0 %v1394
      %1520 = vmatprep.subr.bf16.mxu0 0
      %1521 = vmatpush1.bf16.msra.mxu0 %v1393
      %1522 = vmatprep.subr.bf16.mxu0 0
      %1523 = vmatpush1.bf16.msra.mxu0 %v1392
      %1524 = vmatprep.subr.bf16.mxu0 0
      %1525 = vmatpush1.bf16.msra.mxu0 %v1391
      %1526 = vmatprep.subr.bf16.mxu0 0
      %1527 = vmatpush1.bf16.msra.mxu0 %v1390
      %1528 = vmatprep.subr.bf16.mxu0 0
      %1529 = vmatpush1.bf16.msra.mxu0 %v1389
      %1530 = vmatprep.subr.bf16.mxu0 0
      %1531 = vmatpush1.bf16.msra.mxu0 %v1388
      %1532 = vmatprep.subr.bf16.mxu0 0
      %1533 = vmatpush2.bf16.msra.mxu0 %v1403
      %1534 = vmatprep.subr.bf16.mxu0 0
      %1535 = vmatpush2.bf16.msra.mxu0 %v1402
      %1536 = vmatprep.subr.bf16.mxu0 0
      %1537 = vmatpush2.bf16.msra.mxu0 %v1401
      %1538 = vmatprep.subr.bf16.mxu0 0
      %1539 = vmatpush2.bf16.msra.mxu0 %v1400
      %1540 = vmatprep.subr.bf16.mxu0 0
      %1541 = vmatpush2.bf16.msra.mxu0 %v1399
      %1542 = vmatprep.subr.bf16.mxu0 0
      %1543 = vmatpush2.bf16.msra.mxu0 %v1398
      %1544 = vmatprep.subr.bf16.mxu0 0
      %1545 = vmatpush2.bf16.msra.mxu0 %v1397
      %1546 = vmatprep.subr.bf16.mxu0 0
      %1547 = vmatpush2.bf16.msra.mxu0 %v1396
      %1548 = vmatprep.mubr.bf16.mxu0 %v877
      %1549 = vmatmul.mubr.bf16.gmra.mxu0 %v876
      %v1550 = vpop.f32.mrf.mxu0
      %v1551 = vadd.f32 %v490, %v1550
      %v1552 = vpop.f32.mrf.mxu0
      %v1553 = vpop.f32.mrf.mxu0
      %v1554 = vadd.f32 %v490, %v1553
      %v1555 = vpop.f32.mrf.mxu0
      %1556 = vmatprep.mubr.bf16.mxu0 %v885
      %1557 = vmatmul.mubr.bf16.gmra.mxu0 %v884
      %v1558 = vpop.f32.mrf.mxu0
      %v1559 = vadd.f32 %v490, %v1558
      %v1560 = vpop.f32.mrf.mxu0
      %v1561 = vpop.f32.mrf.mxu0
      %v1562 = vadd.f32 %v490, %v1561
      %v1563 = vpop.f32.mrf.mxu0
      %1564 = vmatprep.mubr.bf16.mxu0 %v893
      %1565 = vmatmul.mubr.bf16.gmra.mxu0 %v892
      %v1566 = vpop.f32.mrf.mxu0
      %v1567 = vadd.f32 %v490, %v1566
      %v1568 = vpop.f32.mrf.mxu0
      %v1569 = vpop.f32.mrf.mxu0
      %v1570 = vadd.f32 %v490, %v1569
      %v1571 = vpop.f32.mrf.mxu0
      %1572 = vmatprep.mubr.bf16.mxu0 %v901
      %1573 = vmatmul.mubr.bf16.gmra.mxu0 %v900
      %v1574 = vpop.f32.mrf.mxu0
      %v1575 = vadd.f32 %v490, %v1574
      %v1576 = vpop.f32.mrf.mxu0
      %v1577 = vpop.f32.mrf.mxu0
      %v1578 = vadd.f32 %v490, %v1577
      %v1579 = vpop.f32.mrf.mxu0
      %1580 = vmatprep.mubr.bf16.mxu0 %v909
      %1581 = vmatmul.mubr.bf16.gmra.mxu0 %v908
      %v1582 = vpop.f32.mrf.mxu0
      %v1583 = vadd.f32 %v490, %v1582
      %v1584 = vpop.f32.mrf.mxu0
      %v1585 = vpop.f32.mrf.mxu0
      %v1586 = vadd.f32 %v490, %v1585
      %v1587 = vpop.f32.mrf.mxu0
      %1588 = vmatprep.mubr.bf16.mxu0 %v917
      %1589 = vmatmul.mubr.bf16.gmra.mxu0 %v916
      %v1590 = vpop.f32.mrf.mxu0
      %v1591 = vadd.f32 %v490, %v1590
      %v1592 = vpop.f32.mrf.mxu0
      %v1593 = vpop.f32.mrf.mxu0
      %v1594 = vadd.f32 %v490, %v1593
      %v1595 = vpop.f32.mrf.mxu0
      %1596 = vmatprep.mubr.bf16.mxu0 %v925
      %1597 = vmatmul.mubr.bf16.gmra.mxu0 %v924
      %v1598 = vpop.f32.mrf.mxu0
      %v1599 = vadd.f32 %v490, %v1598
      %v1600 = vpop.f32.mrf.mxu0
      %v1601 = vpop.f32.mrf.mxu0
      %v1602 = vadd.f32 %v490, %v1601
      %v1603 = vpop.f32.mrf.mxu0
      %1604 = vmatprep.mubr.bf16.mxu0 %v933
      %1605 = vmatmul.mubr.bf16.gmra.mxu0 %v932
      %v1606 = vpop.f32.mrf.mxu0
      %v1607 = vadd.f32 %v490, %v1606
      %v1608 = vpop.f32.mrf.mxu0
      %v1609 = vpop.f32.mrf.mxu0
      %v1610 = vadd.f32 %v490, %v1609
      %v1611 = vpop.f32.mrf.mxu0
      %1612 = vmatprep.mubr.bf16.mxu0 %v941
      %1613 = vmatmul.mubr.bf16.gmra.mxu0 %v940
      %v1614 = vpop.f32.mrf.mxu0
      %v1615 = vadd.f32 %v490, %v1614
      %v1616 = vpop.f32.mrf.mxu0
      %v1617 = vpop.f32.mrf.mxu0
      %v1618 = vadd.f32 %v490, %v1617
      %v1619 = vpop.f32.mrf.mxu0
      %1620 = vmatprep.mubr.bf16.mxu0 %v949
      %1621 = vmatmul.mubr.bf16.gmra.mxu0 %v948
      %v1622 = vpop.f32.mrf.mxu0
      %v1623 = vadd.f32 %v490, %v1622
      %v1624 = vpop.f32.mrf.mxu0
      %v1625 = vpop.f32.mrf.mxu0
      %v1626 = vadd.f32 %v490, %v1625
      %v1627 = vpop.f32.mrf.mxu0
      %1628 = vmatprep.mubr.bf16.mxu0 %v957
      %1629 = vmatmul.mubr.bf16.gmra.mxu0 %v956
      %v1630 = vpop.f32.mrf.mxu0
      %v1631 = vadd.f32 %v490, %v1630
      %v1632 = vpop.f32.mrf.mxu0
      %v1633 = vpop.f32.mrf.mxu0
      %v1634 = vadd.f32 %v490, %v1633
      %v1635 = vpop.f32.mrf.mxu0
      %1636 = vmatprep.mubr.bf16.mxu0 %v965
      %1637 = vmatmul.mubr.bf16.gmra.mxu0 %v964
      %v1638 = vpop.f32.mrf.mxu0
      %v1639 = vadd.f32 %v490, %v1638
      %v1640 = vpop.f32.mrf.mxu0
      %v1641 = vpop.f32.mrf.mxu0
      %v1642 = vadd.f32 %v490, %v1641
      %v1643 = vpop.f32.mrf.mxu0
      %1644 = vmatprep.mubr.bf16.mxu0 %v973
      %1645 = vmatmul.mubr.bf16.gmra.mxu0 %v972
      %v1646 = vpop.f32.mrf.mxu0
      %v1647 = vadd.f32 %v490, %v1646
      %v1648 = vpop.f32.mrf.mxu0
      %v1649 = vpop.f32.mrf.mxu0
      %v1650 = vadd.f32 %v490, %v1649
      %v1651 = vpop.f32.mrf.mxu0
      %1652 = vmatprep.mubr.bf16.mxu0 %v981
      %1653 = vmatmul.mubr.bf16.gmra.mxu0 %v980
      %v1654 = vpop.f32.mrf.mxu0
      %v1655 = vadd.f32 %v490, %v1654
      %v1656 = vpop.f32.mrf.mxu0
      %v1657 = vpop.f32.mrf.mxu0
      %v1658 = vadd.f32 %v490, %v1657
      %v1659 = vpop.f32.mrf.mxu0
      %1660 = vmatprep.mubr.bf16.mxu0 %v989
      %1661 = vmatmul.mubr.bf16.gmra.mxu0 %v988
      %v1662 = vpop.f32.mrf.mxu0
      %v1663 = vadd.f32 %v490, %v1662
      %v1664 = vpop.f32.mrf.mxu0
      %v1665 = vpop.f32.mrf.mxu0
      %v1666 = vadd.f32 %v490, %v1665
      %v1667 = vpop.f32.mrf.mxu0
      %1668 = vmatprep.mubr.bf16.mxu0 %v997
      %1669 = vmatmul.mubr.bf16.gmra.mxu0 %v996
      %v1670 = vpop.f32.mrf.mxu0
      %v1671 = vadd.f32 %v490, %v1670
      %v1672 = vpop.f32.mrf.mxu0
      %v1673 = vpop.f32.mrf.mxu0
      %v1674 = vadd.f32 %v490, %v1673
      %v1675 = vpop.f32.mrf.mxu0
      %1676 = vdwg.mxu0
      %1677 = vmatprep.subr.bf16.mxu0 0
      %1678 = vmatpush1.bf16.msra.mxu0 %v1411
      %1679 = vmatprep.subr.bf16.mxu0 0
      %1680 = vmatpush1.bf16.msra.mxu0 %v1410
      %1681 = vmatprep.subr.bf16.mxu0 0
      %1682 = vmatpush1.bf16.msra.mxu0 %v1409
      %1683 = vmatprep.subr.bf16.mxu0 0
      %1684 = vmatpush1.bf16.msra.mxu0 %v1408
      %1685 = vmatprep.subr.bf16.mxu0 0
      %1686 = vmatpush1.bf16.msra.mxu0 %v1407
      %1687 = vmatprep.subr.bf16.mxu0 0
      %1688 = vmatpush1.bf16.msra.mxu0 %v1406
      %1689 = vmatprep.subr.bf16.mxu0 0
      %1690 = vmatpush1.bf16.msra.mxu0 %v1405
      %1691 = vmatprep.subr.bf16.mxu0 0
      %1692 = vmatpush1.bf16.msra.mxu0 %v1404
      %1693 = vmatprep.subr.bf16.mxu0 0
      %1694 = vmatpush2.bf16.msra.mxu0 %v1419
      %1695 = vmatprep.subr.bf16.mxu0 0
      %1696 = vmatpush2.bf16.msra.mxu0 %v1418
      %1697 = vmatprep.subr.bf16.mxu0 0
      %1698 = vmatpush2.bf16.msra.mxu0 %v1417
      %1699 = vmatprep.subr.bf16.mxu0 0
      %1700 = vmatpush2.bf16.msra.mxu0 %v1416
      %1701 = vmatprep.subr.bf16.mxu0 0
      %1702 = vmatpush2.bf16.msra.mxu0 %v1415
      %1703 = vmatprep.subr.bf16.mxu0 0
      %1704 = vmatpush2.bf16.msra.mxu0 %v1414
      %1705 = vmatprep.subr.bf16.mxu0 0
      %1706 = vmatpush2.bf16.msra.mxu0 %v1413
      %1707 = vmatprep.subr.bf16.mxu0 0
      %1708 = vmatpush2.bf16.msra.mxu0 %v1412
      %1709 = vmatprep.mubr.bf16.mxu0 %v879
      %1710 = vmatmul.mubr.bf16.gmra.mxu0 %v878
      %v1711 = vpop.f32.mrf.mxu0
      %v1712 = vadd.f32 %v1551, %v1711
      %v1713 = vpop.f32.mrf.mxu0
      %v1714 = vpop.f32.mrf.mxu0
      %v1715 = vadd.f32 %v1554, %v1714
      %v1716 = vpop.f32.mrf.mxu0
      %1717 = vmatprep.mubr.bf16.mxu0 %v887
      %1718 = vmatmul.mubr.bf16.gmra.mxu0 %v886
      %v1719 = vpop.f32.mrf.mxu0
      %v1720 = vadd.f32 %v1559, %v1719
      %v1721 = vpop.f32.mrf.mxu0
      %v1722 = vpop.f32.mrf.mxu0
      %v1723 = vadd.f32 %v1562, %v1722
      %v1724 = vpop.f32.mrf.mxu0
      %1725 = vmatprep.mubr.bf16.mxu0 %v895
      %1726 = vmatmul.mubr.bf16.gmra.mxu0 %v894
      %v1727 = vpop.f32.mrf.mxu0
      %v1728 = vadd.f32 %v1567, %v1727
      %v1729 = vpop.f32.mrf.mxu0
      %v1730 = vpop.f32.mrf.mxu0
      %v1731 = vadd.f32 %v1570, %v1730
      %v1732 = vpop.f32.mrf.mxu0
      %1733 = vmatprep.mubr.bf16.mxu0 %v903
      %1734 = vmatmul.mubr.bf16.gmra.mxu0 %v902
      %v1735 = vpop.f32.mrf.mxu0
      %v1736 = vadd.f32 %v1575, %v1735
      %v1737 = vpop.f32.mrf.mxu0
      %v1738 = vpop.f32.mrf.mxu0
      %v1739 = vadd.f32 %v1578, %v1738
      %v1740 = vpop.f32.mrf.mxu0
      %1741 = vmatprep.mubr.bf16.mxu0 %v911
      %1742 = vmatmul.mubr.bf16.gmra.mxu0 %v910
      %v1743 = vpop.f32.mrf.mxu0
      %v1744 = vadd.f32 %v1583, %v1743
      %v1745 = vpop.f32.mrf.mxu0
      %v1746 = vpop.f32.mrf.mxu0
      %v1747 = vadd.f32 %v1586, %v1746
      %v1748 = vpop.f32.mrf.mxu0
      %1749 = vmatprep.mubr.bf16.mxu0 %v919
      %1750 = vmatmul.mubr.bf16.gmra.mxu0 %v918
      %v1751 = vpop.f32.mrf.mxu0
      %v1752 = vadd.f32 %v1591, %v1751
      %v1753 = vpop.f32.mrf.mxu0
      %v1754 = vpop.f32.mrf.mxu0
      %v1755 = vadd.f32 %v1594, %v1754
      %v1756 = vpop.f32.mrf.mxu0
      %1757 = vmatprep.mubr.bf16.mxu0 %v927
      %1758 = vmatmul.mubr.bf16.gmra.mxu0 %v926
      %v1759 = vpop.f32.mrf.mxu0
      %v1760 = vadd.f32 %v1599, %v1759
      %v1761 = vpop.f32.mrf.mxu0
      %v1762 = vpop.f32.mrf.mxu0
      %v1763 = vadd.f32 %v1602, %v1762
      %v1764 = vpop.f32.mrf.mxu0
      %1765 = vmatprep.mubr.bf16.mxu0 %v935
      %1766 = vmatmul.mubr.bf16.gmra.mxu0 %v934
      %v1767 = vpop.f32.mrf.mxu0
      %v1768 = vadd.f32 %v1607, %v1767
      %v1769 = vpop.f32.mrf.mxu0
      %v1770 = vpop.f32.mrf.mxu0
      %v1771 = vadd.f32 %v1610, %v1770
      %v1772 = vpop.f32.mrf.mxu0
      %1773 = vmatprep.mubr.bf16.mxu0 %v943
      %1774 = vmatmul.mubr.bf16.gmra.mxu0 %v942
      %v1775 = vpop.f32.mrf.mxu0
      %v1776 = vadd.f32 %v1615, %v1775
      %v1777 = vpop.f32.mrf.mxu0
      %v1778 = vpop.f32.mrf.mxu0
      %v1779 = vadd.f32 %v1618, %v1778
      %v1780 = vpop.f32.mrf.mxu0
      %1781 = vmatprep.mubr.bf16.mxu0 %v951
      %1782 = vmatmul.mubr.bf16.gmra.mxu0 %v950
      %v1783 = vpop.f32.mrf.mxu0
      %v1784 = vadd.f32 %v1623, %v1783
      %v1785 = vpop.f32.mrf.mxu0
      %v1786 = vpop.f32.mrf.mxu0
      %v1787 = vadd.f32 %v1626, %v1786
      %v1788 = vpop.f32.mrf.mxu0
      %1789 = vmatprep.mubr.bf16.mxu0 %v959
      %1790 = vmatmul.mubr.bf16.gmra.mxu0 %v958
      %v1791 = vpop.f32.mrf.mxu0
      %v1792 = vadd.f32 %v1631, %v1791
      %v1793 = vpop.f32.mrf.mxu0
      %v1794 = vpop.f32.mrf.mxu0
      %v1795 = vadd.f32 %v1634, %v1794
      %v1796 = vpop.f32.mrf.mxu0
      %1797 = vmatprep.mubr.bf16.mxu0 %v967
      %1798 = vmatmul.mubr.bf16.gmra.mxu0 %v966
      %v1799 = vpop.f32.mrf.mxu0
      %v1800 = vadd.f32 %v1639, %v1799
      %v1801 = vpop.f32.mrf.mxu0
      %v1802 = vpop.f32.mrf.mxu0
      %v1803 = vadd.f32 %v1642, %v1802
      %v1804 = vpop.f32.mrf.mxu0
      %1805 = vmatprep.mubr.bf16.mxu0 %v975
      %1806 = vmatmul.mubr.bf16.gmra.mxu0 %v974
      %v1807 = vpop.f32.mrf.mxu0
      %v1808 = vadd.f32 %v1647, %v1807
      %v1809 = vpop.f32.mrf.mxu0
      %v1810 = vpop.f32.mrf.mxu0
      %v1811 = vadd.f32 %v1650, %v1810
      %v1812 = vpop.f32.mrf.mxu0
      %1813 = vmatprep.mubr.bf16.mxu0 %v983
      %1814 = vmatmul.mubr.bf16.gmra.mxu0 %v982
      %v1815 = vpop.f32.mrf.mxu0
      %v1816 = vadd.f32 %v1655, %v1815
      %v1817 = vpop.f32.mrf.mxu0
      %v1818 = vpop.f32.mrf.mxu0
      %v1819 = vadd.f32 %v1658, %v1818
      %v1820 = vpop.f32.mrf.mxu0
      %1821 = vmatprep.mubr.bf16.mxu0 %v991
      %1822 = vmatmul.mubr.bf16.gmra.mxu0 %v990
      %v1823 = vpop.f32.mrf.mxu0
      %v1824 = vadd.f32 %v1663, %v1823
      %v1825 = vpop.f32.mrf.mxu0
      %v1826 = vpop.f32.mrf.mxu0
      %v1827 = vadd.f32 %v1666, %v1826
      %v1828 = vpop.f32.mrf.mxu0
      %1829 = vmatprep.mubr.bf16.mxu0 %v999
      %1830 = vmatmul.mubr.bf16.gmra.mxu0 %v998
      %v1831 = vpop.f32.mrf.mxu0
      %v1832 = vadd.f32 %v1671, %v1831
      %v1833 = vpop.f32.mrf.mxu0
      %v1834 = vpop.f32.mrf.mxu0
      %v1835 = vadd.f32 %v1674, %v1834
      %v1836 = vpop.f32.mrf.mxu0
      %1837 = vdwg.mxu0
      %1838 = vmatprep.subr.bf16.mxu0 0
      %1839 = vmatpush1.bf16.msra.mxu0 %v1427
      %1840 = vmatprep.subr.bf16.mxu0 0
      %1841 = vmatpush1.bf16.msra.mxu0 %v1426
      %1842 = vmatprep.subr.bf16.mxu0 0
      %1843 = vmatpush1.bf16.msra.mxu0 %v1425
      %1844 = vmatprep.subr.bf16.mxu0 0
      %1845 = vmatpush1.bf16.msra.mxu0 %v1424
      %1846 = vmatprep.subr.bf16.mxu0 0
      %1847 = vmatpush1.bf16.msra.mxu0 %v1423
      %1848 = vmatprep.subr.bf16.mxu0 0
      %1849 = vmatpush1.bf16.msra.mxu0 %v1422
      %1850 = vmatprep.subr.bf16.mxu0 0
      %1851 = vmatpush1.bf16.msra.mxu0 %v1421
      %1852 = vmatprep.subr.bf16.mxu0 0
      %1853 = vmatpush1.bf16.msra.mxu0 %v1420
      %1854 = vmatprep.subr.bf16.mxu0 0
      %1855 = vmatpush2.bf16.msra.mxu0 %v1435
      %1856 = vmatprep.subr.bf16.mxu0 0
      %1857 = vmatpush2.bf16.msra.mxu0 %v1434
      %1858 = vmatprep.subr.bf16.mxu0 0
      %1859 = vmatpush2.bf16.msra.mxu0 %v1433
      %1860 = vmatprep.subr.bf16.mxu0 0
      %1861 = vmatpush2.bf16.msra.mxu0 %v1432
      %1862 = vmatprep.subr.bf16.mxu0 0
      %1863 = vmatpush2.bf16.msra.mxu0 %v1431
      %1864 = vmatprep.subr.bf16.mxu0 0
      %1865 = vmatpush2.bf16.msra.mxu0 %v1430
      %1866 = vmatprep.subr.bf16.mxu0 0
      %1867 = vmatpush2.bf16.msra.mxu0 %v1429
      %1868 = vmatprep.subr.bf16.mxu0 0
      %1869 = vmatpush2.bf16.msra.mxu0 %v1428
      %1870 = vmatprep.mubr.bf16.mxu0 %v881
      %1871 = vmatmul.mubr.bf16.gmra.mxu0 %v880
      %v1872 = vpop.f32.mrf.mxu0
      %v1873 = vadd.f32 %v1712, %v1872
      %v1874 = vpop.f32.mrf.mxu0
      %v1875 = vpop.f32.mrf.mxu0
      %v1876 = vadd.f32 %v1715, %v1875
      %v1877 = vpop.f32.mrf.mxu0
      %1878 = vmatprep.mubr.bf16.mxu0 %v889
      %1879 = vmatmul.mubr.bf16.gmra.mxu0 %v888
      %v1880 = vpop.f32.mrf.mxu0
      %v1881 = vadd.f32 %v1720, %v1880
      %v1882 = vpop.f32.mrf.mxu0
      %v1883 = vpop.f32.mrf.mxu0
      %v1884 = vadd.f32 %v1723, %v1883
      %v1885 = vpop.f32.mrf.mxu0
      %1886 = vmatprep.mubr.bf16.mxu0 %v897
      %1887 = vmatmul.mubr.bf16.gmra.mxu0 %v896
      %v1888 = vpop.f32.mrf.mxu0
      %v1889 = vadd.f32 %v1728, %v1888
      %v1890 = vpop.f32.mrf.mxu0
      %v1891 = vpop.f32.mrf.mxu0
      %v1892 = vadd.f32 %v1731, %v1891
      %v1893 = vpop.f32.mrf.mxu0
      %1894 = vmatprep.mubr.bf16.mxu0 %v905
      %1895 = vmatmul.mubr.bf16.gmra.mxu0 %v904
      %v1896 = vpop.f32.mrf.mxu0
      %v1897 = vadd.f32 %v1736, %v1896
      %v1898 = vpop.f32.mrf.mxu0
      %v1899 = vpop.f32.mrf.mxu0
      %v1900 = vadd.f32 %v1739, %v1899
      %v1901 = vpop.f32.mrf.mxu0
      %1902 = vmatprep.mubr.bf16.mxu0 %v913
      %1903 = vmatmul.mubr.bf16.gmra.mxu0 %v912
      %v1904 = vpop.f32.mrf.mxu0
      %v1905 = vadd.f32 %v1744, %v1904
      %v1906 = vpop.f32.mrf.mxu0
      %v1907 = vpop.f32.mrf.mxu0
      %v1908 = vadd.f32 %v1747, %v1907
      %v1909 = vpop.f32.mrf.mxu0
      %1910 = vmatprep.mubr.bf16.mxu0 %v921
      %1911 = vmatmul.mubr.bf16.gmra.mxu0 %v920
      %v1912 = vpop.f32.mrf.mxu0
      %v1913 = vadd.f32 %v1752, %v1912
      %v1914 = vpop.f32.mrf.mxu0
      %v1915 = vpop.f32.mrf.mxu0
      %v1916 = vadd.f32 %v1755, %v1915
      %v1917 = vpop.f32.mrf.mxu0
      %1918 = vmatprep.mubr.bf16.mxu0 %v929
      %1919 = vmatmul.mubr.bf16.gmra.mxu0 %v928
      %v1920 = vpop.f32.mrf.mxu0
      %v1921 = vadd.f32 %v1760, %v1920
      %v1922 = vpop.f32.mrf.mxu0
      %v1923 = vpop.f32.mrf.mxu0
      %v1924 = vadd.f32 %v1763, %v1923
      %v1925 = vpop.f32.mrf.mxu0
      %1926 = vmatprep.mubr.bf16.mxu0 %v937
      %1927 = vmatmul.mubr.bf16.gmra.mxu0 %v936
      %v1928 = vpop.f32.mrf.mxu0
      %v1929 = vadd.f32 %v1768, %v1928
      %v1930 = vpop.f32.mrf.mxu0
      %v1931 = vpop.f32.mrf.mxu0
      %v1932 = vadd.f32 %v1771, %v1931
      %v1933 = vpop.f32.mrf.mxu0
      %1934 = vmatprep.mubr.bf16.mxu0 %v945
      %1935 = vmatmul.mubr.bf16.gmra.mxu0 %v944
      %v1936 = vpop.f32.mrf.mxu0
      %v1937 = vadd.f32 %v1776, %v1936
      %v1938 = vpop.f32.mrf.mxu0
      %v1939 = vpop.f32.mrf.mxu0
      %v1940 = vadd.f32 %v1779, %v1939
      %v1941 = vpop.f32.mrf.mxu0
      %1942 = vmatprep.mubr.bf16.mxu0 %v953
      %1943 = vmatmul.mubr.bf16.gmra.mxu0 %v952
      %v1944 = vpop.f32.mrf.mxu0
      %v1945 = vadd.f32 %v1784, %v1944
      %v1946 = vpop.f32.mrf.mxu0
      %v1947 = vpop.f32.mrf.mxu0
      %v1948 = vadd.f32 %v1787, %v1947
      %v1949 = vpop.f32.mrf.mxu0
      %1950 = vmatprep.mubr.bf16.mxu0 %v961
      %1951 = vmatmul.mubr.bf16.gmra.mxu0 %v960
      %v1952 = vpop.f32.mrf.mxu0
      %v1953 = vadd.f32 %v1792, %v1952
      %v1954 = vpop.f32.mrf.mxu0
      %v1955 = vpop.f32.mrf.mxu0
      %v1956 = vadd.f32 %v1795, %v1955
      %v1957 = vpop.f32.mrf.mxu0
      %1958 = vmatprep.mubr.bf16.mxu0 %v969
      %1959 = vmatmul.mubr.bf16.gmra.mxu0 %v968
      %v1960 = vpop.f32.mrf.mxu0
      %v1961 = vadd.f32 %v1800, %v1960
      %v1962 = vpop.f32.mrf.mxu0
      %v1963 = vpop.f32.mrf.mxu0
      %v1964 = vadd.f32 %v1803, %v1963
      %v1965 = vpop.f32.mrf.mxu0
      %1966 = vmatprep.mubr.bf16.mxu0 %v977
      %1967 = vmatmul.mubr.bf16.gmra.mxu0 %v976
      %v1968 = vpop.f32.mrf.mxu0
      %v1969 = vadd.f32 %v1808, %v1968
      %v1970 = vpop.f32.mrf.mxu0
      %v1971 = vpop.f32.mrf.mxu0
      %v1972 = vadd.f32 %v1811, %v1971
      %v1973 = vpop.f32.mrf.mxu0
      %1974 = vmatprep.mubr.bf16.mxu0 %v985
      %1975 = vmatmul.mubr.bf16.gmra.mxu0 %v984
      %v1976 = vpop.f32.mrf.mxu0
      %v1977 = vadd.f32 %v1816, %v1976
      %v1978 = vpop.f32.mrf.mxu0
      %v1979 = vpop.f32.mrf.mxu0
      %v1980 = vadd.f32 %v1819, %v1979
      %v1981 = vpop.f32.mrf.mxu0
      %1982 = vmatprep.mubr.bf16.mxu0 %v993
      %1983 = vmatmul.mubr.bf16.gmra.mxu0 %v992
      %v1984 = vpop.f32.mrf.mxu0
      %v1985 = vadd.f32 %v1824, %v1984
      %v1986 = vpop.f32.mrf.mxu0
      %v1987 = vpop.f32.mrf.mxu0
      %v1988 = vadd.f32 %v1827, %v1987
      %v1989 = vpop.f32.mrf.mxu0
      %1990 = vmatprep.mubr.bf16.mxu0 %v1001
      %1991 = vmatmul.mubr.bf16.gmra.mxu0 %v1000
      %v1992 = vpop.f32.mrf.mxu0
      %v1993 = vadd.f32 %v1832, %v1992
      %v1994 = vpop.f32.mrf.mxu0
      %v1995 = vpop.f32.mrf.mxu0
      %v1996 = vadd.f32 %v1835, %v1995
      %v1997 = vpop.f32.mrf.mxu0
      %1998 = vdwg.mxu0
      %1999 = vmatprep.subr.bf16.mxu0 0
      %2000 = vmatpush1.bf16.msra.mxu0 %v1443
      %2001 = vmatprep.subr.bf16.mxu0 0
      %2002 = vmatpush1.bf16.msra.mxu0 %v1442
      %2003 = vmatprep.subr.bf16.mxu0 0
      %2004 = vmatpush1.bf16.msra.mxu0 %v1441
      %2005 = vmatprep.subr.bf16.mxu0 0
      %2006 = vmatpush1.bf16.msra.mxu0 %v1440
      %2007 = vmatprep.subr.bf16.mxu0 0
      %2008 = vmatpush1.bf16.msra.mxu0 %v1439
      %2009 = vmatprep.subr.bf16.mxu0 0
      %2010 = vmatpush1.bf16.msra.mxu0 %v1438
      %2011 = vmatprep.subr.bf16.mxu0 0
      %2012 = vmatpush1.bf16.msra.mxu0 %v1437
      %2013 = vmatprep.subr.bf16.mxu0 0
      %2014 = vmatpush1.bf16.msra.mxu0 %v1436
      %2015 = vmatprep.subr.bf16.mxu0 0
      %2016 = vmatpush2.bf16.msra.mxu0 %v1451
      %2017 = vmatprep.subr.bf16.mxu0 0
      %2018 = vmatpush2.bf16.msra.mxu0 %v1450
      %2019 = vmatprep.subr.bf16.mxu0 0
      %2020 = vmatpush2.bf16.msra.mxu0 %v1449
      %2021 = vmatprep.subr.bf16.mxu0 0
      %2022 = vmatpush2.bf16.msra.mxu0 %v1448
      %2023 = vmatprep.subr.bf16.mxu0 0
      %2024 = vmatpush2.bf16.msra.mxu0 %v1447
      %2025 = vmatprep.subr.bf16.mxu0 0
      %2026 = vmatpush2.bf16.msra.mxu0 %v1446
      %2027 = vmatprep.subr.bf16.mxu0 0
      %2028 = vmatpush2.bf16.msra.mxu0 %v1445
      %2029 = vmatprep.subr.bf16.mxu0 0
      %2030 = vmatpush2.bf16.msra.mxu0 %v1444
      %2031 = vmatprep.mubr.bf16.mxu0 %v883
      %2032 = vmatmul.mubr.bf16.gmra.mxu0 %v882
      %v2033 = vpop.f32.mrf.mxu0
      %v2034 = vadd.f32 %v1873, %v2033
      %v2035 = vpop.f32.mrf.mxu0
      %v2036 = vpop.f32.mrf.mxu0
      %v2037 = vadd.f32 %v1876, %v2036
      %v2038 = vpop.f32.mrf.mxu0
      %2039 = vmatprep.mubr.bf16.mxu0 %v891
      %2040 = vmatmul.mubr.bf16.gmra.mxu0 %v890
      %v2041 = vpop.f32.mrf.mxu0
      %v2042 = vadd.f32 %v1881, %v2041
      %v2043 = vpop.f32.mrf.mxu0
      %v2044 = vpop.f32.mrf.mxu0
      %v2045 = vadd.f32 %v1884, %v2044
      %v2046 = vpop.f32.mrf.mxu0
      %2047 = vmatprep.mubr.bf16.mxu0 %v899
      %2048 = vmatmul.mubr.bf16.gmra.mxu0 %v898
      %v2049 = vpop.f32.mrf.mxu0
      %v2050 = vadd.f32 %v1889, %v2049
      %v2051 = vpop.f32.mrf.mxu0
      %v2052 = vpop.f32.mrf.mxu0
      %v2053 = vadd.f32 %v1892, %v2052
      %v2054 = vpop.f32.mrf.mxu0
      %2055 = vmatprep.mubr.bf16.mxu0 %v907
      %2056 = vmatmul.mubr.bf16.gmra.mxu0 %v906
      %v2057 = vpop.f32.mrf.mxu0
      %v2058 = vadd.f32 %v1897, %v2057
      %v2059 = vpop.f32.mrf.mxu0
      %v2060 = vpop.f32.mrf.mxu0
      %v2061 = vadd.f32 %v1900, %v2060
      %v2062 = vpop.f32.mrf.mxu0
      %2063 = vmatprep.mubr.bf16.mxu0 %v915
      %2064 = vmatmul.mubr.bf16.gmra.mxu0 %v914
      %v2065 = vpop.f32.mrf.mxu0
      %v2066 = vadd.f32 %v1905, %v2065
      %v2067 = vpop.f32.mrf.mxu0
      %v2068 = vpop.f32.mrf.mxu0
      %v2069 = vadd.f32 %v1908, %v2068
      %v2070 = vpop.f32.mrf.mxu0
      %2071 = vmatprep.mubr.bf16.mxu0 %v923
      %2072 = vmatmul.mubr.bf16.gmra.mxu0 %v922
      %v2073 = vpop.f32.mrf.mxu0
      %v2074 = vadd.f32 %v1913, %v2073
      %v2075 = vpop.f32.mrf.mxu0
      %v2076 = vpop.f32.mrf.mxu0
      %v2077 = vadd.f32 %v1916, %v2076
      %v2078 = vpop.f32.mrf.mxu0
      %2079 = vmatprep.mubr.bf16.mxu0 %v931
      %2080 = vmatmul.mubr.bf16.gmra.mxu0 %v930
      %v2081 = vpop.f32.mrf.mxu0
      %v2082 = vadd.f32 %v1921, %v2081
      %v2083 = vpop.f32.mrf.mxu0
      %v2084 = vpop.f32.mrf.mxu0
      %v2085 = vadd.f32 %v1924, %v2084
      %v2086 = vpop.f32.mrf.mxu0
      %2087 = vmatprep.mubr.bf16.mxu0 %v939
      %2088 = vmatmul.mubr.bf16.gmra.mxu0 %v938
      %v2089 = vpop.f32.mrf.mxu0
      %v2090 = vadd.f32 %v1929, %v2089
      %v2091 = vpop.f32.mrf.mxu0
      %v2092 = vpop.f32.mrf.mxu0
      %v2093 = vadd.f32 %v1932, %v2092
      %v2094 = vpop.f32.mrf.mxu0
      %2095 = vmatprep.mubr.bf16.mxu0 %v947
      %2096 = vmatmul.mubr.bf16.gmra.mxu0 %v946
      %v2097 = vpop.f32.mrf.mxu0
      %v2098 = vadd.f32 %v1937, %v2097
      %v2099 = vpop.f32.mrf.mxu0
      %v2100 = vpop.f32.mrf.mxu0
      %v2101 = vadd.f32 %v1940, %v2100
      %v2102 = vpop.f32.mrf.mxu0
      %2103 = vmatprep.mubr.bf16.mxu0 %v955
      %2104 = vmatmul.mubr.bf16.gmra.mxu0 %v954
      %v2105 = vpop.f32.mrf.mxu0
      %v2106 = vadd.f32 %v1945, %v2105
      %v2107 = vpop.f32.mrf.mxu0
      %v2108 = vpop.f32.mrf.mxu0
      %v2109 = vadd.f32 %v1948, %v2108
      %v2110 = vpop.f32.mrf.mxu0
      %2111 = vmatprep.mubr.bf16.mxu0 %v963
      %2112 = vmatmul.mubr.bf16.gmra.mxu0 %v962
      %v2113 = vpop.f32.mrf.mxu0
      %v2114 = vadd.f32 %v1953, %v2113
      %v2115 = vpop.f32.mrf.mxu0
      %v2116 = vpop.f32.mrf.mxu0
      %v2117 = vadd.f32 %v1956, %v2116
      %v2118 = vpop.f32.mrf.mxu0
      %2119 = vmatprep.mubr.bf16.mxu0 %v971
      %2120 = vmatmul.mubr.bf16.gmra.mxu0 %v970
      %v2121 = vpop.f32.mrf.mxu0
      %v2122 = vadd.f32 %v1961, %v2121
      %v2123 = vpop.f32.mrf.mxu0
      %v2124 = vpop.f32.mrf.mxu0
      %v2125 = vadd.f32 %v1964, %v2124
      %v2126 = vpop.f32.mrf.mxu0
      %2127 = vmatprep.mubr.bf16.mxu0 %v979
      %2128 = vmatmul.mubr.bf16.gmra.mxu0 %v978
      %v2129 = vpop.f32.mrf.mxu0
      %v2130 = vadd.f32 %v1969, %v2129
      %v2131 = vpop.f32.mrf.mxu0
      %v2132 = vpop.f32.mrf.mxu0
      %v2133 = vadd.f32 %v1972, %v2132
      %v2134 = vpop.f32.mrf.mxu0
      %2135 = vmatprep.mubr.bf16.mxu0 %v987
      %2136 = vmatmul.mubr.bf16.gmra.mxu0 %v986
      %v2137 = vpop.f32.mrf.mxu0
      %v2138 = vadd.f32 %v1977, %v2137
      %v2139 = vpop.f32.mrf.mxu0
      %v2140 = vpop.f32.mrf.mxu0
      %v2141 = vadd.f32 %v1980, %v2140
      %v2142 = vpop.f32.mrf.mxu0
      %2143 = vmatprep.mubr.bf16.mxu0 %v995
      %2144 = vmatmul.mubr.bf16.gmra.mxu0 %v994
      %v2145 = vpop.f32.mrf.mxu0
      %v2146 = vadd.f32 %v1985, %v2145
      %v2147 = vpop.f32.mrf.mxu0
      %v2148 = vpop.f32.mrf.mxu0
      %v2149 = vadd.f32 %v1988, %v2148
      %v2150 = vpop.f32.mrf.mxu0
      %2151 = vmatprep.mubr.bf16.mxu0 %v1003
      %2152 = vmatmul.mubr.bf16.gmra.mxu0 %v1002
      %v2153 = vpop.f32.mrf.mxu0
      %v2154 = vadd.f32 %v1993, %v2153
      %v2155 = vpop.f32.mrf.mxu0
      %v2156 = vpop.f32.mrf.mxu0
      %v2157 = vadd.f32 %v1996, %v2156
      %v2158 = vpop.f32.mrf.mxu0
      %2159 = vdwg.mxu0
      %vm2160 = vcmp.ge.f32.partialorder %v2034, 0.0
      %vm2161 = vcmp.ge.f32.partialorder %v2037, 0.0
      %vm2162 = vcmp.ge.f32.partialorder %v2042, 0.0
      %vm2163 = vcmp.ge.f32.partialorder %v2045, 0.0
      %vm2164 = vcmp.ge.f32.partialorder %v2050, 0.0
      %vm2165 = vcmp.ge.f32.partialorder %v2053, 0.0
      %vm2166 = vcmp.ge.f32.partialorder %v2058, 0.0
      %vm2167 = vcmp.ge.f32.partialorder %v2061, 0.0
      %vm2168 = vcmp.ge.f32.partialorder %v2066, 0.0
      %vm2169 = vcmp.ge.f32.partialorder %v2069, 0.0
      %vm2170 = vcmp.ge.f32.partialorder %v2074, 0.0
      %vm2171 = vcmp.ge.f32.partialorder %v2077, 0.0
      %vm2172 = vcmp.ge.f32.partialorder %v2082, 0.0
      %vm2173 = vcmp.ge.f32.partialorder %v2085, 0.0
      %vm2174 = vcmp.ge.f32.partialorder %v2090, 0.0
      %vm2175 = vcmp.ge.f32.partialorder %v2093, 0.0
      %vm2176 = vcmp.ge.f32.partialorder %v2098, 0.0
      %vm2177 = vcmp.ge.f32.partialorder %v2101, 0.0
      %vm2178 = vcmp.ge.f32.partialorder %v2106, 0.0
      %vm2179 = vcmp.ge.f32.partialorder %v2109, 0.0
      %vm2180 = vcmp.ge.f32.partialorder %v2114, 0.0
      %vm2181 = vcmp.ge.f32.partialorder %v2117, 0.0
      %vm2182 = vcmp.ge.f32.partialorder %v2122, 0.0
      %vm2183 = vcmp.ge.f32.partialorder %v2125, 0.0
      %vm2184 = vcmp.ge.f32.partialorder %v2130, 0.0
      %vm2185 = vcmp.ge.f32.partialorder %v2133, 0.0
      %vm2186 = vcmp.ge.f32.partialorder %v2138, 0.0
      %vm2187 = vcmp.ge.f32.partialorder %v2141, 0.0
      %vm2188 = vcmp.ge.f32.partialorder %v2146, 0.0
      %vm2189 = vcmp.ge.f32.partialorder %v2149, 0.0
      %vm2190 = vcmp.ge.f32.partialorder %v2154, 0.0
      %vm2191 = vcmp.ge.f32.partialorder %v2157, 0.0
      %v2192 = vmul.f32 %v2034, 0.1
      %v2193 = vmul.f32 %v2037, 0.1
      %v2194 = vmul.f32 %v2042, 0.1
      %v2195 = vmul.f32 %v2045, 0.1
      %v2196 = vmul.f32 %v2050, 0.1
      %v2197 = vmul.f32 %v2053, 0.1
      %v2198 = vmul.f32 %v2058, 0.1
      %v2199 = vmul.f32 %v2061, 0.1
      %v2200 = vmul.f32 %v2066, 0.1
      %v2201 = vmul.f32 %v2069, 0.1
      %v2202 = vmul.f32 %v2074, 0.1
      %v2203 = vmul.f32 %v2077, 0.1
      %v2204 = vmul.f32 %v2082, 0.1
      %v2205 = vmul.f32 %v2085, 0.1
      %v2206 = vmul.f32 %v2090, 0.1
      %v2207 = vmul.f32 %v2093, 0.1
      %v2208 = vmul.f32 %v2098, 0.1
      %v2209 = vmul.f32 %v2101, 0.1
      %v2210 = vmul.f32 %v2106, 0.1
      %v2211 = vmul.f32 %v2109, 0.1
      %v2212 = vmul.f32 %v2114, 0.1
      %v2213 = vmul.f32 %v2117, 0.1
      %v2214 = vmul.f32 %v2122, 0.1
      %v2215 = vmul.f32 %v2125, 0.1
      %v2216 = vmul.f32 %v2130, 0.1
      %v2217 = vmul.f32 %v2133, 0.1
      %v2218 = vmul.f32 %v2138, 0.1
      %v2219 = vmul.f32 %v2141, 0.1
      %v2220 = vmul.f32 %v2146, 0.1
      %v2221 = vmul.f32 %v2149, 0.1
      %v2222 = vmul.f32 %v2154, 0.1
      %v2223 = vmul.f32 %v2157, 0.1
      %v2224 = vsel %vm2160, %v2034, %v2192
      %v2225 = vsel %vm2161, %v2037, %v2193
      %v2226 = vsel %vm2162, %v2042, %v2194
      %v2227 = vsel %vm2163, %v2045, %v2195
      %v2228 = vsel %vm2164, %v2050, %v2196
      %v2229 = vsel %vm2165, %v2053, %v2197
      %v2230 = vsel %vm2166, %v2058, %v2198
      %v2231 = vsel %vm2167, %v2061, %v2199
      %v2232 = vsel %vm2168, %v2066, %v2200
      %v2233 = vsel %vm2169, %v2069, %v2201
      %v2234 = vsel %vm2170, %v2074, %v2202
      %v2235 = vsel %vm2171, %v2077, %v2203
      %v2236 = vsel %vm2172, %v2082, %v2204
      %v2237 = vsel %vm2173, %v2085, %v2205
      %v2238 = vsel %vm2174, %v2090, %v2206
      %v2239 = vsel %vm2175, %v2093, %v2207
      %v2240 = vsel %vm2176, %v2098, %v2208
      %v2241 = vsel %vm2177, %v2101, %v2209
      %v2242 = vsel %vm2178, %v2106, %v2210
      %v2243 = vsel %vm2179, %v2109, %v2211
      %v2244 = vsel %vm2180, %v2114, %v2212
      %v2245 = vsel %vm2181, %v2117, %v2213
      %v2246 = vsel %vm2182, %v2122, %v2214
      %v2247 = vsel %vm2183, %v2125, %v2215
      %v2248 = vsel %vm2184, %v2130, %v2216
      %v2249 = vsel %vm2185, %v2133, %v2217
      %v2250 = vsel %vm2186, %v2138, %v2218
      %v2251 = vsel %vm2187, %v2141, %v2219
      %v2252 = vsel %vm2188, %v2146, %v2220
      %v2253 = vsel %vm2189, %v2149, %v2221
      %v2254 = vsel %vm2190, %v2154, %v2222
      %v2255 = vsel %vm2191, %v2157, %v2223
      %v2256 = vpack.c.bf16 %v2225, %v2224
      %v2257 = vpack.c.bf16 %v2227, %v2226
      %v2258 = vpack.c.bf16 %v2229, %v2228
      %v2259 = vpack.c.bf16 %v2231, %v2230
      %v2260 = vpack.c.bf16 %v2233, %v2232
      %v2261 = vpack.c.bf16 %v2235, %v2234
      %v2262 = vpack.c.bf16 %v2237, %v2236
      %v2263 = vpack.c.bf16 %v2239, %v2238
      %v2264 = vpack.c.bf16 %v2241, %v2240
      %v2265 = vpack.c.bf16 %v2243, %v2242
      %v2266 = vpack.c.bf16 %v2245, %v2244
      %v2267 = vpack.c.bf16 %v2247, %v2246
      %v2268 = vpack.c.bf16 %v2249, %v2248
      %v2269 = vpack.c.bf16 %v2251, %v2250
      %v2270 = vpack.c.bf16 %v2253, %v2252
      %v2271 = vpack.c.bf16 %v2255, %v2254
      %v2288 = vunpack.c.l.b16 %v2256
      %v2289 = vunpack.c.h.b16 %v2256
      %v2290 = vunpack.c.l.b16 %v2257
      %v2291 = vunpack.c.h.b16 %v2257
      %v2292 = vunpack.c.l.b16 %v2258
      %v2293 = vunpack.c.h.b16 %v2258
      %v2294 = vunpack.c.l.b16 %v2259
      %v2295 = vunpack.c.h.b16 %v2259
      %v2296 = vunpack.c.l.b16 %v2260
      %v2297 = vunpack.c.h.b16 %v2260
      %v2298 = vunpack.c.l.b16 %v2261
      %v2299 = vunpack.c.h.b16 %v2261
      %v2300 = vunpack.c.l.b16 %v2262
      %v2301 = vunpack.c.h.b16 %v2262
      %v2302 = vunpack.c.l.b16 %v2263
      %v2303 = vunpack.c.h.b16 %v2263
      %v2304 = vunpack.c.l.b16 %v2264
      %v2305 = vunpack.c.h.b16 %v2264
      %v2306 = vunpack.c.l.b16 %v2265
      %v2307 = vunpack.c.h.b16 %v2265
      %v2308 = vunpack.c.l.b16 %v2266
      %v2309 = vunpack.c.h.b16 %v2266
      %v2310 = vunpack.c.l.b16 %v2267
      %v2311 = vunpack.c.h.b16 %v2267
      %v2312 = vunpack.c.l.b16 %v2268
      %v2313 = vunpack.c.h.b16 %v2268
      %v2314 = vunpack.c.l.b16 %v2269
      %v2315 = vunpack.c.h.b16 %v2269
      %v2316 = vunpack.c.l.b16 %v2270
      %v2317 = vunpack.c.h.b16 %v2270
      %v2318 = vunpack.c.l.b16 %v2271
      %v2319 = vunpack.c.h.b16 %v2271
      %v2320 = vpack.c.b16 %v2288, %v2288
      %v2321 = vpack.c.b16 %v2289, %v2289
      %v2322 = vpack.c.b16 %v2290, %v2290
      %v2323 = vpack.c.b16 %v2291, %v2291
      %v2324 = vpack.c.b16 %v2292, %v2292
      %v2325 = vpack.c.b16 %v2293, %v2293
      %v2326 = vpack.c.b16 %v2294, %v2294
      %v2327 = vpack.c.b16 %v2295, %v2295
      %v2328 = vpack.c.b16 %v2296, %v2296
      %v2329 = vpack.c.b16 %v2297, %v2297
      %v2330 = vpack.c.b16 %v2298, %v2298
      %v2331 = vpack.c.b16 %v2299, %v2299
      %v2332 = vpack.c.b16 %v2300, %v2300
      %v2333 = vpack.c.b16 %v2301, %v2301
      %v2334 = vpack.c.b16 %v2302, %v2302
      %v2335 = vpack.c.b16 %v2303, %v2303
      %v2336 = vpack.c.b16 %v2304, %v2304
      %v2337 = vpack.c.b16 %v2305, %v2305
      %v2338 = vpack.c.b16 %v2306, %v2306
      %v2339 = vpack.c.b16 %v2307, %v2307
      %v2340 = vpack.c.b16 %v2308, %v2308
      %v2341 = vpack.c.b16 %v2309, %v2309
      %v2342 = vpack.c.b16 %v2310, %v2310
      %v2343 = vpack.c.b16 %v2311, %v2311
      %v2344 = vpack.c.b16 %v2312, %v2312
      %v2345 = vpack.c.b16 %v2313, %v2313
      %v2346 = vpack.c.b16 %v2314, %v2314
      %v2347 = vpack.c.b16 %v2315, %v2315
      %v2348 = vpack.c.b16 %v2316, %v2316
      %v2349 = vpack.c.b16 %v2317, %v2317
      %v2350 = vpack.c.b16 %v2318, %v2318
      %v2351 = vpack.c.b16 %v2319, %v2319
      %2384 = vst [vmem:[%s226] sm:$0xf] %v2320
      %2385 = vst [vmem:[%s226 + $0x4] sm:$0xf] %v2321
      %2386 = vst [vmem:[%s226 + $0x8] sm:$0xf] %v2322
      %2387 = vst [vmem:[%s226 + $0xc] sm:$0xf] %v2323
      %2388 = vst [vmem:[%s226 + $0x10] sm:$0xf] %v2324
      %2389 = vst [vmem:[%s226 + $0x14] sm:$0xf] %v2325
      %2390 = vst [vmem:[%s226 + $0x18] sm:$0xf] %v2326
      %2391 = vst [vmem:[%s226 + $0x1c] sm:$0xf] %v2327
      %2392 = vst [vmem:[%s226 + $0x20] sm:$0xf] %v2328
      %2393 = vst [vmem:[%s226 + $0x24] sm:$0xf] %v2329
      %2394 = vst [vmem:[%s226 + $0x28] sm:$0xf] %v2330
      %2395 = vst [vmem:[%s226 + $0x2c] sm:$0xf] %v2331
      %2396 = vst [vmem:[%s226 + $0x30] sm:$0xf] %v2332
      %2397 = vst [vmem:[%s226 + $0x34] sm:$0xf] %v2333
      %2398 = vst [vmem:[%s226 + $0x38] sm:$0xf] %v2334
      %2399 = vst [vmem:[%s226 + $0x3c] sm:$0xf] %v2335
      %2400 = vst [vmem:[%s226 + $0x40] sm:$0xf] %v2336
      %2401 = vst [vmem:[%s226 + $0x44] sm:$0xf] %v2337
      %2402 = vst [vmem:[%s226 + $0x48] sm:$0xf] %v2338
      %2403 = vst [vmem:[%s226 + $0x4c] sm:$0xf] %v2339
      %2404 = vst [vmem:[%s226 + $0x50] sm:$0xf] %v2340
      %2405 = vst [vmem:[%s226 + $0x54] sm:$0xf] %v2341
      %2406 = vst [vmem:[%s226 + $0x58] sm:$0xf] %v2342
      %2407 = vst [vmem:[%s226 + $0x5c] sm:$0xf] %v2343
      %2408 = vst [vmem:[%s226 + $0x60] sm:$0xf] %v2344
      %2409 = vst [vmem:[%s226 + $0x64] sm:$0xf] %v2345
      %2410 = vst [vmem:[%s226 + $0x68] sm:$0xf] %v2346
      %2411 = vst [vmem:[%s226 + $0x6c] sm:$0xf] %v2347
      %2412 = vst [vmem:[%s226 + $0x70] sm:$0xf] %v2348
      %2413 = vst [vmem:[%s226 + $0x74] sm:$0xf] %v2349
      %2414 = vst [vmem:[%s226 + $0x78] sm:$0xf] %v2350
      %2415 = vst [vmem:[%s226 + $0x7c] sm:$0xf] %v2351
      %s2416 = smul.u32 32, %s18
      %p2417 = scmp.lt.s32.totalorder %s2416, 63
      %s2418 = scalar_select %p2417, %s2416, 63
      %p2419 = scmp.lt.s32.totalorder %s19, 0
      %s2420 = scalar_select %p2419, %s19, 0
      %s2421 = sadd.s32 %s2420, %s2418
      %s2422 = smul.addr %s2421, 4
      %s2423 = scalar_lea.vmem %s3, %s2422
      // Predicated region
      $region33: #{discriminator_forward.5} parent=31 // pred_check
        %p2424 = pneg %p124
      $region34: #{discriminator_forward.5} parent=31 // pred_check_branch
        %2426 = sbr.rel (%p2424) target = $region36
      $region35: #{discriminator_forward.5} parent=31 // pred_region
        %s2427 = smul.u32 32, %s18
      $region36: #{discriminator_forward.5} parent=31 // pred_fallthru
        _
    $region32: #{discriminator_forward.5} parent=5 // pred_fallthru
      _
    %p2428 = scmp.le.s32.totalorder 2, %s9
    // Predicated region
    $region37: #{discriminator_forward.5} parent=5 // pred_check
      %p2429 = pneg %p2428
    $region38: #{discriminator_forward.5} parent=5 // pred_check_branch
      %2431 = sbr.rel (%p2429) target = $region40
    $region39: #{discriminator_forward.5} parent=5 // pred_region
      %s2432 = ssub.s32 %s9, 2
      // Predicated region
      $region41: #{discriminator_forward.5} parent=39 // pred_check
        %p2433 = pneg %p130
      $region42: #{discriminator_forward.5} parent=39 // pred_check_branch
        %2435 = sbr.rel (%p2433) target = $region44
      $region43: #{discriminator_forward.5} parent=39 // pred_region
        %s2436 = smul.u32 32, %s20
        %p2437 = scmp.lt.s32.totalorder %s2436, 63
        %s2438 = scalar_select %p2437, %s2436, 63
        %p2439 = scmp.lt.s32.totalorder %s21, 0
        %s2440 = scalar_select %p2439, %s21, 0
        %s2441 = sadd.s32 %s2440, %s2438
        %s2442 = smul.addr %s2441, 4
        %s2443 = scalar_lea.vmem %s3, %s2442
      $region44: #{discriminator_forward.5} parent=39 // pred_fallthru
        _
    $region40: #{discriminator_forward.5} parent=5 // pred_fallthru
      _
  $region6: #{discriminator_forward.5} parent=0 // loop_footer
    %s13 = sadd.s32 1, %s9
  $region7: #{discriminator_forward.5} parent=0 // loop_footer_branch
    %8 = sbr.rel target = $region3
  $region8: #{discriminator_forward.5} parent=0 // loop_exit
    _

// kernel: discriminator_forward.6
$region0: #{discriminator_forward.6}
  #allocation0 [shape = 'u32[]', space=smem, size = 0x4, offset = 0x4, fixed_abs, tag = 'smem constant byte address 0x4 - core index']
  #allocation1 [shape = 'u32[144,128]{1,0:T(1,128)}', space=vmem, size = 0x12000, scoped, tag = 'internal scratch']
  %s0 = inlined_call_operand.vmem [shape: bf16[128,2048], index: 0, kind: input, shape index: {}]
  %s1 = inlined_call_operand.vmem [shape: bf16[2048,256], index: 1, kind: input, shape index: {}]
  %s2 = inlined_call_operand.vmem [shape: f32[1,256], index: 2, kind: input, shape index: {}]
  %s3 = inlined_call_operand.vmem [shape: bf16[128,256], index: 3, kind: output, shape index: {}]
  %s4 = sld [smem:[#allocation0]]
  $region45: #{discriminator_forward.6} parent=0
    _
  %s6 = ssub.s32 1, %s4
  %s7 = scalar_select 0, %s6, %s4
  loop: start=0, step=1, limit=4
  $region2: #{discriminator_forward.6} parent=0 // loop_pre_header
    _
  $region3: #{discriminator_forward.6} parent=0 // loop_header
    %s9 = sphi 0, %s13
    %p10 = scmp.ge.s32.totalorder %s9, 4
    %s16 = sphi 0, %s28
    %s17 = sphi 0, %s24
    %s18 = sphi 0, %s16
    %s19 = sphi 0, %s17
    %s20 = sphi 0, %s18
    %s21 = sphi 0, %s19
    %s31 = sphi 0, %s33
    %s34 = sphi 0, %s31
    %s35 = sphi 0, %s34
    %s51 = sphi 0, %s35
    %s57 = sphi 0, %s59
    %s60 = sphi 0, %s57
    %s61 = sphi 0, %s60
    %s77 = sphi 0, %s61
    %s83 = sphi 0, %s85
    %s86 = sphi 0, %s83
    %s87 = sphi 0, %s86
    %s103 = sphi 0, %s87
    %s111 = sphi 0, %s113
    %s114 = sphi 0, %s111
    %s115 = sphi 0, %s114
    %s131 = sphi 0, %s115
  $region4: #{discriminator_forward.6} parent=0 // loop_header_branch
    %12 = sbr.rel (%p10) target = $region8
  $region5: #{discriminator_forward.6} parent=0 // loop_body
    %s14 = ssub.s32 %s9, 1
    %s15 = ssub.s32 %s9, 2
    %s22 = sadd.s32 1, %s17
    %p23 = scmp.ge.s32.totalorder %s22, 1
    %s24 = scalar_select %p23, 0, %s22
    %s25 = sadd.s32 1, %s16
    %s26 = scalar_select %p23, %s25, %s16
    %p27 = scmp.ge.s32.totalorder %s26, 2
    %s28 = scalar_select %p27, 0, %s26
    %s29 = ssub.s32 %s16, %s28
    %p30 = scmp.eq.s32.totalorder %s29, 0
    %s32 = sadd.s32 %s31, 1
    %s33 = scalar_select %p30, %s31, %s32
    %p36 = pneg %p30
    %p37 = scmp.eq.s32.totalorder %s9, 1
    %p38 = por %p36, %p37
    %p39 = scmp.ne.s32.totalorder %s31, %s34
    %p40 = scmp.eq.s32.totalorder %s9, 0
    %p41 = por %p39, %p40
    %p42 = scmp.ne.s32.totalorder %s31, %s34
    %p43 = scmp.eq.s32.totalorder %s14, 1
    %p44 = por %p42, %p43
    %p45 = scmp.ne.s32.totalorder %s34, %s35
    %p46 = scmp.eq.s32.totalorder %s14, 0
    %p47 = por %p45, %p46
    %p48 = scmp.ne.s32.totalorder %s34, %s35
    %p49 = scmp.eq.s32.totalorder %s15, 1
    %p50 = por %p48, %p49
    %p52 = scmp.ne.s32.totalorder %s35, %s51
    %p53 = scmp.eq.s32.totalorder %s15, 0
    %p54 = por %p52, %p53
    %s55 = ssub.s32 %s17, %s24
    %p56 = scmp.eq.s32.totalorder %s55, 0
    %s58 = sadd.s32 %s57, 1
    %s59 = scalar_select %p56, %s57, %s58
    %p62 = pneg %p56
    %p63 = scmp.eq.s32.totalorder %s9, 1
    %p64 = por %p62, %p63
    %p65 = scmp.ne.s32.totalorder %s57, %s60
    %p66 = scmp.eq.s32.totalorder %s9, 0
    %p67 = por %p65, %p66
    %p68 = scmp.ne.s32.totalorder %s57, %s60
    %p69 = scmp.eq.s32.totalorder %s14, 1
    %p70 = por %p68, %p69
    %p71 = scmp.ne.s32.totalorder %s60, %s61
    %p72 = scmp.eq.s32.totalorder %s14, 0
    %p73 = por %p71, %p72
    %p74 = scmp.ne.s32.totalorder %s60, %s61
    %p75 = scmp.eq.s32.totalorder %s15, 1
    %p76 = por %p74, %p75
    %p78 = scmp.ne.s32.totalorder %s61, %s77
    %p79 = scmp.eq.s32.totalorder %s15, 0
    %p80 = por %p78, %p79
    %s81 = ssub.s32 %s17, %s24
    %p82 = scmp.eq.s32.totalorder %s81, 0
    %s84 = sadd.s32 %s83, 1
    %s85 = scalar_select %p82, %s83, %s84
    %p88 = pneg %p82
    %p89 = scmp.eq.s32.totalorder %s9, 1
    %p90 = por %p88, %p89
    %p91 = scmp.ne.s32.totalorder %s83, %s86
    %p92 = scmp.eq.s32.totalorder %s9, 0
    %p93 = por %p91, %p92
    %p94 = scmp.ne.s32.totalorder %s83, %s86
    %p95 = scmp.eq.s32.totalorder %s14, 1
    %p96 = por %p94, %p95
    %p97 = scmp.ne.s32.totalorder %s86, %s87
    %p98 = scmp.eq.s32.totalorder %s14, 0
    %p99 = por %p97, %p98
    %p100 = scmp.ne.s32.totalorder %s86, %s87
    %p101 = scmp.eq.s32.totalorder %s15, 1
    %p102 = por %p100, %p101
    %p104 = scmp.ne.s32.totalorder %s87, %s103
    %p105 = scmp.eq.s32.totalorder %s15, 0
    %p106 = por %p104, %p105
    %s107 = ssub.s32 %s16, %s28
    %s108 = ssub.s32 %s17, %s24
    %s109 = sor.u32 %s107, %s108
    %p110 = scmp.eq.s32.totalorder %s109, 0
    %s112 = sadd.s32 %s111, 1
    %s113 = scalar_select %p110, %s111, %s112
    %p116 = pneg %p110
    %p117 = scmp.eq.s32.totalorder %s9, 1
    %p118 = por %p116, %p117
    %p119 = scmp.ne.s32.totalorder %s111, %s114
    %p120 = scmp.eq.s32.totalorder %s9, 0
    %p121 = por %p119, %p120
    %p122 = scmp.ne.s32.totalorder %s111, %s114
    %p123 = scmp.eq.s32.totalorder %s14, 1
    %p124 = por %p122, %p123
    %p125 = scmp.ne.s32.totalorder %s114, %s115
    %p126 = scmp.eq.s32.totalorder %s14, 0
    %p127 = por %p125, %p126
    %p128 = scmp.ne.s32.totalorder %s114, %s115
    %p129 = scmp.eq.s32.totalorder %s15, 1
    %p130 = por %p128, %p129
    %p132 = scmp.ne.s32.totalorder %s115, %s131
    %p133 = scmp.eq.s32.totalorder %s15, 0
    %p134 = por %p132, %p133
    %p135 = scmp.le.s32.totalorder 1, %s9
    %p136 = scmp.lt.s32.totalorder %s9, 3
    %p137 = pnand %p135, %p136
    %p138 = pneg %p137
    // Predicated region
    $region9: #{discriminator_forward.6} parent=5 // pred_check
      _
    $region10: #{discriminator_forward.6} parent=5 // pred_check_branch
      %140 = sbr.rel (%p137) target = $region12
    $region11: #{discriminator_forward.6} parent=5 // pred_region
      %s141 = ssub.s32 %s9, 1
      // Predicated region
      $region13: #{discriminator_forward.6} parent=11 // pred_check
        %p142 = pneg %p73
      $region14: #{discriminator_forward.6} parent=11 // pred_check_branch
        %144 = sbr.rel (%p142) target = $region16
      $region15: #{discriminator_forward.6} parent=11 // pred_region
        %s145 = smul.u32 2, %s19
        %p146 = scmp.lt.s32.totalorder %s145, 1
        %s147 = scalar_select %p146, %s145, 1
        %s148 = smul.addr %s147, 4
        %s149 = scalar_lea.vmem %s1, %s148
        %s150 = smul.u32 2, %s19
      $region16: #{discriminator_forward.6} parent=11 // pred_fallthru
        _
      // Predicated region
      $region17: #{discriminator_forward.6} parent=11 // pred_check
        %p151 = pneg %p99
      $region18: #{discriminator_forward.6} parent=11 // pred_check_branch
        %153 = sbr.rel (%p151) target = $region20
      $region19: #{discriminator_forward.6} parent=11 // pred_region
        %s154 = smul.u32 2, %s19
        %p155 = scmp.lt.s32.totalorder %s154, 1
        %s156 = scalar_select %p155, %s154, 1
        %s157 = scalar_lea.vmem %s2, %s156
        %s158 = smul.u32 2, %s19
      $region20: #{discriminator_forward.6} parent=11 // pred_fallthru
        _
    $region12: #{discriminator_forward.6} parent=5 // pred_fallthru
      _
    %p159 = scmp.lt.s32.totalorder %s9, 2
    // Predicated region
    $region21: #{discriminator_forward.6} parent=5 // pred_check
      %p160 = pneg %p159
    $region22: #{discriminator_forward.6} parent=5 // pred_check_branch
      %162 = sbr.rel (%p160) target = $region24
    $region23: #{discriminator_forward.6} parent=5 // pred_region
      // Predicated region
      $region25: #{discriminator_forward.6} parent=23 // pred_check
        %p163 = pneg %p41
      $region26: #{discriminator_forward.6} parent=23 // pred_check_branch
        %165 = sbr.rel (%p163) target = $region28
      $region27: #{discriminator_forward.6} parent=23 // pred_region
        %s166 = smul.u32 8, %s16
        %p167 = scmp.lt.s32.totalorder %s166, 15
        %s168 = scalar_select %p167, %s166, 15
        %s169 = smul.addr %s168, 16
        %s170 = smul.addr %s169, 4
        %s171 = scalar_lea.vmem %s0, %s170
        %s172 = smul.u32 8, %s16
      $region28: #{discriminator_forward.6} parent=23 // pred_fallthru
        _
    $region24: #{discriminator_forward.6} parent=5 // pred_fallthru
      _
    %p173 = scmp.le.s32.totalorder 1, %s9
    %p174 = scmp.lt.s32.totalorder %s9, 3
    %p175 = pnand %p173, %p174
    %p176 = pneg %p175
    // Predicated region
    $region29: #{discriminator_forward.6} parent=5 // pred_check
      _
    $region30: #{discriminator_forward.6} parent=5 // pred_check_branch
      %178 = sbr.rel (%p175) target = $region32
    $region31: #{discriminator_forward.6} parent=5 // pred_region
      %s179 = ssub.s32 %s9, 1
      %s180 = smul.u32 8, %s18
      %p181 = scmp.lt.s32.totalorder %s180, 15
      %s182 = scalar_select %p181, %s180, 15
      %s183 = smul.addr %s182, 16
      %s184 = smul.addr %s183, 4
      %s185 = scalar_lea.vmem %s0, %s184
      %p186 = pneg %p47
      %p187 = pneg %p44
      %s188 = smul.u32 2, %s19
      %p189 = scmp.lt.s32.totalorder %s188, 1
      %s190 = scalar_select %p189, %s188, 1
      %s191 = smul.addr %s190, 4
      %s192 = scalar_lea.vmem %s1, %s191
      %p193 = pneg %p73
      %p194 = pneg %p70
      %s195 = smul.u32 2, %s19
      %p196 = scmp.lt.s32.totalorder %s195, 1
      %s197 = scalar_select %p196, %s195, 1
      %s198 = scalar_lea.vmem %s2, %s197
      %p199 = pneg %p99
      %p200 = pneg %p96
      %p201 = pneg %p127
      %p202 = pneg %p124
      %s203 = smul.u32 8, %s18
      %s204 = smul.u32 2, %s19
      %p205 = scmp.lt.s32.totalorder %s203, 15
      %s206 = scalar_select %p205, %s203, 15
      %p207 = scmp.lt.s32.totalorder %s204, 1
      %s208 = scalar_select %p207, %s204, 1
      %s209 = smul.addr %s206, 2
      %s210 = sadd.s32 %s208, %s209
      %s211 = smul.addr %s210, 4
      %s212 = scalar_lea.vmem %s3, %s211
      %s213 = smul.u32 8, %s18
      %p214 = scmp.lt.s32.totalorder %s213, 15
      %s215 = scalar_select %p214, %s213, 15
      %s216 = smul.addr %s215, 16
      %s217 = smul.addr %s216, 4
      %s218 = scalar_lea.vmem %s0, %s217
      %s219 = smul.u32 8, %s18
      %s220 = smul.u32 2, %s19
      %p221 = scmp.lt.s32.totalorder %s220, 1
      %s222 = scalar_select %p221, %s220, 1
      %s223 = smul.addr %s222, 4
      %s224 = scalar_lea.vmem %s1, %s223
      %s225 = smul.u32 2, %s19
      %s226 = smul.u32 2, %s19
      %p227 = scmp.lt.s32.totalorder %s226, 1
      %s228 = scalar_select %p227, %s226, 1
      %s229 = scalar_lea.vmem %s2, %s228
      %s230 = smul.u32 2, %s19
      %s231 = smul.u32 8, %s18
      %s232 = smul.u32 2, %s19
      %p233 = scmp.lt.s32.totalorder %s231, 15
      %s234 = scalar_select %p233, %s231, 15
      %p235 = scmp.lt.s32.totalorder %s232, 1
      %s236 = scalar_select %p235, %s232, 1
      %s237 = smul.addr %s234, 2
      %s238 = sadd.s32 %s236, %s237
      %s239 = smul.addr %s238, 4
      %s240 = scalar_lea.vmem %s3, %s239
      %s241 = smul.u32 8, %s18
      %s242 = smul.u32 2, %s19
      %v243 = vld [vmem:[%s218] sm:$0xff]
      %v244 = vld [vmem:[%s218 + $0x8] sm:$0xff]
      %v245 = vld [vmem:[%s218 + $0x10] sm:$0xff]
      %v246 = vld [vmem:[%s218 + $0x18] sm:$0xff]
      %v247 = vld [vmem:[%s218 + $0x20] sm:$0xff]
      %v248 = vld [vmem:[%s218 + $0x28] sm:$0xff]
      %v249 = vld [vmem:[%s218 + $0x30] sm:$0xff]
      %v250 = vld [vmem:[%s218 + $0x38] sm:$0xff]
      %v251 = vld [vmem:[%s218 + $0x40] sm:$0xff]
      %v252 = vld [vmem:[%s218 + $0x48] sm:$0xff]
      %v253 = vld [vmem:[%s218 + $0x50] sm:$0xff]
      %v254 = vld [vmem:[%s218 + $0x58] sm:$0xff]
      %v255 = vld [vmem:[%s218 + $0x60] sm:$0xff]
      %v256 = vld [vmem:[%s218 + $0x68] sm:$0xff]
      %v257 = vld [vmem:[%s218 + $0x70] sm:$0xff]
      %v258 = vld [vmem:[%s218 + $0x78] sm:$0xff]
      %v259 = vld [vmem:[%s218 + $0x80] sm:$0xff]
      %v260 = vld [vmem:[%s218 + $0x88] sm:$0xff]
      %v261 = vld [vmem:[%s218 + $0x90] sm:$0xff]
      %v262 = vld [vmem:[%s218 + $0x98] sm:$0xff]
      %v263 = vld [vmem:[%s218 + $0xa0] sm:$0xff]
      %v264 = vld [vmem:[%s218 + $0xa8] sm:$0xff]
      %v265 = vld [vmem:[%s218 + $0xb0] sm:$0xff]
      %v266 = vld [vmem:[%s218 + $0xb8] sm:$0xff]
      %v267 = vld [vmem:[%s218 + $0xc0] sm:$0xff]
      %v268 = vld [vmem:[%s218 + $0xc8] sm:$0xff]
      %v269 = vld [vmem:[%s218 + $0xd0] sm:$0xff]
      %v270 = vld [vmem:[%s218 + $0xd8] sm:$0xff]
      %v271 = vld [vmem:[%s218 + $0xe0] sm:$0xff]
      %v272 = vld [vmem:[%s218 + $0xe8] sm:$0xff]
      %v273 = vld [vmem:[%s218 + $0xf0] sm:$0xff]
      %v274 = vld [vmem:[%s218 + $0xf8] sm:$0xff]
      %v275 = vld [vmem:[%s218 + $0x100] sm:$0xff]
      %v276 = vld [vmem:[%s218 + $0x108] sm:$0xff]
      %v277 = vld [vmem:[%s218 + $0x110] sm:$0xff]
      %v278 = vld [vmem:[%s218 + $0x118] sm:$0xff]
      %v279 = vld [vmem:[%s218 + $0x120] sm:$0xff]
      %v280 = vld [vmem:[%s218 + $0x128] sm:$0xff]
      %v281 = vld [vmem:[%s218 + $0x130] sm:$0xff]
      %v282 = vld [vmem:[%s218 + $0x138] sm:$0xff]
      %v283 = vld [vmem:[%s218 + $0x140] sm:$0xff]
      %v284 = vld [vmem:[%s218 + $0x148] sm:$0xff]
      %v285 = vld [vmem:[%s218 + $0x150] sm:$0xff]
      %v286 = vld [vmem:[%s218 + $0x158] sm:$0xff]
      %v287 = vld [vmem:[%s218 + $0x160] sm:$0xff]
      %v288 = vld [vmem:[%s218 + $0x168] sm:$0xff]
      %v289 = vld [vmem:[%s218 + $0x170] sm:$0xff]
      %v290 = vld [vmem:[%s218 + $0x178] sm:$0xff]
      %v291 = vld [vmem:[%s218 + $0x180] sm:$0xff]
      %v292 = vld [vmem:[%s218 + $0x188] sm:$0xff]
      %v293 = vld [vmem:[%s218 + $0x190] sm:$0xff]
      %v294 = vld [vmem:[%s218 + $0x198] sm:$0xff]
      %v295 = vld [vmem:[%s218 + $0x1a0] sm:$0xff]
      %v296 = vld [vmem:[%s218 + $0x1a8] sm:$0xff]
      %v297 = vld [vmem:[%s218 + $0x1b0] sm:$0xff]
      %v298 = vld [vmem:[%s218 + $0x1b8] sm:$0xff]
      %v299 = vld [vmem:[%s218 + $0x1c0] sm:$0xff]
      %v300 = vld [vmem:[%s218 + $0x1c8] sm:$0xff]
      %v301 = vld [vmem:[%s218 + $0x1d0] sm:$0xff]
      %v302 = vld [vmem:[%s218 + $0x1d8] sm:$0xff]
      %v303 = vld [vmem:[%s218 + $0x1e0] sm:$0xff]
      %v304 = vld [vmem:[%s218 + $0x1e8] sm:$0xff]
      %v305 = vld [vmem:[%s218 + $0x1f0] sm:$0xff]
      %v306 = vld [vmem:[%s218 + $0x1f8] sm:$0xff]
      %v307 = vld [vmem:[%s224] sm:$0xff]
      %v308 = vld [vmem:[%s224 + $0x8] sm:$0xff]
      %v309 = vld [vmem:[%s224 + $0x10] sm:$0xff]
      %v310 = vld [vmem:[%s224 + $0x18] sm:$0xff]
      %v311 = vld [vmem:[%s224 + $0x20] sm:$0xff]
      %v312 = vld [vmem:[%s224 + $0x28] sm:$0xff]
      %v313 = vld [vmem:[%s224 + $0x30] sm:$0xff]
      %v314 = vld [vmem:[%s224 + $0x38] sm:$0xff]
      %v315 = vld [vmem:[%s224 + $0x40] sm:$0xff]
      %v316 = vld [vmem:[%s224 + $0x48] sm:$0xff]
      %v317 = vld [vmem:[%s224 + $0x50] sm:$0xff]
      %v318 = vld [vmem:[%s224 + $0x58] sm:$0xff]
      %v319 = vld [vmem:[%s224 + $0x60] sm:$0xff]
      %v320 = vld [vmem:[%s224 + $0x68] sm:$0xff]
      %v321 = vld [vmem:[%s224 + $0x70] sm:$0xff]
      %v322 = vld [vmem:[%s224 + $0x78] sm:$0xff]
      %v323 = vld [vmem:[%s224 + $0x80] sm:$0xff]
      %v324 = vld [vmem:[%s224 + $0x88] sm:$0xff]
      %v325 = vld [vmem:[%s224 + $0x90] sm:$0xff]
      %v326 = vld [vmem:[%s224 + $0x98] sm:$0xff]
      %v327 = vld [vmem:[%s224 + $0xa0] sm:$0xff]
      %v328 = vld [vmem:[%s224 + $0xa8] sm:$0xff]
      %v329 = vld [vmem:[%s224 + $0xb0] sm:$0xff]
      %v330 = vld [vmem:[%s224 + $0xb8] sm:$0xff]
      %v331 = vld [vmem:[%s224 + $0xc0] sm:$0xff]
      %v332 = vld [vmem:[%s224 + $0xc8] sm:$0xff]
      %v333 = vld [vmem:[%s224 + $0xd0] sm:$0xff]
      %v334 = vld [vmem:[%s224 + $0xd8] sm:$0xff]
      %v335 = vld [vmem:[%s224 + $0xe0] sm:$0xff]
      %v336 = vld [vmem:[%s224 + $0xe8] sm:$0xff]
      %v337 = vld [vmem:[%s224 + $0xf0] sm:$0xff]
      %v338 = vld [vmem:[%s224 + $0xf8] sm:$0xff]
      %v339 = vld [vmem:[%s224 + $0x100] sm:$0xff]
      %v340 = vld [vmem:[%s224 + $0x108] sm:$0xff]
      %v341 = vld [vmem:[%s224 + $0x110] sm:$0xff]
      %v342 = vld [vmem:[%s224 + $0x118] sm:$0xff]
      %v343 = vld [vmem:[%s224 + $0x120] sm:$0xff]
      %v344 = vld [vmem:[%s224 + $0x128] sm:$0xff]
      %v345 = vld [vmem:[%s224 + $0x130] sm:$0xff]
      %v346 = vld [vmem:[%s224 + $0x138] sm:$0xff]
      %v347 = vld [vmem:[%s224 + $0x140] sm:$0xff]
      %v348 = vld [vmem:[%s224 + $0x148] sm:$0xff]
      %v349 = vld [vmem:[%s224 + $0x150] sm:$0xff]
      %v350 = vld [vmem:[%s224 + $0x158] sm:$0xff]
      %v351 = vld [vmem:[%s224 + $0x160] sm:$0xff]
      %v352 = vld [vmem:[%s224 + $0x168] sm:$0xff]
      %v353 = vld [vmem:[%s224 + $0x170] sm:$0xff]
      %v354 = vld [vmem:[%s224 + $0x178] sm:$0xff]
      %v355 = vld [vmem:[%s224 + $0x180] sm:$0xff]
      %v356 = vld [vmem:[%s224 + $0x188] sm:$0xff]
      %v357 = vld [vmem:[%s224 + $0x190] sm:$0xff]
      %v358 = vld [vmem:[%s224 + $0x198] sm:$0xff]
      %v359 = vld [vmem:[%s224 + $0x1a0] sm:$0xff]
      %v360 = vld [vmem:[%s224 + $0x1a8] sm:$0xff]
      %v361 = vld [vmem:[%s224 + $0x1b0] sm:$0xff]
      %v362 = vld [vmem:[%s224 + $0x1b8] sm:$0xff]
      %v363 = vld [vmem:[%s224 + $0x1c0] sm:$0xff]
      %v364 = vld [vmem:[%s224 + $0x1c8] sm:$0xff]
      %v365 = vld [vmem:[%s224 + $0x1d0] sm:$0xff]
      %v366 = vld [vmem:[%s224 + $0x1d8] sm:$0xff]
      %v367 = vld [vmem:[%s224 + $0x1e0] sm:$0xff]
      %v368 = vld [vmem:[%s224 + $0x1e8] sm:$0xff]
      %v369 = vld [vmem:[%s224 + $0x1f0] sm:$0xff]
      %v370 = vld [vmem:[%s224 + $0x1f8] sm:$0xff]
      %v371 = vld [vmem:[%s224 + $0x200] sm:$0xff]
      %v372 = vld [vmem:[%s224 + $0x208] sm:$0xff]
      %v373 = vld [vmem:[%s224 + $0x210] sm:$0xff]
      %v374 = vld [vmem:[%s224 + $0x218] sm:$0xff]
      %v375 = vld [vmem:[%s224 + $0x220] sm:$0xff]
      %v376 = vld [vmem:[%s224 + $0x228] sm:$0xff]
      %v377 = vld [vmem:[%s224 + $0x230] sm:$0xff]
      %v378 = vld [vmem:[%s224 + $0x238] sm:$0xff]
      %v379 = vld [vmem:[%s224 + $0x240] sm:$0xff]
      %v380 = vld [vmem:[%s224 + $0x248] sm:$0xff]
      %v381 = vld [vmem:[%s224 + $0x250] sm:$0xff]
      %v382 = vld [vmem:[%s224 + $0x258] sm:$0xff]
      %v383 = vld [vmem:[%s224 + $0x260] sm:$0xff]
      %v384 = vld [vmem:[%s224 + $0x268] sm:$0xff]
      %v385 = vld [vmem:[%s224 + $0x270] sm:$0xff]
      %v386 = vld [vmem:[%s224 + $0x278] sm:$0xff]
      %v387 = vld [vmem:[%s224 + $0x280] sm:$0xff]
      %v388 = vld [vmem:[%s224 + $0x288] sm:$0xff]
      %v389 = vld [vmem:[%s224 + $0x290] sm:$0xff]
      %v390 = vld [vmem:[%s224 + $0x298] sm:$0xff]
      %v391 = vld [vmem:[%s224 + $0x2a0] sm:$0xff]
      %v392 = vld [vmem:[%s224 + $0x2a8] sm:$0xff]
      %v393 = vld [vmem:[%s224 + $0x2b0] sm:$0xff]
      %v394 = vld [vmem:[%s224 + $0x2b8] sm:$0xff]
      %v395 = vld [vmem:[%s224 + $0x2c0] sm:$0xff]
      %v396 = vld [vmem:[%s224 + $0x2c8] sm:$0xff]
      %v397 = vld [vmem:[%s224 + $0x2d0] sm:$0xff]
      %v398 = vld [vmem:[%s224 + $0x2d8] sm:$0xff]
      %v399 = vld [vmem:[%s224 + $0x2e0] sm:$0xff]
      %v400 = vld [vmem:[%s224 + $0x2e8] sm:$0xff]
      %v401 = vld [vmem:[%s224 + $0x2f0] sm:$0xff]
      %v402 = vld [vmem:[%s224 + $0x2f8] sm:$0xff]
      %v403 = vld [vmem:[%s224 + $0x300] sm:$0xff]
      %v404 = vld [vmem:[%s224 + $0x308] sm:$0xff]
      %v405 = vld [vmem:[%s224 + $0x310] sm:$0xff]
      %v406 = vld [vmem:[%s224 + $0x318] sm:$0xff]
      %v407 = vld [vmem:[%s224 + $0x320] sm:$0xff]
      %v408 = vld [vmem:[%s224 + $0x328] sm:$0xff]
      %v409 = vld [vmem:[%s224 + $0x330] sm:$0xff]
      %v410 = vld [vmem:[%s224 + $0x338] sm:$0xff]
      %v411 = vld [vmem:[%s224 + $0x340] sm:$0xff]
      %v412 = vld [vmem:[%s224 + $0x348] sm:$0xff]
      %v413 = vld [vmem:[%s224 + $0x350] sm:$0xff]
      %v414 = vld [vmem:[%s224 + $0x358] sm:$0xff]
      %v415 = vld [vmem:[%s224 + $0x360] sm:$0xff]
      %v416 = vld [vmem:[%s224 + $0x368] sm:$0xff]
      %v417 = vld [vmem:[%s224 + $0x370] sm:$0xff]
      %v418 = vld [vmem:[%s224 + $0x378] sm:$0xff]
      %v419 = vld [vmem:[%s224 + $0x380] sm:$0xff]
      %v420 = vld [vmem:[%s224 + $0x388] sm:$0xff]
      %v421 = vld [vmem:[%s224 + $0x390] sm:$0xff]
      %v422 = vld [vmem:[%s224 + $0x398] sm:$0xff]
      %v423 = vld [vmem:[%s224 + $0x3a0] sm:$0xff]
      %v424 = vld [vmem:[%s224 + $0x3a8] sm:$0xff]
      %v425 = vld [vmem:[%s224 + $0x3b0] sm:$0xff]
      %v426 = vld [vmem:[%s224 + $0x3b8] sm:$0xff]
      %v427 = vld [vmem:[%s224 + $0x3c0] sm:$0xff]
      %v428 = vld [vmem:[%s224 + $0x3c8] sm:$0xff]
      %v429 = vld [vmem:[%s224 + $0x3d0] sm:$0xff]
      %v430 = vld [vmem:[%s224 + $0x3d8] sm:$0xff]
      %v431 = vld [vmem:[%s224 + $0x3e0] sm:$0xff]
      %v432 = vld [vmem:[%s224 + $0x3e8] sm:$0xff]
      %v433 = vld [vmem:[%s224 + $0x3f0] sm:$0xff]
      %v434 = vld [vmem:[%s224 + $0x3f8] sm:$0xff]
      %v435 = vld [vmem:[%s224 + $0x400] sm:$0xff]
      %v436 = vld [vmem:[%s224 + $0x408] sm:$0xff]
      %v437 = vld [vmem:[%s224 + $0x410] sm:$0xff]
      %v438 = vld [vmem:[%s224 + $0x418] sm:$0xff]
      %v439 = vld [vmem:[%s224 + $0x420] sm:$0xff]
      %v440 = vld [vmem:[%s224 + $0x428] sm:$0xff]
      %v441 = vld [vmem:[%s224 + $0x430] sm:$0xff]
      %v442 = vld [vmem:[%s224 + $0x438] sm:$0xff]
      %v443 = vld [vmem:[%s224 + $0x440] sm:$0xff]
      %v444 = vld [vmem:[%s224 + $0x448] sm:$0xff]
      %v445 = vld [vmem:[%s224 + $0x450] sm:$0xff]
      %v446 = vld [vmem:[%s224 + $0x458] sm:$0xff]
      %v447 = vld [vmem:[%s224 + $0x460] sm:$0xff]
      %v448 = vld [vmem:[%s224 + $0x468] sm:$0xff]
      %v449 = vld [vmem:[%s224 + $0x470] sm:$0xff]
      %v450 = vld [vmem:[%s224 + $0x478] sm:$0xff]
      %v451 = vld [vmem:[%s224 + $0x480] sm:$0xff]
      %v452 = vld [vmem:[%s224 + $0x488] sm:$0xff]
      %v453 = vld [vmem:[%s224 + $0x490] sm:$0xff]
      %v454 = vld [vmem:[%s224 + $0x498] sm:$0xff]
      %v455 = vld [vmem:[%s224 + $0x4a0] sm:$0xff]
      %v456 = vld [vmem:[%s224 + $0x4a8] sm:$0xff]
      %v457 = vld [vmem:[%s224 + $0x4b0] sm:$0xff]
      %v458 = vld [vmem:[%s224 + $0x4b8] sm:$0xff]
      %v459 = vld [vmem:[%s224 + $0x4c0] sm:$0xff]
      %v460 = vld [vmem:[%s224 + $0x4c8] sm:$0xff]
      %v461 = vld [vmem:[%s224 + $0x4d0] sm:$0xff]
      %v462 = vld [vmem:[%s224 + $0x4d8] sm:$0xff]
      %v463 = vld [vmem:[%s224 + $0x4e0] sm:$0xff]
      %v464 = vld [vmem:[%s224 + $0x4e8] sm:$0xff]
      %v465 = vld [vmem:[%s224 + $0x4f0] sm:$0xff]
      %v466 = vld [vmem:[%s224 + $0x4f8] sm:$0xff]
      %v467 = vld [vmem:[%s224 + $0x500] sm:$0xff]
      %v468 = vld [vmem:[%s224 + $0x508] sm:$0xff]
      %v469 = vld [vmem:[%s224 + $0x510] sm:$0xff]
      %v470 = vld [vmem:[%s224 + $0x518] sm:$0xff]
      %v471 = vld [vmem:[%s224 + $0x520] sm:$0xff]
      %v472 = vld [vmem:[%s224 + $0x528] sm:$0xff]
      %v473 = vld [vmem:[%s224 + $0x530] sm:$0xff]
      %v474 = vld [vmem:[%s224 + $0x538] sm:$0xff]
      %v475 = vld [vmem:[%s224 + $0x540] sm:$0xff]
      %v476 = vld [vmem:[%s224 + $0x548] sm:$0xff]
      %v477 = vld [vmem:[%s224 + $0x550] sm:$0xff]
      %v478 = vld [vmem:[%s224 + $0x558] sm:$0xff]
      %v479 = vld [vmem:[%s224 + $0x560] sm:$0xff]
      %v480 = vld [vmem:[%s224 + $0x568] sm:$0xff]
      %v481 = vld [vmem:[%s224 + $0x570] sm:$0xff]
      %v482 = vld [vmem:[%s224 + $0x578] sm:$0xff]
      %v483 = vld [vmem:[%s224 + $0x580] sm:$0xff]
      %v484 = vld [vmem:[%s224 + $0x588] sm:$0xff]
      %v485 = vld [vmem:[%s224 + $0x590] sm:$0xff]
      %v486 = vld [vmem:[%s224 + $0x598] sm:$0xff]
      %v487 = vld [vmem:[%s224 + $0x5a0] sm:$0xff]
      %v488 = vld [vmem:[%s224 + $0x5a8] sm:$0xff]
      %v489 = vld [vmem:[%s224 + $0x5b0] sm:$0xff]
      %v490 = vld [vmem:[%s224 + $0x5b8] sm:$0xff]
      %v491 = vld [vmem:[%s224 + $0x5c0] sm:$0xff]
      %v492 = vld [vmem:[%s224 + $0x5c8] sm:$0xff]
      %v493 = vld [vmem:[%s224 + $0x5d0] sm:$0xff]
      %v494 = vld [vmem:[%s224 + $0x5d8] sm:$0xff]
      %v495 = vld [vmem:[%s224 + $0x5e0] sm:$0xff]
      %v496 = vld [vmem:[%s224 + $0x5e8] sm:$0xff]
      %v497 = vld [vmem:[%s224 + $0x5f0] sm:$0xff]
      %v498 = vld [vmem:[%s224 + $0x5f8] sm:$0xff]
      %v499 = vld [vmem:[%s224 + $0x600] sm:$0xff]
      %v500 = vld [vmem:[%s224 + $0x608] sm:$0xff]
      %v501 = vld [vmem:[%s224 + $0x610] sm:$0xff]
      %v502 = vld [vmem:[%s224 + $0x618] sm:$0xff]
      %v503 = vld [vmem:[%s224 + $0x620] sm:$0xff]
      %v504 = vld [vmem:[%s224 + $0x628] sm:$0xff]
      %v505 = vld [vmem:[%s224 + $0x630] sm:$0xff]
      %v506 = vld [vmem:[%s224 + $0x638] sm:$0xff]
      %v507 = vld [vmem:[%s224 + $0x640] sm:$0xff]
      %v508 = vld [vmem:[%s224 + $0x648] sm:$0xff]
      %v509 = vld [vmem:[%s224 + $0x650] sm:$0xff]
      %v510 = vld [vmem:[%s224 + $0x658] sm:$0xff]
      %v511 = vld [vmem:[%s224 + $0x660] sm:$0xff]
      %v512 = vld [vmem:[%s224 + $0x668] sm:$0xff]
      %v513 = vld [vmem:[%s224 + $0x670] sm:$0xff]
      %v514 = vld [vmem:[%s224 + $0x678] sm:$0xff]
      %v515 = vld [vmem:[%s224 + $0x680] sm:$0xff]
      %v516 = vld [vmem:[%s224 + $0x688] sm:$0xff]
      %v517 = vld [vmem:[%s224 + $0x690] sm:$0xff]
      %v518 = vld [vmem:[%s224 + $0x698] sm:$0xff]
      %v519 = vld [vmem:[%s224 + $0x6a0] sm:$0xff]
      %v520 = vld [vmem:[%s224 + $0x6a8] sm:$0xff]
      %v521 = vld [vmem:[%s224 + $0x6b0] sm:$0xff]
      %v522 = vld [vmem:[%s224 + $0x6b8] sm:$0xff]
      %v523 = vld [vmem:[%s224 + $0x6c0] sm:$0xff]
      %v524 = vld [vmem:[%s224 + $0x6c8] sm:$0xff]
      %v525 = vld [vmem:[%s224 + $0x6d0] sm:$0xff]
      %v526 = vld [vmem:[%s224 + $0x6d8] sm:$0xff]
      %v527 = vld [vmem:[%s224 + $0x6e0] sm:$0xff]
      %v528 = vld [vmem:[%s224 + $0x6e8] sm:$0xff]
      %v529 = vld [vmem:[%s224 + $0x6f0] sm:$0xff]
      %v530 = vld [vmem:[%s224 + $0x6f8] sm:$0xff]
      %v531 = vld [vmem:[%s224 + $0x700] sm:$0xff]
      %v532 = vld [vmem:[%s224 + $0x708] sm:$0xff]
      %v533 = vld [vmem:[%s224 + $0x710] sm:$0xff]
      %v534 = vld [vmem:[%s224 + $0x718] sm:$0xff]
      %v535 = vld [vmem:[%s224 + $0x720] sm:$0xff]
      %v536 = vld [vmem:[%s224 + $0x728] sm:$0xff]
      %v537 = vld [vmem:[%s224 + $0x730] sm:$0xff]
      %v538 = vld [vmem:[%s224 + $0x738] sm:$0xff]
      %v539 = vld [vmem:[%s224 + $0x740] sm:$0xff]
      %v540 = vld [vmem:[%s224 + $0x748] sm:$0xff]
      %v541 = vld [vmem:[%s224 + $0x750] sm:$0xff]
      %v542 = vld [vmem:[%s224 + $0x758] sm:$0xff]
      %v543 = vld [vmem:[%s224 + $0x760] sm:$0xff]
      %v544 = vld [vmem:[%s224 + $0x768] sm:$0xff]
      %v545 = vld [vmem:[%s224 + $0x770] sm:$0xff]
      %v546 = vld [vmem:[%s224 + $0x778] sm:$0xff]
      %v547 = vld [vmem:[%s224 + $0x780] sm:$0xff]
      %v548 = vld [vmem:[%s224 + $0x788] sm:$0xff]
      %v549 = vld [vmem:[%s224 + $0x790] sm:$0xff]
      %v550 = vld [vmem:[%s224 + $0x798] sm:$0xff]
      %v551 = vld [vmem:[%s224 + $0x7a0] sm:$0xff]
      %v552 = vld [vmem:[%s224 + $0x7a8] sm:$0xff]
      %v553 = vld [vmem:[%s224 + $0x7b0] sm:$0xff]
      %v554 = vld [vmem:[%s224 + $0x7b8] sm:$0xff]
      %v555 = vld [vmem:[%s224 + $0x7c0] sm:$0xff]
      %v556 = vld [vmem:[%s224 + $0x7c8] sm:$0xff]
      %v557 = vld [vmem:[%s224 + $0x7d0] sm:$0xff]
      %v558 = vld [vmem:[%s224 + $0x7d8] sm:$0xff]
      %v559 = vld [vmem:[%s224 + $0x7e0] sm:$0xff]
      %v560 = vld [vmem:[%s224 + $0x7e8] sm:$0xff]
      %v561 = vld [vmem:[%s224 + $0x7f0] sm:$0xff]
      %v562 = vld [vmem:[%s224 + $0x7f8] sm:$0xff]
      %v563 = vld [vmem:[%s229] sm:$0x3]
      %v565 = vlaneseq
      %v566 = vshrl.u32 %v565, 7
      %v567 = vsub.s32 0, %v566
      %v568 = vrot.slane %v563, %v567
      %v569 = vlaneseq
      %v570 = vshrl.u32 %v569, 7
      %v571 = vsub.s32 1, %v570
      %v572 = vrot.slane %v563, %v571
      %v639 = vunpack.c.l.b16 %v243
      %v640 = vunpack.c.h.b16 %v243
      %v641 = vunpack.c.l.b16 %v244
      %v642 = vunpack.c.h.b16 %v244
      %v643 = vunpack.c.l.b16 %v245
      %v644 = vunpack.c.h.b16 %v245
      %v645 = vunpack.c.l.b16 %v246
      %v646 = vunpack.c.h.b16 %v246
      %v647 = vunpack.c.l.b16 %v247
      %v648 = vunpack.c.h.b16 %v247
      %v649 = vunpack.c.l.b16 %v248
      %v650 = vunpack.c.h.b16 %v248
      %v651 = vunpack.c.l.b16 %v249
      %v652 = vunpack.c.h.b16 %v249
      %v653 = vunpack.c.l.b16 %v250
      %v654 = vunpack.c.h.b16 %v250
      %v655 = vunpack.c.l.b16 %v251
      %v656 = vunpack.c.h.b16 %v251
      %v657 = vunpack.c.l.b16 %v252
      %v658 = vunpack.c.h.b16 %v252
      %v659 = vunpack.c.l.b16 %v253
      %v660 = vunpack.c.h.b16 %v253
      %v661 = vunpack.c.l.b16 %v254
      %v662 = vunpack.c.h.b16 %v254
      %v663 = vunpack.c.l.b16 %v255
      %v664 = vunpack.c.h.b16 %v255
      %v665 = vunpack.c.l.b16 %v256
      %v666 = vunpack.c.h.b16 %v256
      %v667 = vunpack.c.l.b16 %v257
      %v668 = vunpack.c.h.b16 %v257
      %v669 = vunpack.c.l.b16 %v258
      %v670 = vunpack.c.h.b16 %v258
      %v671 = vunpack.c.l.b16 %v259
      %v672 = vunpack.c.h.b16 %v259
      %v673 = vunpack.c.l.b16 %v260
      %v674 = vunpack.c.h.b16 %v260
      %v675 = vunpack.c.l.b16 %v261
      %v676 = vunpack.c.h.b16 %v261
      %v677 = vunpack.c.l.b16 %v262
      %v678 = vunpack.c.h.b16 %v262
      %v679 = vunpack.c.l.b16 %v263
      %v680 = vunpack.c.h.b16 %v263
      %v681 = vunpack.c.l.b16 %v264
      %v682 = vunpack.c.h.b16 %v264
      %v683 = vunpack.c.l.b16 %v265
      %v684 = vunpack.c.h.b16 %v265
      %v685 = vunpack.c.l.b16 %v266
      %v686 = vunpack.c.h.b16 %v266
      %v687 = vunpack.c.l.b16 %v267
      %v688 = vunpack.c.h.b16 %v267
      %v689 = vunpack.c.l.b16 %v268
      %v690 = vunpack.c.h.b16 %v268
      %v691 = vunpack.c.l.b16 %v269
      %v692 = vunpack.c.h.b16 %v269
      %v693 = vunpack.c.l.b16 %v270
      %v694 = vunpack.c.h.b16 %v270
      %v695 = vunpack.c.l.b16 %v271
      %v696 = vunpack.c.h.b16 %v271
      %v697 = vunpack.c.l.b16 %v272
      %v698 = vunpack.c.h.b16 %v272
      %v699 = vunpack.c.l.b16 %v273
      %v700 = vunpack.c.h.b16 %v273
      %v701 = vunpack.c.l.b16 %v274
      %v702 = vunpack.c.h.b16 %v274
      %v703 = vunpack.c.l.b16 %v275
      %v704 = vunpack.c.h.b16 %v275
      %v705 = vunpack.c.l.b16 %v276
      %v706 = vunpack.c.h.b16 %v276
      %v707 = vunpack.c.l.b16 %v277
      %v708 = vunpack.c.h.b16 %v277
      %v709 = vunpack.c.l.b16 %v278
      %v710 = vunpack.c.h.b16 %v278
      %v711 = vunpack.c.l.b16 %v279
      %v712 = vunpack.c.h.b16 %v279
      %v713 = vunpack.c.l.b16 %v280
      %v714 = vunpack.c.h.b16 %v280
      %v715 = vunpack.c.l.b16 %v281
      %v716 = vunpack.c.h.b16 %v281
      %v717 = vunpack.c.l.b16 %v282
      %v718 = vunpack.c.h.b16 %v282
      %v719 = vunpack.c.l.b16 %v283
      %v720 = vunpack.c.h.b16 %v283
      %v721 = vunpack.c.l.b16 %v284
      %v722 = vunpack.c.h.b16 %v284
      %v723 = vunpack.c.l.b16 %v285
      %v724 = vunpack.c.h.b16 %v285
      %v725 = vunpack.c.l.b16 %v286
      %v726 = vunpack.c.h.b16 %v286
      %v727 = vunpack.c.l.b16 %v287
      %v728 = vunpack.c.h.b16 %v287
      %v729 = vunpack.c.l.b16 %v288
      %v730 = vunpack.c.h.b16 %v288
      %v731 = vunpack.c.l.b16 %v289
      %v732 = vunpack.c.h.b16 %v289
      %v733 = vunpack.c.l.b16 %v290
      %v734 = vunpack.c.h.b16 %v290
      %v735 = vunpack.c.l.b16 %v291
      %v736 = vunpack.c.h.b16 %v291
      %v737 = vunpack.c.l.b16 %v292
      %v738 = vunpack.c.h.b16 %v292
      %v739 = vunpack.c.l.b16 %v293
      %v740 = vunpack.c.h.b16 %v293
      %v741 = vunpack.c.l.b16 %v294
      %v742 = vunpack.c.h.b16 %v294
      %v743 = vunpack.c.l.b16 %v295
      %v744 = vunpack.c.h.b16 %v295
      %v745 = vunpack.c.l.b16 %v296
      %v746 = vunpack.c.h.b16 %v296
      %v747 = vunpack.c.l.b16 %v297
      %v748 = vunpack.c.h.b16 %v297
      %v749 = vunpack.c.l.b16 %v298
      %v750 = vunpack.c.h.b16 %v298
      %v751 = vunpack.c.l.b16 %v299
      %v752 = vunpack.c.h.b16 %v299
      %v753 = vunpack.c.l.b16 %v300
      %v754 = vunpack.c.h.b16 %v300
      %v755 = vunpack.c.l.b16 %v301
      %v756 = vunpack.c.h.b16 %v301
      %v757 = vunpack.c.l.b16 %v302
      %v758 = vunpack.c.h.b16 %v302
      %v759 = vunpack.c.l.b16 %v303
      %v760 = vunpack.c.h.b16 %v303
      %v761 = vunpack.c.l.b16 %v304
      %v762 = vunpack.c.h.b16 %v304
      %v763 = vunpack.c.l.b16 %v305
      %v764 = vunpack.c.h.b16 %v305
      %v765 = vunpack.c.l.b16 %v306
      %v766 = vunpack.c.h.b16 %v306
      %v767 = vpack.c.b16 %v655, %v639
      %v768 = vpack.c.b16 %v656, %v640
      %v769 = vpack.c.b16 %v657, %v641
      %v770 = vpack.c.b16 %v658, %v642
      %v771 = vpack.c.b16 %v659, %v643
      %v772 = vpack.c.b16 %v660, %v644
      %v773 = vpack.c.b16 %v661, %v645
      %v774 = vpack.c.b16 %v662, %v646
      %v775 = vpack.c.b16 %v663, %v647
      %v776 = vpack.c.b16 %v664, %v648
      %v777 = vpack.c.b16 %v665, %v649
      %v778 = vpack.c.b16 %v666, %v650
      %v779 = vpack.c.b16 %v667, %v651
      %v780 = vpack.c.b16 %v668, %v652
      %v781 = vpack.c.b16 %v669, %v653
      %v782 = vpack.c.b16 %v670, %v654
      %v783 = vpack.c.b16 %v687, %v671
      %v784 = vpack.c.b16 %v688, %v672
      %v785 = vpack.c.b16 %v689, %v673
      %v786 = vpack.c.b16 %v690, %v674
      %v787 = vpack.c.b16 %v691, %v675
      %v788 = vpack.c.b16 %v692, %v676
      %v789 = vpack.c.b16 %v693, %v677
      %v790 = vpack.c.b16 %v694, %v678
      %v791 = vpack.c.b16 %v695, %v679
      %v792 = vpack.c.b16 %v696, %v680
      %v793 = vpack.c.b16 %v697, %v681
      %v794 = vpack.c.b16 %v698, %v682
      %v795 = vpack.c.b16 %v699, %v683
      %v796 = vpack.c.b16 %v700, %v684
      %v797 = vpack.c.b16 %v701, %v685
      %v798 = vpack.c.b16 %v702, %v686
      %v799 = vpack.c.b16 %v719, %v703
      %v800 = vpack.c.b16 %v720, %v704
      %v801 = vpack.c.b16 %v721, %v705
      %v802 = vpack.c.b16 %v722, %v706
      %v803 = vpack.c.b16 %v723, %v707
      %v804 = vpack.c.b16 %v724, %v708
      %v805 = vpack.c.b16 %v725, %v709
      %v806 = vpack.c.b16 %v726, %v710
      %v807 = vpack.c.b16 %v727, %v711
      %v808 = vpack.c.b16 %v728, %v712
      %v809 = vpack.c.b16 %v729, %v713
      %v810 = vpack.c.b16 %v730, %v714
      %v811 = vpack.c.b16 %v731, %v715
      %v812 = vpack.c.b16 %v732, %v716
      %v813 = vpack.c.b16 %v733, %v717
      %v814 = vpack.c.b16 %v734, %v718
      %v815 = vpack.c.b16 %v751, %v735
      %v816 = vpack.c.b16 %v752, %v736
      %v817 = vpack.c.b16 %v753, %v737
      %v818 = vpack.c.b16 %v754, %v738
      %v819 = vpack.c.b16 %v755, %v739
      %v820 = vpack.c.b16 %v756, %v740
      %v821 = vpack.c.b16 %v757, %v741
      %v822 = vpack.c.b16 %v758, %v742
      %v823 = vpack.c.b16 %v759, %v743
      %v824 = vpack.c.b16 %v760, %v744
      %v825 = vpack.c.b16 %v761, %v745
      %v826 = vpack.c.b16 %v762, %v746
      %v827 = vpack.c.b16 %v763, %v747
      %v828 = vpack.c.b16 %v764, %v748
      %v829 = vpack.c.b16 %v765, %v749
      %v830 = vpack.c.b16 %v766, %v750
      %v1151 = vunpack.c.l.b16 %v307
      %v1152 = vunpack.c.h.b16 %v307
      %v1153 = vunpack.c.l.b16 %v308
      %v1154 = vunpack.c.h.b16 %v308
      %v1155 = vunpack.c.l.b16 %v309
      %v1156 = vunpack.c.h.b16 %v309
      %v1157 = vunpack.c.l.b16 %v310
      %v1158 = vunpack.c.h.b16 %v310
      %v1159 = vunpack.c.l.b16 %v311
      %v1160 = vunpack.c.h.b16 %v311
      %v1161 = vunpack.c.l.b16 %v312
      %v1162 = vunpack.c.h.b16 %v312
      %v1163 = vunpack.c.l.b16 %v313
      %v1164 = vunpack.c.h.b16 %v313
      %v1165 = vunpack.c.l.b16 %v314
      %v1166 = vunpack.c.h.b16 %v314
      %v1167 = vunpack.c.l.b16 %v315
      %v1168 = vunpack.c.h.b16 %v315
      %v1169 = vunpack.c.l.b16 %v316
      %v1170 = vunpack.c.h.b16 %v316
      %v1171 = vunpack.c.l.b16 %v317
      %v1172 = vunpack.c.h.b16 %v317
      %v1173 = vunpack.c.l.b16 %v318
      %v1174 = vunpack.c.h.b16 %v318
      %v1175 = vunpack.c.l.b16 %v319
      %v1176 = vunpack.c.h.b16 %v319
      %v1177 = vunpack.c.l.b16 %v320
      %v1178 = vunpack.c.h.b16 %v320
      %v1179 = vunpack.c.l.b16 %v321
      %v1180 = vunpack.c.h.b16 %v321
      %v1181 = vunpack.c.l.b16 %v322
      %v1182 = vunpack.c.h.b16 %v322
      %v1183 = vunpack.c.l.b16 %v323
      %v1184 = vunpack.c.h.b16 %v323
      %v1185 = vunpack.c.l.b16 %v324
      %v1186 = vunpack.c.h.b16 %v324
      %v1187 = vunpack.c.l.b16 %v325
      %v1188 = vunpack.c.h.b16 %v325
      %v1189 = vunpack.c.l.b16 %v326
      %v1190 = vunpack.c.h.b16 %v326
      %v1191 = vunpack.c.l.b16 %v327
      %v1192 = vunpack.c.h.b16 %v327
      %v1193 = vunpack.c.l.b16 %v328
      %v1194 = vunpack.c.h.b16 %v328
      %v1195 = vunpack.c.l.b16 %v329
      %v1196 = vunpack.c.h.b16 %v329
      %v1197 = vunpack.c.l.b16 %v330
      %v1198 = vunpack.c.h.b16 %v330
      %v1199 = vunpack.c.l.b16 %v331
      %v1200 = vunpack.c.h.b16 %v331
      %v1201 = vunpack.c.l.b16 %v332
      %v1202 = vunpack.c.h.b16 %v332
      %v1203 = vunpack.c.l.b16 %v333
      %v1204 = vunpack.c.h.b16 %v333
      %v1205 = vunpack.c.l.b16 %v334
      %v1206 = vunpack.c.h.b16 %v334
      %v1207 = vunpack.c.l.b16 %v335
      %v1208 = vunpack.c.h.b16 %v335
      %v1209 = vunpack.c.l.b16 %v336
      %v1210 = vunpack.c.h.b16 %v336
      %v1211 = vunpack.c.l.b16 %v337
      %v1212 = vunpack.c.h.b16 %v337
      %v1213 = vunpack.c.l.b16 %v338
      %v1214 = vunpack.c.h.b16 %v338
      %v1215 = vunpack.c.l.b16 %v339
      %v1216 = vunpack.c.h.b16 %v339
      %v1217 = vunpack.c.l.b16 %v340
      %v1218 = vunpack.c.h.b16 %v340
      %v1219 = vunpack.c.l.b16 %v341
      %v1220 = vunpack.c.h.b16 %v341
      %v1221 = vunpack.c.l.b16 %v342
      %v1222 = vunpack.c.h.b16 %v342
      %v1223 = vunpack.c.l.b16 %v343
      %v1224 = vunpack.c.h.b16 %v343
      %v1225 = vunpack.c.l.b16 %v344
      %v1226 = vunpack.c.h.b16 %v344
      %v1227 = vunpack.c.l.b16 %v345
      %v1228 = vunpack.c.h.b16 %v345
      %v1229 = vunpack.c.l.b16 %v346
      %v1230 = vunpack.c.h.b16 %v346
      %v1231 = vunpack.c.l.b16 %v347
      %v1232 = vunpack.c.h.b16 %v347
      %v1233 = vunpack.c.l.b16 %v348
      %v1234 = vunpack.c.h.b16 %v348
      %v1235 = vunpack.c.l.b16 %v349
      %v1236 = vunpack.c.h.b16 %v349
      %v1237 = vunpack.c.l.b16 %v350
      %v1238 = vunpack.c.h.b16 %v350
      %v1239 = vunpack.c.l.b16 %v351
      %v1240 = vunpack.c.h.b16 %v351
      %v1241 = vunpack.c.l.b16 %v352
      %v1242 = vunpack.c.h.b16 %v352
      %v1243 = vunpack.c.l.b16 %v353
      %v1244 = vunpack.c.h.b16 %v353
      %v1245 = vunpack.c.l.b16 %v354
      %v1246 = vunpack.c.h.b16 %v354
      %v1247 = vunpack.c.l.b16 %v355
      %v1248 = vunpack.c.h.b16 %v355
      %v1249 = vunpack.c.l.b16 %v356
      %v1250 = vunpack.c.h.b16 %v356
      %v1251 = vunpack.c.l.b16 %v357
      %v1252 = vunpack.c.h.b16 %v357
      %v1253 = vunpack.c.l.b16 %v358
      %v1254 = vunpack.c.h.b16 %v358
      %v1255 = vunpack.c.l.b16 %v359
      %v1256 = vunpack.c.h.b16 %v359
      %v1257 = vunpack.c.l.b16 %v360
      %v1258 = vunpack.c.h.b16 %v360
      %v1259 = vunpack.c.l.b16 %v361
      %v1260 = vunpack.c.h.b16 %v361
      %v1261 = vunpack.c.l.b16 %v362
      %v1262 = vunpack.c.h.b16 %v362
      %v1263 = vunpack.c.l.b16 %v363
      %v1264 = vunpack.c.h.b16 %v363
      %v1265 = vunpack.c.l.b16 %v364
      %v1266 = vunpack.c.h.b16 %v364
      %v1267 = vunpack.c.l.b16 %v365
      %v1268 = vunpack.c.h.b16 %v365
      %v1269 = vunpack.c.l.b16 %v366
      %v1270 = vunpack.c.h.b16 %v366
      %v1271 = vunpack.c.l.b16 %v367
      %v1272 = vunpack.c.h.b16 %v367
      %v1273 = vunpack.c.l.b16 %v368
      %v1274 = vunpack.c.h.b16 %v368
      %v1275 = vunpack.c.l.b16 %v369
      %v1276 = vunpack.c.h.b16 %v369
      %v1277 = vunpack.c.l.b16 %v370
      %v1278 = vunpack.c.h.b16 %v370
      %v1279 = vunpack.c.l.b16 %v371
      %v1280 = vunpack.c.h.b16 %v371
      %v1281 = vunpack.c.l.b16 %v372
      %v1282 = vunpack.c.h.b16 %v372
      %v1283 = vunpack.c.l.b16 %v373
      %v1284 = vunpack.c.h.b16 %v373
      %v1285 = vunpack.c.l.b16 %v374
      %v1286 = vunpack.c.h.b16 %v374
      %v1287 = vunpack.c.l.b16 %v375
      %v1288 = vunpack.c.h.b16 %v375
      %v1289 = vunpack.c.l.b16 %v376
      %v1290 = vunpack.c.h.b16 %v376
      %v1291 = vunpack.c.l.b16 %v377
      %v1292 = vunpack.c.h.b16 %v377
      %v1293 = vunpack.c.l.b16 %v378
      %v1294 = vunpack.c.h.b16 %v378
      %v1295 = vunpack.c.l.b16 %v379
      %v1296 = vunpack.c.h.b16 %v379
      %v1297 = vunpack.c.l.b16 %v380
      %v1298 = vunpack.c.h.b16 %v380
      %v1299 = vunpack.c.l.b16 %v381
      %v1300 = vunpack.c.h.b16 %v381
      %v1301 = vunpack.c.l.b16 %v382
      %v1302 = vunpack.c.h.b16 %v382
      %v1303 = vunpack.c.l.b16 %v383
      %v1304 = vunpack.c.h.b16 %v383
      %v1305 = vunpack.c.l.b16 %v384
      %v1306 = vunpack.c.h.b16 %v384
      %v1307 = vunpack.c.l.b16 %v385
      %v1308 = vunpack.c.h.b16 %v385
      %v1309 = vunpack.c.l.b16 %v386
      %v1310 = vunpack.c.h.b16 %v386
      %v1311 = vunpack.c.l.b16 %v387
      %v1312 = vunpack.c.h.b16 %v387
      %v1313 = vunpack.c.l.b16 %v388
      %v1314 = vunpack.c.h.b16 %v388
      %v1315 = vunpack.c.l.b16 %v389
      %v1316 = vunpack.c.h.b16 %v389
      %v1317 = vunpack.c.l.b16 %v390
      %v1318 = vunpack.c.h.b16 %v390
      %v1319 = vunpack.c.l.b16 %v391
      %v1320 = vunpack.c.h.b16 %v391
      %v1321 = vunpack.c.l.b16 %v392
      %v1322 = vunpack.c.h.b16 %v392
      %v1323 = vunpack.c.l.b16 %v393
      %v1324 = vunpack.c.h.b16 %v393
      %v1325 = vunpack.c.l.b16 %v394
      %v1326 = vunpack.c.h.b16 %v394
      %v1327 = vunpack.c.l.b16 %v395
      %v1328 = vunpack.c.h.b16 %v395
      %v1329 = vunpack.c.l.b16 %v396
      %v1330 = vunpack.c.h.b16 %v396
      %v1331 = vunpack.c.l.b16 %v397
      %v1332 = vunpack.c.h.b16 %v397
      %v1333 = vunpack.c.l.b16 %v398
      %v1334 = vunpack.c.h.b16 %v398
      %v1335 = vunpack.c.l.b16 %v399
      %v1336 = vunpack.c.h.b16 %v399
      %v1337 = vunpack.c.l.b16 %v400
      %v1338 = vunpack.c.h.b16 %v400
      %v1339 = vunpack.c.l.b16 %v401
      %v1340 = vunpack.c.h.b16 %v401
      %v1341 = vunpack.c.l.b16 %v402
      %v1342 = vunpack.c.h.b16 %v402
      %v1343 = vunpack.c.l.b16 %v403
      %v1344 = vunpack.c.h.b16 %v403
      %v1345 = vunpack.c.l.b16 %v404
      %v1346 = vunpack.c.h.b16 %v404
      %v1347 = vunpack.c.l.b16 %v405
      %v1348 = vunpack.c.h.b16 %v405
      %v1349 = vunpack.c.l.b16 %v406
      %v1350 = vunpack.c.h.b16 %v406
      %v1351 = vunpack.c.l.b16 %v407
      %v1352 = vunpack.c.h.b16 %v407
      %v1353 = vunpack.c.l.b16 %v408
      %v1354 = vunpack.c.h.b16 %v408
      %v1355 = vunpack.c.l.b16 %v409
      %v1356 = vunpack.c.h.b16 %v409
      %v1357 = vunpack.c.l.b16 %v410
      %v1358 = vunpack.c.h.b16 %v410
      %v1359 = vunpack.c.l.b16 %v411
      %v1360 = vunpack.c.h.b16 %v411
      %v1361 = vunpack.c.l.b16 %v412
      %v1362 = vunpack.c.h.b16 %v412
      %v1363 = vunpack.c.l.b16 %v413
      %v1364 = vunpack.c.h.b16 %v413
      %v1365 = vunpack.c.l.b16 %v414
      %v1366 = vunpack.c.h.b16 %v414
      %v1367 = vunpack.c.l.b16 %v415
      %v1368 = vunpack.c.h.b16 %v415
      %v1369 = vunpack.c.l.b16 %v416
      %v1370 = vunpack.c.h.b16 %v416
      %v1371 = vunpack.c.l.b16 %v417
      %v1372 = vunpack.c.h.b16 %v417
      %v1373 = vunpack.c.l.b16 %v418
      %v1374 = vunpack.c.h.b16 %v418
      %v1375 = vunpack.c.l.b16 %v419
      %v1376 = vunpack.c.h.b16 %v419
      %v1377 = vunpack.c.l.b16 %v420
      %v1378 = vunpack.c.h.b16 %v420
      %v1379 = vunpack.c.l.b16 %v421
      %v1380 = vunpack.c.h.b16 %v421
      %v1381 = vunpack.c.l.b16 %v422
      %v1382 = vunpack.c.h.b16 %v422
      %v1383 = vunpack.c.l.b16 %v423
      %v1384 = vunpack.c.h.b16 %v423
      %v1385 = vunpack.c.l.b16 %v424
      %v1386 = vunpack.c.h.b16 %v424
      %v1387 = vunpack.c.l.b16 %v425
      %v1388 = vunpack.c.h.b16 %v425
      %v1389 = vunpack.c.l.b16 %v426
      %v1390 = vunpack.c.h.b16 %v426
      %v1391 = vunpack.c.l.b16 %v427
      %v1392 = vunpack.c.h.b16 %v427
      %v1393 = vunpack.c.l.b16 %v428
      %v1394 = vunpack.c.h.b16 %v428
      %v1395 = vunpack.c.l.b16 %v429
      %v1396 = vunpack.c.h.b16 %v429
      %v1397 = vunpack.c.l.b16 %v430
      %v1398 = vunpack.c.h.b16 %v430
      %v1399 = vunpack.c.l.b16 %v431
      %v1400 = vunpack.c.h.b16 %v431
      %v1401 = vunpack.c.l.b16 %v432
      %v1402 = vunpack.c.h.b16 %v432
      %v1403 = vunpack.c.l.b16 %v433
      %v1404 = vunpack.c.h.b16 %v433
      %v1405 = vunpack.c.l.b16 %v434
      %v1406 = vunpack.c.h.b16 %v434
      %v1407 = vunpack.c.l.b16 %v435
      %v1408 = vunpack.c.h.b16 %v435
      %v1409 = vunpack.c.l.b16 %v436
      %v1410 = vunpack.c.h.b16 %v436
      %v1411 = vunpack.c.l.b16 %v437
      %v1412 = vunpack.c.h.b16 %v437
      %v1413 = vunpack.c.l.b16 %v438
      %v1414 = vunpack.c.h.b16 %v438
      %v1415 = vunpack.c.l.b16 %v439
      %v1416 = vunpack.c.h.b16 %v439
      %v1417 = vunpack.c.l.b16 %v440
      %v1418 = vunpack.c.h.b16 %v440
      %v1419 = vunpack.c.l.b16 %v441
      %v1420 = vunpack.c.h.b16 %v441
      %v1421 = vunpack.c.l.b16 %v442
      %v1422 = vunpack.c.h.b16 %v442
      %v1423 = vunpack.c.l.b16 %v443
      %v1424 = vunpack.c.h.b16 %v443
      %v1425 = vunpack.c.l.b16 %v444
      %v1426 = vunpack.c.h.b16 %v444
      %v1427 = vunpack.c.l.b16 %v445
      %v1428 = vunpack.c.h.b16 %v445
      %v1429 = vunpack.c.l.b16 %v446
      %v1430 = vunpack.c.h.b16 %v446
      %v1431 = vunpack.c.l.b16 %v447
      %v1432 = vunpack.c.h.b16 %v447
      %v1433 = vunpack.c.l.b16 %v448
      %v1434 = vunpack.c.h.b16 %v448
      %v1435 = vunpack.c.l.b16 %v449
      %v1436 = vunpack.c.h.b16 %v449
      %v1437 = vunpack.c.l.b16 %v450
      %v1438 = vunpack.c.h.b16 %v450
      %v1439 = vunpack.c.l.b16 %v451
      %v1440 = vunpack.c.h.b16 %v451
      %v1441 = vunpack.c.l.b16 %v452
      %v1442 = vunpack.c.h.b16 %v452
      %v1443 = vunpack.c.l.b16 %v453
      %v1444 = vunpack.c.h.b16 %v453
      %v1445 = vunpack.c.l.b16 %v454
      %v1446 = vunpack.c.h.b16 %v454
      %v1447 = vunpack.c.l.b16 %v455
      %v1448 = vunpack.c.h.b16 %v455
      %v1449 = vunpack.c.l.b16 %v456
      %v1450 = vunpack.c.h.b16 %v456
      %v1451 = vunpack.c.l.b16 %v457
      %v1452 = vunpack.c.h.b16 %v457
      %v1453 = vunpack.c.l.b16 %v458
      %v1454 = vunpack.c.h.b16 %v458
      %v1455 = vunpack.c.l.b16 %v459
      %v1456 = vunpack.c.h.b16 %v459
      %v1457 = vunpack.c.l.b16 %v460
      %v1458 = vunpack.c.h.b16 %v460
      %v1459 = vunpack.c.l.b16 %v461
      %v1460 = vunpack.c.h.b16 %v461
      %v1461 = vunpack.c.l.b16 %v462
      %v1462 = vunpack.c.h.b16 %v462
      %v1463 = vunpack.c.l.b16 %v463
      %v1464 = vunpack.c.h.b16 %v463
      %v1465 = vunpack.c.l.b16 %v464
      %v1466 = vunpack.c.h.b16 %v464
      %v1467 = vunpack.c.l.b16 %v465
      %v1468 = vunpack.c.h.b16 %v465
      %v1469 = vunpack.c.l.b16 %v466
      %v1470 = vunpack.c.h.b16 %v466
      %v1471 = vunpack.c.l.b16 %v467
      %v1472 = vunpack.c.h.b16 %v467
      %v1473 = vunpack.c.l.b16 %v468
      %v1474 = vunpack.c.h.b16 %v468
      %v1475 = vunpack.c.l.b16 %v469
      %v1476 = vunpack.c.h.b16 %v469
      %v1477 = vunpack.c.l.b16 %v470
      %v1478 = vunpack.c.h.b16 %v470
      %v1479 = vunpack.c.l.b16 %v471
      %v1480 = vunpack.c.h.b16 %v471
      %v1481 = vunpack.c.l.b16 %v472
      %v1482 = vunpack.c.h.b16 %v472
      %v1483 = vunpack.c.l.b16 %v473
      %v1484 = vunpack.c.h.b16 %v473
      %v1485 = vunpack.c.l.b16 %v474
      %v1486 = vunpack.c.h.b16 %v474
      %v1487 = vunpack.c.l.b16 %v475
      %v1488 = vunpack.c.h.b16 %v475
      %v1489 = vunpack.c.l.b16 %v476
      %v1490 = vunpack.c.h.b16 %v476
      %v1491 = vunpack.c.l.b16 %v477
      %v1492 = vunpack.c.h.b16 %v477
      %v1493 = vunpack.c.l.b16 %v478
      %v1494 = vunpack.c.h.b16 %v478
      %v1495 = vunpack.c.l.b16 %v479
      %v1496 = vunpack.c.h.b16 %v479
      %v1497 = vunpack.c.l.b16 %v480
      %v1498 = vunpack.c.h.b16 %v480
      %v1499 = vunpack.c.l.b16 %v481
      %v1500 = vunpack.c.h.b16 %v481
      %v1501 = vunpack.c.l.b16 %v482
      %v1502 = vunpack.c.h.b16 %v482
      %v1503 = vunpack.c.l.b16 %v483
      %v1504 = vunpack.c.h.b16 %v483
      %v1505 = vunpack.c.l.b16 %v484
      %v1506 = vunpack.c.h.b16 %v484
      %v1507 = vunpack.c.l.b16 %v485
      %v1508 = vunpack.c.h.b16 %v485
      %v1509 = vunpack.c.l.b16 %v486
      %v1510 = vunpack.c.h.b16 %v486
      %v1511 = vunpack.c.l.b16 %v487
      %v1512 = vunpack.c.h.b16 %v487
      %v1513 = vunpack.c.l.b16 %v488
      %v1514 = vunpack.c.h.b16 %v488
      %v1515 = vunpack.c.l.b16 %v489
      %v1516 = vunpack.c.h.b16 %v489
      %v1517 = vunpack.c.l.b16 %v490
      %v1518 = vunpack.c.h.b16 %v490
      %v1519 = vunpack.c.l.b16 %v491
      %v1520 = vunpack.c.h.b16 %v491
      %v1521 = vunpack.c.l.b16 %v492
      %v1522 = vunpack.c.h.b16 %v492
      %v1523 = vunpack.c.l.b16 %v493
      %v1524 = vunpack.c.h.b16 %v493
      %v1525 = vunpack.c.l.b16 %v494
      %v1526 = vunpack.c.h.b16 %v494
      %v1527 = vunpack.c.l.b16 %v495
      %v1528 = vunpack.c.h.b16 %v495
      %v1529 = vunpack.c.l.b16 %v496
      %v1530 = vunpack.c.h.b16 %v496
      %v1531 = vunpack.c.l.b16 %v497
      %v1532 = vunpack.c.h.b16 %v497
      %v1533 = vunpack.c.l.b16 %v498
      %v1534 = vunpack.c.h.b16 %v498
      %v1535 = vunpack.c.l.b16 %v499
      %v1536 = vunpack.c.h.b16 %v499
      %v1537 = vunpack.c.l.b16 %v500
      %v1538 = vunpack.c.h.b16 %v500
      %v1539 = vunpack.c.l.b16 %v501
      %v1540 = vunpack.c.h.b16 %v501
      %v1541 = vunpack.c.l.b16 %v502
      %v1542 = vunpack.c.h.b16 %v502
      %v1543 = vunpack.c.l.b16 %v503
      %v1544 = vunpack.c.h.b16 %v503
      %v1545 = vunpack.c.l.b16 %v504
      %v1546 = vunpack.c.h.b16 %v504
      %v1547 = vunpack.c.l.b16 %v505
      %v1548 = vunpack.c.h.b16 %v505
      %v1549 = vunpack.c.l.b16 %v506
      %v1550 = vunpack.c.h.b16 %v506
      %v1551 = vunpack.c.l.b16 %v507
      %v1552 = vunpack.c.h.b16 %v507
      %v1553 = vunpack.c.l.b16 %v508
      %v1554 = vunpack.c.h.b16 %v508
      %v1555 = vunpack.c.l.b16 %v509
      %v1556 = vunpack.c.h.b16 %v509
      %v1557 = vunpack.c.l.b16 %v510
      %v1558 = vunpack.c.h.b16 %v510
      %v1559 = vunpack.c.l.b16 %v511
      %v1560 = vunpack.c.h.b16 %v511
      %v1561 = vunpack.c.l.b16 %v512
      %v1562 = vunpack.c.h.b16 %v512
      %v1563 = vunpack.c.l.b16 %v513
      %v1564 = vunpack.c.h.b16 %v513
      %v1565 = vunpack.c.l.b16 %v514
      %v1566 = vunpack.c.h.b16 %v514
      %v1567 = vunpack.c.l.b16 %v515
      %v1568 = vunpack.c.h.b16 %v515
      %v1569 = vunpack.c.l.b16 %v516
      %v1570 = vunpack.c.h.b16 %v516
      %v1571 = vunpack.c.l.b16 %v517
      %v1572 = vunpack.c.h.b16 %v517
      %v1573 = vunpack.c.l.b16 %v518
      %v1574 = vunpack.c.h.b16 %v518
      %v1575 = vunpack.c.l.b16 %v519
      %v1576 = vunpack.c.h.b16 %v519
      %v1577 = vunpack.c.l.b16 %v520
      %v1578 = vunpack.c.h.b16 %v520
      %v1579 = vunpack.c.l.b16 %v521
      %v1580 = vunpack.c.h.b16 %v521
      %v1581 = vunpack.c.l.b16 %v522
      %v1582 = vunpack.c.h.b16 %v522
      %v1583 = vunpack.c.l.b16 %v523
      %v1584 = vunpack.c.h.b16 %v523
      %v1585 = vunpack.c.l.b16 %v524
      %v1586 = vunpack.c.h.b16 %v524
      %v1587 = vunpack.c.l.b16 %v525
      %v1588 = vunpack.c.h.b16 %v525
      %v1589 = vunpack.c.l.b16 %v526
      %v1590 = vunpack.c.h.b16 %v526
      %v1591 = vunpack.c.l.b16 %v527
      %v1592 = vunpack.c.h.b16 %v527
      %v1593 = vunpack.c.l.b16 %v528
      %v1594 = vunpack.c.h.b16 %v528
      %v1595 = vunpack.c.l.b16 %v529
      %v1596 = vunpack.c.h.b16 %v529
      %v1597 = vunpack.c.l.b16 %v530
      %v1598 = vunpack.c.h.b16 %v530
      %v1599 = vunpack.c.l.b16 %v531
      %v1600 = vunpack.c.h.b16 %v531
      %v1601 = vunpack.c.l.b16 %v532
      %v1602 = vunpack.c.h.b16 %v532
      %v1603 = vunpack.c.l.b16 %v533
      %v1604 = vunpack.c.h.b16 %v533
      %v1605 = vunpack.c.l.b16 %v534
      %v1606 = vunpack.c.h.b16 %v534
      %v1607 = vunpack.c.l.b16 %v535
      %v1608 = vunpack.c.h.b16 %v535
      %v1609 = vunpack.c.l.b16 %v536
      %v1610 = vunpack.c.h.b16 %v536
      %v1611 = vunpack.c.l.b16 %v537
      %v1612 = vunpack.c.h.b16 %v537
      %v1613 = vunpack.c.l.b16 %v538
      %v1614 = vunpack.c.h.b16 %v538
      %v1615 = vunpack.c.l.b16 %v539
      %v1616 = vunpack.c.h.b16 %v539
      %v1617 = vunpack.c.l.b16 %v540
      %v1618 = vunpack.c.h.b16 %v540
      %v1619 = vunpack.c.l.b16 %v541
      %v1620 = vunpack.c.h.b16 %v541
      %v1621 = vunpack.c.l.b16 %v542
      %v1622 = vunpack.c.h.b16 %v542
      %v1623 = vunpack.c.l.b16 %v543
      %v1624 = vunpack.c.h.b16 %v543
      %v1625 = vunpack.c.l.b16 %v544
      %v1626 = vunpack.c.h.b16 %v544
      %v1627 = vunpack.c.l.b16 %v545
      %v1628 = vunpack.c.h.b16 %v545
      %v1629 = vunpack.c.l.b16 %v546
      %v1630 = vunpack.c.h.b16 %v546
      %v1631 = vunpack.c.l.b16 %v547
      %v1632 = vunpack.c.h.b16 %v547
      %v1633 = vunpack.c.l.b16 %v548
      %v1634 = vunpack.c.h.b16 %v548
      %v1635 = vunpack.c.l.b16 %v549
      %v1636 = vunpack.c.h.b16 %v549
      %v1637 = vunpack.c.l.b16 %v550
      %v1638 = vunpack.c.h.b16 %v550
      %v1639 = vunpack.c.l.b16 %v551
      %v1640 = vunpack.c.h.b16 %v551
      %v1641 = vunpack.c.l.b16 %v552
      %v1642 = vunpack.c.h.b16 %v552
      %v1643 = vunpack.c.l.b16 %v553
      %v1644 = vunpack.c.h.b16 %v553
      %v1645 = vunpack.c.l.b16 %v554
      %v1646 = vunpack.c.h.b16 %v554
      %v1647 = vunpack.c.l.b16 %v555
      %v1648 = vunpack.c.h.b16 %v555
      %v1649 = vunpack.c.l.b16 %v556
      %v1650 = vunpack.c.h.b16 %v556
      %v1651 = vunpack.c.l.b16 %v557
      %v1652 = vunpack.c.h.b16 %v557
      %v1653 = vunpack.c.l.b16 %v558
      %v1654 = vunpack.c.h.b16 %v558
      %v1655 = vunpack.c.l.b16 %v559
      %v1656 = vunpack.c.h.b16 %v559
      %v1657 = vunpack.c.l.b16 %v560
      %v1658 = vunpack.c.h.b16 %v560
      %v1659 = vunpack.c.l.b16 %v561
      %v1660 = vunpack.c.h.b16 %v561
      %v1661 = vunpack.c.l.b16 %v562
      %v1662 = vunpack.c.h.b16 %v562
      %v1663 = vpack.c.b16 %v1153, %v1151
      %v1664 = vpack.c.b16 %v1154, %v1152
      %v1665 = vpack.c.b16 %v1157, %v1155
      %v1666 = vpack.c.b16 %v1158, %v1156
      %v1667 = vpack.c.b16 %v1161, %v1159
      %v1668 = vpack.c.b16 %v1162, %v1160
      %v1669 = vpack.c.b16 %v1165, %v1163
      %v1670 = vpack.c.b16 %v1166, %v1164
      %v1671 = vpack.c.b16 %v1169, %v1167
      %v1672 = vpack.c.b16 %v1170, %v1168
      %v1673 = vpack.c.b16 %v1173, %v1171
      %v1674 = vpack.c.b16 %v1174, %v1172
      %v1675 = vpack.c.b16 %v1177, %v1175
      %v1676 = vpack.c.b16 %v1178, %v1176
      %v1677 = vpack.c.b16 %v1181, %v1179
      %v1678 = vpack.c.b16 %v1182, %v1180
      %v1679 = vpack.c.b16 %v1185, %v1183
      %v1680 = vpack.c.b16 %v1186, %v1184
      %v1681 = vpack.c.b16 %v1189, %v1187
      %v1682 = vpack.c.b16 %v1190, %v1188
      %v1683 = vpack.c.b16 %v1193, %v1191
      %v1684 = vpack.c.b16 %v1194, %v1192
      %v1685 = vpack.c.b16 %v1197, %v1195
      %v1686 = vpack.c.b16 %v1198, %v1196
      %v1687 = vpack.c.b16 %v1201, %v1199
      %v1688 = vpack.c.b16 %v1202, %v1200
      %v1689 = vpack.c.b16 %v1205, %v1203
      %v1690 = vpack.c.b16 %v1206, %v1204
      %v1691 = vpack.c.b16 %v1209, %v1207
      %v1692 = vpack.c.b16 %v1210, %v1208
      %v1693 = vpack.c.b16 %v1213, %v1211
      %v1694 = vpack.c.b16 %v1214, %v1212
      %v1695 = vpack.c.b16 %v1217, %v1215
      %v1696 = vpack.c.b16 %v1218, %v1216
      %v1697 = vpack.c.b16 %v1221, %v1219
      %v1698 = vpack.c.b16 %v1222, %v1220
      %v1699 = vpack.c.b16 %v1225, %v1223
      %v1700 = vpack.c.b16 %v1226, %v1224
      %v1701 = vpack.c.b16 %v1229, %v1227
      %v1702 = vpack.c.b16 %v1230, %v1228
      %v1703 = vpack.c.b16 %v1233, %v1231
      %v1704 = vpack.c.b16 %v1234, %v1232
      %v1705 = vpack.c.b16 %v1237, %v1235
      %v1706 = vpack.c.b16 %v1238, %v1236
      %v1707 = vpack.c.b16 %v1241, %v1239
      %v1708 = vpack.c.b16 %v1242, %v1240
      %v1709 = vpack.c.b16 %v1245, %v1243
      %v1710 = vpack.c.b16 %v1246, %v1244
      %v1711 = vpack.c.b16 %v1249, %v1247
      %v1712 = vpack.c.b16 %v1250, %v1248
      %v1713 = vpack.c.b16 %v1253, %v1251
      %v1714 = vpack.c.b16 %v1254, %v1252
      %v1715 = vpack.c.b16 %v1257, %v1255
      %v1716 = vpack.c.b16 %v1258, %v1256
      %v1717 = vpack.c.b16 %v1261, %v1259
      %v1718 = vpack.c.b16 %v1262, %v1260
      %v1719 = vpack.c.b16 %v1265, %v1263
      %v1720 = vpack.c.b16 %v1266, %v1264
      %v1721 = vpack.c.b16 %v1269, %v1267
      %v1722 = vpack.c.b16 %v1270, %v1268
      %v1723 = vpack.c.b16 %v1273, %v1271
      %v1724 = vpack.c.b16 %v1274, %v1272
      %v1725 = vpack.c.b16 %v1277, %v1275
      %v1726 = vpack.c.b16 %v1278, %v1276
      %v1727 = vpack.c.b16 %v1281, %v1279
      %v1728 = vpack.c.b16 %v1282, %v1280
      %v1729 = vpack.c.b16 %v1285, %v1283
      %v1730 = vpack.c.b16 %v1286, %v1284
      %v1731 = vpack.c.b16 %v1289, %v1287
      %v1732 = vpack.c.b16 %v1290, %v1288
      %v1733 = vpack.c.b16 %v1293, %v1291
      %v1734 = vpack.c.b16 %v1294, %v1292
      %v1735 = vpack.c.b16 %v1297, %v1295
      %v1736 = vpack.c.b16 %v1298, %v1296
      %v1737 = vpack.c.b16 %v1301, %v1299
      %v1738 = vpack.c.b16 %v1302, %v1300
      %v1739 = vpack.c.b16 %v1305, %v1303
      %v1740 = vpack.c.b16 %v1306, %v1304
      %v1741 = vpack.c.b16 %v1309, %v1307
      %v1742 = vpack.c.b16 %v1310, %v1308
      %v1743 = vpack.c.b16 %v1313, %v1311
      %v1744 = vpack.c.b16 %v1314, %v1312
      %v1745 = vpack.c.b16 %v1317, %v1315
      %v1746 = vpack.c.b16 %v1318, %v1316
      %v1747 = vpack.c.b16 %v1321, %v1319
      %v1748 = vpack.c.b16 %v1322, %v1320
      %v1749 = vpack.c.b16 %v1325, %v1323
      %v1750 = vpack.c.b16 %v1326, %v1324
      %v1751 = vpack.c.b16 %v1329, %v1327
      %v1752 = vpack.c.b16 %v1330, %v1328
      %v1753 = vpack.c.b16 %v1333, %v1331
      %v1754 = vpack.c.b16 %v1334, %v1332
      %v1755 = vpack.c.b16 %v1337, %v1335
      %v1756 = vpack.c.b16 %v1338, %v1336
      %v1757 = vpack.c.b16 %v1341, %v1339
      %v1758 = vpack.c.b16 %v1342, %v1340
      %v1759 = vpack.c.b16 %v1345, %v1343
      %v1760 = vpack.c.b16 %v1346, %v1344
      %v1761 = vpack.c.b16 %v1349, %v1347
      %v1762 = vpack.c.b16 %v1350, %v1348
      %v1763 = vpack.c.b16 %v1353, %v1351
      %v1764 = vpack.c.b16 %v1354, %v1352
      %v1765 = vpack.c.b16 %v1357, %v1355
      %v1766 = vpack.c.b16 %v1358, %v1356
      %v1767 = vpack.c.b16 %v1361, %v1359
      %v1768 = vpack.c.b16 %v1362, %v1360
      %v1769 = vpack.c.b16 %v1365, %v1363
      %v1770 = vpack.c.b16 %v1366, %v1364
      %v1771 = vpack.c.b16 %v1369, %v1367
      %v1772 = vpack.c.b16 %v1370, %v1368
      %v1773 = vpack.c.b16 %v1373, %v1371
      %v1774 = vpack.c.b16 %v1374, %v1372
      %v1775 = vpack.c.b16 %v1377, %v1375
      %v1776 = vpack.c.b16 %v1378, %v1376
      %v1777 = vpack.c.b16 %v1381, %v1379
      %v1778 = vpack.c.b16 %v1382, %v1380
      %v1779 = vpack.c.b16 %v1385, %v1383
      %v1780 = vpack.c.b16 %v1386, %v1384
      %v1781 = vpack.c.b16 %v1389, %v1387
      %v1782 = vpack.c.b16 %v1390, %v1388
      %v1783 = vpack.c.b16 %v1393, %v1391
      %v1784 = vpack.c.b16 %v1394, %v1392
      %v1785 = vpack.c.b16 %v1397, %v1395
      %v1786 = vpack.c.b16 %v1398, %v1396
      %v1787 = vpack.c.b16 %v1401, %v1399
      %v1788 = vpack.c.b16 %v1402, %v1400
      %v1789 = vpack.c.b16 %v1405, %v1403
      %v1790 = vpack.c.b16 %v1406, %v1404
      %v1791 = vpack.c.b16 %v1409, %v1407
      %v1792 = vpack.c.b16 %v1410, %v1408
      %v1793 = vpack.c.b16 %v1413, %v1411
      %v1794 = vpack.c.b16 %v1414, %v1412
      %v1795 = vpack.c.b16 %v1417, %v1415
      %v1796 = vpack.c.b16 %v1418, %v1416
      %v1797 = vpack.c.b16 %v1421, %v1419
      %v1798 = vpack.c.b16 %v1422, %v1420
      %v1799 = vpack.c.b16 %v1425, %v1423
      %v1800 = vpack.c.b16 %v1426, %v1424
      %v1801 = vpack.c.b16 %v1429, %v1427
      %v1802 = vpack.c.b16 %v1430, %v1428
      %v1803 = vpack.c.b16 %v1433, %v1431
      %v1804 = vpack.c.b16 %v1434, %v1432
      %v1805 = vpack.c.b16 %v1437, %v1435
      %v1806 = vpack.c.b16 %v1438, %v1436
      %v1807 = vpack.c.b16 %v1441, %v1439
      %v1808 = vpack.c.b16 %v1442, %v1440
      %v1809 = vpack.c.b16 %v1445, %v1443
      %v1810 = vpack.c.b16 %v1446, %v1444
      %v1811 = vpack.c.b16 %v1449, %v1447
      %v1812 = vpack.c.b16 %v1450, %v1448
      %v1813 = vpack.c.b16 %v1453, %v1451
      %v1814 = vpack.c.b16 %v1454, %v1452
      %v1815 = vpack.c.b16 %v1457, %v1455
      %v1816 = vpack.c.b16 %v1458, %v1456
      %v1817 = vpack.c.b16 %v1461, %v1459
      %v1818 = vpack.c.b16 %v1462, %v1460
      %v1819 = vpack.c.b16 %v1465, %v1463
      %v1820 = vpack.c.b16 %v1466, %v1464
      %v1821 = vpack.c.b16 %v1469, %v1467
      %v1822 = vpack.c.b16 %v1470, %v1468
      %v1823 = vpack.c.b16 %v1473, %v1471
      %v1824 = vpack.c.b16 %v1474, %v1472
      %v1825 = vpack.c.b16 %v1477, %v1475
      %v1826 = vpack.c.b16 %v1478, %v1476
      %v1827 = vpack.c.b16 %v1481, %v1479
      %v1828 = vpack.c.b16 %v1482, %v1480
      %v1829 = vpack.c.b16 %v1485, %v1483
      %v1830 = vpack.c.b16 %v1486, %v1484
      %v1831 = vpack.c.b16 %v1489, %v1487
      %v1832 = vpack.c.b16 %v1490, %v1488
      %v1833 = vpack.c.b16 %v1493, %v1491
      %v1834 = vpack.c.b16 %v1494, %v1492
      %v1835 = vpack.c.b16 %v1497, %v1495
      %v1836 = vpack.c.b16 %v1498, %v1496
      %v1837 = vpack.c.b16 %v1501, %v1499
      %v1838 = vpack.c.b16 %v1502, %v1500
      %v1839 = vpack.c.b16 %v1505, %v1503
      %v1840 = vpack.c.b16 %v1506, %v1504
      %v1841 = vpack.c.b16 %v1509, %v1507
      %v1842 = vpack.c.b16 %v1510, %v1508
      %v1843 = vpack.c.b16 %v1513, %v1511
      %v1844 = vpack.c.b16 %v1514, %v1512
      %v1845 = vpack.c.b16 %v1517, %v1515
      %v1846 = vpack.c.b16 %v1518, %v1516
      %v1847 = vpack.c.b16 %v1521, %v1519
      %v1848 = vpack.c.b16 %v1522, %v1520
      %v1849 = vpack.c.b16 %v1525, %v1523
      %v1850 = vpack.c.b16 %v1526, %v1524
      %v1851 = vpack.c.b16 %v1529, %v1527
      %v1852 = vpack.c.b16 %v1530, %v1528
      %v1853 = vpack.c.b16 %v1533, %v1531
      %v1854 = vpack.c.b16 %v1534, %v1532
      %v1855 = vpack.c.b16 %v1537, %v1535
      %v1856 = vpack.c.b16 %v1538, %v1536
      %v1857 = vpack.c.b16 %v1541, %v1539
      %v1858 = vpack.c.b16 %v1542, %v1540
      %v1859 = vpack.c.b16 %v1545, %v1543
      %v1860 = vpack.c.b16 %v1546, %v1544
      %v1861 = vpack.c.b16 %v1549, %v1547
      %v1862 = vpack.c.b16 %v1550, %v1548
      %v1863 = vpack.c.b16 %v1553, %v1551
      %v1864 = vpack.c.b16 %v1554, %v1552
      %v1865 = vpack.c.b16 %v1557, %v1555
      %v1866 = vpack.c.b16 %v1558, %v1556
      %v1867 = vpack.c.b16 %v1561, %v1559
      %v1868 = vpack.c.b16 %v1562, %v1560
      %v1869 = vpack.c.b16 %v1565, %v1563
      %v1870 = vpack.c.b16 %v1566, %v1564
      %v1871 = vpack.c.b16 %v1569, %v1567
      %v1872 = vpack.c.b16 %v1570, %v1568
      %v1873 = vpack.c.b16 %v1573, %v1571
      %v1874 = vpack.c.b16 %v1574, %v1572
      %v1875 = vpack.c.b16 %v1577, %v1575
      %v1876 = vpack.c.b16 %v1578, %v1576
      %v1877 = vpack.c.b16 %v1581, %v1579
      %v1878 = vpack.c.b16 %v1582, %v1580
      %v1879 = vpack.c.b16 %v1585, %v1583
      %v1880 = vpack.c.b16 %v1586, %v1584
      %v1881 = vpack.c.b16 %v1589, %v1587
      %v1882 = vpack.c.b16 %v1590, %v1588
      %v1883 = vpack.c.b16 %v1593, %v1591
      %v1884 = vpack.c.b16 %v1594, %v1592
      %v1885 = vpack.c.b16 %v1597, %v1595
      %v1886 = vpack.c.b16 %v1598, %v1596
      %v1887 = vpack.c.b16 %v1601, %v1599
      %v1888 = vpack.c.b16 %v1602, %v1600
      %v1889 = vpack.c.b16 %v1605, %v1603
      %v1890 = vpack.c.b16 %v1606, %v1604
      %v1891 = vpack.c.b16 %v1609, %v1607
      %v1892 = vpack.c.b16 %v1610, %v1608
      %v1893 = vpack.c.b16 %v1613, %v1611
      %v1894 = vpack.c.b16 %v1614, %v1612
      %v1895 = vpack.c.b16 %v1617, %v1615
      %v1896 = vpack.c.b16 %v1618, %v1616
      %v1897 = vpack.c.b16 %v1621, %v1619
      %v1898 = vpack.c.b16 %v1622, %v1620
      %v1899 = vpack.c.b16 %v1625, %v1623
      %v1900 = vpack.c.b16 %v1626, %v1624
      %v1901 = vpack.c.b16 %v1629, %v1627
      %v1902 = vpack.c.b16 %v1630, %v1628
      %v1903 = vpack.c.b16 %v1633, %v1631
      %v1904 = vpack.c.b16 %v1634, %v1632
      %v1905 = vpack.c.b16 %v1637, %v1635
      %v1906 = vpack.c.b16 %v1638, %v1636
      %v1907 = vpack.c.b16 %v1641, %v1639
      %v1908 = vpack.c.b16 %v1642, %v1640
      %v1909 = vpack.c.b16 %v1645, %v1643
      %v1910 = vpack.c.b16 %v1646, %v1644
      %v1911 = vpack.c.b16 %v1649, %v1647
      %v1912 = vpack.c.b16 %v1650, %v1648
      %v1913 = vpack.c.b16 %v1653, %v1651
      %v1914 = vpack.c.b16 %v1654, %v1652
      %v1915 = vpack.c.b16 %v1657, %v1655
      %v1916 = vpack.c.b16 %v1658, %v1656
      %v1917 = vpack.c.b16 %v1661, %v1659
      %v1918 = vpack.c.b16 %v1662, %v1660
      %2175 = vmatprep.subr.bf16.mxu0 %v1678
      %2176 = vmatpush1.bf16.msra.mxu0 %v1677
      %2177 = vmatprep.subr.bf16.mxu0 %v1676
      %2178 = vmatpush1.bf16.msra.mxu0 %v1675
      %2179 = vmatprep.subr.bf16.mxu0 %v1674
      %2180 = vmatpush1.bf16.msra.mxu0 %v1673
      %2181 = vmatprep.subr.bf16.mxu0 %v1672
      %2182 = vmatpush1.bf16.msra.mxu0 %v1671
      %2183 = vmatprep.subr.bf16.mxu0 %v1670
      %2184 = vmatpush1.bf16.msra.mxu0 %v1669
      %2185 = vmatprep.subr.bf16.mxu0 %v1668
      %2186 = vmatpush1.bf16.msra.mxu0 %v1667
      %2187 = vmatprep.subr.bf16.mxu0 %v1666
      %2188 = vmatpush1.bf16.msra.mxu0 %v1665
      %2189 = vmatprep.subr.bf16.mxu0 %v1664
      %2190 = vmatpush1.bf16.msra.mxu0 %v1663
      %2191 = vmatprep.subr.bf16.mxu0 %v1694
      %2192 = vmatpush2.bf16.msra.mxu0 %v1693
      %2193 = vmatprep.subr.bf16.mxu0 %v1692
      %2194 = vmatpush2.bf16.msra.mxu0 %v1691
      %2195 = vmatprep.subr.bf16.mxu0 %v1690
      %2196 = vmatpush2.bf16.msra.mxu0 %v1689
      %2197 = vmatprep.subr.bf16.mxu0 %v1688
      %2198 = vmatpush2.bf16.msra.mxu0 %v1687
      %2199 = vmatprep.subr.bf16.mxu0 %v1686
      %2200 = vmatpush2.bf16.msra.mxu0 %v1685
      %2201 = vmatprep.subr.bf16.mxu0 %v1684
      %2202 = vmatpush2.bf16.msra.mxu0 %v1683
      %2203 = vmatprep.subr.bf16.mxu0 %v1682
      %2204 = vmatpush2.bf16.msra.mxu0 %v1681
      %2205 = vmatprep.subr.bf16.mxu0 %v1680
      %2206 = vmatpush2.bf16.msra.mxu0 %v1679
      %2207 = vmatprep.mubr.bf16.mxu0 %v768
      %2208 = vmatmul.mubr.bf16.gmra.mxu0 %v767
      %v2209 = vpop.f32.mrf.mxu0
      %v2210 = vadd.f32 %v568, %v2209
      %v2211 = vpop.f32.mrf.mxu0
      %v2212 = vadd.f32 %v572, %v2211
      %v2213 = vpop.f32.mrf.mxu0
      %v2214 = vadd.f32 %v568, %v2213
      %v2215 = vpop.f32.mrf.mxu0
      %v2216 = vadd.f32 %v572, %v2215
      %2217 = vmatprep.mubr.bf16.mxu0 %v784
      %2218 = vmatmul.mubr.bf16.gmra.mxu0 %v783
      %v2219 = vpop.f32.mrf.mxu0
      %v2220 = vadd.f32 %v568, %v2219
      %v2221 = vpop.f32.mrf.mxu0
      %v2222 = vadd.f32 %v572, %v2221
      %v2223 = vpop.f32.mrf.mxu0
      %v2224 = vadd.f32 %v568, %v2223
      %v2225 = vpop.f32.mrf.mxu0
      %v2226 = vadd.f32 %v572, %v2225
      %2227 = vmatprep.mubr.bf16.mxu0 %v800
      %2228 = vmatmul.mubr.bf16.gmra.mxu0 %v799
      %v2229 = vpop.f32.mrf.mxu0
      %v2230 = vadd.f32 %v568, %v2229
      %v2231 = vpop.f32.mrf.mxu0
      %v2232 = vadd.f32 %v572, %v2231
      %v2233 = vpop.f32.mrf.mxu0
      %v2234 = vadd.f32 %v568, %v2233
      %v2235 = vpop.f32.mrf.mxu0
      %v2236 = vadd.f32 %v572, %v2235
      %2237 = vmatprep.mubr.bf16.mxu0 %v816
      %2238 = vmatmul.mubr.bf16.gmra.mxu0 %v815
      %v2239 = vpop.f32.mrf.mxu0
      %v2240 = vadd.f32 %v568, %v2239
      %v2241 = vpop.f32.mrf.mxu0
      %v2242 = vadd.f32 %v572, %v2241
      %v2243 = vpop.f32.mrf.mxu0
      %v2244 = vadd.f32 %v568, %v2243
      %v2245 = vpop.f32.mrf.mxu0
      %v2246 = vadd.f32 %v572, %v2245
      %2247 = vdwg.mxu0
      %2248 = vmatprep.subr.bf16.mxu0 %v1710
      %2249 = vmatpush1.bf16.msra.mxu0 %v1709
      %2250 = vmatprep.subr.bf16.mxu0 %v1708
      %2251 = vmatpush1.bf16.msra.mxu0 %v1707
      %2252 = vmatprep.subr.bf16.mxu0 %v1706
      %2253 = vmatpush1.bf16.msra.mxu0 %v1705
      %2254 = vmatprep.subr.bf16.mxu0 %v1704
      %2255 = vmatpush1.bf16.msra.mxu0 %v1703
      %2256 = vmatprep.subr.bf16.mxu0 %v1702
      %2257 = vmatpush1.bf16.msra.mxu0 %v1701
      %2258 = vmatprep.subr.bf16.mxu0 %v1700
      %2259 = vmatpush1.bf16.msra.mxu0 %v1699
      %2260 = vmatprep.subr.bf16.mxu0 %v1698
      %2261 = vmatpush1.bf16.msra.mxu0 %v1697
      %2262 = vmatprep.subr.bf16.mxu0 %v1696
      %2263 = vmatpush1.bf16.msra.mxu0 %v1695
      %2264 = vmatprep.subr.bf16.mxu0 %v1726
      %2265 = vmatpush2.bf16.msra.mxu0 %v1725
      %2266 = vmatprep.subr.bf16.mxu0 %v1724
      %2267 = vmatpush2.bf16.msra.mxu0 %v1723
      %2268 = vmatprep.subr.bf16.mxu0 %v1722
      %2269 = vmatpush2.bf16.msra.mxu0 %v1721
      %2270 = vmatprep.subr.bf16.mxu0 %v1720
      %2271 = vmatpush2.bf16.msra.mxu0 %v1719
      %2272 = vmatprep.subr.bf16.mxu0 %v1718
      %2273 = vmatpush2.bf16.msra.mxu0 %v1717
      %2274 = vmatprep.subr.bf16.mxu0 %v1716
      %2275 = vmatpush2.bf16.msra.mxu0 %v1715
      %2276 = vmatprep.subr.bf16.mxu0 %v1714
      %2277 = vmatpush2.bf16.msra.mxu0 %v1713
      %2278 = vmatprep.subr.bf16.mxu0 %v1712
      %2279 = vmatpush2.bf16.msra.mxu0 %v1711
      %2280 = vmatprep.mubr.bf16.mxu0 %v770
      %2281 = vmatmul.mubr.bf16.gmra.mxu0 %v769
      %v2282 = vpop.f32.mrf.mxu0
      %v2283 = vadd.f32 %v2210, %v2282
      %v2284 = vpop.f32.mrf.mxu0
      %v2285 = vadd.f32 %v2212, %v2284
      %v2286 = vpop.f32.mrf.mxu0
      %v2287 = vadd.f32 %v2214, %v2286
      %v2288 = vpop.f32.mrf.mxu0
      %v2289 = vadd.f32 %v2216, %v2288
      %2290 = vmatprep.mubr.bf16.mxu0 %v786
      %2291 = vmatmul.mubr.bf16.gmra.mxu0 %v785
      %v2292 = vpop.f32.mrf.mxu0
      %v2293 = vadd.f32 %v2220, %v2292
      %v2294 = vpop.f32.mrf.mxu0
      %v2295 = vadd.f32 %v2222, %v2294
      %v2296 = vpop.f32.mrf.mxu0
      %v2297 = vadd.f32 %v2224, %v2296
      %v2298 = vpop.f32.mrf.mxu0
      %v2299 = vadd.f32 %v2226, %v2298
      %2300 = vmatprep.mubr.bf16.mxu0 %v802
      %2301 = vmatmul.mubr.bf16.gmra.mxu0 %v801
      %v2302 = vpop.f32.mrf.mxu0
      %v2303 = vadd.f32 %v2230, %v2302
      %v2304 = vpop.f32.mrf.mxu0
      %v2305 = vadd.f32 %v2232, %v2304
      %v2306 = vpop.f32.mrf.mxu0
      %v2307 = vadd.f32 %v2234, %v2306
      %v2308 = vpop.f32.mrf.mxu0
      %v2309 = vadd.f32 %v2236, %v2308
      %2310 = vmatprep.mubr.bf16.mxu0 %v818
      %2311 = vmatmul.mubr.bf16.gmra.mxu0 %v817
      %v2312 = vpop.f32.mrf.mxu0
      %v2313 = vadd.f32 %v2240, %v2312
      %v2314 = vpop.f32.mrf.mxu0
      %v2315 = vadd.f32 %v2242, %v2314
      %v2316 = vpop.f32.mrf.mxu0
      %v2317 = vadd.f32 %v2244, %v2316
      %v2318 = vpop.f32.mrf.mxu0
      %v2319 = vadd.f32 %v2246, %v2318
      %2320 = vdwg.mxu0
      %2321 = vmatprep.subr.bf16.mxu0 %v1742
      %2322 = vmatpush1.bf16.msra.mxu0 %v1741
      %2323 = vmatprep.subr.bf16.mxu0 %v1740
      %2324 = vmatpush1.bf16.msra.mxu0 %v1739
      %2325 = vmatprep.subr.bf16.mxu0 %v1738
      %2326 = vmatpush1.bf16.msra.mxu0 %v1737
      %2327 = vmatprep.subr.bf16.mxu0 %v1736
      %2328 = vmatpush1.bf16.msra.mxu0 %v1735
      %2329 = vmatprep.subr.bf16.mxu0 %v1734
      %2330 = vmatpush1.bf16.msra.mxu0 %v1733
      %2331 = vmatprep.subr.bf16.mxu0 %v1732
      %2332 = vmatpush1.bf16.msra.mxu0 %v1731
      %2333 = vmatprep.subr.bf16.mxu0 %v1730
      %2334 = vmatpush1.bf16.msra.mxu0 %v1729
      %2335 = vmatprep.subr.bf16.mxu0 %v1728
      %2336 = vmatpush1.bf16.msra.mxu0 %v1727
      %2337 = vmatprep.subr.bf16.mxu0 %v1758
      %2338 = vmatpush2.bf16.msra.mxu0 %v1757
      %2339 = vmatprep.subr.bf16.mxu0 %v1756
      %2340 = vmatpush2.bf16.msra.mxu0 %v1755
      %2341 = vmatprep.subr.bf16.mxu0 %v1754
      %2342 = vmatpush2.bf16.msra.mxu0 %v1753
      %2343 = vmatprep.subr.bf16.mxu0 %v1752
      %2344 = vmatpush2.bf16.msra.mxu0 %v1751
      %2345 = vmatprep.subr.bf16.mxu0 %v1750
      %2346 = vmatpush2.bf16.msra.mxu0 %v1749
      %2347 = vmatprep.subr.bf16.mxu0 %v1748
      %2348 = vmatpush2.bf16.msra.mxu0 %v1747
      %2349 = vmatprep.subr.bf16.mxu0 %v1746
      %2350 = vmatpush2.bf16.msra.mxu0 %v1745
      %2351 = vmatprep.subr.bf16.mxu0 %v1744
      %2352 = vmatpush2.bf16.msra.mxu0 %v1743
      %2353 = vmatprep.mubr.bf16.mxu0 %v772
      %2354 = vmatmul.mubr.bf16.gmra.mxu0 %v771
      %v2355 = vpop.f32.mrf.mxu0
      %v2356 = vadd.f32 %v2283, %v2355
      %v2357 = vpop.f32.mrf.mxu0
      %v2358 = vadd.f32 %v2285, %v2357
      %v2359 = vpop.f32.mrf.mxu0
      %v2360 = vadd.f32 %v2287, %v2359
      %v2361 = vpop.f32.mrf.mxu0
      %v2362 = vadd.f32 %v2289, %v2361
      %2363 = vmatprep.mubr.bf16.mxu0 %v788
      %2364 = vmatmul.mubr.bf16.gmra.mxu0 %v787
      %v2365 = vpop.f32.mrf.mxu0
      %v2366 = vadd.f32 %v2293, %v2365
      %v2367 = vpop.f32.mrf.mxu0
      %v2368 = vadd.f32 %v2295, %v2367
      %v2369 = vpop.f32.mrf.mxu0
      %v2370 = vadd.f32 %v2297, %v2369
      %v2371 = vpop.f32.mrf.mxu0
      %v2372 = vadd.f32 %v2299, %v2371
      %2373 = vmatprep.mubr.bf16.mxu0 %v804
      %2374 = vmatmul.mubr.bf16.gmra.mxu0 %v803
      %v2375 = vpop.f32.mrf.mxu0
      %v2376 = vadd.f32 %v2303, %v2375
      %v2377 = vpop.f32.mrf.mxu0
      %v2378 = vadd.f32 %v2305, %v2377
      %v2379 = vpop.f32.mrf.mxu0
      %v2380 = vadd.f32 %v2307, %v2379
      %v2381 = vpop.f32.mrf.mxu0
      %v2382 = vadd.f32 %v2309, %v2381
      %2383 = vmatprep.mubr.bf16.mxu0 %v820
      %2384 = vmatmul.mubr.bf16.gmra.mxu0 %v819
      %v2385 = vpop.f32.mrf.mxu0
      %v2386 = vadd.f32 %v2313, %v2385
      %v2387 = vpop.f32.mrf.mxu0
      %v2388 = vadd.f32 %v2315, %v2387
      %v2389 = vpop.f32.mrf.mxu0
      %v2390 = vadd.f32 %v2317, %v2389
      %v2391 = vpop.f32.mrf.mxu0
      %v2392 = vadd.f32 %v2319, %v2391
      %2393 = vdwg.mxu0
      %2394 = vmatprep.subr.bf16.mxu0 %v1774
      %2395 = vmatpush1.bf16.msra.mxu0 %v1773
      %2396 = vmatprep.subr.bf16.mxu0 %v1772
      %2397 = vmatpush1.bf16.msra.mxu0 %v1771
      %2398 = vmatprep.subr.bf16.mxu0 %v1770
      %2399 = vmatpush1.bf16.msra.mxu0 %v1769
      %2400 = vmatprep.subr.bf16.mxu0 %v1768
      %2401 = vmatpush1.bf16.msra.mxu0 %v1767
      %2402 = vmatprep.subr.bf16.mxu0 %v1766
      %2403 = vmatpush1.bf16.msra.mxu0 %v1765
      %2404 = vmatprep.subr.bf16.mxu0 %v1764
      %2405 = vmatpush1.bf16.msra.mxu0 %v1763
      %2406 = vmatprep.subr.bf16.mxu0 %v1762
      %2407 = vmatpush1.bf16.msra.mxu0 %v1761
      %2408 = vmatprep.subr.bf16.mxu0 %v1760
      %2409 = vmatpush1.bf16.msra.mxu0 %v1759
      %2410 = vmatprep.subr.bf16.mxu0 %v1790
      %2411 = vmatpush2.bf16.msra.mxu0 %v1789
      %2412 = vmatprep.subr.bf16.mxu0 %v1788
      %2413 = vmatpush2.bf16.msra.mxu0 %v1787
      %2414 = vmatprep.subr.bf16.mxu0 %v1786
      %2415 = vmatpush2.bf16.msra.mxu0 %v1785
      %2416 = vmatprep.subr.bf16.mxu0 %v1784
      %2417 = vmatpush2.bf16.msra.mxu0 %v1783
      %2418 = vmatprep.subr.bf16.mxu0 %v1782
      %2419 = vmatpush2.bf16.msra.mxu0 %v1781
      %2420 = vmatprep.subr.bf16.mxu0 %v1780
      %2421 = vmatpush2.bf16.msra.mxu0 %v1779
      %2422 = vmatprep.subr.bf16.mxu0 %v1778
      %2423 = vmatpush2.bf16.msra.mxu0 %v1777
      %2424 = vmatprep.subr.bf16.mxu0 %v1776
      %2425 = vmatpush2.bf16.msra.mxu0 %v1775
      %2426 = vmatprep.mubr.bf16.mxu0 %v774
      %2427 = vmatmul.mubr.bf16.gmra.mxu0 %v773
      %v2428 = vpop.f32.mrf.mxu0
      %v2429 = vadd.f32 %v2356, %v2428
      %v2430 = vpop.f32.mrf.mxu0
      %v2431 = vadd.f32 %v2358, %v2430
      %v2432 = vpop.f32.mrf.mxu0
      %v2433 = vadd.f32 %v2360, %v2432
      %v2434 = vpop.f32.mrf.mxu0
      %v2435 = vadd.f32 %v2362, %v2434
      %2436 = vmatprep.mubr.bf16.mxu0 %v790
      %2437 = vmatmul.mubr.bf16.gmra.mxu0 %v789
      %v2438 = vpop.f32.mrf.mxu0
      %v2439 = vadd.f32 %v2366, %v2438
      %v2440 = vpop.f32.mrf.mxu0
      %v2441 = vadd.f32 %v2368, %v2440
      %v2442 = vpop.f32.mrf.mxu0
      %v2443 = vadd.f32 %v2370, %v2442
      %v2444 = vpop.f32.mrf.mxu0
      %v2445 = vadd.f32 %v2372, %v2444
      %2446 = vmatprep.mubr.bf16.mxu0 %v806
      %2447 = vmatmul.mubr.bf16.gmra.mxu0 %v805
      %v2448 = vpop.f32.mrf.mxu0
      %v2449 = vadd.f32 %v2376, %v2448
      %v2450 = vpop.f32.mrf.mxu0
      %v2451 = vadd.f32 %v2378, %v2450
      %v2452 = vpop.f32.mrf.mxu0
      %v2453 = vadd.f32 %v2380, %v2452
      %v2454 = vpop.f32.mrf.mxu0
      %v2455 = vadd.f32 %v2382, %v2454
      %2456 = vmatprep.mubr.bf16.mxu0 %v822
      %2457 = vmatmul.mubr.bf16.gmra.mxu0 %v821
      %v2458 = vpop.f32.mrf.mxu0
      %v2459 = vadd.f32 %v2386, %v2458
      %v2460 = vpop.f32.mrf.mxu0
      %v2461 = vadd.f32 %v2388, %v2460
      %v2462 = vpop.f32.mrf.mxu0
      %v2463 = vadd.f32 %v2390, %v2462
      %v2464 = vpop.f32.mrf.mxu0
      %v2465 = vadd.f32 %v2392, %v2464
      %2466 = vdwg.mxu0
      %2467 = vmatprep.subr.bf16.mxu0 %v1806
      %2468 = vmatpush1.bf16.msra.mxu0 %v1805
      %2469 = vmatprep.subr.bf16.mxu0 %v1804
      %2470 = vmatpush1.bf16.msra.mxu0 %v1803
      %2471 = vmatprep.subr.bf16.mxu0 %v1802
      %2472 = vmatpush1.bf16.msra.mxu0 %v1801
      %2473 = vmatprep.subr.bf16.mxu0 %v1800
      %2474 = vmatpush1.bf16.msra.mxu0 %v1799
      %2475 = vmatprep.subr.bf16.mxu0 %v1798
      %2476 = vmatpush1.bf16.msra.mxu0 %v1797
      %2477 = vmatprep.subr.bf16.mxu0 %v1796
      %2478 = vmatpush1.bf16.msra.mxu0 %v1795
      %2479 = vmatprep.subr.bf16.mxu0 %v1794
      %2480 = vmatpush1.bf16.msra.mxu0 %v1793
      %2481 = vmatprep.subr.bf16.mxu0 %v1792
      %2482 = vmatpush1.bf16.msra.mxu0 %v1791
      %2483 = vmatprep.subr.bf16.mxu0 %v1822
      %2484 = vmatpush2.bf16.msra.mxu0 %v1821
      %2485 = vmatprep.subr.bf16.mxu0 %v1820
      %2486 = vmatpush2.bf16.msra.mxu0 %v1819
      %2487 = vmatprep.subr.bf16.mxu0 %v1818
      %2488 = vmatpush2.bf16.msra.mxu0 %v1817
      %2489 = vmatprep.subr.bf16.mxu0 %v1816
      %2490 = vmatpush2.bf16.msra.mxu0 %v1815
      %2491 = vmatprep.subr.bf16.mxu0 %v1814
      %2492 = vmatpush2.bf16.msra.mxu0 %v1813
      %2493 = vmatprep.subr.bf16.mxu0 %v1812
      %2494 = vmatpush2.bf16.msra.mxu0 %v1811
      %2495 = vmatprep.subr.bf16.mxu0 %v1810
      %2496 = vmatpush2.bf16.msra.mxu0 %v1809
      %2497 = vmatprep.subr.bf16.mxu0 %v1808
      %2498 = vmatpush2.bf16.msra.mxu0 %v1807
      %2499 = vmatprep.mubr.bf16.mxu0 %v776
      %2500 = vmatmul.mubr.bf16.gmra.mxu0 %v775
      %v2501 = vpop.f32.mrf.mxu0
      %v2502 = vadd.f32 %v2429, %v2501
      %v2503 = vpop.f32.mrf.mxu0
      %v2504 = vadd.f32 %v2431, %v2503
      %v2505 = vpop.f32.mrf.mxu0
      %v2506 = vadd.f32 %v2433, %v2505
      %v2507 = vpop.f32.mrf.mxu0
      %v2508 = vadd.f32 %v2435, %v2507
      %2509 = vmatprep.mubr.bf16.mxu0 %v792
      %2510 = vmatmul.mubr.bf16.gmra.mxu0 %v791
      %v2511 = vpop.f32.mrf.mxu0
      %v2512 = vadd.f32 %v2439, %v2511
      %v2513 = vpop.f32.mrf.mxu0
      %v2514 = vadd.f32 %v2441, %v2513
      %v2515 = vpop.f32.mrf.mxu0
      %v2516 = vadd.f32 %v2443, %v2515
      %v2517 = vpop.f32.mrf.mxu0
      %v2518 = vadd.f32 %v2445, %v2517
      %2519 = vmatprep.mubr.bf16.mxu0 %v808
      %2520 = vmatmul.mubr.bf16.gmra.mxu0 %v807
      %v2521 = vpop.f32.mrf.mxu0
      %v2522 = vadd.f32 %v2449, %v2521
      %v2523 = vpop.f32.mrf.mxu0
      %v2524 = vadd.f32 %v2451, %v2523
      %v2525 = vpop.f32.mrf.mxu0
      %v2526 = vadd.f32 %v2453, %v2525
      %v2527 = vpop.f32.mrf.mxu0
      %v2528 = vadd.f32 %v2455, %v2527
      %2529 = vmatprep.mubr.bf16.mxu0 %v824
      %2530 = vmatmul.mubr.bf16.gmra.mxu0 %v823
      %v2531 = vpop.f32.mrf.mxu0
      %v2532 = vadd.f32 %v2459, %v2531
      %v2533 = vpop.f32.mrf.mxu0
      %v2534 = vadd.f32 %v2461, %v2533
      %v2535 = vpop.f32.mrf.mxu0
      %v2536 = vadd.f32 %v2463, %v2535
      %v2537 = vpop.f32.mrf.mxu0
      %v2538 = vadd.f32 %v2465, %v2537
      %2539 = vdwg.mxu0
      %2540 = vmatprep.subr.bf16.mxu0 %v1838
      %2541 = vmatpush1.bf16.msra.mxu0 %v1837
      %2542 = vmatprep.subr.bf16.mxu0 %v1836
      %2543 = vmatpush1.bf16.msra.mxu0 %v1835
      %2544 = vmatprep.subr.bf16.mxu0 %v1834
      %2545 = vmatpush1.bf16.msra.mxu0 %v1833
      %2546 = vmatprep.subr.bf16.mxu0 %v1832
      %2547 = vmatpush1.bf16.msra.mxu0 %v1831
      %2548 = vmatprep.subr.bf16.mxu0 %v1830
      %2549 = vmatpush1.bf16.msra.mxu0 %v1829
      %2550 = vmatprep.subr.bf16.mxu0 %v1828
      %2551 = vmatpush1.bf16.msra.mxu0 %v1827
      %2552 = vmatprep.subr.bf16.mxu0 %v1826
      %2553 = vmatpush1.bf16.msra.mxu0 %v1825
      %2554 = vmatprep.subr.bf16.mxu0 %v1824
      %2555 = vmatpush1.bf16.msra.mxu0 %v1823
      %2556 = vmatprep.subr.bf16.mxu0 %v1854
      %2557 = vmatpush2.bf16.msra.mxu0 %v1853
      %2558 = vmatprep.subr.bf16.mxu0 %v1852
      %2559 = vmatpush2.bf16.msra.mxu0 %v1851
      %2560 = vmatprep.subr.bf16.mxu0 %v1850
      %2561 = vmatpush2.bf16.msra.mxu0 %v1849
      %2562 = vmatprep.subr.bf16.mxu0 %v1848
      %2563 = vmatpush2.bf16.msra.mxu0 %v1847
      %2564 = vmatprep.subr.bf16.mxu0 %v1846
      %2565 = vmatpush2.bf16.msra.mxu0 %v1845
      %2566 = vmatprep.subr.bf16.mxu0 %v1844
      %2567 = vmatpush2.bf16.msra.mxu0 %v1843
      %2568 = vmatprep.subr.bf16.mxu0 %v1842
      %2569 = vmatpush2.bf16.msra.mxu0 %v1841
      %2570 = vmatprep.subr.bf16.mxu0 %v1840
      %2571 = vmatpush2.bf16.msra.mxu0 %v1839
      %2572 = vmatprep.mubr.bf16.mxu0 %v778
      %2573 = vmatmul.mubr.bf16.gmra.mxu0 %v777
      %v2574 = vpop.f32.mrf.mxu0
      %v2575 = vadd.f32 %v2502, %v2574
      %v2576 = vpop.f32.mrf.mxu0
      %v2577 = vadd.f32 %v2504, %v2576
      %v2578 = vpop.f32.mrf.mxu0
      %v2579 = vadd.f32 %v2506, %v2578
      %v2580 = vpop.f32.mrf.mxu0
      %v2581 = vadd.f32 %v2508, %v2580
      %2582 = vmatprep.mubr.bf16.mxu0 %v794
      %2583 = vmatmul.mubr.bf16.gmra.mxu0 %v793
      %v2584 = vpop.f32.mrf.mxu0
      %v2585 = vadd.f32 %v2512, %v2584
      %v2586 = vpop.f32.mrf.mxu0
      %v2587 = vadd.f32 %v2514, %v2586
      %v2588 = vpop.f32.mrf.mxu0
      %v2589 = vadd.f32 %v2516, %v2588
      %v2590 = vpop.f32.mrf.mxu0
      %v2591 = vadd.f32 %v2518, %v2590
      %2592 = vmatprep.mubr.bf16.mxu0 %v810
      %2593 = vmatmul.mubr.bf16.gmra.mxu0 %v809
      %v2594 = vpop.f32.mrf.mxu0
      %v2595 = vadd.f32 %v2522, %v2594
      %v2596 = vpop.f32.mrf.mxu0
      %v2597 = vadd.f32 %v2524, %v2596
      %v2598 = vpop.f32.mrf.mxu0
      %v2599 = vadd.f32 %v2526, %v2598
      %v2600 = vpop.f32.mrf.mxu0
      %v2601 = vadd.f32 %v2528, %v2600
      %2602 = vmatprep.mubr.bf16.mxu0 %v826
      %2603 = vmatmul.mubr.bf16.gmra.mxu0 %v825
      %v2604 = vpop.f32.mrf.mxu0
      %v2605 = vadd.f32 %v2532, %v2604
      %v2606 = vpop.f32.mrf.mxu0
      %v2607 = vadd.f32 %v2534, %v2606
      %v2608 = vpop.f32.mrf.mxu0
      %v2609 = vadd.f32 %v2536, %v2608
      %v2610 = vpop.f32.mrf.mxu0
      %v2611 = vadd.f32 %v2538, %v2610
      %2612 = vdwg.mxu0
      %2613 = vmatprep.subr.bf16.mxu0 %v1870
      %2614 = vmatpush1.bf16.msra.mxu0 %v1869
      %2615 = vmatprep.subr.bf16.mxu0 %v1868
      %2616 = vmatpush1.bf16.msra.mxu0 %v1867
      %2617 = vmatprep.subr.bf16.mxu0 %v1866
      %2618 = vmatpush1.bf16.msra.mxu0 %v1865
      %2619 = vmatprep.subr.bf16.mxu0 %v1864
      %2620 = vmatpush1.bf16.msra.mxu0 %v1863
      %2621 = vmatprep.subr.bf16.mxu0 %v1862
      %2622 = vmatpush1.bf16.msra.mxu0 %v1861
      %2623 = vmatprep.subr.bf16.mxu0 %v1860
      %2624 = vmatpush1.bf16.msra.mxu0 %v1859
      %2625 = vmatprep.subr.bf16.mxu0 %v1858
      %2626 = vmatpush1.bf16.msra.mxu0 %v1857
      %2627 = vmatprep.subr.bf16.mxu0 %v1856
      %2628 = vmatpush1.bf16.msra.mxu0 %v1855
      %2629 = vmatprep.subr.bf16.mxu0 %v1886
      %2630 = vmatpush2.bf16.msra.mxu0 %v1885
      %2631 = vmatprep.subr.bf16.mxu0 %v1884
      %2632 = vmatpush2.bf16.msra.mxu0 %v1883
      %2633 = vmatprep.subr.bf16.mxu0 %v1882
      %2634 = vmatpush2.bf16.msra.mxu0 %v1881
      %2635 = vmatprep.subr.bf16.mxu0 %v1880
      %2636 = vmatpush2.bf16.msra.mxu0 %v1879
      %2637 = vmatprep.subr.bf16.mxu0 %v1878
      %2638 = vmatpush2.bf16.msra.mxu0 %v1877
      %2639 = vmatprep.subr.bf16.mxu0 %v1876
      %2640 = vmatpush2.bf16.msra.mxu0 %v1875
      %2641 = vmatprep.subr.bf16.mxu0 %v1874
      %2642 = vmatpush2.bf16.msra.mxu0 %v1873
      %2643 = vmatprep.subr.bf16.mxu0 %v1872
      %2644 = vmatpush2.bf16.msra.mxu0 %v1871
      %2645 = vmatprep.mubr.bf16.mxu0 %v780
      %2646 = vmatmul.mubr.bf16.gmra.mxu0 %v779
      %v2647 = vpop.f32.mrf.mxu0
      %v2648 = vadd.f32 %v2575, %v2647
      %v2649 = vpop.f32.mrf.mxu0
      %v2650 = vadd.f32 %v2577, %v2649
      %v2651 = vpop.f32.mrf.mxu0
      %v2652 = vadd.f32 %v2579, %v2651
      %v2653 = vpop.f32.mrf.mxu0
      %v2654 = vadd.f32 %v2581, %v2653
      %2655 = vmatprep.mubr.bf16.mxu0 %v796
      %2656 = vmatmul.mubr.bf16.gmra.mxu0 %v795
      %v2657 = vpop.f32.mrf.mxu0
      %v2658 = vadd.f32 %v2585, %v2657
      %v2659 = vpop.f32.mrf.mxu0
      %v2660 = vadd.f32 %v2587, %v2659
      %v2661 = vpop.f32.mrf.mxu0
      %v2662 = vadd.f32 %v2589, %v2661
      %v2663 = vpop.f32.mrf.mxu0
      %v2664 = vadd.f32 %v2591, %v2663
      %2665 = vmatprep.mubr.bf16.mxu0 %v812
      %2666 = vmatmul.mubr.bf16.gmra.mxu0 %v811
      %v2667 = vpop.f32.mrf.mxu0
      %v2668 = vadd.f32 %v2595, %v2667
      %v2669 = vpop.f32.mrf.mxu0
      %v2670 = vadd.f32 %v2597, %v2669
      %v2671 = vpop.f32.mrf.mxu0
      %v2672 = vadd.f32 %v2599, %v2671
      %v2673 = vpop.f32.mrf.mxu0
      %v2674 = vadd.f32 %v2601, %v2673
      %2675 = vmatprep.mubr.bf16.mxu0 %v828
      %2676 = vmatmul.mubr.bf16.gmra.mxu0 %v827
      %v2677 = vpop.f32.mrf.mxu0
      %v2678 = vadd.f32 %v2605, %v2677
      %v2679 = vpop.f32.mrf.mxu0
      %v2680 = vadd.f32 %v2607, %v2679
      %v2681 = vpop.f32.mrf.mxu0
      %v2682 = vadd.f32 %v2609, %v2681
      %v2683 = vpop.f32.mrf.mxu0
      %v2684 = vadd.f32 %v2611, %v2683
      %2685 = vdwg.mxu0
      %2686 = vmatprep.subr.bf16.mxu0 %v1902
      %2687 = vmatpush1.bf16.msra.mxu0 %v1901
      %2688 = vmatprep.subr.bf16.mxu0 %v1900
      %2689 = vmatpush1.bf16.msra.mxu0 %v1899
      %2690 = vmatprep.subr.bf16.mxu0 %v1898
      %2691 = vmatpush1.bf16.msra.mxu0 %v1897
      %2692 = vmatprep.subr.bf16.mxu0 %v1896
      %2693 = vmatpush1.bf16.msra.mxu0 %v1895
      %2694 = vmatprep.subr.bf16.mxu0 %v1894
      %2695 = vmatpush1.bf16.msra.mxu0 %v1893
      %2696 = vmatprep.subr.bf16.mxu0 %v1892
      %2697 = vmatpush1.bf16.msra.mxu0 %v1891
      %2698 = vmatprep.subr.bf16.mxu0 %v1890
      %2699 = vmatpush1.bf16.msra.mxu0 %v1889
      %2700 = vmatprep.subr.bf16.mxu0 %v1888
      %2701 = vmatpush1.bf16.msra.mxu0 %v1887
      %2702 = vmatprep.subr.bf16.mxu0 %v1918
      %2703 = vmatpush2.bf16.msra.mxu0 %v1917
      %2704 = vmatprep.subr.bf16.mxu0 %v1916
      %2705 = vmatpush2.bf16.msra.mxu0 %v1915
      %2706 = vmatprep.subr.bf16.mxu0 %v1914
      %2707 = vmatpush2.bf16.msra.mxu0 %v1913
      %2708 = vmatprep.subr.bf16.mxu0 %v1912
      %2709 = vmatpush2.bf16.msra.mxu0 %v1911
      %2710 = vmatprep.subr.bf16.mxu0 %v1910
      %2711 = vmatpush2.bf16.msra.mxu0 %v1909
      %2712 = vmatprep.subr.bf16.mxu0 %v1908
      %2713 = vmatpush2.bf16.msra.mxu0 %v1907
      %2714 = vmatprep.subr.bf16.mxu0 %v1906
      %2715 = vmatpush2.bf16.msra.mxu0 %v1905
      %2716 = vmatprep.subr.bf16.mxu0 %v1904
      %2717 = vmatpush2.bf16.msra.mxu0 %v1903
      %2718 = vmatprep.mubr.bf16.mxu0 %v782
      %2719 = vmatmul.mubr.bf16.gmra.mxu0 %v781
      %v2720 = vpop.f32.mrf.mxu0
      %v2721 = vadd.f32 %v2648, %v2720
      %v2722 = vpop.f32.mrf.mxu0
      %v2723 = vadd.f32 %v2650, %v2722
      %v2724 = vpop.f32.mrf.mxu0
      %v2725 = vadd.f32 %v2652, %v2724
      %v2726 = vpop.f32.mrf.mxu0
      %v2727 = vadd.f32 %v2654, %v2726
      %2728 = vmatprep.mubr.bf16.mxu0 %v798
      %2729 = vmatmul.mubr.bf16.gmra.mxu0 %v797
      %v2730 = vpop.f32.mrf.mxu0
      %v2731 = vadd.f32 %v2658, %v2730
      %v2732 = vpop.f32.mrf.mxu0
      %v2733 = vadd.f32 %v2660, %v2732
      %v2734 = vpop.f32.mrf.mxu0
      %v2735 = vadd.f32 %v2662, %v2734
      %v2736 = vpop.f32.mrf.mxu0
      %v2737 = vadd.f32 %v2664, %v2736
      %2738 = vmatprep.mubr.bf16.mxu0 %v814
      %2739 = vmatmul.mubr.bf16.gmra.mxu0 %v813
      %v2740 = vpop.f32.mrf.mxu0
      %v2741 = vadd.f32 %v2668, %v2740
      %v2742 = vpop.f32.mrf.mxu0
      %v2743 = vadd.f32 %v2670, %v2742
      %v2744 = vpop.f32.mrf.mxu0
      %v2745 = vadd.f32 %v2672, %v2744
      %v2746 = vpop.f32.mrf.mxu0
      %v2747 = vadd.f32 %v2674, %v2746
      %2748 = vmatprep.mubr.bf16.mxu0 %v830
      %2749 = vmatmul.mubr.bf16.gmra.mxu0 %v829
      %v2750 = vpop.f32.mrf.mxu0
      %v2751 = vadd.f32 %v2678, %v2750
      %v2752 = vpop.f32.mrf.mxu0
      %v2753 = vadd.f32 %v2680, %v2752
      %v2754 = vpop.f32.mrf.mxu0
      %v2755 = vadd.f32 %v2682, %v2754
      %v2756 = vpop.f32.mrf.mxu0
      %v2757 = vadd.f32 %v2684, %v2756
      %2758 = vdwg.mxu0
      %vm2759 = vcmp.ge.f32.partialorder %v2721, 0.0
      %vm2760 = vcmp.ge.f32.partialorder %v2723, 0.0
      %vm2761 = vcmp.ge.f32.partialorder %v2725, 0.0
      %vm2762 = vcmp.ge.f32.partialorder %v2727, 0.0
      %vm2763 = vcmp.ge.f32.partialorder %v2731, 0.0
      %vm2764 = vcmp.ge.f32.partialorder %v2733, 0.0
      %vm2765 = vcmp.ge.f32.partialorder %v2735, 0.0
      %vm2766 = vcmp.ge.f32.partialorder %v2737, 0.0
      %vm2767 = vcmp.ge.f32.partialorder %v2741, 0.0
      %vm2768 = vcmp.ge.f32.partialorder %v2743, 0.0
      %vm2769 = vcmp.ge.f32.partialorder %v2745, 0.0
      %vm2770 = vcmp.ge.f32.partialorder %v2747, 0.0
      %vm2771 = vcmp.ge.f32.partialorder %v2751, 0.0
      %vm2772 = vcmp.ge.f32.partialorder %v2753, 0.0
      %vm2773 = vcmp.ge.f32.partialorder %v2755, 0.0
      %vm2774 = vcmp.ge.f32.partialorder %v2757, 0.0
      %v2775 = vmul.f32 %v2721, 0.1
      %v2776 = vmul.f32 %v2723, 0.1
      %v2777 = vmul.f32 %v2725, 0.1
      %v2778 = vmul.f32 %v2727, 0.1
      %v2779 = vmul.f32 %v2731, 0.1
      %v2780 = vmul.f32 %v2733, 0.1
      %v2781 = vmul.f32 %v2735, 0.1
      %v2782 = vmul.f32 %v2737, 0.1
      %v2783 = vmul.f32 %v2741, 0.1
      %v2784 = vmul.f32 %v2743, 0.1
      %v2785 = vmul.f32 %v2745, 0.1
      %v2786 = vmul.f32 %v2747, 0.1
      %v2787 = vmul.f32 %v2751, 0.1
      %v2788 = vmul.f32 %v2753, 0.1
      %v2789 = vmul.f32 %v2755, 0.1
      %v2790 = vmul.f32 %v2757, 0.1
      %v2791 = vsel %vm2759, %v2721, %v2775
      %v2792 = vsel %vm2760, %v2723, %v2776
      %v2793 = vsel %vm2761, %v2725, %v2777
      %v2794 = vsel %vm2762, %v2727, %v2778
      %v2795 = vsel %vm2763, %v2731, %v2779
      %v2796 = vsel %vm2764, %v2733, %v2780
      %v2797 = vsel %vm2765, %v2735, %v2781
      %v2798 = vsel %vm2766, %v2737, %v2782
      %v2799 = vsel %vm2767, %v2741, %v2783
      %v2800 = vsel %vm2768, %v2743, %v2784
      %v2801 = vsel %vm2769, %v2745, %v2785
      %v2802 = vsel %vm2770, %v2747, %v2786
      %v2803 = vsel %vm2771, %v2751, %v2787
      %v2804 = vsel %vm2772, %v2753, %v2788
      %v2805 = vsel %vm2773, %v2755, %v2789
      %v2806 = vsel %vm2774, %v2757, %v2790
      %v2807 = vpack.c.bf16 %v2793, %v2791
      %v2808 = vpack.c.bf16 %v2794, %v2792
      %v2809 = vpack.c.bf16 %v2797, %v2795
      %v2810 = vpack.c.bf16 %v2798, %v2796
      %v2811 = vpack.c.bf16 %v2801, %v2799
      %v2812 = vpack.c.bf16 %v2802, %v2800
      %v2813 = vpack.c.bf16 %v2805, %v2803
      %v2814 = vpack.c.bf16 %v2806, %v2804
      %v2823 = vunpack.c.l.b16 %v2807
      %v2824 = vunpack.c.l.b16 %v2808
      %v2825 = vunpack.c.h.b16 %v2807
      %v2826 = vunpack.c.h.b16 %v2808
      %v2827 = vunpack.c.l.b16 %v2809
      %v2828 = vunpack.c.l.b16 %v2810
      %v2829 = vunpack.c.h.b16 %v2809
      %v2830 = vunpack.c.h.b16 %v2810
      %v2831 = vunpack.c.l.b16 %v2811
      %v2832 = vunpack.c.l.b16 %v2812
      %v2833 = vunpack.c.h.b16 %v2811
      %v2834 = vunpack.c.h.b16 %v2812
      %v2835 = vunpack.c.l.b16 %v2813
      %v2836 = vunpack.c.l.b16 %v2814
      %v2837 = vunpack.c.h.b16 %v2813
      %v2838 = vunpack.c.h.b16 %v2814
      %v2839 = vpack.c.b16 %v2824, %v2823
      %v2840 = vpack.c.b16 %v2826, %v2825
      %v2841 = vpack.c.b16 %v2828, %v2827
      %v2842 = vpack.c.b16 %v2830, %v2829
      %v2843 = vpack.c.b16 %v2832, %v2831
      %v2844 = vpack.c.b16 %v2834, %v2833
      %v2845 = vpack.c.b16 %v2836, %v2835
      %v2846 = vpack.c.b16 %v2838, %v2837
      %2855 = vst [vmem:[%s240] sm:$0xff] %v2839
      %2856 = vst [vmem:[%s240 + $0x8] sm:$0xff] %v2840
      %2857 = vst [vmem:[%s240 + $0x10] sm:$0xff] %v2841
      %2858 = vst [vmem:[%s240 + $0x18] sm:$0xff] %v2842
      %2859 = vst [vmem:[%s240 + $0x20] sm:$0xff] %v2843
      %2860 = vst [vmem:[%s240 + $0x28] sm:$0xff] %v2844
      %2861 = vst [vmem:[%s240 + $0x30] sm:$0xff] %v2845
      %2862 = vst [vmem:[%s240 + $0x38] sm:$0xff] %v2846
      %s2863 = smul.u32 8, %s18
      %s2864 = smul.u32 2, %s19
      %p2865 = scmp.lt.s32.totalorder %s2863, 15
      %s2866 = scalar_select %p2865, %s2863, 15
      %p2867 = scmp.lt.s32.totalorder %s2864, 1
      %s2868 = scalar_select %p2867, %s2864, 1
      %s2869 = smul.addr %s2866, 2
      %s2870 = sadd.s32 %s2868, %s2869
      %s2871 = smul.addr %s2870, 4
      %s2872 = scalar_lea.vmem %s3, %s2871
      // Predicated region
      $region33: #{discriminator_forward.6} parent=31 // pred_check
        %p2873 = pneg %p124
      $region34: #{discriminator_forward.6} parent=31 // pred_check_branch
        %2875 = sbr.rel (%p2873) target = $region36
      $region35: #{discriminator_forward.6} parent=31 // pred_region
        %s2876 = smul.u32 8, %s18
        %s2877 = smul.u32 2, %s19
      $region36: #{discriminator_forward.6} parent=31 // pred_fallthru
        _
    $region32: #{discriminator_forward.6} parent=5 // pred_fallthru
      _
    %p2878 = scmp.le.s32.totalorder 2, %s9
    // Predicated region
    $region37: #{discriminator_forward.6} parent=5 // pred_check
      %p2879 = pneg %p2878
    $region38: #{discriminator_forward.6} parent=5 // pred_check_branch
      %2881 = sbr.rel (%p2879) target = $region40
    $region39: #{discriminator_forward.6} parent=5 // pred_region
      %s2882 = ssub.s32 %s9, 2
      // Predicated region
      $region41: #{discriminator_forward.6} parent=39 // pred_check
        %p2883 = pneg %p130
      $region42: #{discriminator_forward.6} parent=39 // pred_check_branch
        %2885 = sbr.rel (%p2883) target = $region44
      $region43: #{discriminator_forward.6} parent=39 // pred_region
        %s2886 = smul.u32 8, %s20
        %s2887 = smul.u32 2, %s21
        %p2888 = scmp.lt.s32.totalorder %s2886, 15
        %s2889 = scalar_select %p2888, %s2886, 15
        %p2890 = scmp.lt.s32.totalorder %s2887, 1
        %s2891 = scalar_select %p2890, %s2887, 1
        %s2892 = smul.addr %s2889, 2
        %s2893 = sadd.s32 %s2891, %s2892
        %s2894 = smul.addr %s2893, 4
        %s2895 = scalar_lea.vmem %s3, %s2894
      $region44: #{discriminator_forward.6} parent=39 // pred_fallthru
        _
    $region40: #{discriminator_forward.6} parent=5 // pred_fallthru
      _
  $region6: #{discriminator_forward.6} parent=0 // loop_footer
    %s13 = sadd.s32 1, %s9
  $region7: #{discriminator_forward.6} parent=0 // loop_footer_branch
    %8 = sbr.rel target = $region3
  $region8: #{discriminator_forward.6} parent=0 // loop_exit
    _

// kernel: discriminator_forward.7
$region0: #{discriminator_forward.7}
  #allocation0 [shape = 'u32[]', space=smem, size = 0x4, offset = 0x4, fixed_abs, tag = 'smem constant byte address 0x4 - core index']
  #allocation1 [shape = 'u32[144,128]{1,0:T(1,128)}', space=vmem, size = 0x12000, scoped, tag = 'internal scratch']
  #allocation2 [shape = 'f32[1]{0:T(128)S(6)}', space=smem, size = 0x200, scoped, tag = 'scoped memory for discriminator_forward.7']
  #allocation3 [shape = 'f32[1]{0:T(128)S(6)}', space=smem, size = 0x200, scoped, tag = 'scoped memory for discriminator_forward.7']
  %s0 = inlined_call_operand.vmem [shape: bf16[128,256], index: 0, kind: input, shape index: {}]
  %s1 = inlined_call_operand.vmem [shape: bf16[256,32], index: 1, kind: input, shape index: {}]
  %s2 = inlined_call_operand.vmem [shape: f32[1,32], index: 2, kind: input, shape index: {}]
  %s3 = inlined_call_operand.vmem [shape: bf16[256,32], index: 3, kind: input, shape index: {}]
  %s4 = inlined_call_operand.vmem [shape: f32[1,32], index: 4, kind: input, shape index: {}]
  %s5 = inlined_call_operand.vmem [shape: bf16[256,256], index: 5, kind: input, shape index: {}]
  %s6 = inlined_call_operand.vmem [shape: f32[1,256], index: 6, kind: input, shape index: {}]
  %s7 = inlined_call_operand.<no memory space> [shape: f32[1], index: 7, kind: input, shape index: {}, may-alias: {7,14}]
  %s8 = inlined_call_operand.vmem [shape: bf16[256,32], index: 8, kind: input, shape index: {}]
  %s9 = inlined_call_operand.vmem [shape: f32[1,32], index: 9, kind: input, shape index: {}]
  %s10 = inlined_call_operand.vmem [shape: bf16[256,32], index: 10, kind: input, shape index: {}]
  %s11 = inlined_call_operand.vmem [shape: f32[1,32], index: 11, kind: input, shape index: {}]
  %s12 = inlined_call_operand.vmem [shape: bf16[256,256], index: 12, kind: input, shape index: {}]
  %s13 = inlined_call_operand.vmem [shape: f32[1,256], index: 13, kind: input, shape index: {}]
  %s14 = inlined_call_operand.<no memory space> [shape: f32[1], index: 14, kind: input, shape index: {}, may-alias: {7,14}]
  %s15 = inlined_call_operand.vmem [shape: bf16[256,128], index: 15, kind: input, shape index: {}]
  %s16 = inlined_call_operand.vmem [shape: f32[128,128], index: 16, kind: output, shape index: {}]
  %s17 = sld [smem:[#allocation0]]
  $region74: #{discriminator_forward.7} parent=0
    _
  %s19 = ssub.s32 1, %s17
  %s20 = scalar_select 0, %s19, %s17
  %21 = sst [smem:[#allocation2]] %s7
  %22 = sst [smem:[#allocation3]] %s14
  // Predicated region
  $region2: #{discriminator_forward.7} parent=0 // pred_check
    _
  $region3: #{discriminator_forward.7} parent=0 // pred_check_branch
    %24 = sbr.rel (0) target = $region5
  $region4: #{discriminator_forward.7} parent=0 // pred_region
    _
  $region5: #{discriminator_forward.7} parent=0 // pred_fallthru
    _
  // Predicated region
  $region6: #{discriminator_forward.7} parent=0 // pred_check
    _
  $region7: #{discriminator_forward.7} parent=0 // pred_check_branch
    %26 = sbr.rel (0) target = $region9
  $region8: #{discriminator_forward.7} parent=0 // pred_region
    _
  $region9: #{discriminator_forward.7} parent=0 // pred_fallthru
    _
  // Predicated region
  $region10: #{discriminator_forward.7} parent=0 // pred_check
    _
  $region11: #{discriminator_forward.7} parent=0 // pred_check_branch
    %28 = sbr.rel (0) target = $region13
  $region12: #{discriminator_forward.7} parent=0 // pred_region
    _
  $region13: #{discriminator_forward.7} parent=0 // pred_fallthru
    _
  // Predicated region
  $region14: #{discriminator_forward.7} parent=0 // pred_check
    _
  $region15: #{discriminator_forward.7} parent=0 // pred_check_branch
    %30 = sbr.rel (0) target = $region17
  $region16: #{discriminator_forward.7} parent=0 // pred_region
    _
  $region17: #{discriminator_forward.7} parent=0 // pred_fallthru
    _
  // Predicated region
  $region18: #{discriminator_forward.7} parent=0 // pred_check
    _
  $region19: #{discriminator_forward.7} parent=0 // pred_check_branch
    %32 = sbr.rel (0) target = $region21
  $region20: #{discriminator_forward.7} parent=0 // pred_region
    _
  $region21: #{discriminator_forward.7} parent=0 // pred_fallthru
    _
  // Predicated region
  $region22: #{discriminator_forward.7} parent=0 // pred_check
    _
  $region23: #{discriminator_forward.7} parent=0 // pred_check_branch
    %34 = sbr.rel (0) target = $region25
  $region24: #{discriminator_forward.7} parent=0 // pred_region
    _
  $region25: #{discriminator_forward.7} parent=0 // pred_fallthru
    _
  // Predicated region
  $region26: #{discriminator_forward.7} parent=0 // pred_check
    _
  $region27: #{discriminator_forward.7} parent=0 // pred_check_branch
    %36 = sbr.rel (0) target = $region29
  $region28: #{discriminator_forward.7} parent=0 // pred_region
    _
  $region29: #{discriminator_forward.7} parent=0 // pred_fallthru
    _
  // Predicated region
  $region30: #{discriminator_forward.7} parent=0 // pred_check
    _
  $region31: #{discriminator_forward.7} parent=0 // pred_check_branch
    %38 = sbr.rel (0) target = $region33
  $region32: #{discriminator_forward.7} parent=0 // pred_region
    _
  $region33: #{discriminator_forward.7} parent=0 // pred_fallthru
    _
  // Predicated region
  $region34: #{discriminator_forward.7} parent=0 // pred_check
    _
  $region35: #{discriminator_forward.7} parent=0 // pred_check_branch
    %40 = sbr.rel (0) target = $region37
  $region36: #{discriminator_forward.7} parent=0 // pred_region
    _
  $region37: #{discriminator_forward.7} parent=0 // pred_fallthru
    _
  // Predicated region
  $region38: #{discriminator_forward.7} parent=0 // pred_check
    _
  $region39: #{discriminator_forward.7} parent=0 // pred_check_branch
    %42 = sbr.rel (0) target = $region41
  $region40: #{discriminator_forward.7} parent=0 // pred_region
    _
  $region41: #{discriminator_forward.7} parent=0 // pred_fallthru
    _
  // Predicated region
  $region42: #{discriminator_forward.7} parent=0 // pred_check
    _
  $region43: #{discriminator_forward.7} parent=0 // pred_check_branch
    %44 = sbr.rel (0) target = $region45
  $region44: #{discriminator_forward.7} parent=0 // pred_region
    _
  $region45: #{discriminator_forward.7} parent=0 // pred_fallthru
    _
  // Predicated region
  $region46: #{discriminator_forward.7} parent=0 // pred_check
    _
  $region47: #{discriminator_forward.7} parent=0 // pred_check_branch
    %46 = sbr.rel (0) target = $region49
  $region48: #{discriminator_forward.7} parent=0 // pred_region
    _
  $region49: #{discriminator_forward.7} parent=0 // pred_fallthru
    _
  // Predicated region
  $region50: #{discriminator_forward.7} parent=0 // pred_check
    _
  $region51: #{discriminator_forward.7} parent=0 // pred_check_branch
    %48 = sbr.rel (0) target = $region53
  $region52: #{discriminator_forward.7} parent=0 // pred_region
    _
  $region53: #{discriminator_forward.7} parent=0 // pred_fallthru
    _
  // Predicated region
  $region54: #{discriminator_forward.7} parent=0 // pred_check
    _
  $region55: #{discriminator_forward.7} parent=0 // pred_check_branch
    %50 = sbr.rel (0) target = $region57
  $region56: #{discriminator_forward.7} parent=0 // pred_region
    _
  $region57: #{discriminator_forward.7} parent=0 // pred_fallthru
    _
  // Predicated region
  $region58: #{discriminator_forward.7} parent=0 // pred_check
    _
  $region59: #{discriminator_forward.7} parent=0 // pred_check_branch
    %52 = sbr.rel (0) target = $region61
  $region60: #{discriminator_forward.7} parent=0 // pred_region
    _
  $region61: #{discriminator_forward.7} parent=0 // pred_fallthru
    _
  // Predicated region
  $region62: #{discriminator_forward.7} parent=0 // pred_check
    _
  $region63: #{discriminator_forward.7} parent=0 // pred_check_branch
    %54 = sbr.rel (0) target = $region65
  $region64: #{discriminator_forward.7} parent=0 // pred_region
    _
  $region65: #{discriminator_forward.7} parent=0 // pred_fallthru
    _
  %v56 = vld [vmem:[%s0] sm:$0xff]
  %v57 = vld [vmem:[%s0 + $0x8] sm:$0xff]
  %v58 = vld [vmem:[%s0 + $0x10] sm:$0xff]
  %v59 = vld [vmem:[%s0 + $0x18] sm:$0xff]
  %v60 = vld [vmem:[%s0 + $0x20] sm:$0xff]
  %v61 = vld [vmem:[%s0 + $0x28] sm:$0xff]
  %v62 = vld [vmem:[%s0 + $0x30] sm:$0xff]
  %v63 = vld [vmem:[%s0 + $0x38] sm:$0xff]
  %v64 = vld [vmem:[%s0 + $0x40] sm:$0xff]
  %v65 = vld [vmem:[%s0 + $0x48] sm:$0xff]
  %v66 = vld [vmem:[%s0 + $0x50] sm:$0xff]
  %v67 = vld [vmem:[%s0 + $0x58] sm:$0xff]
  %v68 = vld [vmem:[%s0 + $0x60] sm:$0xff]
  %v69 = vld [vmem:[%s0 + $0x68] sm:$0xff]
  %v70 = vld [vmem:[%s0 + $0x70] sm:$0xff]
  %v71 = vld [vmem:[%s0 + $0x78] sm:$0xff]
  %v72 = vunpack.c.l.bf16 %v56
  %v73 = vunpack.c.h.bf16 %v56
  %v74 = vunpack.c.l.bf16 %v57
  %v75 = vunpack.c.h.bf16 %v57
  %v76 = vunpack.c.l.bf16 %v58
  %v77 = vunpack.c.h.bf16 %v58
  %v78 = vunpack.c.l.bf16 %v59
  %v79 = vunpack.c.h.bf16 %v59
  %v80 = vunpack.c.l.bf16 %v60
  %v81 = vunpack.c.h.bf16 %v60
  %v82 = vunpack.c.l.bf16 %v61
  %v83 = vunpack.c.h.bf16 %v61
  %v84 = vunpack.c.l.bf16 %v62
  %v85 = vunpack.c.h.bf16 %v62
  %v86 = vunpack.c.l.bf16 %v63
  %v87 = vunpack.c.h.bf16 %v63
  %v88 = vunpack.c.l.bf16 %v64
  %v89 = vunpack.c.h.bf16 %v64
  %v90 = vunpack.c.l.bf16 %v65
  %v91 = vunpack.c.h.bf16 %v65
  %v92 = vunpack.c.l.bf16 %v66
  %v93 = vunpack.c.h.bf16 %v66
  %v94 = vunpack.c.l.bf16 %v67
  %v95 = vunpack.c.h.bf16 %v67
  %v96 = vunpack.c.l.bf16 %v68
  %v97 = vunpack.c.h.bf16 %v68
  %v98 = vunpack.c.l.bf16 %v69
  %v99 = vunpack.c.h.bf16 %v69
  %v100 = vunpack.c.l.bf16 %v70
  %v101 = vunpack.c.h.bf16 %v70
  %v102 = vunpack.c.l.bf16 %v71
  %v103 = vunpack.c.h.bf16 %v71
  %v104 = vld [vmem:[%s1] sm:$0xf]
  %v105 = vld [vmem:[%s1 + $0x4] sm:$0xf]
  %v106 = vld [vmem:[%s1 + $0x8] sm:$0xf]
  %v107 = vld [vmem:[%s1 + $0xc] sm:$0xf]
  %v108 = vld [vmem:[%s1 + $0x10] sm:$0xf]
  %v109 = vld [vmem:[%s1 + $0x14] sm:$0xf]
  %v110 = vld [vmem:[%s1 + $0x18] sm:$0xf]
  %v111 = vld [vmem:[%s1 + $0x1c] sm:$0xf]
  %v112 = vld [vmem:[%s1 + $0x20] sm:$0xf]
  %v113 = vld [vmem:[%s1 + $0x24] sm:$0xf]
  %v114 = vld [vmem:[%s1 + $0x28] sm:$0xf]
  %v115 = vld [vmem:[%s1 + $0x2c] sm:$0xf]
  %v116 = vld [vmem:[%s1 + $0x30] sm:$0xf]
  %v117 = vld [vmem:[%s1 + $0x34] sm:$0xf]
  %v118 = vld [vmem:[%s1 + $0x38] sm:$0xf]
  %v119 = vld [vmem:[%s1 + $0x3c] sm:$0xf]
  %v120 = vld [vmem:[%s1 + $0x40] sm:$0xf]
  %v121 = vld [vmem:[%s1 + $0x44] sm:$0xf]
  %v122 = vld [vmem:[%s1 + $0x48] sm:$0xf]
  %v123 = vld [vmem:[%s1 + $0x4c] sm:$0xf]
  %v124 = vld [vmem:[%s1 + $0x50] sm:$0xf]
  %v125 = vld [vmem:[%s1 + $0x54] sm:$0xf]
  %v126 = vld [vmem:[%s1 + $0x58] sm:$0xf]
  %v127 = vld [vmem:[%s1 + $0x5c] sm:$0xf]
  %v128 = vld [vmem:[%s1 + $0x60] sm:$0xf]
  %v129 = vld [vmem:[%s1 + $0x64] sm:$0xf]
  %v130 = vld [vmem:[%s1 + $0x68] sm:$0xf]
  %v131 = vld [vmem:[%s1 + $0x6c] sm:$0xf]
  %v132 = vld [vmem:[%s1 + $0x70] sm:$0xf]
  %v133 = vld [vmem:[%s1 + $0x74] sm:$0xf]
  %v134 = vld [vmem:[%s1 + $0x78] sm:$0xf]
  %v135 = vld [vmem:[%s1 + $0x7c] sm:$0xf]
  %v136 = vld [vmem:[%s2] sm:$0x1]
  %v138 = vlaneseq
  %v139 = vshrl.u32 %v138, 7
  %v140 = vsub.s32 0, %v139
  %v141 = vrot.slane %v136, %v140
  %v159 = vunpack.c.l.b16 %v56
  %v160 = vunpack.c.h.b16 %v56
  %v161 = vunpack.c.l.b16 %v57
  %v162 = vunpack.c.h.b16 %v57
  %v163 = vunpack.c.l.b16 %v58
  %v164 = vunpack.c.h.b16 %v58
  %v165 = vunpack.c.l.b16 %v59
  %v166 = vunpack.c.h.b16 %v59
  %v167 = vunpack.c.l.b16 %v60
  %v168 = vunpack.c.h.b16 %v60
  %v169 = vunpack.c.l.b16 %v61
  %v170 = vunpack.c.h.b16 %v61
  %v171 = vunpack.c.l.b16 %v62
  %v172 = vunpack.c.h.b16 %v62
  %v173 = vunpack.c.l.b16 %v63
  %v174 = vunpack.c.h.b16 %v63
  %v175 = vunpack.c.l.b16 %v64
  %v176 = vunpack.c.h.b16 %v64
  %v177 = vunpack.c.l.b16 %v65
  %v178 = vunpack.c.h.b16 %v65
  %v179 = vunpack.c.l.b16 %v66
  %v180 = vunpack.c.h.b16 %v66
  %v181 = vunpack.c.l.b16 %v67
  %v182 = vunpack.c.h.b16 %v67
  %v183 = vunpack.c.l.b16 %v68
  %v184 = vunpack.c.h.b16 %v68
  %v185 = vunpack.c.l.b16 %v69
  %v186 = vunpack.c.h.b16 %v69
  %v187 = vunpack.c.l.b16 %v70
  %v188 = vunpack.c.h.b16 %v70
  %v189 = vunpack.c.l.b16 %v71
  %v190 = vunpack.c.h.b16 %v71
  %v191 = vpack.c.b16 %v161, %v159
  %v192 = vpack.c.b16 %v162, %v160
  %v193 = vpack.c.b16 %v165, %v163
  %v194 = vpack.c.b16 %v166, %v164
  %v195 = vpack.c.b16 %v169, %v167
  %v196 = vpack.c.b16 %v170, %v168
  %v197 = vpack.c.b16 %v173, %v171
  %v198 = vpack.c.b16 %v174, %v172
  %v199 = vpack.c.b16 %v177, %v175
  %v200 = vpack.c.b16 %v178, %v176
  %v201 = vpack.c.b16 %v181, %v179
  %v202 = vpack.c.b16 %v182, %v180
  %v203 = vpack.c.b16 %v185, %v183
  %v204 = vpack.c.b16 %v186, %v184
  %v205 = vpack.c.b16 %v189, %v187
  %v206 = vpack.c.b16 %v190, %v188
  %v255 = vunpack.c.l.b16 %v104
  %v256 = vunpack.c.l.b16 %v105
  %v257 = vunpack.c.l.b16 %v106
  %v258 = vunpack.c.l.b16 %v107
  %v259 = vunpack.c.l.b16 %v108
  %v260 = vunpack.c.l.b16 %v109
  %v261 = vunpack.c.l.b16 %v110
  %v262 = vunpack.c.l.b16 %v111
  %v263 = vunpack.c.l.b16 %v112
  %v264 = vunpack.c.l.b16 %v113
  %v265 = vunpack.c.l.b16 %v114
  %v266 = vunpack.c.l.b16 %v115
  %v267 = vunpack.c.l.b16 %v116
  %v268 = vunpack.c.l.b16 %v117
  %v269 = vunpack.c.l.b16 %v118
  %v270 = vunpack.c.l.b16 %v119
  %v271 = vunpack.c.l.b16 %v120
  %v272 = vunpack.c.l.b16 %v121
  %v273 = vunpack.c.l.b16 %v122
  %v274 = vunpack.c.l.b16 %v123
  %v275 = vunpack.c.l.b16 %v124
  %v276 = vunpack.c.l.b16 %v125
  %v277 = vunpack.c.l.b16 %v126
  %v278 = vunpack.c.l.b16 %v127
  %v279 = vunpack.c.l.b16 %v128
  %v280 = vunpack.c.l.b16 %v129
  %v281 = vunpack.c.l.b16 %v130
  %v282 = vunpack.c.l.b16 %v131
  %v283 = vunpack.c.l.b16 %v132
  %v284 = vunpack.c.l.b16 %v133
  %v285 = vunpack.c.l.b16 %v134
  %v286 = vunpack.c.l.b16 %v135
  %v287 = vpack.c.b16 %v256, %v255
  %v288 = vpack.c.b16 %v258, %v257
  %v289 = vpack.c.b16 %v260, %v259
  %v290 = vpack.c.b16 %v262, %v261
  %v291 = vpack.c.b16 %v264, %v263
  %v292 = vpack.c.b16 %v266, %v265
  %v293 = vpack.c.b16 %v268, %v267
  %v294 = vpack.c.b16 %v270, %v269
  %v295 = vpack.c.b16 %v272, %v271
  %v296 = vpack.c.b16 %v274, %v273
  %v297 = vpack.c.b16 %v276, %v275
  %v298 = vpack.c.b16 %v278, %v277
  %v299 = vpack.c.b16 %v280, %v279
  %v300 = vpack.c.b16 %v282, %v281
  %v301 = vpack.c.b16 %v284, %v283
  %v302 = vpack.c.b16 %v286, %v285
  %319 = vmatprep.subr.bf16.mxu0 0
  %320 = vmatpush1.bf16.msra.mxu0 %v294
  %321 = vmatprep.subr.bf16.mxu0 0
  %322 = vmatpush1.bf16.msra.mxu0 %v293
  %323 = vmatprep.subr.bf16.mxu0 0
  %324 = vmatpush1.bf16.msra.mxu0 %v292
  %325 = vmatprep.subr.bf16.mxu0 0
  %326 = vmatpush1.bf16.msra.mxu0 %v291
  %327 = vmatprep.subr.bf16.mxu0 0
  %328 = vmatpush1.bf16.msra.mxu0 %v290
  %329 = vmatprep.subr.bf16.mxu0 0
  %330 = vmatpush1.bf16.msra.mxu0 %v289
  %331 = vmatprep.subr.bf16.mxu0 0
  %332 = vmatpush1.bf16.msra.mxu0 %v288
  %333 = vmatprep.subr.bf16.mxu0 0
  %334 = vmatpush1.bf16.msra.mxu0 %v287
  %335 = vmatprep.subr.bf16.mxu0 0
  %336 = vmatpush2.bf16.msra.mxu0 %v302
  %337 = vmatprep.subr.bf16.mxu0 0
  %338 = vmatpush2.bf16.msra.mxu0 %v301
  %339 = vmatprep.subr.bf16.mxu0 0
  %340 = vmatpush2.bf16.msra.mxu0 %v300
  %341 = vmatprep.subr.bf16.mxu0 0
  %342 = vmatpush2.bf16.msra.mxu0 %v299
  %343 = vmatprep.subr.bf16.mxu0 0
  %344 = vmatpush2.bf16.msra.mxu0 %v298
  %345 = vmatprep.subr.bf16.mxu0 0
  %346 = vmatpush2.bf16.msra.mxu0 %v297
  %347 = vmatprep.subr.bf16.mxu0 0
  %348 = vmatpush2.bf16.msra.mxu0 %v296
  %349 = vmatprep.subr.bf16.mxu0 0
  %350 = vmatpush2.bf16.msra.mxu0 %v295
  %351 = vmatprep.mubr.bf16.mxu0 %v192
  %352 = vmatmul.mubr.bf16.gmra.mxu0 %v191
  %v353 = vpop.f32.mrf.mxu0
  %v354 = vadd.f32 %v141, %v353
  %v355 = vpop.f32.mrf.mxu0
  %v356 = vpop.f32.mrf.mxu0
  %v357 = vadd.f32 %v141, %v356
  %v358 = vpop.f32.mrf.mxu0
  %359 = vmatprep.mubr.bf16.mxu0 %v194
  %360 = vmatmul.mubr.bf16.gmra.mxu0 %v193
  %v361 = vpop.f32.mrf.mxu0
  %v362 = vadd.f32 %v141, %v361
  %v363 = vpop.f32.mrf.mxu0
  %v364 = vpop.f32.mrf.mxu0
  %v365 = vadd.f32 %v141, %v364
  %v366 = vpop.f32.mrf.mxu0
  %367 = vmatprep.mubr.bf16.mxu0 %v196
  %368 = vmatmul.mubr.bf16.gmra.mxu0 %v195
  %v369 = vpop.f32.mrf.mxu0
  %v370 = vadd.f32 %v141, %v369
  %v371 = vpop.f32.mrf.mxu0
  %v372 = vpop.f32.mrf.mxu0
  %v373 = vadd.f32 %v141, %v372
  %v374 = vpop.f32.mrf.mxu0
  %375 = vmatprep.mubr.bf16.mxu0 %v198
  %376 = vmatmul.mubr.bf16.gmra.mxu0 %v197
  %v377 = vpop.f32.mrf.mxu0
  %v378 = vadd.f32 %v141, %v377
  %v379 = vpop.f32.mrf.mxu0
  %v380 = vpop.f32.mrf.mxu0
  %v381 = vadd.f32 %v141, %v380
  %v382 = vpop.f32.mrf.mxu0
  %383 = vmatprep.mubr.bf16.mxu0 %v200
  %384 = vmatmul.mubr.bf16.gmra.mxu0 %v199
  %v385 = vpop.f32.mrf.mxu0
  %v386 = vadd.f32 %v141, %v385
  %v387 = vpop.f32.mrf.mxu0
  %v388 = vpop.f32.mrf.mxu0
  %v389 = vadd.f32 %v141, %v388
  %v390 = vpop.f32.mrf.mxu0
  %391 = vmatprep.mubr.bf16.mxu0 %v202
  %392 = vmatmul.mubr.bf16.gmra.mxu0 %v201
  %v393 = vpop.f32.mrf.mxu0
  %v394 = vadd.f32 %v141, %v393
  %v395 = vpop.f32.mrf.mxu0
  %v396 = vpop.f32.mrf.mxu0
  %v397 = vadd.f32 %v141, %v396
  %v398 = vpop.f32.mrf.mxu0
  %399 = vmatprep.mubr.bf16.mxu0 %v204
  %400 = vmatmul.mubr.bf16.gmra.mxu0 %v203
  %v401 = vpop.f32.mrf.mxu0
  %v402 = vadd.f32 %v141, %v401
  %v403 = vpop.f32.mrf.mxu0
  %v404 = vpop.f32.mrf.mxu0
  %v405 = vadd.f32 %v141, %v404
  %v406 = vpop.f32.mrf.mxu0
  %407 = vmatprep.mubr.bf16.mxu0 %v206
  %408 = vmatmul.mubr.bf16.gmra.mxu0 %v205
  %v409 = vpop.f32.mrf.mxu0
  %v410 = vadd.f32 %v141, %v409
  %v411 = vpop.f32.mrf.mxu0
  %v412 = vpop.f32.mrf.mxu0
  %v413 = vadd.f32 %v141, %v412
  %v414 = vpop.f32.mrf.mxu0
  %415 = vdwg.mxu0
  %v416 = vld [vmem:[%s3] sm:$0xf]
  %v417 = vld [vmem:[%s3 + $0x4] sm:$0xf]
  %v418 = vld [vmem:[%s3 + $0x8] sm:$0xf]
  %v419 = vld [vmem:[%s3 + $0xc] sm:$0xf]
  %v420 = vld [vmem:[%s3 + $0x10] sm:$0xf]
  %v421 = vld [vmem:[%s3 + $0x14] sm:$0xf]
  %v422 = vld [vmem:[%s3 + $0x18] sm:$0xf]
  %v423 = vld [vmem:[%s3 + $0x1c] sm:$0xf]
  %v424 = vld [vmem:[%s3 + $0x20] sm:$0xf]
  %v425 = vld [vmem:[%s3 + $0x24] sm:$0xf]
  %v426 = vld [vmem:[%s3 + $0x28] sm:$0xf]
  %v427 = vld [vmem:[%s3 + $0x2c] sm:$0xf]
  %v428 = vld [vmem:[%s3 + $0x30] sm:$0xf]
  %v429 = vld [vmem:[%s3 + $0x34] sm:$0xf]
  %v430 = vld [vmem:[%s3 + $0x38] sm:$0xf]
  %v431 = vld [vmem:[%s3 + $0x3c] sm:$0xf]
  %v432 = vld [vmem:[%s3 + $0x40] sm:$0xf]
  %v433 = vld [vmem:[%s3 + $0x44] sm:$0xf]
  %v434 = vld [vmem:[%s3 + $0x48] sm:$0xf]
  %v435 = vld [vmem:[%s3 + $0x4c] sm:$0xf]
  %v436 = vld [vmem:[%s3 + $0x50] sm:$0xf]
  %v437 = vld [vmem:[%s3 + $0x54] sm:$0xf]
  %v438 = vld [vmem:[%s3 + $0x58] sm:$0xf]
  %v439 = vld [vmem:[%s3 + $0x5c] sm:$0xf]
  %v440 = vld [vmem:[%s3 + $0x60] sm:$0xf]
  %v441 = vld [vmem:[%s3 + $0x64] sm:$0xf]
  %v442 = vld [vmem:[%s3 + $0x68] sm:$0xf]
  %v443 = vld [vmem:[%s3 + $0x6c] sm:$0xf]
  %v444 = vld [vmem:[%s3 + $0x70] sm:$0xf]
  %v445 = vld [vmem:[%s3 + $0x74] sm:$0xf]
  %v446 = vld [vmem:[%s3 + $0x78] sm:$0xf]
  %v447 = vld [vmem:[%s3 + $0x7c] sm:$0xf]
  %v448 = vld [vmem:[%s4] sm:$0x1]
  %v450 = vlaneseq
  %v451 = vshrl.u32 %v450, 7
  %v452 = vsub.s32 0, %v451
  %v453 = vrot.slane %v448, %v452
  %v487 = vunpack.c.l.b16 %v416
  %v488 = vunpack.c.l.b16 %v417
  %v489 = vunpack.c.l.b16 %v418
  %v490 = vunpack.c.l.b16 %v419
  %v491 = vunpack.c.l.b16 %v420
  %v492 = vunpack.c.l.b16 %v421
  %v493 = vunpack.c.l.b16 %v422
  %v494 = vunpack.c.l.b16 %v423
  %v495 = vunpack.c.l.b16 %v424
  %v496 = vunpack.c.l.b16 %v425
  %v497 = vunpack.c.l.b16 %v426
  %v498 = vunpack.c.l.b16 %v427
  %v499 = vunpack.c.l.b16 %v428
  %v500 = vunpack.c.l.b16 %v429
  %v501 = vunpack.c.l.b16 %v430
  %v502 = vunpack.c.l.b16 %v431
  %v503 = vunpack.c.l.b16 %v432
  %v504 = vunpack.c.l.b16 %v433
  %v505 = vunpack.c.l.b16 %v434
  %v506 = vunpack.c.l.b16 %v435
  %v507 = vunpack.c.l.b16 %v436
  %v508 = vunpack.c.l.b16 %v437
  %v509 = vunpack.c.l.b16 %v438
  %v510 = vunpack.c.l.b16 %v439
  %v511 = vunpack.c.l.b16 %v440
  %v512 = vunpack.c.l.b16 %v441
  %v513 = vunpack.c.l.b16 %v442
  %v514 = vunpack.c.l.b16 %v443
  %v515 = vunpack.c.l.b16 %v444
  %v516 = vunpack.c.l.b16 %v445
  %v517 = vunpack.c.l.b16 %v446
  %v518 = vunpack.c.l.b16 %v447
  %v519 = vpack.c.b16 %v488, %v487
  %v520 = vpack.c.b16 %v490, %v489
  %v521 = vpack.c.b16 %v492, %v491
  %v522 = vpack.c.b16 %v494, %v493
  %v523 = vpack.c.b16 %v496, %v495
  %v524 = vpack.c.b16 %v498, %v497
  %v525 = vpack.c.b16 %v500, %v499
  %v526 = vpack.c.b16 %v502, %v501
  %v527 = vpack.c.b16 %v504, %v503
  %v528 = vpack.c.b16 %v506, %v505
  %v529 = vpack.c.b16 %v508, %v507
  %v530 = vpack.c.b16 %v510, %v509
  %v531 = vpack.c.b16 %v512, %v511
  %v532 = vpack.c.b16 %v514, %v513
  %v533 = vpack.c.b16 %v516, %v515
  %v534 = vpack.c.b16 %v518, %v517
  %551 = vmatprep.subr.bf16.mxu0 0
  %552 = vmatpush1.bf16.msra.mxu0 %v526
  %553 = vmatprep.subr.bf16.mxu0 0
  %554 = vmatpush1.bf16.msra.mxu0 %v525
  %555 = vmatprep.subr.bf16.mxu0 0
  %556 = vmatpush1.bf16.msra.mxu0 %v524
  %557 = vmatprep.subr.bf16.mxu0 0
  %558 = vmatpush1.bf16.msra.mxu0 %v523
  %559 = vmatprep.subr.bf16.mxu0 0
  %560 = vmatpush1.bf16.msra.mxu0 %v522
  %561 = vmatprep.subr.bf16.mxu0 0
  %562 = vmatpush1.bf16.msra.mxu0 %v521
  %563 = vmatprep.subr.bf16.mxu0 0
  %564 = vmatpush1.bf16.msra.mxu0 %v520
  %565 = vmatprep.subr.bf16.mxu0 0
  %566 = vmatpush1.bf16.msra.mxu0 %v519
  %567 = vmatprep.subr.bf16.mxu0 0
  %568 = vmatpush2.bf16.msra.mxu0 %v534
  %569 = vmatprep.subr.bf16.mxu0 0
  %570 = vmatpush2.bf16.msra.mxu0 %v533
  %571 = vmatprep.subr.bf16.mxu0 0
  %572 = vmatpush2.bf16.msra.mxu0 %v532
  %573 = vmatprep.subr.bf16.mxu0 0
  %574 = vmatpush2.bf16.msra.mxu0 %v531
  %575 = vmatprep.subr.bf16.mxu0 0
  %576 = vmatpush2.bf16.msra.mxu0 %v530
  %577 = vmatprep.subr.bf16.mxu0 0
  %578 = vmatpush2.bf16.msra.mxu0 %v529
  %579 = vmatprep.subr.bf16.mxu0 0
  %580 = vmatpush2.bf16.msra.mxu0 %v528
  %581 = vmatprep.subr.bf16.mxu0 0
  %582 = vmatpush2.bf16.msra.mxu0 %v527
  %583 = vmatprep.mubr.bf16.mxu0 %v192
  %584 = vmatmul.mubr.bf16.gmra.mxu0 %v191
  %v585 = vpop.f32.mrf.mxu0
  %v586 = vadd.f32 %v453, %v585
  %v587 = vpop.f32.mrf.mxu0
  %v588 = vpop.f32.mrf.mxu0
  %v589 = vadd.f32 %v453, %v588
  %v590 = vpop.f32.mrf.mxu0
  %591 = vmatprep.mubr.bf16.mxu0 %v194
  %592 = vmatmul.mubr.bf16.gmra.mxu0 %v193
  %v593 = vpop.f32.mrf.mxu0
  %v594 = vadd.f32 %v453, %v593
  %v595 = vpop.f32.mrf.mxu0
  %v596 = vpop.f32.mrf.mxu0
  %v597 = vadd.f32 %v453, %v596
  %v598 = vpop.f32.mrf.mxu0
  %599 = vmatprep.mubr.bf16.mxu0 %v196
  %600 = vmatmul.mubr.bf16.gmra.mxu0 %v195
  %v601 = vpop.f32.mrf.mxu0
  %v602 = vadd.f32 %v453, %v601
  %v603 = vpop.f32.mrf.mxu0
  %v604 = vpop.f32.mrf.mxu0
  %v605 = vadd.f32 %v453, %v604
  %v606 = vpop.f32.mrf.mxu0
  %607 = vmatprep.mubr.bf16.mxu0 %v198
  %608 = vmatmul.mubr.bf16.gmra.mxu0 %v197
  %v609 = vpop.f32.mrf.mxu0
  %v610 = vadd.f32 %v453, %v609
  %v611 = vpop.f32.mrf.mxu0
  %v612 = vpop.f32.mrf.mxu0
  %v613 = vadd.f32 %v453, %v612
  %v614 = vpop.f32.mrf.mxu0
  %615 = vmatprep.mubr.bf16.mxu0 %v200
  %616 = vmatmul.mubr.bf16.gmra.mxu0 %v199
  %v617 = vpop.f32.mrf.mxu0
  %v618 = vadd.f32 %v453, %v617
  %v619 = vpop.f32.mrf.mxu0
  %v620 = vpop.f32.mrf.mxu0
  %v621 = vadd.f32 %v453, %v620
  %v622 = vpop.f32.mrf.mxu0
  %623 = vmatprep.mubr.bf16.mxu0 %v202
  %624 = vmatmul.mubr.bf16.gmra.mxu0 %v201
  %v625 = vpop.f32.mrf.mxu0
  %v626 = vadd.f32 %v453, %v625
  %v627 = vpop.f32.mrf.mxu0
  %v628 = vpop.f32.mrf.mxu0
  %v629 = vadd.f32 %v453, %v628
  %v630 = vpop.f32.mrf.mxu0
  %631 = vmatprep.mubr.bf16.mxu0 %v204
  %632 = vmatmul.mubr.bf16.gmra.mxu0 %v203
  %v633 = vpop.f32.mrf.mxu0
  %v634 = vadd.f32 %v453, %v633
  %v635 = vpop.f32.mrf.mxu0
  %v636 = vpop.f32.mrf.mxu0
  %v637 = vadd.f32 %v453, %v636
  %v638 = vpop.f32.mrf.mxu0
  %639 = vmatprep.mubr.bf16.mxu0 %v206
  %640 = vmatmul.mubr.bf16.gmra.mxu0 %v205
  %v641 = vpop.f32.mrf.mxu0
  %v642 = vadd.f32 %v453, %v641
  %v643 = vpop.f32.mrf.mxu0
  %v644 = vpop.f32.mrf.mxu0
  %v645 = vadd.f32 %v453, %v644
  %v646 = vpop.f32.mrf.mxu0
  %647 = vdwg.mxu0
  %v648 = vld [vmem:[%s5] sm:$0xff]
  %v649 = vld [vmem:[%s5 + $0x8] sm:$0xff]
  %v650 = vld [vmem:[%s5 + $0x10] sm:$0xff]
  %v651 = vld [vmem:[%s5 + $0x18] sm:$0xff]
  %v652 = vld [vmem:[%s5 + $0x20] sm:$0xff]
  %v653 = vld [vmem:[%s5 + $0x28] sm:$0xff]
  %v654 = vld [vmem:[%s5 + $0x30] sm:$0xff]
  %v655 = vld [vmem:[%s5 + $0x38] sm:$0xff]
  %v656 = vld [vmem:[%s5 + $0x40] sm:$0xff]
  %v657 = vld [vmem:[%s5 + $0x48] sm:$0xff]
  %v658 = vld [vmem:[%s5 + $0x50] sm:$0xff]
  %v659 = vld [vmem:[%s5 + $0x58] sm:$0xff]
  %v660 = vld [vmem:[%s5 + $0x60] sm:$0xff]
  %v661 = vld [vmem:[%s5 + $0x68] sm:$0xff]
  %v662 = vld [vmem:[%s5 + $0x70] sm:$0xff]
  %v663 = vld [vmem:[%s5 + $0x78] sm:$0xff]
  %v664 = vld [vmem:[%s5 + $0x80] sm:$0xff]
  %v665 = vld [vmem:[%s5 + $0x88] sm:$0xff]
  %v666 = vld [vmem:[%s5 + $0x90] sm:$0xff]
  %v667 = vld [vmem:[%s5 + $0x98] sm:$0xff]
  %v668 = vld [vmem:[%s5 + $0xa0] sm:$0xff]
  %v669 = vld [vmem:[%s5 + $0xa8] sm:$0xff]
  %v670 = vld [vmem:[%s5 + $0xb0] sm:$0xff]
  %v671 = vld [vmem:[%s5 + $0xb8] sm:$0xff]
  %v672 = vld [vmem:[%s5 + $0xc0] sm:$0xff]
  %v673 = vld [vmem:[%s5 + $0xc8] sm:$0xff]
  %v674 = vld [vmem:[%s5 + $0xd0] sm:$0xff]
  %v675 = vld [vmem:[%s5 + $0xd8] sm:$0xff]
  %v676 = vld [vmem:[%s5 + $0xe0] sm:$0xff]
  %v677 = vld [vmem:[%s5 + $0xe8] sm:$0xff]
  %v678 = vld [vmem:[%s5 + $0xf0] sm:$0xff]
  %v679 = vld [vmem:[%s5 + $0xf8] sm:$0xff]
  %v680 = vld [vmem:[%s6] sm:$0x3]
  %v682 = vlaneseq
  %v683 = vshrl.u32 %v682, 7
  %v684 = vsub.s32 0, %v683
  %v685 = vrot.slane %v680, %v684
  %v686 = vlaneseq
  %v687 = vshrl.u32 %v686, 7
  %v688 = vsub.s32 1, %v687
  %v689 = vrot.slane %v680, %v688
  %v724 = vunpack.c.l.b16 %v648
  %v725 = vunpack.c.h.b16 %v648
  %v726 = vunpack.c.l.b16 %v649
  %v727 = vunpack.c.h.b16 %v649
  %v728 = vunpack.c.l.b16 %v650
  %v729 = vunpack.c.h.b16 %v650
  %v730 = vunpack.c.l.b16 %v651
  %v731 = vunpack.c.h.b16 %v651
  %v732 = vunpack.c.l.b16 %v652
  %v733 = vunpack.c.h.b16 %v652
  %v734 = vunpack.c.l.b16 %v653
  %v735 = vunpack.c.h.b16 %v653
  %v736 = vunpack.c.l.b16 %v654
  %v737 = vunpack.c.h.b16 %v654
  %v738 = vunpack.c.l.b16 %v655
  %v739 = vunpack.c.h.b16 %v655
  %v740 = vunpack.c.l.b16 %v656
  %v741 = vunpack.c.h.b16 %v656
  %v742 = vunpack.c.l.b16 %v657
  %v743 = vunpack.c.h.b16 %v657
  %v744 = vunpack.c.l.b16 %v658
  %v745 = vunpack.c.h.b16 %v658
  %v746 = vunpack.c.l.b16 %v659
  %v747 = vunpack.c.h.b16 %v659
  %v748 = vunpack.c.l.b16 %v660
  %v749 = vunpack.c.h.b16 %v660
  %v750 = vunpack.c.l.b16 %v661
  %v751 = vunpack.c.h.b16 %v661
  %v752 = vunpack.c.l.b16 %v662
  %v753 = vunpack.c.h.b16 %v662
  %v754 = vunpack.c.l.b16 %v663
  %v755 = vunpack.c.h.b16 %v663
  %v756 = vunpack.c.l.b16 %v664
  %v757 = vunpack.c.h.b16 %v664
  %v758 = vunpack.c.l.b16 %v665
  %v759 = vunpack.c.h.b16 %v665
  %v760 = vunpack.c.l.b16 %v666
  %v761 = vunpack.c.h.b16 %v666
  %v762 = vunpack.c.l.b16 %v667
  %v763 = vunpack.c.h.b16 %v667
  %v764 = vunpack.c.l.b16 %v668
  %v765 = vunpack.c.h.b16 %v668
  %v766 = vunpack.c.l.b16 %v669
  %v767 = vunpack.c.h.b16 %v669
  %v768 = vunpack.c.l.b16 %v670
  %v769 = vunpack.c.h.b16 %v670
  %v770 = vunpack.c.l.b16 %v671
  %v771 = vunpack.c.h.b16 %v671
  %v772 = vunpack.c.l.b16 %v672
  %v773 = vunpack.c.h.b16 %v672
  %v774 = vunpack.c.l.b16 %v673
  %v775 = vunpack.c.h.b16 %v673
  %v776 = vunpack.c.l.b16 %v674
  %v777 = vunpack.c.h.b16 %v674
  %v778 = vunpack.c.l.b16 %v675
  %v779 = vunpack.c.h.b16 %v675
  %v780 = vunpack.c.l.b16 %v676
  %v781 = vunpack.c.h.b16 %v676
  %v782 = vunpack.c.l.b16 %v677
  %v783 = vunpack.c.h.b16 %v677
  %v784 = vunpack.c.l.b16 %v678
  %v785 = vunpack.c.h.b16 %v678
  %v786 = vunpack.c.l.b16 %v679
  %v787 = vunpack.c.h.b16 %v679
  %v788 = vpack.c.b16 %v726, %v724
  %v789 = vpack.c.b16 %v727, %v725
  %v790 = vpack.c.b16 %v730, %v728
  %v791 = vpack.c.b16 %v731, %v729
  %v792 = vpack.c.b16 %v734, %v732
  %v793 = vpack.c.b16 %v735, %v733
  %v794 = vpack.c.b16 %v738, %v736
  %v795 = vpack.c.b16 %v739, %v737
  %v796 = vpack.c.b16 %v742, %v740
  %v797 = vpack.c.b16 %v743, %v741
  %v798 = vpack.c.b16 %v746, %v744
  %v799 = vpack.c.b16 %v747, %v745
  %v800 = vpack.c.b16 %v750, %v748
  %v801 = vpack.c.b16 %v751, %v749
  %v802 = vpack.c.b16 %v754, %v752
  %v803 = vpack.c.b16 %v755, %v753
  %v804 = vpack.c.b16 %v758, %v756
  %v805 = vpack.c.b16 %v759, %v757
  %v806 = vpack.c.b16 %v762, %v760
  %v807 = vpack.c.b16 %v763, %v761
  %v808 = vpack.c.b16 %v766, %v764
  %v809 = vpack.c.b16 %v767, %v765
  %v810 = vpack.c.b16 %v770, %v768
  %v811 = vpack.c.b16 %v771, %v769
  %v812 = vpack.c.b16 %v774, %v772
  %v813 = vpack.c.b16 %v775, %v773
  %v814 = vpack.c.b16 %v778, %v776
  %v815 = vpack.c.b16 %v779, %v777
  %v816 = vpack.c.b16 %v782, %v780
  %v817 = vpack.c.b16 %v783, %v781
  %v818 = vpack.c.b16 %v786, %v784
  %v819 = vpack.c.b16 %v787, %v785
  %852 = vmatprep.subr.bf16.mxu0 %v803
  %853 = vmatpush1.bf16.msra.mxu0 %v802
  %854 = vmatprep.subr.bf16.mxu0 %v801
  %855 = vmatpush1.bf16.msra.mxu0 %v800
  %856 = vmatprep.subr.bf16.mxu0 %v799
  %857 = vmatpush1.bf16.msra.mxu0 %v798
  %858 = vmatprep.subr.bf16.mxu0 %v797
  %859 = vmatpush1.bf16.msra.mxu0 %v796
  %860 = vmatprep.subr.bf16.mxu0 %v795
  %861 = vmatpush1.bf16.msra.mxu0 %v794
  %862 = vmatprep.subr.bf16.mxu0 %v793
  %863 = vmatpush1.bf16.msra.mxu0 %v792
  %864 = vmatprep.subr.bf16.mxu0 %v791
  %865 = vmatpush1.bf16.msra.mxu0 %v790
  %866 = vmatprep.subr.bf16.mxu0 %v789
  %867 = vmatpush1.bf16.msra.mxu0 %v788
  %868 = vmatprep.subr.bf16.mxu0 %v819
  %869 = vmatpush2.bf16.msra.mxu0 %v818
  %870 = vmatprep.subr.bf16.mxu0 %v817
  %871 = vmatpush2.bf16.msra.mxu0 %v816
  %872 = vmatprep.subr.bf16.mxu0 %v815
  %873 = vmatpush2.bf16.msra.mxu0 %v814
  %874 = vmatprep.subr.bf16.mxu0 %v813
  %875 = vmatpush2.bf16.msra.mxu0 %v812
  %876 = vmatprep.subr.bf16.mxu0 %v811
  %877 = vmatpush2.bf16.msra.mxu0 %v810
  %878 = vmatprep.subr.bf16.mxu0 %v809
  %879 = vmatpush2.bf16.msra.mxu0 %v808
  %880 = vmatprep.subr.bf16.mxu0 %v807
  %881 = vmatpush2.bf16.msra.mxu0 %v806
  %882 = vmatprep.subr.bf16.mxu0 %v805
  %883 = vmatpush2.bf16.msra.mxu0 %v804
  %884 = vmatprep.mubr.bf16.mxu0 %v192
  %885 = vmatmul.mubr.bf16.gmra.mxu0 %v191
  %v886 = vpop.f32.mrf.mxu0
  %v887 = vadd.f32 %v685, %v886
  %v888 = vpop.f32.mrf.mxu0
  %v889 = vadd.f32 %v689, %v888
  %v890 = vpop.f32.mrf.mxu0
  %v891 = vadd.f32 %v685, %v890
  %v892 = vpop.f32.mrf.mxu0
  %v893 = vadd.f32 %v689, %v892
  %894 = vmatprep.mubr.bf16.mxu0 %v194
  %895 = vmatmul.mubr.bf16.gmra.mxu0 %v193
  %v896 = vpop.f32.mrf.mxu0
  %v897 = vadd.f32 %v685, %v896
  %v898 = vpop.f32.mrf.mxu0
  %v899 = vadd.f32 %v689, %v898
  %v900 = vpop.f32.mrf.mxu0
  %v901 = vadd.f32 %v685, %v900
  %v902 = vpop.f32.mrf.mxu0
  %v903 = vadd.f32 %v689, %v902
  %904 = vmatprep.mubr.bf16.mxu0 %v196
  %905 = vmatmul.mubr.bf16.gmra.mxu0 %v195
  %v906 = vpop.f32.mrf.mxu0
  %v907 = vadd.f32 %v685, %v906
  %v908 = vpop.f32.mrf.mxu0
  %v909 = vadd.f32 %v689, %v908
  %v910 = vpop.f32.mrf.mxu0
  %v911 = vadd.f32 %v685, %v910
  %v912 = vpop.f32.mrf.mxu0
  %v913 = vadd.f32 %v689, %v912
  %914 = vmatprep.mubr.bf16.mxu0 %v198
  %915 = vmatmul.mubr.bf16.gmra.mxu0 %v197
  %v916 = vpop.f32.mrf.mxu0
  %v917 = vadd.f32 %v685, %v916
  %v918 = vpop.f32.mrf.mxu0
  %v919 = vadd.f32 %v689, %v918
  %v920 = vpop.f32.mrf.mxu0
  %v921 = vadd.f32 %v685, %v920
  %v922 = vpop.f32.mrf.mxu0
  %v923 = vadd.f32 %v689, %v922
  %924 = vmatprep.mubr.bf16.mxu0 %v200
  %925 = vmatmul.mubr.bf16.gmra.mxu0 %v199
  %v926 = vpop.f32.mrf.mxu0
  %v927 = vadd.f32 %v685, %v926
  %v928 = vpop.f32.mrf.mxu0
  %v929 = vadd.f32 %v689, %v928
  %v930 = vpop.f32.mrf.mxu0
  %v931 = vadd.f32 %v685, %v930
  %v932 = vpop.f32.mrf.mxu0
  %v933 = vadd.f32 %v689, %v932
  %934 = vmatprep.mubr.bf16.mxu0 %v202
  %935 = vmatmul.mubr.bf16.gmra.mxu0 %v201
  %v936 = vpop.f32.mrf.mxu0
  %v937 = vadd.f32 %v685, %v936
  %v938 = vpop.f32.mrf.mxu0
  %v939 = vadd.f32 %v689, %v938
  %v940 = vpop.f32.mrf.mxu0
  %v941 = vadd.f32 %v685, %v940
  %v942 = vpop.f32.mrf.mxu0
  %v943 = vadd.f32 %v689, %v942
  %944 = vmatprep.mubr.bf16.mxu0 %v204
  %945 = vmatmul.mubr.bf16.gmra.mxu0 %v203
  %v946 = vpop.f32.mrf.mxu0
  %v947 = vadd.f32 %v685, %v946
  %v948 = vpop.f32.mrf.mxu0
  %v949 = vadd.f32 %v689, %v948
  %v950 = vpop.f32.mrf.mxu0
  %v951 = vadd.f32 %v685, %v950
  %v952 = vpop.f32.mrf.mxu0
  %v953 = vadd.f32 %v689, %v952
  %954 = vmatprep.mubr.bf16.mxu0 %v206
  %955 = vmatmul.mubr.bf16.gmra.mxu0 %v205
  %v956 = vpop.f32.mrf.mxu0
  %v957 = vadd.f32 %v685, %v956
  %v958 = vpop.f32.mrf.mxu0
  %v959 = vadd.f32 %v689, %v958
  %v960 = vpop.f32.mrf.mxu0
  %v961 = vadd.f32 %v685, %v960
  %v962 = vpop.f32.mrf.mxu0
  %v963 = vadd.f32 %v689, %v962
  %964 = vdwg.mxu0
  %v965 = vpack.c.bf16 %v357, %v354
  %v966 = vpack.c.bf16 %v365, %v362
  %v967 = vpack.c.bf16 %v373, %v370
  %v968 = vpack.c.bf16 %v381, %v378
  %v969 = vpack.c.bf16 %v389, %v386
  %v970 = vpack.c.bf16 %v397, %v394
  %v971 = vpack.c.bf16 %v405, %v402
  %v972 = vpack.c.bf16 %v413, %v410
  %v973 = vpack.c.bf16 %v589, %v586
  %v974 = vpack.c.bf16 %v597, %v594
  %v975 = vpack.c.bf16 %v605, %v602
  %v976 = vpack.c.bf16 %v613, %v610
  %v977 = vpack.c.bf16 %v621, %v618
  %v978 = vpack.c.bf16 %v629, %v626
  %v979 = vpack.c.bf16 %v637, %v634
  %v980 = vpack.c.bf16 %v645, %v642
  %v981 = vpack.c.bf16 %v891, %v887
  %v982 = vpack.c.bf16 %v893, %v889
  %v983 = vpack.c.bf16 %v901, %v897
  %v984 = vpack.c.bf16 %v903, %v899
  %v985 = vpack.c.bf16 %v911, %v907
  %v986 = vpack.c.bf16 %v913, %v909
  %v987 = vpack.c.bf16 %v921, %v917
  %v988 = vpack.c.bf16 %v923, %v919
  %v989 = vpack.c.bf16 %v931, %v927
  %v990 = vpack.c.bf16 %v933, %v929
  %v991 = vpack.c.bf16 %v941, %v937
  %v992 = vpack.c.bf16 %v943, %v939
  %v993 = vpack.c.bf16 %v951, %v947
  %v994 = vpack.c.bf16 %v953, %v949
  %v995 = vpack.c.bf16 %v961, %v957
  %v996 = vpack.c.bf16 %v963, %v959
  %vm997 = vcmask 261120
  %v999 = vsel %vm997, %v965, 0
  %v1002 = vsel %vm997, %v966, 0
  %v1005 = vsel %vm997, %v967, 0
  %v1008 = vsel %vm997, %v968, 0
  %v1011 = vsel %vm997, %v973, 0
  %v1014 = vsel %vm997, %v974, 0
  %v1017 = vsel %vm997, %v975, 0
  %v1020 = vsel %vm997, %v976, 0
  %1022 = vmatprep.subr.bf16.mxu0 0
  %1023 = vmatpush1.bf16.xpose.msra.mxu0 0
  %1024 = vmatprep.subr.bf16.mxu0 0
  %1025 = vmatpush1.bf16.xpose.msra.mxu0 0
  %1026 = vmatprep.subr.bf16.mxu0 0
  %1027 = vmatpush1.bf16.xpose.msra.mxu0 0
  %1028 = vmatprep.subr.bf16.mxu0 0
  %1029 = vmatpush1.bf16.xpose.msra.mxu0 0
  %1030 = vmatprep.subr.bf16.mxu0 0
  %1031 = vmatpush1.bf16.xpose.msra.mxu0 %v1020
  %1032 = vmatprep.subr.bf16.mxu0 0
  %1033 = vmatpush1.bf16.xpose.msra.mxu0 %v1017
  %1034 = vmatprep.subr.bf16.mxu0 0
  %1035 = vmatpush1.bf16.xpose.msra.mxu0 %v1014
  %1036 = vmatprep.subr.bf16.mxu0 0
  %1037 = vmatpush1.bf16.xpose.msra.mxu0 %v1011
  %1038 = vmatprep.subr.bf16.mxu0 0
  %1039 = vmatpush2.bf16.xpose.msra.mxu0 0
  %1040 = vmatprep.subr.bf16.mxu0 0
  %1041 = vmatpush2.bf16.xpose.msra.mxu0 0
  %1042 = vmatprep.subr.bf16.mxu0 0
  %1043 = vmatpush2.bf16.xpose.msra.mxu0 0
  %1044 = vmatprep.subr.bf16.mxu0 0
  %1045 = vmatpush2.bf16.xpose.msra.mxu0 0
  %1046 = vmatprep.subr.bf16.mxu0 0
  %1047 = vmatpush2.bf16.xpose.msra.mxu0 0
  %1048 = vmatprep.subr.bf16.mxu0 0
  %1049 = vmatpush2.bf16.xpose.msra.mxu0 0
  %1050 = vmatprep.subr.bf16.mxu0 0
  %1051 = vmatpush2.bf16.xpose.msra.mxu0 0
  %1052 = vmatprep.subr.bf16.mxu0 0
  %1053 = vmatpush2.bf16.xpose.msra.mxu0 0
  %1054 = vmatprep.mubr.bf16.mxu0 0
  %1055 = vmatmul.mubr.bf16.gmra.mxu0 %v999
  %v1056 = vpop.f32.mrf.mxu0
  %v1057 = vadd.f32 0.0, %v1056
  %v1058 = vpop.f32.mrf.mxu0
  %v1059 = vpop.f32.mrf.mxu0
  %v1060 = vadd.f32 0.0, %v1059
  %v1061 = vpop.f32.mrf.mxu0
  %1062 = vmatprep.mubr.bf16.mxu0 0
  %1063 = vmatmul.mubr.bf16.gmra.mxu0 %v1002
  %v1064 = vpop.f32.mrf.mxu0
  %v1065 = vadd.f32 0.0, %v1064
  %v1066 = vpop.f32.mrf.mxu0
  %v1067 = vpop.f32.mrf.mxu0
  %v1068 = vadd.f32 0.0, %v1067
  %v1069 = vpop.f32.mrf.mxu0
  %1070 = vmatprep.mubr.bf16.mxu0 0
  %1071 = vmatmul.mubr.bf16.gmra.mxu0 %v1005
  %v1072 = vpop.f32.mrf.mxu0
  %v1073 = vadd.f32 0.0, %v1072
  %v1074 = vpop.f32.mrf.mxu0
  %v1075 = vpop.f32.mrf.mxu0
  %v1076 = vadd.f32 0.0, %v1075
  %v1077 = vpop.f32.mrf.mxu0
  %1078 = vmatprep.mubr.bf16.mxu0 0
  %1079 = vmatmul.mubr.bf16.gmra.mxu0 %v1008
  %v1080 = vpop.f32.mrf.mxu0
  %v1081 = vadd.f32 0.0, %v1080
  %v1082 = vpop.f32.mrf.mxu0
  %v1083 = vpop.f32.mrf.mxu0
  %v1084 = vadd.f32 0.0, %v1083
  %v1085 = vpop.f32.mrf.mxu0
  %1086 = vdwg.mxu0
  %v1088 = vsel %vm997, %v969, 0
  %v1091 = vsel %vm997, %v970, 0
  %v1094 = vsel %vm997, %v971, 0
  %v1097 = vsel %vm997, %v972, 0
  %v1100 = vsel %vm997, %v977, 0
  %v1103 = vsel %vm997, %v978, 0
  %v1106 = vsel %vm997, %v979, 0
  %v1109 = vsel %vm997, %v980, 0
  %1111 = vmatprep.subr.bf16.mxu0 0
  %1112 = vmatpush1.bf16.xpose.msra.mxu0 0
  %1113 = vmatprep.subr.bf16.mxu0 0
  %1114 = vmatpush1.bf16.xpose.msra.mxu0 0
  %1115 = vmatprep.subr.bf16.mxu0 0
  %1116 = vmatpush1.bf16.xpose.msra.mxu0 0
  %1117 = vmatprep.subr.bf16.mxu0 0
  %1118 = vmatpush1.bf16.xpose.msra.mxu0 0
  %1119 = vmatprep.subr.bf16.mxu0 0
  %1120 = vmatpush1.bf16.xpose.msra.mxu0 %v1109
  %1121 = vmatprep.subr.bf16.mxu0 0
  %1122 = vmatpush1.bf16.xpose.msra.mxu0 %v1106
  %1123 = vmatprep.subr.bf16.mxu0 0
  %1124 = vmatpush1.bf16.xpose.msra.mxu0 %v1103
  %1125 = vmatprep.subr.bf16.mxu0 0
  %1126 = vmatpush1.bf16.xpose.msra.mxu0 %v1100
  %1127 = vmatprep.subr.bf16.mxu0 0
  %1128 = vmatpush2.bf16.xpose.msra.mxu0 0
  %1129 = vmatprep.subr.bf16.mxu0 0
  %1130 = vmatpush2.bf16.xpose.msra.mxu0 0
  %1131 = vmatprep.subr.bf16.mxu0 0
  %1132 = vmatpush2.bf16.xpose.msra.mxu0 0
  %1133 = vmatprep.subr.bf16.mxu0 0
  %1134 = vmatpush2.bf16.xpose.msra.mxu0 0
  %1135 = vmatprep.subr.bf16.mxu0 0
  %1136 = vmatpush2.bf16.xpose.msra.mxu0 0
  %1137 = vmatprep.subr.bf16.mxu0 0
  %1138 = vmatpush2.bf16.xpose.msra.mxu0 0
  %1139 = vmatprep.subr.bf16.mxu0 0
  %1140 = vmatpush2.bf16.xpose.msra.mxu0 0
  %1141 = vmatprep.subr.bf16.mxu0 0
  %1142 = vmatpush2.bf16.xpose.msra.mxu0 0
  %1143 = vmatprep.mubr.bf16.mxu0 0
  %1144 = vmatmul.mubr.bf16.gmra.mxu0 %v1088
  %v1145 = vpop.f32.mrf.mxu0
  %v1146 = vadd.f32 0.0, %v1145
  %v1147 = vpop.f32.mrf.mxu0
  %v1148 = vpop.f32.mrf.mxu0
  %v1149 = vadd.f32 0.0, %v1148
  %v1150 = vpop.f32.mrf.mxu0
  %1151 = vmatprep.mubr.bf16.mxu0 0
  %1152 = vmatmul.mubr.bf16.gmra.mxu0 %v1091
  %v1153 = vpop.f32.mrf.mxu0
  %v1154 = vadd.f32 0.0, %v1153
  %v1155 = vpop.f32.mrf.mxu0
  %v1156 = vpop.f32.mrf.mxu0
  %v1157 = vadd.f32 0.0, %v1156
  %v1158 = vpop.f32.mrf.mxu0
  %1159 = vmatprep.mubr.bf16.mxu0 0
  %1160 = vmatmul.mubr.bf16.gmra.mxu0 %v1094
  %v1161 = vpop.f32.mrf.mxu0
  %v1162 = vadd.f32 0.0, %v1161
  %v1163 = vpop.f32.mrf.mxu0
  %v1164 = vpop.f32.mrf.mxu0
  %v1165 = vadd.f32 0.0, %v1164
  %v1166 = vpop.f32.mrf.mxu0
  %1167 = vmatprep.mubr.bf16.mxu0 0
  %1168 = vmatmul.mubr.bf16.gmra.mxu0 %v1097
  %v1169 = vpop.f32.mrf.mxu0
  %v1170 = vadd.f32 0.0, %v1169
  %v1171 = vpop.f32.mrf.mxu0
  %v1172 = vpop.f32.mrf.mxu0
  %v1173 = vadd.f32 0.0, %v1172
  %v1174 = vpop.f32.mrf.mxu0
  %1175 = vdwg.mxu0
  %vm1176 = vcmask 523264
  %v1177 = vsel %vm1176, %v1057, -inf
  %1178 = vmax.xlane.f32.xlu0 %v1177
  %v1179 = vpop.xlane.xlu0 %1178
  %v1180 = vsel %vm1176, %v1060, -inf
  %1181 = vmax.xlane.f32.xlu0 %v1180
  %v1182 = vpop.xlane.xlu0 %1181
  %v1183 = vsel %vm1176, %v1065, -inf
  %1184 = vmax.xlane.f32.xlu0 %v1183
  %v1185 = vpop.xlane.xlu0 %1184
  %v1186 = vsel %vm1176, %v1068, -inf
  %1187 = vmax.xlane.f32.xlu0 %v1186
  %v1188 = vpop.xlane.xlu0 %1187
  %v1189 = vsel %vm1176, %v1073, -inf
  %1190 = vmax.xlane.f32.xlu0 %v1189
  %v1191 = vpop.xlane.xlu0 %1190
  %v1192 = vsel %vm1176, %v1076, -inf
  %1193 = vmax.xlane.f32.xlu0 %v1192
  %v1194 = vpop.xlane.xlu0 %1193
  %v1195 = vsel %vm1176, %v1081, -inf
  %1196 = vmax.xlane.f32.xlu0 %v1195
  %v1197 = vpop.xlane.xlu0 %1196
  %v1198 = vsel %vm1176, %v1084, -inf
  %1199 = vmax.xlane.f32.xlu0 %v1198
  %v1200 = vpop.xlane.xlu0 %1199
  %v1201 = vsel %vm1176, %v1146, -inf
  %1202 = vmax.xlane.f32.xlu0 %v1201
  %v1203 = vpop.xlane.xlu0 %1202
  %v1204 = vsel %vm1176, %v1149, -inf
  %1205 = vmax.xlane.f32.xlu0 %v1204
  %v1206 = vpop.xlane.xlu0 %1205
  %v1207 = vsel %vm1176, %v1154, -inf
  %1208 = vmax.xlane.f32.xlu0 %v1207
  %v1209 = vpop.xlane.xlu0 %1208
  %v1210 = vsel %vm1176, %v1157, -inf
  %1211 = vmax.xlane.f32.xlu0 %v1210
  %v1212 = vpop.xlane.xlu0 %1211
  %v1213 = vsel %vm1176, %v1162, -inf
  %1214 = vmax.xlane.f32.xlu0 %v1213
  %v1215 = vpop.xlane.xlu0 %1214
  %v1216 = vsel %vm1176, %v1165, -inf
  %1217 = vmax.xlane.f32.xlu0 %v1216
  %v1218 = vpop.xlane.xlu0 %1217
  %v1219 = vsel %vm1176, %v1170, -inf
  %1220 = vmax.xlane.f32.xlu0 %v1219
  %v1221 = vpop.xlane.xlu0 %1220
  %v1222 = vsel %vm1176, %v1173, -inf
  %1223 = vmax.xlane.f32.xlu0 %v1222
  %v1224 = vpop.xlane.xlu0 %1223
  %v1225 = vsub.f32 %v1057, %v1179
  %v1226 = vsub.f32 %v1060, %v1182
  %v1227 = vsub.f32 %v1065, %v1185
  %v1228 = vsub.f32 %v1068, %v1188
  %v1229 = vsub.f32 %v1073, %v1191
  %v1230 = vsub.f32 %v1076, %v1194
  %v1231 = vsub.f32 %v1081, %v1197
  %v1232 = vsub.f32 %v1084, %v1200
  %v1233 = vsub.f32 %v1146, %v1203
  %v1234 = vsub.f32 %v1149, %v1206
  %v1235 = vsub.f32 %v1154, %v1209
  %v1236 = vsub.f32 %v1157, %v1212
  %v1237 = vsub.f32 %v1162, %v1215
  %v1238 = vsub.f32 %v1165, %v1218
  %v1239 = vsub.f32 %v1170, %v1221
  %v1240 = vsub.f32 %v1173, %v1224
  %v1241 = vmul.f32 %v1225, 1.442695
  %v1242 = vpow.pop %v1241
  %v1243 = vmul.f32 %v1226, 1.442695
  %v1244 = vpow.pop %v1243
  %v1245 = vmul.f32 %v1227, 1.442695
  %v1246 = vpow.pop %v1245
  %v1247 = vmul.f32 %v1228, 1.442695
  %v1248 = vpow.pop %v1247
  %v1249 = vmul.f32 %v1229, 1.442695
  %v1250 = vpow.pop %v1249
  %v1251 = vmul.f32 %v1230, 1.442695
  %v1252 = vpow.pop %v1251
  %v1253 = vmul.f32 %v1231, 1.442695
  %v1254 = vpow.pop %v1253
  %v1255 = vmul.f32 %v1232, 1.442695
  %v1256 = vpow.pop %v1255
  %v1257 = vmul.f32 %v1233, 1.442695
  %v1258 = vpow.pop %v1257
  %v1259 = vmul.f32 %v1234, 1.442695
  %v1260 = vpow.pop %v1259
  %v1261 = vmul.f32 %v1235, 1.442695
  %v1262 = vpow.pop %v1261
  %v1263 = vmul.f32 %v1236, 1.442695
  %v1264 = vpow.pop %v1263
  %v1265 = vmul.f32 %v1237, 1.442695
  %v1266 = vpow.pop %v1265
  %v1267 = vmul.f32 %v1238, 1.442695
  %v1268 = vpow.pop %v1267
  %v1269 = vmul.f32 %v1239, 1.442695
  %v1270 = vpow.pop %v1269
  %v1271 = vmul.f32 %v1240, 1.442695
  %v1272 = vpow.pop %v1271
  %v1273 = vsel %vm1176, %v1242, 0.0
  %1274 = vadd.xlane.f32.xlu0 %v1273
  %v1275 = vpop.xlane.xlu0 %1274
  %v1276 = vsel %vm1176, %v1244, 0.0
  %1277 = vadd.xlane.f32.xlu0 %v1276
  %v1278 = vpop.xlane.xlu0 %1277
  %v1279 = vsel %vm1176, %v1246, 0.0
  %1280 = vadd.xlane.f32.xlu0 %v1279
  %v1281 = vpop.xlane.xlu0 %1280
  %v1282 = vsel %vm1176, %v1248, 0.0
  %1283 = vadd.xlane.f32.xlu0 %v1282
  %v1284 = vpop.xlane.xlu0 %1283
  %v1285 = vsel %vm1176, %v1250, 0.0
  %1286 = vadd.xlane.f32.xlu0 %v1285
  %v1287 = vpop.xlane.xlu0 %1286
  %v1288 = vsel %vm1176, %v1252, 0.0
  %1289 = vadd.xlane.f32.xlu0 %v1288
  %v1290 = vpop.xlane.xlu0 %1289
  %v1291 = vsel %vm1176, %v1254, 0.0
  %1292 = vadd.xlane.f32.xlu0 %v1291
  %v1293 = vpop.xlane.xlu0 %1292
  %v1294 = vsel %vm1176, %v1256, 0.0
  %1295 = vadd.xlane.f32.xlu0 %v1294
  %v1296 = vpop.xlane.xlu0 %1295
  %v1297 = vsel %vm1176, %v1258, 0.0
  %1298 = vadd.xlane.f32.xlu0 %v1297
  %v1299 = vpop.xlane.xlu0 %1298
  %v1300 = vsel %vm1176, %v1260, 0.0
  %1301 = vadd.xlane.f32.xlu0 %v1300
  %v1302 = vpop.xlane.xlu0 %1301
  %v1303 = vsel %vm1176, %v1262, 0.0
  %1304 = vadd.xlane.f32.xlu0 %v1303
  %v1305 = vpop.xlane.xlu0 %1304
  %v1306 = vsel %vm1176, %v1264, 0.0
  %1307 = vadd.xlane.f32.xlu0 %v1306
  %v1308 = vpop.xlane.xlu0 %1307
  %v1309 = vsel %vm1176, %v1266, 0.0
  %1310 = vadd.xlane.f32.xlu0 %v1309
  %v1311 = vpop.xlane.xlu0 %1310
  %v1312 = vsel %vm1176, %v1268, 0.0
  %1313 = vadd.xlane.f32.xlu0 %v1312
  %v1314 = vpop.xlane.xlu0 %1313
  %v1315 = vsel %vm1176, %v1270, 0.0
  %1316 = vadd.xlane.f32.xlu0 %v1315
  %v1317 = vpop.xlane.xlu0 %1316
  %v1318 = vsel %vm1176, %v1272, 0.0
  %1319 = vadd.xlane.f32.xlu0 %v1318
  %v1320 = vpop.xlane.xlu0 %1319
  %v1321 = vrcp.pop %v1275
  %v1322 = vmul.f32 %v1242, %v1321
  %v1323 = vrcp.pop %v1278
  %v1324 = vmul.f32 %v1244, %v1323
  %v1325 = vrcp.pop %v1281
  %v1326 = vmul.f32 %v1246, %v1325
  %v1327 = vrcp.pop %v1284
  %v1328 = vmul.f32 %v1248, %v1327
  %v1329 = vrcp.pop %v1287
  %v1330 = vmul.f32 %v1250, %v1329
  %v1331 = vrcp.pop %v1290
  %v1332 = vmul.f32 %v1252, %v1331
  %v1333 = vrcp.pop %v1293
  %v1334 = vmul.f32 %v1254, %v1333
  %v1335 = vrcp.pop %v1296
  %v1336 = vmul.f32 %v1256, %v1335
  %v1337 = vrcp.pop %v1299
  %v1338 = vmul.f32 %v1258, %v1337
  %v1339 = vrcp.pop %v1302
  %v1340 = vmul.f32 %v1260, %v1339
  %v1341 = vrcp.pop %v1305
  %v1342 = vmul.f32 %v1262, %v1341
  %v1343 = vrcp.pop %v1308
  %v1344 = vmul.f32 %v1264, %v1343
  %v1345 = vrcp.pop %v1311
  %v1346 = vmul.f32 %v1266, %v1345
  %v1347 = vrcp.pop %v1314
  %v1348 = vmul.f32 %v1268, %v1347
  %v1349 = vrcp.pop %v1317
  %v1350 = vmul.f32 %v1270, %v1349
  %v1351 = vrcp.pop %v1320
  %v1352 = vmul.f32 %v1272, %v1351
  %v1353 = vpack.c.bf16 %v1324, %v1322
  %v1354 = vpack.c.bf16 %v1328, %v1326
  %v1355 = vpack.c.bf16 %v1332, %v1330
  %v1356 = vpack.c.bf16 %v1336, %v1334
  %v1357 = vpack.c.bf16 %v1340, %v1338
  %v1358 = vpack.c.bf16 %v1344, %v1342
  %v1359 = vpack.c.bf16 %v1348, %v1346
  %v1360 = vpack.c.bf16 %v1352, %v1350
  %v1362 = vsel %vm1176, %v1353, 0
  %v1365 = vsel %vm1176, %v1354, 0
  %v1368 = vsel %vm1176, %v1355, 0
  %v1371 = vsel %vm1176, %v1356, 0
  %1373 = vmatprep.subr.bf16.mxu0 0
  %1374 = vmatpush1.bf16.msra.mxu0 0
  %1375 = vmatprep.subr.bf16.mxu0 0
  %1376 = vmatpush1.bf16.msra.mxu0 0
  %1377 = vmatprep.subr.bf16.mxu0 0
  %1378 = vmatpush1.bf16.msra.mxu0 0
  %1379 = vmatprep.subr.bf16.mxu0 0
  %1380 = vmatpush1.bf16.msra.mxu0 0
  %1381 = vmatprep.subr.bf16.mxu0 %v988
  %1382 = vmatpush1.bf16.msra.mxu0 %v987
  %1383 = vmatprep.subr.bf16.mxu0 %v986
  %1384 = vmatpush1.bf16.msra.mxu0 %v985
  %1385 = vmatprep.subr.bf16.mxu0 %v984
  %1386 = vmatpush1.bf16.msra.mxu0 %v983
  %1387 = vmatprep.subr.bf16.mxu0 %v982
  %1388 = vmatpush1.bf16.msra.mxu0 %v981
  %1389 = vmatprep.subr.bf16.mxu0 0
  %1390 = vmatpush2.bf16.msra.mxu0 0
  %1391 = vmatprep.subr.bf16.mxu0 0
  %1392 = vmatpush2.bf16.msra.mxu0 0
  %1393 = vmatprep.subr.bf16.mxu0 0
  %1394 = vmatpush2.bf16.msra.mxu0 0
  %1395 = vmatprep.subr.bf16.mxu0 0
  %1396 = vmatpush2.bf16.msra.mxu0 0
  %1397 = vmatprep.subr.bf16.mxu0 0
  %1398 = vmatpush2.bf16.msra.mxu0 0
  %1399 = vmatprep.subr.bf16.mxu0 0
  %1400 = vmatpush2.bf16.msra.mxu0 0
  %1401 = vmatprep.subr.bf16.mxu0 0
  %1402 = vmatpush2.bf16.msra.mxu0 0
  %1403 = vmatprep.subr.bf16.mxu0 0
  %1404 = vmatpush2.bf16.msra.mxu0 0
  %1405 = vmatprep.mubr.bf16.mxu0 0
  %1406 = vmatmul.mubr.bf16.gmra.mxu0 %v1362
  %v1407 = vpop.f32.mrf.mxu0
  %v1408 = vadd.f32 0.0, %v1407
  %v1409 = vpop.f32.mrf.mxu0
  %v1410 = vadd.f32 0.0, %v1409
  %v1411 = vpop.f32.mrf.mxu0
  %v1412 = vadd.f32 0.0, %v1411
  %v1413 = vpop.f32.mrf.mxu0
  %v1414 = vadd.f32 0.0, %v1413
  %1415 = vmatprep.mubr.bf16.mxu0 0
  %1416 = vmatmul.mubr.bf16.gmra.mxu0 %v1365
  %v1417 = vpop.f32.mrf.mxu0
  %v1418 = vadd.f32 0.0, %v1417
  %v1419 = vpop.f32.mrf.mxu0
  %v1420 = vadd.f32 0.0, %v1419
  %v1421 = vpop.f32.mrf.mxu0
  %v1422 = vadd.f32 0.0, %v1421
  %v1423 = vpop.f32.mrf.mxu0
  %v1424 = vadd.f32 0.0, %v1423
  %1425 = vmatprep.mubr.bf16.mxu0 0
  %1426 = vmatmul.mubr.bf16.gmra.mxu0 %v1368
  %v1427 = vpop.f32.mrf.mxu0
  %v1428 = vadd.f32 0.0, %v1427
  %v1429 = vpop.f32.mrf.mxu0
  %v1430 = vadd.f32 0.0, %v1429
  %v1431 = vpop.f32.mrf.mxu0
  %v1432 = vadd.f32 0.0, %v1431
  %v1433 = vpop.f32.mrf.mxu0
  %v1434 = vadd.f32 0.0, %v1433
  %1435 = vmatprep.mubr.bf16.mxu0 0
  %1436 = vmatmul.mubr.bf16.gmra.mxu0 %v1371
  %v1437 = vpop.f32.mrf.mxu0
  %v1438 = vadd.f32 0.0, %v1437
  %v1439 = vpop.f32.mrf.mxu0
  %v1440 = vadd.f32 0.0, %v1439
  %v1441 = vpop.f32.mrf.mxu0
  %v1442 = vadd.f32 0.0, %v1441
  %v1443 = vpop.f32.mrf.mxu0
  %v1444 = vadd.f32 0.0, %v1443
  %1445 = vdwg.mxu0
  %v1447 = vsel %vm1176, %v1357, 0
  %v1450 = vsel %vm1176, %v1358, 0
  %v1453 = vsel %vm1176, %v1359, 0
  %v1456 = vsel %vm1176, %v1360, 0
  %1458 = vmatprep.subr.bf16.mxu0 0
  %1459 = vmatpush1.bf16.msra.mxu0 0
  %1460 = vmatprep.subr.bf16.mxu0 0
  %1461 = vmatpush1.bf16.msra.mxu0 0
  %1462 = vmatprep.subr.bf16.mxu0 0
  %1463 = vmatpush1.bf16.msra.mxu0 0
  %1464 = vmatprep.subr.bf16.mxu0 0
  %1465 = vmatpush1.bf16.msra.mxu0 0
  %1466 = vmatprep.subr.bf16.mxu0 %v996
  %1467 = vmatpush1.bf16.msra.mxu0 %v995
  %1468 = vmatprep.subr.bf16.mxu0 %v994
  %1469 = vmatpush1.bf16.msra.mxu0 %v993
  %1470 = vmatprep.subr.bf16.mxu0 %v992
  %1471 = vmatpush1.bf16.msra.mxu0 %v991
  %1472 = vmatprep.subr.bf16.mxu0 %v990
  %1473 = vmatpush1.bf16.msra.mxu0 %v989
  %1474 = vmatprep.subr.bf16.mxu0 0
  %1475 = vmatpush2.bf16.msra.mxu0 0
  %1476 = vmatprep.subr.bf16.mxu0 0
  %1477 = vmatpush2.bf16.msra.mxu0 0
  %1478 = vmatprep.subr.bf16.mxu0 0
  %1479 = vmatpush2.bf16.msra.mxu0 0
  %1480 = vmatprep.subr.bf16.mxu0 0
  %1481 = vmatpush2.bf16.msra.mxu0 0
  %1482 = vmatprep.subr.bf16.mxu0 0
  %1483 = vmatpush2.bf16.msra.mxu0 0
  %1484 = vmatprep.subr.bf16.mxu0 0
  %1485 = vmatpush2.bf16.msra.mxu0 0
  %1486 = vmatprep.subr.bf16.mxu0 0
  %1487 = vmatpush2.bf16.msra.mxu0 0
  %1488 = vmatprep.subr.bf16.mxu0 0
  %1489 = vmatpush2.bf16.msra.mxu0 0
  %1490 = vmatprep.mubr.bf16.mxu0 0
  %1491 = vmatmul.mubr.bf16.gmra.mxu0 %v1447
  %v1492 = vpop.f32.mrf.mxu0
  %v1493 = vadd.f32 0.0, %v1492
  %v1494 = vpop.f32.mrf.mxu0
  %v1495 = vadd.f32 0.0, %v1494
  %v1496 = vpop.f32.mrf.mxu0
  %v1497 = vadd.f32 0.0, %v1496
  %v1498 = vpop.f32.mrf.mxu0
  %v1499 = vadd.f32 0.0, %v1498
  %1500 = vmatprep.mubr.bf16.mxu0 0
  %1501 = vmatmul.mubr.bf16.gmra.mxu0 %v1450
  %v1502 = vpop.f32.mrf.mxu0
  %v1503 = vadd.f32 0.0, %v1502
  %v1504 = vpop.f32.mrf.mxu0
  %v1505 = vadd.f32 0.0, %v1504
  %v1506 = vpop.f32.mrf.mxu0
  %v1507 = vadd.f32 0.0, %v1506
  %v1508 = vpop.f32.mrf.mxu0
  %v1509 = vadd.f32 0.0, %v1508
  %1510 = vmatprep.mubr.bf16.mxu0 0
  %1511 = vmatmul.mubr.bf16.gmra.mxu0 %v1453
  %v1512 = vpop.f32.mrf.mxu0
  %v1513 = vadd.f32 0.0, %v1512
  %v1514 = vpop.f32.mrf.mxu0
  %v1515 = vadd.f32 0.0, %v1514
  %v1516 = vpop.f32.mrf.mxu0
  %v1517 = vadd.f32 0.0, %v1516
  %v1518 = vpop.f32.mrf.mxu0
  %v1519 = vadd.f32 0.0, %v1518
  %1520 = vmatprep.mubr.bf16.mxu0 0
  %1521 = vmatmul.mubr.bf16.gmra.mxu0 %v1456
  %v1522 = vpop.f32.mrf.mxu0
  %v1523 = vadd.f32 0.0, %v1522
  %v1524 = vpop.f32.mrf.mxu0
  %v1525 = vadd.f32 0.0, %v1524
  %v1526 = vpop.f32.mrf.mxu0
  %v1527 = vadd.f32 0.0, %v1526
  %v1528 = vpop.f32.mrf.mxu0
  %v1529 = vadd.f32 0.0, %v1528
  %1530 = vdwg.mxu0
  %s1531 = sld [smem:[#allocation2]]
  %v1532 = vstv %s1531
  %v1533 = vmul.f32 %v1532, %v1408
  %v1534 = vmul.f32 %v1532, %v1410
  %v1535 = vmul.f32 %v1532, %v1412
  %v1536 = vmul.f32 %v1532, %v1414
  %v1537 = vmul.f32 %v1532, %v1418
  %v1538 = vmul.f32 %v1532, %v1420
  %v1539 = vmul.f32 %v1532, %v1422
  %v1540 = vmul.f32 %v1532, %v1424
  %v1541 = vmul.f32 %v1532, %v1428
  %v1542 = vmul.f32 %v1532, %v1430
  %v1543 = vmul.f32 %v1532, %v1432
  %v1544 = vmul.f32 %v1532, %v1434
  %v1545 = vmul.f32 %v1532, %v1438
  %v1546 = vmul.f32 %v1532, %v1440
  %v1547 = vmul.f32 %v1532, %v1442
  %v1548 = vmul.f32 %v1532, %v1444
  %v1549 = vmul.f32 %v1532, %v1493
  %v1550 = vmul.f32 %v1532, %v1495
  %v1551 = vmul.f32 %v1532, %v1497
  %v1552 = vmul.f32 %v1532, %v1499
  %v1553 = vmul.f32 %v1532, %v1503
  %v1554 = vmul.f32 %v1532, %v1505
  %v1555 = vmul.f32 %v1532, %v1507
  %v1556 = vmul.f32 %v1532, %v1509
  %v1557 = vmul.f32 %v1532, %v1513
  %v1558 = vmul.f32 %v1532, %v1515
  %v1559 = vmul.f32 %v1532, %v1517
  %v1560 = vmul.f32 %v1532, %v1519
  %v1561 = vmul.f32 %v1532, %v1523
  %v1562 = vmul.f32 %v1532, %v1525
  %v1563 = vmul.f32 %v1532, %v1527
  %v1564 = vmul.f32 %v1532, %v1529
  %v1565 = vadd.f32 %v1533, %v72
  %v1566 = vadd.f32 %v1534, %v73
  %v1567 = vadd.f32 %v1535, %v74
  %v1568 = vadd.f32 %v1536, %v75
  %v1569 = vadd.f32 %v1537, %v76
  %v1570 = vadd.f32 %v1538, %v77
  %v1571 = vadd.f32 %v1539, %v78
  %v1572 = vadd.f32 %v1540, %v79
  %v1573 = vadd.f32 %v1541, %v80
  %v1574 = vadd.f32 %v1542, %v81
  %v1575 = vadd.f32 %v1543, %v82
  %v1576 = vadd.f32 %v1544, %v83
  %v1577 = vadd.f32 %v1545, %v84
  %v1578 = vadd.f32 %v1546, %v85
  %v1579 = vadd.f32 %v1547, %v86
  %v1580 = vadd.f32 %v1548, %v87
  %v1581 = vadd.f32 %v1549, %v88
  %v1582 = vadd.f32 %v1550, %v89
  %v1583 = vadd.f32 %v1551, %v90
  %v1584 = vadd.f32 %v1552, %v91
  %v1585 = vadd.f32 %v1553, %v92
  %v1586 = vadd.f32 %v1554, %v93
  %v1587 = vadd.f32 %v1555, %v94
  %v1588 = vadd.f32 %v1556, %v95
  %v1589 = vadd.f32 %v1557, %v96
  %v1590 = vadd.f32 %v1558, %v97
  %v1591 = vadd.f32 %v1559, %v98
  %v1592 = vadd.f32 %v1560, %v99
  %v1593 = vadd.f32 %v1561, %v100
  %v1594 = vadd.f32 %v1562, %v101
  %v1595 = vadd.f32 %v1563, %v102
  %v1596 = vadd.f32 %v1564, %v103
  %v1597 = vmax.f32 %v1565, 0.0
  %v1598 = vmax.f32 %v1566, 0.0
  %v1599 = vmax.f32 %v1567, 0.0
  %v1600 = vmax.f32 %v1568, 0.0
  %v1601 = vmax.f32 %v1569, 0.0
  %v1602 = vmax.f32 %v1570, 0.0
  %v1603 = vmax.f32 %v1571, 0.0
  %v1604 = vmax.f32 %v1572, 0.0
  %v1605 = vmax.f32 %v1573, 0.0
  %v1606 = vmax.f32 %v1574, 0.0
  %v1607 = vmax.f32 %v1575, 0.0
  %v1608 = vmax.f32 %v1576, 0.0
  %v1609 = vmax.f32 %v1577, 0.0
  %v1610 = vmax.f32 %v1578, 0.0
  %v1611 = vmax.f32 %v1579, 0.0
  %v1612 = vmax.f32 %v1580, 0.0
  %v1613 = vmax.f32 %v1581, 0.0
  %v1614 = vmax.f32 %v1582, 0.0
  %v1615 = vmax.f32 %v1583, 0.0
  %v1616 = vmax.f32 %v1584, 0.0
  %v1617 = vmax.f32 %v1585, 0.0
  %v1618 = vmax.f32 %v1586, 0.0
  %v1619 = vmax.f32 %v1587, 0.0
  %v1620 = vmax.f32 %v1588, 0.0
  %v1621 = vmax.f32 %v1589, 0.0
  %v1622 = vmax.f32 %v1590, 0.0
  %v1623 = vmax.f32 %v1591, 0.0
  %v1624 = vmax.f32 %v1592, 0.0
  %v1625 = vmax.f32 %v1593, 0.0
  %v1626 = vmax.f32 %v1594, 0.0
  %v1627 = vmax.f32 %v1595, 0.0
  %v1628 = vmax.f32 %v1596, 0.0
  %v1629 = vpack.c.bf16 %v1599, %v1597
  %v1630 = vpack.c.bf16 %v1600, %v1598
  %v1631 = vpack.c.bf16 %v1603, %v1601
  %v1632 = vpack.c.bf16 %v1604, %v1602
  %v1633 = vpack.c.bf16 %v1607, %v1605
  %v1634 = vpack.c.bf16 %v1608, %v1606
  %v1635 = vpack.c.bf16 %v1611, %v1609
  %v1636 = vpack.c.bf16 %v1612, %v1610
  %v1637 = vpack.c.bf16 %v1615, %v1613
  %v1638 = vpack.c.bf16 %v1616, %v1614
  %v1639 = vpack.c.bf16 %v1619, %v1617
  %v1640 = vpack.c.bf16 %v1620, %v1618
  %v1641 = vpack.c.bf16 %v1623, %v1621
  %v1642 = vpack.c.bf16 %v1624, %v1622
  %v1643 = vpack.c.bf16 %v1627, %v1625
  %v1644 = vpack.c.bf16 %v1628, %v1626
  %v1645 = vld [vmem:[%s8] sm:$0xf]
  %v1646 = vld [vmem:[%s8 + $0x4] sm:$0xf]
  %v1647 = vld [vmem:[%s8 + $0x8] sm:$0xf]
  %v1648 = vld [vmem:[%s8 + $0xc] sm:$0xf]
  %v1649 = vld [vmem:[%s8 + $0x10] sm:$0xf]
  %v1650 = vld [vmem:[%s8 + $0x14] sm:$0xf]
  %v1651 = vld [vmem:[%s8 + $0x18] sm:$0xf]
  %v1652 = vld [vmem:[%s8 + $0x1c] sm:$0xf]
  %v1653 = vld [vmem:[%s8 + $0x20] sm:$0xf]
  %v1654 = vld [vmem:[%s8 + $0x24] sm:$0xf]
  %v1655 = vld [vmem:[%s8 + $0x28] sm:$0xf]
  %v1656 = vld [vmem:[%s8 + $0x2c] sm:$0xf]
  %v1657 = vld [vmem:[%s8 + $0x30] sm:$0xf]
  %v1658 = vld [vmem:[%s8 + $0x34] sm:$0xf]
  %v1659 = vld [vmem:[%s8 + $0x38] sm:$0xf]
  %v1660 = vld [vmem:[%s8 + $0x3c] sm:$0xf]
  %v1661 = vld [vmem:[%s8 + $0x40] sm:$0xf]
  %v1662 = vld [vmem:[%s8 + $0x44] sm:$0xf]
  %v1663 = vld [vmem:[%s8 + $0x48] sm:$0xf]
  %v1664 = vld [vmem:[%s8 + $0x4c] sm:$0xf]
  %v1665 = vld [vmem:[%s8 + $0x50] sm:$0xf]
  %v1666 = vld [vmem:[%s8 + $0x54] sm:$0xf]
  %v1667 = vld [vmem:[%s8 + $0x58] sm:$0xf]
  %v1668 = vld [vmem:[%s8 + $0x5c] sm:$0xf]
  %v1669 = vld [vmem:[%s8 + $0x60] sm:$0xf]
  %v1670 = vld [vmem:[%s8 + $0x64] sm:$0xf]
  %v1671 = vld [vmem:[%s8 + $0x68] sm:$0xf]
  %v1672 = vld [vmem:[%s8 + $0x6c] sm:$0xf]
  %v1673 = vld [vmem:[%s8 + $0x70] sm:$0xf]
  %v1674 = vld [vmem:[%s8 + $0x74] sm:$0xf]
  %v1675 = vld [vmem:[%s8 + $0x78] sm:$0xf]
  %v1676 = vld [vmem:[%s8 + $0x7c] sm:$0xf]
  %v1677 = vld [vmem:[%s9] sm:$0x1]
  %v1679 = vlaneseq
  %v1680 = vshrl.u32 %v1679, 7
  %v1681 = vsub.s32 0, %v1680
  %v1682 = vrot.slane %v1677, %v1681
  %v1716 = vunpack.c.l.b16 %v1645
  %v1717 = vunpack.c.l.b16 %v1646
  %v1718 = vunpack.c.l.b16 %v1647
  %v1719 = vunpack.c.l.b16 %v1648
  %v1720 = vunpack.c.l.b16 %v1649
  %v1721 = vunpack.c.l.b16 %v1650
  %v1722 = vunpack.c.l.b16 %v1651
  %v1723 = vunpack.c.l.b16 %v1652
  %v1724 = vunpack.c.l.b16 %v1653
  %v1725 = vunpack.c.l.b16 %v1654
  %v1726 = vunpack.c.l.b16 %v1655
  %v1727 = vunpack.c.l.b16 %v1656
  %v1728 = vunpack.c.l.b16 %v1657
  %v1729 = vunpack.c.l.b16 %v1658
  %v1730 = vunpack.c.l.b16 %v1659
  %v1731 = vunpack.c.l.b16 %v1660
  %v1732 = vunpack.c.l.b16 %v1661
  %v1733 = vunpack.c.l.b16 %v1662
  %v1734 = vunpack.c.l.b16 %v1663
  %v1735 = vunpack.c.l.b16 %v1664
  %v1736 = vunpack.c.l.b16 %v1665
  %v1737 = vunpack.c.l.b16 %v1666
  %v1738 = vunpack.c.l.b16 %v1667
  %v1739 = vunpack.c.l.b16 %v1668
  %v1740 = vunpack.c.l.b16 %v1669
  %v1741 = vunpack.c.l.b16 %v1670
  %v1742 = vunpack.c.l.b16 %v1671
  %v1743 = vunpack.c.l.b16 %v1672
  %v1744 = vunpack.c.l.b16 %v1673
  %v1745 = vunpack.c.l.b16 %v1674
  %v1746 = vunpack.c.l.b16 %v1675
  %v1747 = vunpack.c.l.b16 %v1676
  %v1748 = vpack.c.b16 %v1717, %v1716
  %v1749 = vpack.c.b16 %v1719, %v1718
  %v1750 = vpack.c.b16 %v1721, %v1720
  %v1751 = vpack.c.b16 %v1723, %v1722
  %v1752 = vpack.c.b16 %v1725, %v1724
  %v1753 = vpack.c.b16 %v1727, %v1726
  %v1754 = vpack.c.b16 %v1729, %v1728
  %v1755 = vpack.c.b16 %v1731, %v1730
  %v1756 = vpack.c.b16 %v1733, %v1732
  %v1757 = vpack.c.b16 %v1735, %v1734
  %v1758 = vpack.c.b16 %v1737, %v1736
  %v1759 = vpack.c.b16 %v1739, %v1738
  %v1760 = vpack.c.b16 %v1741, %v1740
  %v1761 = vpack.c.b16 %v1743, %v1742
  %v1762 = vpack.c.b16 %v1745, %v1744
  %v1763 = vpack.c.b16 %v1747, %v1746
  %1780 = vmatprep.subr.bf16.mxu0 0
  %1781 = vmatpush1.bf16.msra.mxu0 %v1755
  %1782 = vmatprep.subr.bf16.mxu0 0
  %1783 = vmatpush1.bf16.msra.mxu0 %v1754
  %1784 = vmatprep.subr.bf16.mxu0 0
  %1785 = vmatpush1.bf16.msra.mxu0 %v1753
  %1786 = vmatprep.subr.bf16.mxu0 0
  %1787 = vmatpush1.bf16.msra.mxu0 %v1752
  %1788 = vmatprep.subr.bf16.mxu0 0
  %1789 = vmatpush1.bf16.msra.mxu0 %v1751
  %1790 = vmatprep.subr.bf16.mxu0 0
  %1791 = vmatpush1.bf16.msra.mxu0 %v1750
  %1792 = vmatprep.subr.bf16.mxu0 0
  %1793 = vmatpush1.bf16.msra.mxu0 %v1749
  %1794 = vmatprep.subr.bf16.mxu0 0
  %1795 = vmatpush1.bf16.msra.mxu0 %v1748
  %1796 = vmatprep.subr.bf16.mxu0 0
  %1797 = vmatpush2.bf16.msra.mxu0 %v1763
  %1798 = vmatprep.subr.bf16.mxu0 0
  %1799 = vmatpush2.bf16.msra.mxu0 %v1762
  %1800 = vmatprep.subr.bf16.mxu0 0
  %1801 = vmatpush2.bf16.msra.mxu0 %v1761
  %1802 = vmatprep.subr.bf16.mxu0 0
  %1803 = vmatpush2.bf16.msra.mxu0 %v1760
  %1804 = vmatprep.subr.bf16.mxu0 0
  %1805 = vmatpush2.bf16.msra.mxu0 %v1759
  %1806 = vmatprep.subr.bf16.mxu0 0
  %1807 = vmatpush2.bf16.msra.mxu0 %v1758
  %1808 = vmatprep.subr.bf16.mxu0 0
  %1809 = vmatpush2.bf16.msra.mxu0 %v1757
  %1810 = vmatprep.subr.bf16.mxu0 0
  %1811 = vmatpush2.bf16.msra.mxu0 %v1756
  %1812 = vmatprep.mubr.bf16.mxu0 %v1630
  %1813 = vmatmul.mubr.bf16.gmra.mxu0 %v1629
  %v1814 = vpop.f32.mrf.mxu0
  %v1815 = vadd.f32 %v1682, %v1814
  %v1816 = vpop.f32.mrf.mxu0
  %v1817 = vpop.f32.mrf.mxu0
  %v1818 = vadd.f32 %v1682, %v1817
  %v1819 = vpop.f32.mrf.mxu0
  %1820 = vmatprep.mubr.bf16.mxu0 %v1632
  %1821 = vmatmul.mubr.bf16.gmra.mxu0 %v1631
  %v1822 = vpop.f32.mrf.mxu0
  %v1823 = vadd.f32 %v1682, %v1822
  %v1824 = vpop.f32.mrf.mxu0
  %v1825 = vpop.f32.mrf.mxu0
  %v1826 = vadd.f32 %v1682, %v1825
  %v1827 = vpop.f32.mrf.mxu0
  %1828 = vmatprep.mubr.bf16.mxu0 %v1634
  %1829 = vmatmul.mubr.bf16.gmra.mxu0 %v1633
  %v1830 = vpop.f32.mrf.mxu0
  %v1831 = vadd.f32 %v1682, %v1830
  %v1832 = vpop.f32.mrf.mxu0
  %v1833 = vpop.f32.mrf.mxu0
  %v1834 = vadd.f32 %v1682, %v1833
  %v1835 = vpop.f32.mrf.mxu0
  %1836 = vmatprep.mubr.bf16.mxu0 %v1636
  %1837 = vmatmul.mubr.bf16.gmra.mxu0 %v1635
  %v1838 = vpop.f32.mrf.mxu0
  %v1839 = vadd.f32 %v1682, %v1838
  %v1840 = vpop.f32.mrf.mxu0
  %v1841 = vpop.f32.mrf.mxu0
  %v1842 = vadd.f32 %v1682, %v1841
  %v1843 = vpop.f32.mrf.mxu0
  %1844 = vmatprep.mubr.bf16.mxu0 %v1638
  %1845 = vmatmul.mubr.bf16.gmra.mxu0 %v1637
  %v1846 = vpop.f32.mrf.mxu0
  %v1847 = vadd.f32 %v1682, %v1846
  %v1848 = vpop.f32.mrf.mxu0
  %v1849 = vpop.f32.mrf.mxu0
  %v1850 = vadd.f32 %v1682, %v1849
  %v1851 = vpop.f32.mrf.mxu0
  %1852 = vmatprep.mubr.bf16.mxu0 %v1640
  %1853 = vmatmul.mubr.bf16.gmra.mxu0 %v1639
  %v1854 = vpop.f32.mrf.mxu0
  %v1855 = vadd.f32 %v1682, %v1854
  %v1856 = vpop.f32.mrf.mxu0
  %v1857 = vpop.f32.mrf.mxu0
  %v1858 = vadd.f32 %v1682, %v1857
  %v1859 = vpop.f32.mrf.mxu0
  %1860 = vmatprep.mubr.bf16.mxu0 %v1642
  %1861 = vmatmul.mubr.bf16.gmra.mxu0 %v1641
  %v1862 = vpop.f32.mrf.mxu0
  %v1863 = vadd.f32 %v1682, %v1862
  %v1864 = vpop.f32.mrf.mxu0
  %v1865 = vpop.f32.mrf.mxu0
  %v1866 = vadd.f32 %v1682, %v1865
  %v1867 = vpop.f32.mrf.mxu0
  %1868 = vmatprep.mubr.bf16.mxu0 %v1644
  %1869 = vmatmul.mubr.bf16.gmra.mxu0 %v1643
  %v1870 = vpop.f32.mrf.mxu0
  %v1871 = vadd.f32 %v1682, %v1870
  %v1872 = vpop.f32.mrf.mxu0
  %v1873 = vpop.f32.mrf.mxu0
  %v1874 = vadd.f32 %v1682, %v1873
  %v1875 = vpop.f32.mrf.mxu0
  %1876 = vdwg.mxu0
  %v1877 = vld [vmem:[%s10] sm:$0xf]
  %v1878 = vld [vmem:[%s10 + $0x4] sm:$0xf]
  %v1879 = vld [vmem:[%s10 + $0x8] sm:$0xf]
  %v1880 = vld [vmem:[%s10 + $0xc] sm:$0xf]
  %v1881 = vld [vmem:[%s10 + $0x10] sm:$0xf]
  %v1882 = vld [vmem:[%s10 + $0x14] sm:$0xf]
  %v1883 = vld [vmem:[%s10 + $0x18] sm:$0xf]
  %v1884 = vld [vmem:[%s10 + $0x1c] sm:$0xf]
  %v1885 = vld [vmem:[%s10 + $0x20] sm:$0xf]
  %v1886 = vld [vmem:[%s10 + $0x24] sm:$0xf]
  %v1887 = vld [vmem:[%s10 + $0x28] sm:$0xf]
  %v1888 = vld [vmem:[%s10 + $0x2c] sm:$0xf]
  %v1889 = vld [vmem:[%s10 + $0x30] sm:$0xf]
  %v1890 = vld [vmem:[%s10 + $0x34] sm:$0xf]
  %v1891 = vld [vmem:[%s10 + $0x38] sm:$0xf]
  %v1892 = vld [vmem:[%s10 + $0x3c] sm:$0xf]
  %v1893 = vld [vmem:[%s10 + $0x40] sm:$0xf]
  %v1894 = vld [vmem:[%s10 + $0x44] sm:$0xf]
  %v1895 = vld [vmem:[%s10 + $0x48] sm:$0xf]
  %v1896 = vld [vmem:[%s10 + $0x4c] sm:$0xf]
  %v1897 = vld [vmem:[%s10 + $0x50] sm:$0xf]
  %v1898 = vld [vmem:[%s10 + $0x54] sm:$0xf]
  %v1899 = vld [vmem:[%s10 + $0x58] sm:$0xf]
  %v1900 = vld [vmem:[%s10 + $0x5c] sm:$0xf]
  %v1901 = vld [vmem:[%s10 + $0x60] sm:$0xf]
  %v1902 = vld [vmem:[%s10 + $0x64] sm:$0xf]
  %v1903 = vld [vmem:[%s10 + $0x68] sm:$0xf]
  %v1904 = vld [vmem:[%s10 + $0x6c] sm:$0xf]
  %v1905 = vld [vmem:[%s10 + $0x70] sm:$0xf]
  %v1906 = vld [vmem:[%s10 + $0x74] sm:$0xf]
  %v1907 = vld [vmem:[%s10 + $0x78] sm:$0xf]
  %v1908 = vld [vmem:[%s10 + $0x7c] sm:$0xf]
  %v1909 = vld [vmem:[%s11] sm:$0x1]
  %v1911 = vlaneseq
  %v1912 = vshrl.u32 %v1911, 7
  %v1913 = vsub.s32 0, %v1912
  %v1914 = vrot.slane %v1909, %v1913
  %v1948 = vunpack.c.l.b16 %v1877
  %v1949 = vunpack.c.l.b16 %v1878
  %v1950 = vunpack.c.l.b16 %v1879
  %v1951 = vunpack.c.l.b16 %v1880
  %v1952 = vunpack.c.l.b16 %v1881
  %v1953 = vunpack.c.l.b16 %v1882
  %v1954 = vunpack.c.l.b16 %v1883
  %v1955 = vunpack.c.l.b16 %v1884
  %v1956 = vunpack.c.l.b16 %v1885
  %v1957 = vunpack.c.l.b16 %v1886
  %v1958 = vunpack.c.l.b16 %v1887
  %v1959 = vunpack.c.l.b16 %v1888
  %v1960 = vunpack.c.l.b16 %v1889
  %v1961 = vunpack.c.l.b16 %v1890
  %v1962 = vunpack.c.l.b16 %v1891
  %v1963 = vunpack.c.l.b16 %v1892
  %v1964 = vunpack.c.l.b16 %v1893
  %v1965 = vunpack.c.l.b16 %v1894
  %v1966 = vunpack.c.l.b16 %v1895
  %v1967 = vunpack.c.l.b16 %v1896
  %v1968 = vunpack.c.l.b16 %v1897
  %v1969 = vunpack.c.l.b16 %v1898
  %v1970 = vunpack.c.l.b16 %v1899
  %v1971 = vunpack.c.l.b16 %v1900
  %v1972 = vunpack.c.l.b16 %v1901
  %v1973 = vunpack.c.l.b16 %v1902
  %v1974 = vunpack.c.l.b16 %v1903
  %v1975 = vunpack.c.l.b16 %v1904
  %v1976 = vunpack.c.l.b16 %v1905
  %v1977 = vunpack.c.l.b16 %v1906
  %v1978 = vunpack.c.l.b16 %v1907
  %v1979 = vunpack.c.l.b16 %v1908
  %v1980 = vpack.c.b16 %v1949, %v1948
  %v1981 = vpack.c.b16 %v1951, %v1950
  %v1982 = vpack.c.b16 %v1953, %v1952
  %v1983 = vpack.c.b16 %v1955, %v1954
  %v1984 = vpack.c.b16 %v1957, %v1956
  %v1985 = vpack.c.b16 %v1959, %v1958
  %v1986 = vpack.c.b16 %v1961, %v1960
  %v1987 = vpack.c.b16 %v1963, %v1962
  %v1988 = vpack.c.b16 %v1965, %v1964
  %v1989 = vpack.c.b16 %v1967, %v1966
  %v1990 = vpack.c.b16 %v1969, %v1968
  %v1991 = vpack.c.b16 %v1971, %v1970
  %v1992 = vpack.c.b16 %v1973, %v1972
  %v1993 = vpack.c.b16 %v1975, %v1974
  %v1994 = vpack.c.b16 %v1977, %v1976
  %v1995 = vpack.c.b16 %v1979, %v1978
  %2012 = vmatprep.subr.bf16.mxu0 0
  %2013 = vmatpush1.bf16.msra.mxu0 %v1987
  %2014 = vmatprep.subr.bf16.mxu0 0
  %2015 = vmatpush1.bf16.msra.mxu0 %v1986
  %2016 = vmatprep.subr.bf16.mxu0 0
  %2017 = vmatpush1.bf16.msra.mxu0 %v1985
  %2018 = vmatprep.subr.bf16.mxu0 0
  %2019 = vmatpush1.bf16.msra.mxu0 %v1984
  %2020 = vmatprep.subr.bf16.mxu0 0
  %2021 = vmatpush1.bf16.msra.mxu0 %v1983
  %2022 = vmatprep.subr.bf16.mxu0 0
  %2023 = vmatpush1.bf16.msra.mxu0 %v1982
  %2024 = vmatprep.subr.bf16.mxu0 0
  %2025 = vmatpush1.bf16.msra.mxu0 %v1981
  %2026 = vmatprep.subr.bf16.mxu0 0
  %2027 = vmatpush1.bf16.msra.mxu0 %v1980
  %2028 = vmatprep.subr.bf16.mxu0 0
  %2029 = vmatpush2.bf16.msra.mxu0 %v1995
  %2030 = vmatprep.subr.bf16.mxu0 0
  %2031 = vmatpush2.bf16.msra.mxu0 %v1994
  %2032 = vmatprep.subr.bf16.mxu0 0
  %2033 = vmatpush2.bf16.msra.mxu0 %v1993
  %2034 = vmatprep.subr.bf16.mxu0 0
  %2035 = vmatpush2.bf16.msra.mxu0 %v1992
  %2036 = vmatprep.subr.bf16.mxu0 0
  %2037 = vmatpush2.bf16.msra.mxu0 %v1991
  %2038 = vmatprep.subr.bf16.mxu0 0
  %2039 = vmatpush2.bf16.msra.mxu0 %v1990
  %2040 = vmatprep.subr.bf16.mxu0 0
  %2041 = vmatpush2.bf16.msra.mxu0 %v1989
  %2042 = vmatprep.subr.bf16.mxu0 0
  %2043 = vmatpush2.bf16.msra.mxu0 %v1988
  %2044 = vmatprep.mubr.bf16.mxu0 %v1630
  %2045 = vmatmul.mubr.bf16.gmra.mxu0 %v1629
  %v2046 = vpop.f32.mrf.mxu0
  %v2047 = vadd.f32 %v1914, %v2046
  %v2048 = vpop.f32.mrf.mxu0
  %v2049 = vpop.f32.mrf.mxu0
  %v2050 = vadd.f32 %v1914, %v2049
  %v2051 = vpop.f32.mrf.mxu0
  %2052 = vmatprep.mubr.bf16.mxu0 %v1632
  %2053 = vmatmul.mubr.bf16.gmra.mxu0 %v1631
  %v2054 = vpop.f32.mrf.mxu0
  %v2055 = vadd.f32 %v1914, %v2054
  %v2056 = vpop.f32.mrf.mxu0
  %v2057 = vpop.f32.mrf.mxu0
  %v2058 = vadd.f32 %v1914, %v2057
  %v2059 = vpop.f32.mrf.mxu0
  %2060 = vmatprep.mubr.bf16.mxu0 %v1634
  %2061 = vmatmul.mubr.bf16.gmra.mxu0 %v1633
  %v2062 = vpop.f32.mrf.mxu0
  %v2063 = vadd.f32 %v1914, %v2062
  %v2064 = vpop.f32.mrf.mxu0
  %v2065 = vpop.f32.mrf.mxu0
  %v2066 = vadd.f32 %v1914, %v2065
  %v2067 = vpop.f32.mrf.mxu0
  %2068 = vmatprep.mubr.bf16.mxu0 %v1636
  %2069 = vmatmul.mubr.bf16.gmra.mxu0 %v1635
  %v2070 = vpop.f32.mrf.mxu0
  %v2071 = vadd.f32 %v1914, %v2070
  %v2072 = vpop.f32.mrf.mxu0
  %v2073 = vpop.f32.mrf.mxu0
  %v2074 = vadd.f32 %v1914, %v2073
  %v2075 = vpop.f32.mrf.mxu0
  %2076 = vmatprep.mubr.bf16.mxu0 %v1638
  %2077 = vmatmul.mubr.bf16.gmra.mxu0 %v1637
  %v2078 = vpop.f32.mrf.mxu0
  %v2079 = vadd.f32 %v1914, %v2078
  %v2080 = vpop.f32.mrf.mxu0
  %v2081 = vpop.f32.mrf.mxu0
  %v2082 = vadd.f32 %v1914, %v2081
  %v2083 = vpop.f32.mrf.mxu0
  %2084 = vmatprep.mubr.bf16.mxu0 %v1640
  %2085 = vmatmul.mubr.bf16.gmra.mxu0 %v1639
  %v2086 = vpop.f32.mrf.mxu0
  %v2087 = vadd.f32 %v1914, %v2086
  %v2088 = vpop.f32.mrf.mxu0
  %v2089 = vpop.f32.mrf.mxu0
  %v2090 = vadd.f32 %v1914, %v2089
  %v2091 = vpop.f32.mrf.mxu0
  %2092 = vmatprep.mubr.bf16.mxu0 %v1642
  %2093 = vmatmul.mubr.bf16.gmra.mxu0 %v1641
  %v2094 = vpop.f32.mrf.mxu0
  %v2095 = vadd.f32 %v1914, %v2094
  %v2096 = vpop.f32.mrf.mxu0
  %v2097 = vpop.f32.mrf.mxu0
  %v2098 = vadd.f32 %v1914, %v2097
  %v2099 = vpop.f32.mrf.mxu0
  %2100 = vmatprep.mubr.bf16.mxu0 %v1644
  %2101 = vmatmul.mubr.bf16.gmra.mxu0 %v1643
  %v2102 = vpop.f32.mrf.mxu0
  %v2103 = vadd.f32 %v1914, %v2102
  %v2104 = vpop.f32.mrf.mxu0
  %v2105 = vpop.f32.mrf.mxu0
  %v2106 = vadd.f32 %v1914, %v2105
  %v2107 = vpop.f32.mrf.mxu0
  %2108 = vdwg.mxu0
  %v2109 = vld [vmem:[%s12] sm:$0xff]
  %v2110 = vld [vmem:[%s12 + $0x8] sm:$0xff]
  %v2111 = vld [vmem:[%s12 + $0x10] sm:$0xff]
  %v2112 = vld [vmem:[%s12 + $0x18] sm:$0xff]
  %v2113 = vld [vmem:[%s12 + $0x20] sm:$0xff]
  %v2114 = vld [vmem:[%s12 + $0x28] sm:$0xff]
  %v2115 = vld [vmem:[%s12 + $0x30] sm:$0xff]
  %v2116 = vld [vmem:[%s12 + $0x38] sm:$0xff]
  %v2117 = vld [vmem:[%s12 + $0x40] sm:$0xff]
  %v2118 = vld [vmem:[%s12 + $0x48] sm:$0xff]
  %v2119 = vld [vmem:[%s12 + $0x50] sm:$0xff]
  %v2120 = vld [vmem:[%s12 + $0x58] sm:$0xff]
  %v2121 = vld [vmem:[%s12 + $0x60] sm:$0xff]
  %v2122 = vld [vmem:[%s12 + $0x68] sm:$0xff]
  %v2123 = vld [vmem:[%s12 + $0x70] sm:$0xff]
  %v2124 = vld [vmem:[%s12 + $0x78] sm:$0xff]
  %v2125 = vld [vmem:[%s12 + $0x80] sm:$0xff]
  %v2126 = vld [vmem:[%s12 + $0x88] sm:$0xff]
  %v2127 = vld [vmem:[%s12 + $0x90] sm:$0xff]
  %v2128 = vld [vmem:[%s12 + $0x98] sm:$0xff]
  %v2129 = vld [vmem:[%s12 + $0xa0] sm:$0xff]
  %v2130 = vld [vmem:[%s12 + $0xa8] sm:$0xff]
  %v2131 = vld [vmem:[%s12 + $0xb0] sm:$0xff]
  %v2132 = vld [vmem:[%s12 + $0xb8] sm:$0xff]
  %v2133 = vld [vmem:[%s12 + $0xc0] sm:$0xff]
  %v2134 = vld [vmem:[%s12 + $0xc8] sm:$0xff]
  %v2135 = vld [vmem:[%s12 + $0xd0] sm:$0xff]
  %v2136 = vld [vmem:[%s12 + $0xd8] sm:$0xff]
  %v2137 = vld [vmem:[%s12 + $0xe0] sm:$0xff]
  %v2138 = vld [vmem:[%s12 + $0xe8] sm:$0xff]
  %v2139 = vld [vmem:[%s12 + $0xf0] sm:$0xff]
  %v2140 = vld [vmem:[%s12 + $0xf8] sm:$0xff]
  %v2141 = vld [vmem:[%s13] sm:$0x3]
  %v2143 = vlaneseq
  %v2144 = vshrl.u32 %v2143, 7
  %v2145 = vsub.s32 0, %v2144
  %v2146 = vrot.slane %v2141, %v2145
  %v2147 = vlaneseq
  %v2148 = vshrl.u32 %v2147, 7
  %v2149 = vsub.s32 1, %v2148
  %v2150 = vrot.slane %v2141, %v2149
  %v2185 = vunpack.c.l.b16 %v2109
  %v2186 = vunpack.c.h.b16 %v2109
  %v2187 = vunpack.c.l.b16 %v2110
  %v2188 = vunpack.c.h.b16 %v2110
  %v2189 = vunpack.c.l.b16 %v2111
  %v2190 = vunpack.c.h.b16 %v2111
  %v2191 = vunpack.c.l.b16 %v2112
  %v2192 = vunpack.c.h.b16 %v2112
  %v2193 = vunpack.c.l.b16 %v2113
  %v2194 = vunpack.c.h.b16 %v2113
  %v2195 = vunpack.c.l.b16 %v2114
  %v2196 = vunpack.c.h.b16 %v2114
  %v2197 = vunpack.c.l.b16 %v2115
  %v2198 = vunpack.c.h.b16 %v2115
  %v2199 = vunpack.c.l.b16 %v2116
  %v2200 = vunpack.c.h.b16 %v2116
  %v2201 = vunpack.c.l.b16 %v2117
  %v2202 = vunpack.c.h.b16 %v2117
  %v2203 = vunpack.c.l.b16 %v2118
  %v2204 = vunpack.c.h.b16 %v2118
  %v2205 = vunpack.c.l.b16 %v2119
  %v2206 = vunpack.c.h.b16 %v2119
  %v2207 = vunpack.c.l.b16 %v2120
  %v2208 = vunpack.c.h.b16 %v2120
  %v2209 = vunpack.c.l.b16 %v2121
  %v2210 = vunpack.c.h.b16 %v2121
  %v2211 = vunpack.c.l.b16 %v2122
  %v2212 = vunpack.c.h.b16 %v2122
  %v2213 = vunpack.c.l.b16 %v2123
  %v2214 = vunpack.c.h.b16 %v2123
  %v2215 = vunpack.c.l.b16 %v2124
  %v2216 = vunpack.c.h.b16 %v2124
  %v2217 = vunpack.c.l.b16 %v2125
  %v2218 = vunpack.c.h.b16 %v2125
  %v2219 = vunpack.c.l.b16 %v2126
  %v2220 = vunpack.c.h.b16 %v2126
  %v2221 = vunpack.c.l.b16 %v2127
  %v2222 = vunpack.c.h.b16 %v2127
  %v2223 = vunpack.c.l.b16 %v2128
  %v2224 = vunpack.c.h.b16 %v2128
  %v2225 = vunpack.c.l.b16 %v2129
  %v2226 = vunpack.c.h.b16 %v2129
  %v2227 = vunpack.c.l.b16 %v2130
  %v2228 = vunpack.c.h.b16 %v2130
  %v2229 = vunpack.c.l.b16 %v2131
  %v2230 = vunpack.c.h.b16 %v2131
  %v2231 = vunpack.c.l.b16 %v2132
  %v2232 = vunpack.c.h.b16 %v2132
  %v2233 = vunpack.c.l.b16 %v2133
  %v2234 = vunpack.c.h.b16 %v2133
  %v2235 = vunpack.c.l.b16 %v2134
  %v2236 = vunpack.c.h.b16 %v2134
  %v2237 = vunpack.c.l.b16 %v2135
  %v2238 = vunpack.c.h.b16 %v2135
  %v2239 = vunpack.c.l.b16 %v2136
  %v2240 = vunpack.c.h.b16 %v2136
  %v2241 = vunpack.c.l.b16 %v2137
  %v2242 = vunpack.c.h.b16 %v2137
  %v2243 = vunpack.c.l.b16 %v2138
  %v2244 = vunpack.c.h.b16 %v2138
  %v2245 = vunpack.c.l.b16 %v2139
  %v2246 = vunpack.c.h.b16 %v2139
  %v2247 = vunpack.c.l.b16 %v2140
  %v2248 = vunpack.c.h.b16 %v2140
  %v2249 = vpack.c.b16 %v2187, %v2185
  %v2250 = vpack.c.b16 %v2188, %v2186
  %v2251 = vpack.c.b16 %v2191, %v2189
  %v2252 = vpack.c.b16 %v2192, %v2190
  %v2253 = vpack.c.b16 %v2195, %v2193
  %v2254 = vpack.c.b16 %v2196, %v2194
  %v2255 = vpack.c.b16 %v2199, %v2197
  %v2256 = vpack.c.b16 %v2200, %v2198
  %v2257 = vpack.c.b16 %v2203, %v2201
  %v2258 = vpack.c.b16 %v2204, %v2202
  %v2259 = vpack.c.b16 %v2207, %v2205
  %v2260 = vpack.c.b16 %v2208, %v2206
  %v2261 = vpack.c.b16 %v2211, %v2209
  %v2262 = vpack.c.b16 %v2212, %v2210
  %v2263 = vpack.c.b16 %v2215, %v2213
  %v2264 = vpack.c.b16 %v2216, %v2214
  %v2265 = vpack.c.b16 %v2219, %v2217
  %v2266 = vpack.c.b16 %v2220, %v2218
  %v2267 = vpack.c.b16 %v2223, %v2221
  %v2268 = vpack.c.b16 %v2224, %v2222
  %v2269 = vpack.c.b16 %v2227, %v2225
  %v2270 = vpack.c.b16 %v2228, %v2226
  %v2271 = vpack.c.b16 %v2231, %v2229
  %v2272 = vpack.c.b16 %v2232, %v2230
  %v2273 = vpack.c.b16 %v2235, %v2233
  %v2274 = vpack.c.b16 %v2236, %v2234
  %v2275 = vpack.c.b16 %v2239, %v2237
  %v2276 = vpack.c.b16 %v2240, %v2238
  %v2277 = vpack.c.b16 %v2243, %v2241
  %v2278 = vpack.c.b16 %v2244, %v2242
  %v2279 = vpack.c.b16 %v2247, %v2245
  %v2280 = vpack.c.b16 %v2248, %v2246
  %2313 = vmatprep.subr.bf16.mxu0 %v2264
  %2314 = vmatpush1.bf16.msra.mxu0 %v2263
  %2315 = vmatprep.subr.bf16.mxu0 %v2262
  %2316 = vmatpush1.bf16.msra.mxu0 %v2261
  %2317 = vmatprep.subr.bf16.mxu0 %v2260
  %2318 = vmatpush1.bf16.msra.mxu0 %v2259
  %2319 = vmatprep.subr.bf16.mxu0 %v2258
  %2320 = vmatpush1.bf16.msra.mxu0 %v2257
  %2321 = vmatprep.subr.bf16.mxu0 %v2256
  %2322 = vmatpush1.bf16.msra.mxu0 %v2255
  %2323 = vmatprep.subr.bf16.mxu0 %v2254
  %2324 = vmatpush1.bf16.msra.mxu0 %v2253
  %2325 = vmatprep.subr.bf16.mxu0 %v2252
  %2326 = vmatpush1.bf16.msra.mxu0 %v2251
  %2327 = vmatprep.subr.bf16.mxu0 %v2250
  %2328 = vmatpush1.bf16.msra.mxu0 %v2249
  %2329 = vmatprep.subr.bf16.mxu0 %v2280
  %2330 = vmatpush2.bf16.msra.mxu0 %v2279
  %2331 = vmatprep.subr.bf16.mxu0 %v2278
  %2332 = vmatpush2.bf16.msra.mxu0 %v2277
  %2333 = vmatprep.subr.bf16.mxu0 %v2276
  %2334 = vmatpush2.bf16.msra.mxu0 %v2275
  %2335 = vmatprep.subr.bf16.mxu0 %v2274
  %2336 = vmatpush2.bf16.msra.mxu0 %v2273
  %2337 = vmatprep.subr.bf16.mxu0 %v2272
  %2338 = vmatpush2.bf16.msra.mxu0 %v2271
  %2339 = vmatprep.subr.bf16.mxu0 %v2270
  %2340 = vmatpush2.bf16.msra.mxu0 %v2269
  %2341 = vmatprep.subr.bf16.mxu0 %v2268
  %2342 = vmatpush2.bf16.msra.mxu0 %v2267
  %2343 = vmatprep.subr.bf16.mxu0 %v2266
  %2344 = vmatpush2.bf16.msra.mxu0 %v2265
  %2345 = vmatprep.mubr.bf16.mxu0 %v1630
  %2346 = vmatmul.mubr.bf16.gmra.mxu0 %v1629
  %v2347 = vpop.f32.mrf.mxu0
  %v2348 = vadd.f32 %v2146, %v2347
  %v2349 = vpop.f32.mrf.mxu0
  %v2350 = vadd.f32 %v2150, %v2349
  %v2351 = vpop.f32.mrf.mxu0
  %v2352 = vadd.f32 %v2146, %v2351
  %v2353 = vpop.f32.mrf.mxu0
  %v2354 = vadd.f32 %v2150, %v2353
  %2355 = vmatprep.mubr.bf16.mxu0 %v1632
  %2356 = vmatmul.mubr.bf16.gmra.mxu0 %v1631
  %v2357 = vpop.f32.mrf.mxu0
  %v2358 = vadd.f32 %v2146, %v2357
  %v2359 = vpop.f32.mrf.mxu0
  %v2360 = vadd.f32 %v2150, %v2359
  %v2361 = vpop.f32.mrf.mxu0
  %v2362 = vadd.f32 %v2146, %v2361
  %v2363 = vpop.f32.mrf.mxu0
  %v2364 = vadd.f32 %v2150, %v2363
  %2365 = vmatprep.mubr.bf16.mxu0 %v1634
  %2366 = vmatmul.mubr.bf16.gmra.mxu0 %v1633
  %v2367 = vpop.f32.mrf.mxu0
  %v2368 = vadd.f32 %v2146, %v2367
  %v2369 = vpop.f32.mrf.mxu0
  %v2370 = vadd.f32 %v2150, %v2369
  %v2371 = vpop.f32.mrf.mxu0
  %v2372 = vadd.f32 %v2146, %v2371
  %v2373 = vpop.f32.mrf.mxu0
  %v2374 = vadd.f32 %v2150, %v2373
  %2375 = vmatprep.mubr.bf16.mxu0 %v1636
  %2376 = vmatmul.mubr.bf16.gmra.mxu0 %v1635
  %v2377 = vpop.f32.mrf.mxu0
  %v2378 = vadd.f32 %v2146, %v2377
  %v2379 = vpop.f32.mrf.mxu0
  %v2380 = vadd.f32 %v2150, %v2379
  %v2381 = vpop.f32.mrf.mxu0
  %v2382 = vadd.f32 %v2146, %v2381
  %v2383 = vpop.f32.mrf.mxu0
  %v2384 = vadd.f32 %v2150, %v2383
  %2385 = vmatprep.mubr.bf16.mxu0 %v1638
  %2386 = vmatmul.mubr.bf16.gmra.mxu0 %v1637
  %v2387 = vpop.f32.mrf.mxu0
  %v2388 = vadd.f32 %v2146, %v2387
  %v2389 = vpop.f32.mrf.mxu0
  %v2390 = vadd.f32 %v2150, %v2389
  %v2391 = vpop.f32.mrf.mxu0
  %v2392 = vadd.f32 %v2146, %v2391
  %v2393 = vpop.f32.mrf.mxu0
  %v2394 = vadd.f32 %v2150, %v2393
  %2395 = vmatprep.mubr.bf16.mxu0 %v1640
  %2396 = vmatmul.mubr.bf16.gmra.mxu0 %v1639
  %v2397 = vpop.f32.mrf.mxu0
  %v2398 = vadd.f32 %v2146, %v2397
  %v2399 = vpop.f32.mrf.mxu0
  %v2400 = vadd.f32 %v2150, %v2399
  %v2401 = vpop.f32.mrf.mxu0
  %v2402 = vadd.f32 %v2146, %v2401
  %v2403 = vpop.f32.mrf.mxu0
  %v2404 = vadd.f32 %v2150, %v2403
  %2405 = vmatprep.mubr.bf16.mxu0 %v1642
  %2406 = vmatmul.mubr.bf16.gmra.mxu0 %v1641
  %v2407 = vpop.f32.mrf.mxu0
  %v2408 = vadd.f32 %v2146, %v2407
  %v2409 = vpop.f32.mrf.mxu0
  %v2410 = vadd.f32 %v2150, %v2409
  %v2411 = vpop.f32.mrf.mxu0
  %v2412 = vadd.f32 %v2146, %v2411
  %v2413 = vpop.f32.mrf.mxu0
  %v2414 = vadd.f32 %v2150, %v2413
  %2415 = vmatprep.mubr.bf16.mxu0 %v1644
  %2416 = vmatmul.mubr.bf16.gmra.mxu0 %v1643
  %v2417 = vpop.f32.mrf.mxu0
  %v2418 = vadd.f32 %v2146, %v2417
  %v2419 = vpop.f32.mrf.mxu0
  %v2420 = vadd.f32 %v2150, %v2419
  %v2421 = vpop.f32.mrf.mxu0
  %v2422 = vadd.f32 %v2146, %v2421
  %v2423 = vpop.f32.mrf.mxu0
  %v2424 = vadd.f32 %v2150, %v2423
  %2425 = vdwg.mxu0
  %v2426 = vpack.c.bf16 %v1818, %v1815
  %v2427 = vpack.c.bf16 %v1826, %v1823
  %v2428 = vpack.c.bf16 %v1834, %v1831
  %v2429 = vpack.c.bf16 %v1842, %v1839
  %v2430 = vpack.c.bf16 %v1850, %v1847
  %v2431 = vpack.c.bf16 %v1858, %v1855
  %v2432 = vpack.c.bf16 %v1866, %v1863
  %v2433 = vpack.c.bf16 %v1874, %v1871
  %v2434 = vpack.c.bf16 %v2050, %v2047
  %v2435 = vpack.c.bf16 %v2058, %v2055
  %v2436 = vpack.c.bf16 %v2066, %v2063
  %v2437 = vpack.c.bf16 %v2074, %v2071
  %v2438 = vpack.c.bf16 %v2082, %v2079
  %v2439 = vpack.c.bf16 %v2090, %v2087
  %v2440 = vpack.c.bf16 %v2098, %v2095
  %v2441 = vpack.c.bf16 %v2106, %v2103
  %v2442 = vpack.c.bf16 %v2352, %v2348
  %v2443 = vpack.c.bf16 %v2354, %v2350
  %v2444 = vpack.c.bf16 %v2362, %v2358
  %v2445 = vpack.c.bf16 %v2364, %v2360
  %v2446 = vpack.c.bf16 %v2372, %v2368
  %v2447 = vpack.c.bf16 %v2374, %v2370
  %v2448 = vpack.c.bf16 %v2382, %v2378
  %v2449 = vpack.c.bf16 %v2384, %v2380
  %v2450 = vpack.c.bf16 %v2392, %v2388
  %v2451 = vpack.c.bf16 %v2394, %v2390
  %v2452 = vpack.c.bf16 %v2402, %v2398
  %v2453 = vpack.c.bf16 %v2404, %v2400
  %v2454 = vpack.c.bf16 %v2412, %v2408
  %v2455 = vpack.c.bf16 %v2414, %v2410
  %v2456 = vpack.c.bf16 %v2422, %v2418
  %v2457 = vpack.c.bf16 %v2424, %v2420
  %v2459 = vsel %vm997, %v2426, 0
  %v2462 = vsel %vm997, %v2427, 0
  %v2465 = vsel %vm997, %v2428, 0
  %v2468 = vsel %vm997, %v2429, 0
  %v2471 = vsel %vm997, %v2434, 0
  %v2474 = vsel %vm997, %v2435, 0
  %v2477 = vsel %vm997, %v2436, 0
  %v2480 = vsel %vm997, %v2437, 0
  %2482 = vmatprep.subr.bf16.mxu0 0
  %2483 = vmatpush1.bf16.xpose.msra.mxu0 0
  %2484 = vmatprep.subr.bf16.mxu0 0
  %2485 = vmatpush1.bf16.xpose.msra.mxu0 0
  %2486 = vmatprep.subr.bf16.mxu0 0
  %2487 = vmatpush1.bf16.xpose.msra.mxu0 0
  %2488 = vmatprep.subr.bf16.mxu0 0
  %2489 = vmatpush1.bf16.xpose.msra.mxu0 0
  %2490 = vmatprep.subr.bf16.mxu0 0
  %2491 = vmatpush1.bf16.xpose.msra.mxu0 %v2480
  %2492 = vmatprep.subr.bf16.mxu0 0
  %2493 = vmatpush1.bf16.xpose.msra.mxu0 %v2477
  %2494 = vmatprep.subr.bf16.mxu0 0
  %2495 = vmatpush1.bf16.xpose.msra.mxu0 %v2474
  %2496 = vmatprep.subr.bf16.mxu0 0
  %2497 = vmatpush1.bf16.xpose.msra.mxu0 %v2471
  %2498 = vmatprep.subr.bf16.mxu0 0
  %2499 = vmatpush2.bf16.xpose.msra.mxu0 0
  %2500 = vmatprep.subr.bf16.mxu0 0
  %2501 = vmatpush2.bf16.xpose.msra.mxu0 0
  %2502 = vmatprep.subr.bf16.mxu0 0
  %2503 = vmatpush2.bf16.xpose.msra.mxu0 0
  %2504 = vmatprep.subr.bf16.mxu0 0
  %2505 = vmatpush2.bf16.xpose.msra.mxu0 0
  %2506 = vmatprep.subr.bf16.mxu0 0
  %2507 = vmatpush2.bf16.xpose.msra.mxu0 0
  %2508 = vmatprep.subr.bf16.mxu0 0
  %2509 = vmatpush2.bf16.xpose.msra.mxu0 0
  %2510 = vmatprep.subr.bf16.mxu0 0
  %2511 = vmatpush2.bf16.xpose.msra.mxu0 0
  %2512 = vmatprep.subr.bf16.mxu0 0
  %2513 = vmatpush2.bf16.xpose.msra.mxu0 0
  %2514 = vmatprep.mubr.bf16.mxu0 0
  %2515 = vmatmul.mubr.bf16.gmra.mxu0 %v2459
  %v2516 = vpop.f32.mrf.mxu0
  %v2517 = vadd.f32 0.0, %v2516
  %v2518 = vpop.f32.mrf.mxu0
  %v2519 = vpop.f32.mrf.mxu0
  %v2520 = vadd.f32 0.0, %v2519
  %v2521 = vpop.f32.mrf.mxu0
  %2522 = vmatprep.mubr.bf16.mxu0 0
  %2523 = vmatmul.mubr.bf16.gmra.mxu0 %v2462
  %v2524 = vpop.f32.mrf.mxu0
  %v2525 = vadd.f32 0.0, %v2524
  %v2526 = vpop.f32.mrf.mxu0
  %v2527 = vpop.f32.mrf.mxu0
  %v2528 = vadd.f32 0.0, %v2527
  %v2529 = vpop.f32.mrf.mxu0
  %2530 = vmatprep.mubr.bf16.mxu0 0
  %2531 = vmatmul.mubr.bf16.gmra.mxu0 %v2465
  %v2532 = vpop.f32.mrf.mxu0
  %v2533 = vadd.f32 0.0, %v2532
  %v2534 = vpop.f32.mrf.mxu0
  %v2535 = vpop.f32.mrf.mxu0
  %v2536 = vadd.f32 0.0, %v2535
  %v2537 = vpop.f32.mrf.mxu0
  %2538 = vmatprep.mubr.bf16.mxu0 0
  %2539 = vmatmul.mubr.bf16.gmra.mxu0 %v2468
  %v2540 = vpop.f32.mrf.mxu0
  %v2541 = vadd.f32 0.0, %v2540
  %v2542 = vpop.f32.mrf.mxu0
  %v2543 = vpop.f32.mrf.mxu0
  %v2544 = vadd.f32 0.0, %v2543
  %v2545 = vpop.f32.mrf.mxu0
  %2546 = vdwg.mxu0
  %v2548 = vsel %vm997, %v2430, 0
  %v2551 = vsel %vm997, %v2431, 0
  %v2554 = vsel %vm997, %v2432, 0
  %v2557 = vsel %vm997, %v2433, 0
  %v2560 = vsel %vm997, %v2438, 0
  %v2563 = vsel %vm997, %v2439, 0
  %v2566 = vsel %vm997, %v2440, 0
  %v2569 = vsel %vm997, %v2441, 0
  %2571 = vmatprep.subr.bf16.mxu0 0
  %2572 = vmatpush1.bf16.xpose.msra.mxu0 0
  %2573 = vmatprep.subr.bf16.mxu0 0
  %2574 = vmatpush1.bf16.xpose.msra.mxu0 0
  %2575 = vmatprep.subr.bf16.mxu0 0
  %2576 = vmatpush1.bf16.xpose.msra.mxu0 0
  %2577 = vmatprep.subr.bf16.mxu0 0
  %2578 = vmatpush1.bf16.xpose.msra.mxu0 0
  %2579 = vmatprep.subr.bf16.mxu0 0
  %2580 = vmatpush1.bf16.xpose.msra.mxu0 %v2569
  %2581 = vmatprep.subr.bf16.mxu0 0
  %2582 = vmatpush1.bf16.xpose.msra.mxu0 %v2566
  %2583 = vmatprep.subr.bf16.mxu0 0
  %2584 = vmatpush1.bf16.xpose.msra.mxu0 %v2563
  %2585 = vmatprep.subr.bf16.mxu0 0
  %2586 = vmatpush1.bf16.xpose.msra.mxu0 %v2560
  %2587 = vmatprep.subr.bf16.mxu0 0
  %2588 = vmatpush2.bf16.xpose.msra.mxu0 0
  %2589 = vmatprep.subr.bf16.mxu0 0
  %2590 = vmatpush2.bf16.xpose.msra.mxu0 0
  %2591 = vmatprep.subr.bf16.mxu0 0
  %2592 = vmatpush2.bf16.xpose.msra.mxu0 0
  %2593 = vmatprep.subr.bf16.mxu0 0
  %2594 = vmatpush2.bf16.xpose.msra.mxu0 0
  %2595 = vmatprep.subr.bf16.mxu0 0
  %2596 = vmatpush2.bf16.xpose.msra.mxu0 0
  %2597 = vmatprep.subr.bf16.mxu0 0
  %2598 = vmatpush2.bf16.xpose.msra.mxu0 0
  %2599 = vmatprep.subr.bf16.mxu0 0
  %2600 = vmatpush2.bf16.xpose.msra.mxu0 0
  %2601 = vmatprep.subr.bf16.mxu0 0
  %2602 = vmatpush2.bf16.xpose.msra.mxu0 0
  %2603 = vmatprep.mubr.bf16.mxu0 0
  %2604 = vmatmul.mubr.bf16.gmra.mxu0 %v2548
  %v2605 = vpop.f32.mrf.mxu0
  %v2606 = vadd.f32 0.0, %v2605
  %v2607 = vpop.f32.mrf.mxu0
  %v2608 = vpop.f32.mrf.mxu0
  %v2609 = vadd.f32 0.0, %v2608
  %v2610 = vpop.f32.mrf.mxu0
  %2611 = vmatprep.mubr.bf16.mxu0 0
  %2612 = vmatmul.mubr.bf16.gmra.mxu0 %v2551
  %v2613 = vpop.f32.mrf.mxu0
  %v2614 = vadd.f32 0.0, %v2613
  %v2615 = vpop.f32.mrf.mxu0
  %v2616 = vpop.f32.mrf.mxu0
  %v2617 = vadd.f32 0.0, %v2616
  %v2618 = vpop.f32.mrf.mxu0
  %2619 = vmatprep.mubr.bf16.mxu0 0
  %2620 = vmatmul.mubr.bf16.gmra.mxu0 %v2554
  %v2621 = vpop.f32.mrf.mxu0
  %v2622 = vadd.f32 0.0, %v2621
  %v2623 = vpop.f32.mrf.mxu0
  %v2624 = vpop.f32.mrf.mxu0
  %v2625 = vadd.f32 0.0, %v2624
  %v2626 = vpop.f32.mrf.mxu0
  %2627 = vmatprep.mubr.bf16.mxu0 0
  %2628 = vmatmul.mubr.bf16.gmra.mxu0 %v2557
  %v2629 = vpop.f32.mrf.mxu0
  %v2630 = vadd.f32 0.0, %v2629
  %v2631 = vpop.f32.mrf.mxu0
  %v2632 = vpop.f32.mrf.mxu0
  %v2633 = vadd.f32 0.0, %v2632
  %v2634 = vpop.f32.mrf.mxu0
  %2635 = vdwg.mxu0
  %v2636 = vsel %vm1176, %v2517, -inf
  %2637 = vmax.xlane.f32.xlu0 %v2636
  %v2638 = vpop.xlane.xlu0 %2637
  %v2639 = vsel %vm1176, %v2520, -inf
  %2640 = vmax.xlane.f32.xlu0 %v2639
  %v2641 = vpop.xlane.xlu0 %2640
  %v2642 = vsel %vm1176, %v2525, -inf
  %2643 = vmax.xlane.f32.xlu0 %v2642
  %v2644 = vpop.xlane.xlu0 %2643
  %v2645 = vsel %vm1176, %v2528, -inf
  %2646 = vmax.xlane.f32.xlu0 %v2645
  %v2647 = vpop.xlane.xlu0 %2646
  %v2648 = vsel %vm1176, %v2533, -inf
  %2649 = vmax.xlane.f32.xlu0 %v2648
  %v2650 = vpop.xlane.xlu0 %2649
  %v2651 = vsel %vm1176, %v2536, -inf
  %2652 = vmax.xlane.f32.xlu0 %v2651
  %v2653 = vpop.xlane.xlu0 %2652
  %v2654 = vsel %vm1176, %v2541, -inf
  %2655 = vmax.xlane.f32.xlu0 %v2654
  %v2656 = vpop.xlane.xlu0 %2655
  %v2657 = vsel %vm1176, %v2544, -inf
  %2658 = vmax.xlane.f32.xlu0 %v2657
  %v2659 = vpop.xlane.xlu0 %2658
  %v2660 = vsel %vm1176, %v2606, -inf
  %2661 = vmax.xlane.f32.xlu0 %v2660
  %v2662 = vpop.xlane.xlu0 %2661
  %v2663 = vsel %vm1176, %v2609, -inf
  %2664 = vmax.xlane.f32.xlu0 %v2663
  %v2665 = vpop.xlane.xlu0 %2664
  %v2666 = vsel %vm1176, %v2614, -inf
  %2667 = vmax.xlane.f32.xlu0 %v2666
  %v2668 = vpop.xlane.xlu0 %2667
  %v2669 = vsel %vm1176, %v2617, -inf
  %2670 = vmax.xlane.f32.xlu0 %v2669
  %v2671 = vpop.xlane.xlu0 %2670
  %v2672 = vsel %vm1176, %v2622, -inf
  %2673 = vmax.xlane.f32.xlu0 %v2672
  %v2674 = vpop.xlane.xlu0 %2673
  %v2675 = vsel %vm1176, %v2625, -inf
  %2676 = vmax.xlane.f32.xlu0 %v2675
  %v2677 = vpop.xlane.xlu0 %2676
  %v2678 = vsel %vm1176, %v2630, -inf
  %2679 = vmax.xlane.f32.xlu0 %v2678
  %v2680 = vpop.xlane.xlu0 %2679
  %v2681 = vsel %vm1176, %v2633, -inf
  %2682 = vmax.xlane.f32.xlu0 %v2681
  %v2683 = vpop.xlane.xlu0 %2682
  %v2684 = vsub.f32 %v2517, %v2638
  %v2685 = vsub.f32 %v2520, %v2641
  %v2686 = vsub.f32 %v2525, %v2644
  %v2687 = vsub.f32 %v2528, %v2647
  %v2688 = vsub.f32 %v2533, %v2650
  %v2689 = vsub.f32 %v2536, %v2653
  %v2690 = vsub.f32 %v2541, %v2656
  %v2691 = vsub.f32 %v2544, %v2659
  %v2692 = vsub.f32 %v2606, %v2662
  %v2693 = vsub.f32 %v2609, %v2665
  %v2694 = vsub.f32 %v2614, %v2668
  %v2695 = vsub.f32 %v2617, %v2671
  %v2696 = vsub.f32 %v2622, %v2674
  %v2697 = vsub.f32 %v2625, %v2677
  %v2698 = vsub.f32 %v2630, %v2680
  %v2699 = vsub.f32 %v2633, %v2683
  %v2700 = vmul.f32 %v2684, 1.442695
  %v2701 = vpow.pop %v2700
  %v2702 = vmul.f32 %v2685, 1.442695
  %v2703 = vpow.pop %v2702
  %v2704 = vmul.f32 %v2686, 1.442695
  %v2705 = vpow.pop %v2704
  %v2706 = vmul.f32 %v2687, 1.442695
  %v2707 = vpow.pop %v2706
  %v2708 = vmul.f32 %v2688, 1.442695
  %v2709 = vpow.pop %v2708
  %v2710 = vmul.f32 %v2689, 1.442695
  %v2711 = vpow.pop %v2710
  %v2712 = vmul.f32 %v2690, 1.442695
  %v2713 = vpow.pop %v2712
  %v2714 = vmul.f32 %v2691, 1.442695
  %v2715 = vpow.pop %v2714
  %v2716 = vmul.f32 %v2692, 1.442695
  %v2717 = vpow.pop %v2716
  %v2718 = vmul.f32 %v2693, 1.442695
  %v2719 = vpow.pop %v2718
  %v2720 = vmul.f32 %v2694, 1.442695
  %v2721 = vpow.pop %v2720
  %v2722 = vmul.f32 %v2695, 1.442695
  %v2723 = vpow.pop %v2722
  %v2724 = vmul.f32 %v2696, 1.442695
  %v2725 = vpow.pop %v2724
  %v2726 = vmul.f32 %v2697, 1.442695
  %v2727 = vpow.pop %v2726
  %v2728 = vmul.f32 %v2698, 1.442695
  %v2729 = vpow.pop %v2728
  %v2730 = vmul.f32 %v2699, 1.442695
  %v2731 = vpow.pop %v2730
  %v2732 = vsel %vm1176, %v2701, 0.0
  %2733 = vadd.xlane.f32.xlu0 %v2732
  %v2734 = vpop.xlane.xlu0 %2733
  %v2735 = vsel %vm1176, %v2703, 0.0
  %2736 = vadd.xlane.f32.xlu0 %v2735
  %v2737 = vpop.xlane.xlu0 %2736
  %v2738 = vsel %vm1176, %v2705, 0.0
  %2739 = vadd.xlane.f32.xlu0 %v2738
  %v2740 = vpop.xlane.xlu0 %2739
  %v2741 = vsel %vm1176, %v2707, 0.0
  %2742 = vadd.xlane.f32.xlu0 %v2741
  %v2743 = vpop.xlane.xlu0 %2742
  %v2744 = vsel %vm1176, %v2709, 0.0
  %2745 = vadd.xlane.f32.xlu0 %v2744
  %v2746 = vpop.xlane.xlu0 %2745
  %v2747 = vsel %vm1176, %v2711, 0.0
  %2748 = vadd.xlane.f32.xlu0 %v2747
  %v2749 = vpop.xlane.xlu0 %2748
  %v2750 = vsel %vm1176, %v2713, 0.0
  %2751 = vadd.xlane.f32.xlu0 %v2750
  %v2752 = vpop.xlane.xlu0 %2751
  %v2753 = vsel %vm1176, %v2715, 0.0
  %2754 = vadd.xlane.f32.xlu0 %v2753
  %v2755 = vpop.xlane.xlu0 %2754
  %v2756 = vsel %vm1176, %v2717, 0.0
  %2757 = vadd.xlane.f32.xlu0 %v2756
  %v2758 = vpop.xlane.xlu0 %2757
  %v2759 = vsel %vm1176, %v2719, 0.0
  %2760 = vadd.xlane.f32.xlu0 %v2759
  %v2761 = vpop.xlane.xlu0 %2760
  %v2762 = vsel %vm1176, %v2721, 0.0
  %2763 = vadd.xlane.f32.xlu0 %v2762
  %v2764 = vpop.xlane.xlu0 %2763
  %v2765 = vsel %vm1176, %v2723, 0.0
  %2766 = vadd.xlane.f32.xlu0 %v2765
  %v2767 = vpop.xlane.xlu0 %2766
  %v2768 = vsel %vm1176, %v2725, 0.0
  %2769 = vadd.xlane.f32.xlu0 %v2768
  %v2770 = vpop.xlane.xlu0 %2769
  %v2771 = vsel %vm1176, %v2727, 0.0
  %2772 = vadd.xlane.f32.xlu0 %v2771
  %v2773 = vpop.xlane.xlu0 %2772
  %v2774 = vsel %vm1176, %v2729, 0.0
  %2775 = vadd.xlane.f32.xlu0 %v2774
  %v2776 = vpop.xlane.xlu0 %2775
  %v2777 = vsel %vm1176, %v2731, 0.0
  %2778 = vadd.xlane.f32.xlu0 %v2777
  %v2779 = vpop.xlane.xlu0 %2778
  %v2780 = vrcp.pop %v2734
  %v2781 = vmul.f32 %v2701, %v2780
  %v2782 = vrcp.pop %v2737
  %v2783 = vmul.f32 %v2703, %v2782
  %v2784 = vrcp.pop %v2740
  %v2785 = vmul.f32 %v2705, %v2784
  %v2786 = vrcp.pop %v2743
  %v2787 = vmul.f32 %v2707, %v2786
  %v2788 = vrcp.pop %v2746
  %v2789 = vmul.f32 %v2709, %v2788
  %v2790 = vrcp.pop %v2749
  %v2791 = vmul.f32 %v2711, %v2790
  %v2792 = vrcp.pop %v2752
  %v2793 = vmul.f32 %v2713, %v2792
  %v2794 = vrcp.pop %v2755
  %v2795 = vmul.f32 %v2715, %v2794
  %v2796 = vrcp.pop %v2758
  %v2797 = vmul.f32 %v2717, %v2796
  %v2798 = vrcp.pop %v2761
  %v2799 = vmul.f32 %v2719, %v2798
  %v2800 = vrcp.pop %v2764
  %v2801 = vmul.f32 %v2721, %v2800
  %v2802 = vrcp.pop %v2767
  %v2803 = vmul.f32 %v2723, %v2802
  %v2804 = vrcp.pop %v2770
  %v2805 = vmul.f32 %v2725, %v2804
  %v2806 = vrcp.pop %v2773
  %v2807 = vmul.f32 %v2727, %v2806
  %v2808 = vrcp.pop %v2776
  %v2809 = vmul.f32 %v2729, %v2808
  %v2810 = vrcp.pop %v2779
  %v2811 = vmul.f32 %v2731, %v2810
  %v2812 = vpack.c.bf16 %v2783, %v2781
  %v2813 = vpack.c.bf16 %v2787, %v2785
  %v2814 = vpack.c.bf16 %v2791, %v2789
  %v2815 = vpack.c.bf16 %v2795, %v2793
  %v2816 = vpack.c.bf16 %v2799, %v2797
  %v2817 = vpack.c.bf16 %v2803, %v2801
  %v2818 = vpack.c.bf16 %v2807, %v2805
  %v2819 = vpack.c.bf16 %v2811, %v2809
  %v2821 = vsel %vm1176, %v2812, 0
  %v2824 = vsel %vm1176, %v2813, 0
  %v2827 = vsel %vm1176, %v2814, 0
  %v2830 = vsel %vm1176, %v2815, 0
  %2832 = vmatprep.subr.bf16.mxu0 0
  %2833 = vmatpush1.bf16.msra.mxu0 0
  %2834 = vmatprep.subr.bf16.mxu0 0
  %2835 = vmatpush1.bf16.msra.mxu0 0
  %2836 = vmatprep.subr.bf16.mxu0 0
  %2837 = vmatpush1.bf16.msra.mxu0 0
  %2838 = vmatprep.subr.bf16.mxu0 0
  %2839 = vmatpush1.bf16.msra.mxu0 0
  %2840 = vmatprep.subr.bf16.mxu0 %v2449
  %2841 = vmatpush1.bf16.msra.mxu0 %v2448
  %2842 = vmatprep.subr.bf16.mxu0 %v2447
  %2843 = vmatpush1.bf16.msra.mxu0 %v2446
  %2844 = vmatprep.subr.bf16.mxu0 %v2445
  %2845 = vmatpush1.bf16.msra.mxu0 %v2444
  %2846 = vmatprep.subr.bf16.mxu0 %v2443
  %2847 = vmatpush1.bf16.msra.mxu0 %v2442
  %2848 = vmatprep.subr.bf16.mxu0 0
  %2849 = vmatpush2.bf16.msra.mxu0 0
  %2850 = vmatprep.subr.bf16.mxu0 0
  %2851 = vmatpush2.bf16.msra.mxu0 0
  %2852 = vmatprep.subr.bf16.mxu0 0
  %2853 = vmatpush2.bf16.msra.mxu0 0
  %2854 = vmatprep.subr.bf16.mxu0 0
  %2855 = vmatpush2.bf16.msra.mxu0 0
  %2856 = vmatprep.subr.bf16.mxu0 0
  %2857 = vmatpush2.bf16.msra.mxu0 0
  %2858 = vmatprep.subr.bf16.mxu0 0
  %2859 = vmatpush2.bf16.msra.mxu0 0
  %2860 = vmatprep.subr.bf16.mxu0 0
  %2861 = vmatpush2.bf16.msra.mxu0 0
  %2862 = vmatprep.subr.bf16.mxu0 0
  %2863 = vmatpush2.bf16.msra.mxu0 0
  %2864 = vmatprep.mubr.bf16.mxu0 0
  %2865 = vmatmul.mubr.bf16.gmra.mxu0 %v2821
  %v2866 = vpop.f32.mrf.mxu0
  %v2867 = vadd.f32 0.0, %v2866
  %v2868 = vpop.f32.mrf.mxu0
  %v2869 = vadd.f32 0.0, %v2868
  %v2870 = vpop.f32.mrf.mxu0
  %v2871 = vadd.f32 0.0, %v2870
  %v2872 = vpop.f32.mrf.mxu0
  %v2873 = vadd.f32 0.0, %v2872
  %2874 = vmatprep.mubr.bf16.mxu0 0
  %2875 = vmatmul.mubr.bf16.gmra.mxu0 %v2824
  %v2876 = vpop.f32.mrf.mxu0
  %v2877 = vadd.f32 0.0, %v2876
  %v2878 = vpop.f32.mrf.mxu0
  %v2879 = vadd.f32 0.0, %v2878
  %v2880 = vpop.f32.mrf.mxu0
  %v2881 = vadd.f32 0.0, %v2880
  %v2882 = vpop.f32.mrf.mxu0
  %v2883 = vadd.f32 0.0, %v2882
  %2884 = vmatprep.mubr.bf16.mxu0 0
  %2885 = vmatmul.mubr.bf16.gmra.mxu0 %v2827
  %v2886 = vpop.f32.mrf.mxu0
  %v2887 = vadd.f32 0.0, %v2886
  %v2888 = vpop.f32.mrf.mxu0
  %v2889 = vadd.f32 0.0, %v2888
  %v2890 = vpop.f32.mrf.mxu0
  %v2891 = vadd.f32 0.0, %v2890
  %v2892 = vpop.f32.mrf.mxu0
  %v2893 = vadd.f32 0.0, %v2892
  %2894 = vmatprep.mubr.bf16.mxu0 0
  %2895 = vmatmul.mubr.bf16.gmra.mxu0 %v2830
  %v2896 = vpop.f32.mrf.mxu0
  %v2897 = vadd.f32 0.0, %v2896
  %v2898 = vpop.f32.mrf.mxu0
  %v2899 = vadd.f32 0.0, %v2898
  %v2900 = vpop.f32.mrf.mxu0
  %v2901 = vadd.f32 0.0, %v2900
  %v2902 = vpop.f32.mrf.mxu0
  %v2903 = vadd.f32 0.0, %v2902
  %2904 = vdwg.mxu0
  %v2906 = vsel %vm1176, %v2816, 0
  %v2909 = vsel %vm1176, %v2817, 0
  %v2912 = vsel %vm1176, %v2818, 0
  %v2915 = vsel %vm1176, %v2819, 0
  %2917 = vmatprep.subr.bf16.mxu0 0
  %2918 = vmatpush1.bf16.msra.mxu0 0
  %2919 = vmatprep.subr.bf16.mxu0 0
  %2920 = vmatpush1.bf16.msra.mxu0 0
  %2921 = vmatprep.subr.bf16.mxu0 0
  %2922 = vmatpush1.bf16.msra.mxu0 0
  %2923 = vmatprep.subr.bf16.mxu0 0
  %2924 = vmatpush1.bf16.msra.mxu0 0
  %2925 = vmatprep.subr.bf16.mxu0 %v2457
  %2926 = vmatpush1.bf16.msra.mxu0 %v2456
  %2927 = vmatprep.subr.bf16.mxu0 %v2455
  %2928 = vmatpush1.bf16.msra.mxu0 %v2454
  %2929 = vmatprep.subr.bf16.mxu0 %v2453
  %2930 = vmatpush1.bf16.msra.mxu0 %v2452
  %2931 = vmatprep.subr.bf16.mxu0 %v2451
  %2932 = vmatpush1.bf16.msra.mxu0 %v2450
  %2933 = vmatprep.subr.bf16.mxu0 0
  %2934 = vmatpush2.bf16.msra.mxu0 0
  %2935 = vmatprep.subr.bf16.mxu0 0
  %2936 = vmatpush2.bf16.msra.mxu0 0
  %2937 = vmatprep.subr.bf16.mxu0 0
  %2938 = vmatpush2.bf16.msra.mxu0 0
  %2939 = vmatprep.subr.bf16.mxu0 0
  %2940 = vmatpush2.bf16.msra.mxu0 0
  %2941 = vmatprep.subr.bf16.mxu0 0
  %2942 = vmatpush2.bf16.msra.mxu0 0
  %2943 = vmatprep.subr.bf16.mxu0 0
  %2944 = vmatpush2.bf16.msra.mxu0 0
  %2945 = vmatprep.subr.bf16.mxu0 0
  %2946 = vmatpush2.bf16.msra.mxu0 0
  %2947 = vmatprep.subr.bf16.mxu0 0
  %2948 = vmatpush2.bf16.msra.mxu0 0
  %2949 = vmatprep.mubr.bf16.mxu0 0
  %2950 = vmatmul.mubr.bf16.gmra.mxu0 %v2906
  %v2951 = vpop.f32.mrf.mxu0
  %v2952 = vadd.f32 0.0, %v2951
  %v2953 = vpop.f32.mrf.mxu0
  %v2954 = vadd.f32 0.0, %v2953
  %v2955 = vpop.f32.mrf.mxu0
  %v2956 = vadd.f32 0.0, %v2955
  %v2957 = vpop.f32.mrf.mxu0
  %v2958 = vadd.f32 0.0, %v2957
  %2959 = vmatprep.mubr.bf16.mxu0 0
  %2960 = vmatmul.mubr.bf16.gmra.mxu0 %v2909
  %v2961 = vpop.f32.mrf.mxu0
  %v2962 = vadd.f32 0.0, %v2961
  %v2963 = vpop.f32.mrf.mxu0
  %v2964 = vadd.f32 0.0, %v2963
  %v2965 = vpop.f32.mrf.mxu0
  %v2966 = vadd.f32 0.0, %v2965
  %v2967 = vpop.f32.mrf.mxu0
  %v2968 = vadd.f32 0.0, %v2967
  %2969 = vmatprep.mubr.bf16.mxu0 0
  %2970 = vmatmul.mubr.bf16.gmra.mxu0 %v2912
  %v2971 = vpop.f32.mrf.mxu0
  %v2972 = vadd.f32 0.0, %v2971
  %v2973 = vpop.f32.mrf.mxu0
  %v2974 = vadd.f32 0.0, %v2973
  %v2975 = vpop.f32.mrf.mxu0
  %v2976 = vadd.f32 0.0, %v2975
  %v2977 = vpop.f32.mrf.mxu0
  %v2978 = vadd.f32 0.0, %v2977
  %2979 = vmatprep.mubr.bf16.mxu0 0
  %2980 = vmatmul.mubr.bf16.gmra.mxu0 %v2915
  %v2981 = vpop.f32.mrf.mxu0
  %v2982 = vadd.f32 0.0, %v2981
  %v2983 = vpop.f32.mrf.mxu0
  %v2984 = vadd.f32 0.0, %v2983
  %v2985 = vpop.f32.mrf.mxu0
  %v2986 = vadd.f32 0.0, %v2985
  %v2987 = vpop.f32.mrf.mxu0
  %v2988 = vadd.f32 0.0, %v2987
  %2989 = vdwg.mxu0
  %s2990 = sld [smem:[#allocation3]]
  %v2991 = vstv %s2990
  %v2992 = vmul.f32 %v2991, %v2867
  %v2993 = vmul.f32 %v2991, %v2869
  %v2994 = vmul.f32 %v2991, %v2871
  %v2995 = vmul.f32 %v2991, %v2873
  %v2996 = vmul.f32 %v2991, %v2877
  %v2997 = vmul.f32 %v2991, %v2879
  %v2998 = vmul.f32 %v2991, %v2881
  %v2999 = vmul.f32 %v2991, %v2883
  %v3000 = vmul.f32 %v2991, %v2887
  %v3001 = vmul.f32 %v2991, %v2889
  %v3002 = vmul.f32 %v2991, %v2891
  %v3003 = vmul.f32 %v2991, %v2893
  %v3004 = vmul.f32 %v2991, %v2897
  %v3005 = vmul.f32 %v2991, %v2899
  %v3006 = vmul.f32 %v2991, %v2901
  %v3007 = vmul.f32 %v2991, %v2903
  %v3008 = vmul.f32 %v2991, %v2952
  %v3009 = vmul.f32 %v2991, %v2954
  %v3010 = vmul.f32 %v2991, %v2956
  %v3011 = vmul.f32 %v2991, %v2958
  %v3012 = vmul.f32 %v2991, %v2962
  %v3013 = vmul.f32 %v2991, %v2964
  %v3014 = vmul.f32 %v2991, %v2966
  %v3015 = vmul.f32 %v2991, %v2968
  %v3016 = vmul.f32 %v2991, %v2972
  %v3017 = vmul.f32 %v2991, %v2974
  %v3018 = vmul.f32 %v2991, %v2976
  %v3019 = vmul.f32 %v2991, %v2978
  %v3020 = vmul.f32 %v2991, %v2982
  %v3021 = vmul.f32 %v2991, %v2984
  %v3022 = vmul.f32 %v2991, %v2986
  %v3023 = vmul.f32 %v2991, %v2988
  %v3024 = vadd.f32 %v2992, %v1597
  %v3025 = vadd.f32 %v2993, %v1598
  %v3026 = vadd.f32 %v2994, %v1599
  %v3027 = vadd.f32 %v2995, %v1600
  %v3028 = vadd.f32 %v2996, %v1601
  %v3029 = vadd.f32 %v2997, %v1602
  %v3030 = vadd.f32 %v2998, %v1603
  %v3031 = vadd.f32 %v2999, %v1604
  %v3032 = vadd.f32 %v3000, %v1605
  %v3033 = vadd.f32 %v3001, %v1606
  %v3034 = vadd.f32 %v3002, %v1607
  %v3035 = vadd.f32 %v3003, %v1608
  %v3036 = vadd.f32 %v3004, %v1609
  %v3037 = vadd.f32 %v3005, %v1610
  %v3038 = vadd.f32 %v3006, %v1611
  %v3039 = vadd.f32 %v3007, %v1612
  %v3040 = vadd.f32 %v3008, %v1613
  %v3041 = vadd.f32 %v3009, %v1614
  %v3042 = vadd.f32 %v3010, %v1615
  %v3043 = vadd.f32 %v3011, %v1616
  %v3044 = vadd.f32 %v3012, %v1617
  %v3045 = vadd.f32 %v3013, %v1618
  %v3046 = vadd.f32 %v3014, %v1619
  %v3047 = vadd.f32 %v3015, %v1620
  %v3048 = vadd.f32 %v3016, %v1621
  %v3049 = vadd.f32 %v3017, %v1622
  %v3050 = vadd.f32 %v3018, %v1623
  %v3051 = vadd.f32 %v3019, %v1624
  %v3052 = vadd.f32 %v3020, %v1625
  %v3053 = vadd.f32 %v3021, %v1626
  %v3054 = vadd.f32 %v3022, %v1627
  %v3055 = vadd.f32 %v3023, %v1628
  %v3056 = vmax.f32 %v3024, 0.0
  %v3057 = vmax.f32 %v3025, 0.0
  %v3058 = vmax.f32 %v3026, 0.0
  %v3059 = vmax.f32 %v3027, 0.0
  %v3060 = vmax.f32 %v3028, 0.0
  %v3061 = vmax.f32 %v3029, 0.0
  %v3062 = vmax.f32 %v3030, 0.0
  %v3063 = vmax.f32 %v3031, 0.0
  %v3064 = vmax.f32 %v3032, 0.0
  %v3065 = vmax.f32 %v3033, 0.0
  %v3066 = vmax.f32 %v3034, 0.0
  %v3067 = vmax.f32 %v3035, 0.0
  %v3068 = vmax.f32 %v3036, 0.0
  %v3069 = vmax.f32 %v3037, 0.0
  %v3070 = vmax.f32 %v3038, 0.0
  %v3071 = vmax.f32 %v3039, 0.0
  %v3072 = vmax.f32 %v3040, 0.0
  %v3073 = vmax.f32 %v3041, 0.0
  %v3074 = vmax.f32 %v3042, 0.0
  %v3075 = vmax.f32 %v3043, 0.0
  %v3076 = vmax.f32 %v3044, 0.0
  %v3077 = vmax.f32 %v3045, 0.0
  %v3078 = vmax.f32 %v3046, 0.0
  %v3079 = vmax.f32 %v3047, 0.0
  %v3080 = vmax.f32 %v3048, 0.0
  %v3081 = vmax.f32 %v3049, 0.0
  %v3082 = vmax.f32 %v3050, 0.0
  %v3083 = vmax.f32 %v3051, 0.0
  %v3084 = vmax.f32 %v3052, 0.0
  %v3085 = vmax.f32 %v3053, 0.0
  %v3086 = vmax.f32 %v3054, 0.0
  %v3087 = vmax.f32 %v3055, 0.0
  %v3088 = vpack.c.bf16 %v3058, %v3056
  %v3089 = vpack.c.bf16 %v3059, %v3057
  %v3090 = vpack.c.bf16 %v3062, %v3060
  %v3091 = vpack.c.bf16 %v3063, %v3061
  %v3092 = vpack.c.bf16 %v3066, %v3064
  %v3093 = vpack.c.bf16 %v3067, %v3065
  %v3094 = vpack.c.bf16 %v3070, %v3068
  %v3095 = vpack.c.bf16 %v3071, %v3069
  %v3096 = vpack.c.bf16 %v3074, %v3072
  %v3097 = vpack.c.bf16 %v3075, %v3073
  %v3098 = vpack.c.bf16 %v3078, %v3076
  %v3099 = vpack.c.bf16 %v3079, %v3077
  %v3100 = vpack.c.bf16 %v3082, %v3080
  %v3101 = vpack.c.bf16 %v3083, %v3081
  %v3102 = vpack.c.bf16 %v3086, %v3084
  %v3103 = vpack.c.bf16 %v3087, %v3085
  %v3104 = vld [vmem:[%s15] sm:$0xf]
  %v3105 = vld [vmem:[%s15 + $0x4] sm:$0xf]
  %v3106 = vld [vmem:[%s15 + $0x8] sm:$0xf]
  %v3107 = vld [vmem:[%s15 + $0xc] sm:$0xf]
  %v3108 = vld [vmem:[%s15 + $0x10] sm:$0xf]
  %v3109 = vld [vmem:[%s15 + $0x14] sm:$0xf]
  %v3110 = vld [vmem:[%s15 + $0x18] sm:$0xf]
  %v3111 = vld [vmem:[%s15 + $0x1c] sm:$0xf]
  %v3112 = vld [vmem:[%s15 + $0x20] sm:$0xf]
  %v3113 = vld [vmem:[%s15 + $0x24] sm:$0xf]
  %v3114 = vld [vmem:[%s15 + $0x28] sm:$0xf]
  %v3115 = vld [vmem:[%s15 + $0x2c] sm:$0xf]
  %v3116 = vld [vmem:[%s15 + $0x30] sm:$0xf]
  %v3117 = vld [vmem:[%s15 + $0x34] sm:$0xf]
  %v3118 = vld [vmem:[%s15 + $0x38] sm:$0xf]
  %v3119 = vld [vmem:[%s15 + $0x3c] sm:$0xf]
  %v3120 = vld [vmem:[%s15 + $0x40] sm:$0xf]
  %v3121 = vld [vmem:[%s15 + $0x44] sm:$0xf]
  %v3122 = vld [vmem:[%s15 + $0x48] sm:$0xf]
  %v3123 = vld [vmem:[%s15 + $0x4c] sm:$0xf]
  %v3124 = vld [vmem:[%s15 + $0x50] sm:$0xf]
  %v3125 = vld [vmem:[%s15 + $0x54] sm:$0xf]
  %v3126 = vld [vmem:[%s15 + $0x58] sm:$0xf]
  %v3127 = vld [vmem:[%s15 + $0x5c] sm:$0xf]
  %v3128 = vld [vmem:[%s15 + $0x60] sm:$0xf]
  %v3129 = vld [vmem:[%s15 + $0x64] sm:$0xf]
  %v3130 = vld [vmem:[%s15 + $0x68] sm:$0xf]
  %v3131 = vld [vmem:[%s15 + $0x6c] sm:$0xf]
  %v3132 = vld [vmem:[%s15 + $0x70] sm:$0xf]
  %v3133 = vld [vmem:[%s15 + $0x74] sm:$0xf]
  %v3134 = vld [vmem:[%s15 + $0x78] sm:$0xf]
  %v3135 = vld [vmem:[%s15 + $0x7c] sm:$0xf]
  %v3168 = vunpack.c.l.b16 %v3104
  %v3169 = vunpack.c.l.b16 %v3105
  %v3170 = vunpack.c.l.b16 %v3106
  %v3171 = vunpack.c.l.b16 %v3107
  %v3172 = vunpack.c.l.b16 %v3108
  %v3173 = vunpack.c.l.b16 %v3109
  %v3174 = vunpack.c.l.b16 %v3110
  %v3175 = vunpack.c.l.b16 %v3111
  %v3176 = vunpack.c.l.b16 %v3112
  %v3177 = vunpack.c.l.b16 %v3113
  %v3178 = vunpack.c.l.b16 %v3114
  %v3179 = vunpack.c.l.b16 %v3115
  %v3180 = vunpack.c.l.b16 %v3116
  %v3181 = vunpack.c.l.b16 %v3117
  %v3182 = vunpack.c.l.b16 %v3118
  %v3183 = vunpack.c.l.b16 %v3119
  %v3184 = vunpack.c.l.b16 %v3120
  %v3185 = vunpack.c.l.b16 %v3121
  %v3186 = vunpack.c.l.b16 %v3122
  %v3187 = vunpack.c.l.b16 %v3123
  %v3188 = vunpack.c.l.b16 %v3124
  %v3189 = vunpack.c.l.b16 %v3125
  %v3190 = vunpack.c.l.b16 %v3126
  %v3191 = vunpack.c.l.b16 %v3127
  %v3192 = vunpack.c.l.b16 %v3128
  %v3193 = vunpack.c.l.b16 %v3129
  %v3194 = vunpack.c.l.b16 %v3130
  %v3195 = vunpack.c.l.b16 %v3131
  %v3196 = vunpack.c.l.b16 %v3132
  %v3197 = vunpack.c.l.b16 %v3133
  %v3198 = vunpack.c.l.b16 %v3134
  %v3199 = vunpack.c.l.b16 %v3135
  %v3200 = vpack.c.b16 %v3169, %v3168
  %v3201 = vpack.c.b16 %v3171, %v3170
  %v3202 = vpack.c.b16 %v3173, %v3172
  %v3203 = vpack.c.b16 %v3175, %v3174
  %v3204 = vpack.c.b16 %v3177, %v3176
  %v3205 = vpack.c.b16 %v3179, %v3178
  %v3206 = vpack.c.b16 %v3181, %v3180
  %v3207 = vpack.c.b16 %v3183, %v3182
  %v3208 = vpack.c.b16 %v3185, %v3184
  %v3209 = vpack.c.b16 %v3187, %v3186
  %v3210 = vpack.c.b16 %v3189, %v3188
  %v3211 = vpack.c.b16 %v3191, %v3190
  %v3212 = vpack.c.b16 %v3193, %v3192
  %v3213 = vpack.c.b16 %v3195, %v3194
  %v3214 = vpack.c.b16 %v3197, %v3196
  %v3215 = vpack.c.b16 %v3199, %v3198
  %3232 = vmatprep.subr.bf16.mxu0 0
  %3233 = vmatpush1.bf16.msra.mxu0 %v3207
  %3234 = vmatprep.subr.bf16.mxu0 0
  %3235 = vmatpush1.bf16.msra.mxu0 %v3206
  %3236 = vmatprep.subr.bf16.mxu0 0
  %3237 = vmatpush1.bf16.msra.mxu0 %v3205
  %3238 = vmatprep.subr.bf16.mxu0 0
  %3239 = vmatpush1.bf16.msra.mxu0 %v3204
  %3240 = vmatprep.subr.bf16.mxu0 0
  %3241 = vmatpush1.bf16.msra.mxu0 %v3203
  %3242 = vmatprep.subr.bf16.mxu0 0
  %3243 = vmatpush1.bf16.msra.mxu0 %v3202
  %3244 = vmatprep.subr.bf16.mxu0 0
  %3245 = vmatpush1.bf16.msra.mxu0 %v3201
  %3246 = vmatprep.subr.bf16.mxu0 0
  %3247 = vmatpush1.bf16.msra.mxu0 %v3200
  %3248 = vmatprep.subr.bf16.mxu0 0
  %3249 = vmatpush2.bf16.msra.mxu0 %v3215
  %3250 = vmatprep.subr.bf16.mxu0 0
  %3251 = vmatpush2.bf16.msra.mxu0 %v3214
  %3252 = vmatprep.subr.bf16.mxu0 0
  %3253 = vmatpush2.bf16.msra.mxu0 %v3213
  %3254 = vmatprep.subr.bf16.mxu0 0
  %3255 = vmatpush2.bf16.msra.mxu0 %v3212
  %3256 = vmatprep.subr.bf16.mxu0 0
  %3257 = vmatpush2.bf16.msra.mxu0 %v3211
  %3258 = vmatprep.subr.bf16.mxu0 0
  %3259 = vmatpush2.bf16.msra.mxu0 %v3210
  %3260 = vmatprep.subr.bf16.mxu0 0
  %3261 = vmatpush2.bf16.msra.mxu0 %v3209
  %3262 = vmatprep.subr.bf16.mxu0 0
  %3263 = vmatpush2.bf16.msra.mxu0 %v3208
  %3264 = vmatprep.mubr.bf16.mxu0 %v3089
  %3265 = vmatmul.mubr.bf16.gmra.mxu0 %v3088
  %v3266 = vpop.f32.mrf.mxu0
  %v3267 = vadd.f32 0.0, %v3266
  %v3268 = vpop.f32.mrf.mxu0
  %v3269 = vpop.f32.mrf.mxu0
  %v3270 = vadd.f32 0.0, %v3269
  %v3271 = vpop.f32.mrf.mxu0
  %3272 = vmatprep.mubr.bf16.mxu0 %v3091
  %3273 = vmatmul.mubr.bf16.gmra.mxu0 %v3090
  %v3274 = vpop.f32.mrf.mxu0
  %v3275 = vadd.f32 0.0, %v3274
  %v3276 = vpop.f32.mrf.mxu0
  %v3277 = vpop.f32.mrf.mxu0
  %v3278 = vadd.f32 0.0, %v3277
  %v3279 = vpop.f32.mrf.mxu0
  %3280 = vmatprep.mubr.bf16.mxu0 %v3093
  %3281 = vmatmul.mubr.bf16.gmra.mxu0 %v3092
  %v3282 = vpop.f32.mrf.mxu0
  %v3283 = vadd.f32 0.0, %v3282
  %v3284 = vpop.f32.mrf.mxu0
  %v3285 = vpop.f32.mrf.mxu0
  %v3286 = vadd.f32 0.0, %v3285
  %v3287 = vpop.f32.mrf.mxu0
  %3288 = vmatprep.mubr.bf16.mxu0 %v3095
  %3289 = vmatmul.mubr.bf16.gmra.mxu0 %v3094
  %v3290 = vpop.f32.mrf.mxu0
  %v3291 = vadd.f32 0.0, %v3290
  %v3292 = vpop.f32.mrf.mxu0
  %v3293 = vpop.f32.mrf.mxu0
  %v3294 = vadd.f32 0.0, %v3293
  %v3295 = vpop.f32.mrf.mxu0
  %3296 = vmatprep.mubr.bf16.mxu0 %v3097
  %3297 = vmatmul.mubr.bf16.gmra.mxu0 %v3096
  %v3298 = vpop.f32.mrf.mxu0
  %v3299 = vadd.f32 0.0, %v3298
  %v3300 = vpop.f32.mrf.mxu0
  %v3301 = vpop.f32.mrf.mxu0
  %v3302 = vadd.f32 0.0, %v3301
  %v3303 = vpop.f32.mrf.mxu0
  %3304 = vmatprep.mubr.bf16.mxu0 %v3099
  %3305 = vmatmul.mubr.bf16.gmra.mxu0 %v3098
  %v3306 = vpop.f32.mrf.mxu0
  %v3307 = vadd.f32 0.0, %v3306
  %v3308 = vpop.f32.mrf.mxu0
  %v3309 = vpop.f32.mrf.mxu0
  %v3310 = vadd.f32 0.0, %v3309
  %v3311 = vpop.f32.mrf.mxu0
  %3312 = vmatprep.mubr.bf16.mxu0 %v3101
  %3313 = vmatmul.mubr.bf16.gmra.mxu0 %v3100
  %v3314 = vpop.f32.mrf.mxu0
  %v3315 = vadd.f32 0.0, %v3314
  %v3316 = vpop.f32.mrf.mxu0
  %v3317 = vpop.f32.mrf.mxu0
  %v3318 = vadd.f32 0.0, %v3317
  %v3319 = vpop.f32.mrf.mxu0
  %3320 = vmatprep.mubr.bf16.mxu0 %v3103
  %3321 = vmatmul.mubr.bf16.gmra.mxu0 %v3102
  %v3322 = vpop.f32.mrf.mxu0
  %v3323 = vadd.f32 0.0, %v3322
  %v3324 = vpop.f32.mrf.mxu0
  %v3325 = vpop.f32.mrf.mxu0
  %v3326 = vadd.f32 0.0, %v3325
  %v3327 = vpop.f32.mrf.mxu0
  %3328 = vdwg.mxu0
  %3329 = vst [vmem:[%s16] sm:$0xff] %v3267
  %3330 = vst [vmem:[%s16 + $0x8] sm:$0xff] %v3270
  %3331 = vst [vmem:[%s16 + $0x10] sm:$0xff] %v3275
  %3332 = vst [vmem:[%s16 + $0x18] sm:$0xff] %v3278
  %3333 = vst [vmem:[%s16 + $0x20] sm:$0xff] %v3283
  %3334 = vst [vmem:[%s16 + $0x28] sm:$0xff] %v3286
  %3335 = vst [vmem:[%s16 + $0x30] sm:$0xff] %v3291
  %3336 = vst [vmem:[%s16 + $0x38] sm:$0xff] %v3294
  %3337 = vst [vmem:[%s16 + $0x40] sm:$0xff] %v3299
  %3338 = vst [vmem:[%s16 + $0x48] sm:$0xff] %v3302
  %3339 = vst [vmem:[%s16 + $0x50] sm:$0xff] %v3307
  %3340 = vst [vmem:[%s16 + $0x58] sm:$0xff] %v3310
  %3341 = vst [vmem:[%s16 + $0x60] sm:$0xff] %v3315
  %3342 = vst [vmem:[%s16 + $0x68] sm:$0xff] %v3318
  %3343 = vst [vmem:[%s16 + $0x70] sm:$0xff] %v3323
  %3344 = vst [vmem:[%s16 + $0x78] sm:$0xff] %v3326
  // Predicated region
  $region66: #{discriminator_forward.7} parent=0 // pred_check
    _
  $region67: #{discriminator_forward.7} parent=0 // pred_check_branch
    %3346 = sbr.rel (0) target = $region69
  $region68: #{discriminator_forward.7} parent=0 // pred_region
    _
  $region69: #{discriminator_forward.7} parent=0 // pred_fallthru
    _
  // Predicated region
  $region70: #{discriminator_forward.7} parent=0 // pred_check
    _
  $region71: #{discriminator_forward.7} parent=0 // pred_check_branch
    %3348 = sbr.rel (0) target = $region73
  $region72: #{discriminator_forward.7} parent=0 // pred_region
    _
  $region73: #{discriminator_forward.7} parent=0 // pred_fallthru
    _

</llo_original>
